<compile_context>
chip_gen: v7x
topology: tpu7x:2x2x1
jax: 0.10.0
libtpu: 0.0.40
codegen_flags: <defaults>
</compile_context>

<pallas_src>
import jax
import jax.numpy as jnp
from jax import lax
from jax.experimental import pallas as pl
from jax.experimental.pallas import tpu as pltpu

K = 4          # conv kernel size for every layer
NEG = -1e30    # large negative additive value: ReLU-masks folded "garbage" columns to 0

# per layer: (h_out, p_out) -- output rows and physical (folded) output columns
#   L1: 64x64 in (fold 16 -> 4(+2 pad) phys cols)  -> 31 rows, 5 phys cols (fold 8)
#   L2: 31 rows, 5 cols (fold 8)                   -> 14 rows, 4 phys cols (fold 4)
#   L3: 14 rows, 4 cols (fold 4)                   ->  6 rows, 3 phys cols (fold 2)
#   L4:  6 rows, 3 cols (fold 2)                   ->  2 rows, 2 phys cols (fold 1 = NHWC)
_GEOM = ((31, 5), (14, 4), (6, 3), (2, 2))


# ----------------------------- Pallas kernel -----------------------------

def _conv_relu_layer(x16, m_ref, add_ref, h_out, p_out):
    """One folded stride-2 4x4 conv + bias/coord add + ReLU + garbage-column mask.

    x16    : (rows, p_in, Bt, D) bf16 activation slab (rows >= 2*(h_out+1))
    m_ref  : (8*D, E) bf16 folded mixing matrix, rows ordered (kh, u, j, ci)
    add_ref: (h_out or 1, p_out, 1, E) f32 additive map (bias [+ coord term], NEG on garbage)
    returns: (h_out, p_out, Bt, E) f32
    """
    rows, p_in, bt, d_in = x16.shape
    he = 2 * (h_out + 1)                                    # input rows actually consumed
    # fold row parity into a leading axis: leading-dim-only slice + reshape (no relayout)
    x2 = x16[:he].reshape(he // 2, 2, p_in, bt, d_in)
    taps = []
    for kh in range(K):                                     # 4 row taps
        a, par = divmod(kh, 2)
        for u in range(2):                                   # 2 physical-column offsets
            taps.append(x2[a:a + h_out, par, u:u + p_out])   # leading-dim slices only
    # lane-concat (all pieces 128-lane multiples) -> single deep-K MXU matmul per layer
    s = jnp.concatenate(taps, axis=-1)                       # (h_out, p_out, Bt, 8*D)
    acc = jnp.dot(s.reshape(h_out * p_out * bt, K * 2 * d_in), m_ref[...],
                  preferred_element_type=jnp.float32)
    acc = acc.reshape(h_out, p_out, bt, -1)
    return jnp.maximum(acc + add_ref[...], 0.0)              # bias/coord add + ReLU (+ mask)


def _haconv_kernel(x_ref, m1, a1, m2, a2, m3, a3, m4, a4, o_ref):
    """One grid step = Bt batch elements. x_ref: (64, 6, Bt, 16*Cin_pad) bf16."""
    y = x_ref[...]
    y = _conv_relu_layer(y, m1, a1, *_GEOM[0]).astype(jnp.bfloat16)
    y = _conv_relu_layer(y, m2, a2, *_GEOM[1]).astype(jnp.bfloat16)
    y = _conv_relu_layer(y, m3, a3, *_GEOM[2]).astype(jnp.bfloat16)
    y = _conv_relu_layer(y, m4, a4, *_GEOM[3])               # (2, 2, Bt, Cout) f32
    o_ref[...] = y


# ------------------------- weight folding (init-time) -------------------------

def _fold_conv_weight(w, f_in, f_out):
    """Fold a stride-2 4x4 conv (torch weight layout (Co, Ci, 4, 4)) into ONE
    column-space-to-depth mixing matrix of shape (4*2*f_in*Ci, f_out*Co), with rows
    ordered (kh, u, j, ci) to match the kernel's lane-concat order.

    Entry[(kh,u,j,ci), (r,co)] = w[co, ci, kh, kw]   with kw = u*f_in + j - 2*r
    (zero if kw not in [0, 4)).
    """
    Co, Ci, Kh, Kw = w.shape
    wp = jnp.transpose(w, (2, 3, 1, 0))                      # (Kh, Kw, Ci, Co)
    j = jnp.arange(2 * f_in)
    r = jnp.arange(f_out)
    kw = j[:, None] - 2 * r[None, :]                         # (2*f_in, f_out)
    valid = (kw >= 0) & (kw < Kw)
    g = wp[:, jnp.clip(kw, 0, Kw - 1), :, :]                 # (Kh, 2*f_in, f_out, Ci, Co)
    g = g * valid[None, :, :, None, None].astype(w.dtype)
    g = jnp.transpose(g, (0, 1, 3, 2, 4))                    # (Kh, 2*f_in, Ci, f_out, Co)
    return g.reshape(Kh * 2 * f_in * Ci, f_out * Co)


def _bias_add_map(b, f_out, p_out, w_valid):
    """(1, p_out, 1, f_out*Co) additive map: bias on valid folded columns, NEG on garbage."""
    Co = b.shape[0]
    col = jnp.arange(p_out)[:, None] * f_out + jnp.arange(f_out)[None, :]
    a = jnp.where((col < w_valid)[:, :, None], b[None, None, :], NEG)   # (p_out, f_out, Co)
    return a.reshape(1, p_out, 1, f_out * Co).astype(jnp.float32)


# ----------------------------- model wrapper -----------------------------

class HaConvNetPallas:
    def __init__(self, input_ch, divider=1, key=None, batch_tile=8):
        assert batch_tile % 8 == 0, "batch_tile must be a multiple of 8 (sublane alignment)"
        d = divider
        self.input_ch = input_ch
        self.Bt = batch_tile
        self.chans = (32 // d, 64 // d, 128 // d, 256 // d)
        c1, c2, c3, c4 = self.chans
        c0 = input_ch + 2                                    # torch conv1 in-ch (incl. coords)
        self.cin_pad = ((input_ch + 7) // 8) * 8             # image channels padded for lanes
        self.d0 = 16 * self.cin_pad                          # layer-1 folded lane width
        # NOTE: divider > 2 makes channel lane-widths < 128 (masked stores); still correct.

        ks = jax.random.split(key, 8)

        def init(k, shape, scale=0.05):
            return scale * jax.random.normal(k, shape, dtype=jnp.float32)

        # torch-layout parameters (used by the pure-JAX reference and folded below)
        self.w1 = init(ks[0], (c1, c0, K, K)); self.b1 = init(ks[1], (c1,))
        self.w2 = init(ks[2], (c2, c1, K, K)); self.b2 = init(ks[3], (c2,))
        self.w3 = init(ks[4], (c3, c2, K, K)); self.b3 = init(ks[5], (c3,))
        self.w4 = init(ks[6], (c4, c3, K, K)); self.b4 = init(ks[7], (c4,))

        # fixed coord grid (torch: channel 0 varies along H, channel 1 along W)
        lin = jnp.linspace(-1.0, 1.0, 64, dtype=jnp.float32)
        gx = jnp.broadcast_to(lin[:, None], (64, 64))
        gy = jnp.broadcast_to(lin[None, :], (64, 64))
        self.grid_chw = jnp.stack([gx, gy], axis=0)          # (2, 64, 64)

        # ---- fold conv weights into bf16 space-to-depth mixing matrices (done once) ----
        w1_img = jnp.pad(self.w1[:, :input_ch],
                         ((0, 0), (0, self.cin_pad - input_ch), (0, 0), (0, 0)))
        self.m1 = _fold_conv_weight(w1_img, 16, 8).astype(jnp.bfloat16)
        self.m2 = _fold_conv_weight(self.w2, 8, 4).astype(jnp.bfloat16)
        self.m3 = _fold_conv_weight(self.w3, 4, 2).astype(jnp.bfloat16)
        self.m4 = _fold_conv_weight(self.w4, 2, 1).astype(jnp.bfloat16)

        # ---- per-layer additive maps: bias (+ input-independent coord term for layer 1),
        #      garbage folded columns get NEG so ReLU zeroes them exactly ----
        coord1 = lax.conv_general_dilated(
            self.grid_chw[None], self.w1[:, input_ch:], window_strides=(2, 2),
            padding='VALID', dimension_numbers=('NCHW', 'OIHW', 'NCHW'))[0]   # (c1, 31, 31)
        coord1 = jnp.pad(coord1, ((0, 0), (0, 0), (0, 5 * 8 - 31)))           # W 31 -> 40
        coord1 = jnp.transpose(coord1.reshape(c1, 31, 5, 8), (1, 2, 3, 0))    # (h, p, r, co)
        coord1 = coord1.reshape(31, 5, 1, 8 * c1)
        self.add1 = (coord1 + _bias_add_map(self.b1, 8, 5, 31)).astype(jnp.float32)
        self.add2 = _bias_add_map(self.b2, 4, 4, 14)
        self.add3 = _bias_add_map(self.b3, 2, 3, 6)
        self.add4 = _bias_add_map(self.b4, 1, 2, 2)

    def __call__(self, x):
        B = x.shape[0]
        Bt = self.Bt
        G = -(-B // Bt)                                       # grid length (>= 2 uses 2 TCs on v7x)
        Bp = G * Bt
        cin = self.input_ch

        # --- thin XLA glue: NCHW -> folded (rows, phys-cols, batch-tile, lanes) layout ---
        xh = jnp.transpose(x.astype(jnp.float32), (0, 2, 3, 1))          # (B, 64, 64, Cin)
        xh = jnp.pad(xh, ((0, Bp - B), (0, 0), (0, 0), (0, self.cin_pad - cin)))
        xf = xh.reshape(Bp, 64, 4, self.d0)                   # fold 16 logical cols into lanes
        xf = xf.reshape(G, Bt, 64, 4, self.d0)
        xf = jnp.transpose(xf, (0, 2, 3, 1, 4))               # batch tile -> sublane axis
        xf = jnp.pad(xf, ((0, 0), (0, 0), (0, 2), (0, 0), (0, 0)))   # 2 zero-pad phys cols
        xf = xf.astype(jnp.bfloat16)                          # halves the per-step input DMA

        e4 = self.m4.shape[-1]                                # = chans[3]
        out = pl.pallas_call(
            _haconv_kernel,
            out_shape=jax.ShapeDtypeStruct((G, 2, 2, Bt, e4), jnp.float32),
            grid=(G,),
            in_specs=[
                pl.BlockSpec((None, 64, 6, Bt, self.d0), lambda g: (g, 0, 0, 0, 0)),
                pl.BlockSpec(self.m1.shape, lambda g: (0, 0)),
                pl.BlockSpec(self.add1.shape, lambda g: (0, 0, 0, 0)),
                pl.BlockSpec(self.m2.shape, lambda g: (0, 0)),
                pl.BlockSpec(self.add2.shape, lambda g: (0, 0, 0, 0)),
                pl.BlockSpec(self.m3.shape, lambda g: (0, 0)),
                pl.BlockSpec(self.add3.shape, lambda g: (0, 0, 0, 0)),
                pl.BlockSpec(self.m4.shape, lambda g: (0, 0)),
                pl.BlockSpec(self.add4.shape, lambda g: (0, 0, 0, 0)),
            ],
            out_specs=pl.BlockSpec((None, 2, 2, Bt, e4), lambda g: (g, 0, 0, 0, 0)),
            compiler_params=pltpu.CompilerParams(
                dimension_semantics=("parallel",)),
        )(xf, self.m1, self.add1, self.m2, self.add2,
          self.m3, self.add3, self.m4, self.add4)

        # kernel output is (grid, h, w, batch-tile, channel); torch nn.Flatten of NCHW
        # wants index c*4 + h*2 + w
        out = jnp.transpose(out, (0, 3, 4, 1, 2)).reshape(Bp, e4 * 4)
        return out[:B]


# ----------------------------- pure-JAX reference -----------------------------

def reference_forward(model, x):
    B = x.shape[0]
    g = model.grid_chw                                                   # (2, 64, 64)
    y = jnp.concatenate(
        [x.astype(jnp.float32), jnp.broadcast_to(g[None], (B, 2, 64, 64))], axis=1)
    for w, b in ((model.w1, model.b1), (model.w2, model.b2),
                 (model.w3, model.b3), (model.w4, model.b4)):
        y = lax.conv_general_dilated(
            y, w, window_strides=(2, 2), padding='VALID',
            dimension_numbers=('NCHW', 'OIHW', 'NCHW'))
        y = jnp.maximum(y + b.reshape(1, -1, 1, 1), 0.0)
    return y.reshape(B, -1)                                              # torch Flatten order


if __name__ == "__main__":
    key = jax.random.PRNGKey(0)
    kp, kx = jax.random.split(key)

    B, input_ch, divider = 2, 3, 2
    model = HaConvNetPallas(input_ch, divider=divider, key=kp)
    x = jax.random.normal(kx, (B, input_ch, 64, 64), dtype=jnp.float32)

    forward = jax.jit(lambda inp: model(inp))
    out = jax.block_until_ready(forward(x))
    assert out.shape == (B, (256 // divider) * 4), out.shape

    ref = jax.block_until_ready(reference_forward(model, x))
    err = float(jnp.max(jnp.abs(out - ref)))
    assert err < 2e-2, f"max abs err {err}"   # bf16-dot limited; f32 fold math is exact

    print("KERNEL_OK")
</pallas_src>

<mosaic_0001>
module attributes {stable_mosaic.version = 11 : i64} {
  func.func @_haconv_kernel(%arg0: i32, %arg1: memref<1x64x6x8x128xbf16, #tpu.memory_space<vmem>>, %arg2: memref<1024x128xbf16, #tpu.memory_space<vmem>>, %arg3: memref<31x5x1x128xf32, #tpu.memory_space<vmem>>, %arg4: memref<1024x128xbf16, #tpu.memory_space<vmem>>, %arg5: memref<1x4x1x128xf32, #tpu.memory_space<vmem>>, %arg6: memref<1024x128xbf16, #tpu.memory_space<vmem>>, %arg7: memref<1x3x1x128xf32, #tpu.memory_space<vmem>>, %arg8: memref<1024x128xbf16, #tpu.memory_space<vmem>>, %arg9: memref<1x2x1x128xf32, #tpu.memory_space<vmem>>, %arg10: memref<1x2x2x8x128xf32, #tpu.memory_space<vmem>>) attributes {dimension_semantics = [#tpu.dimension_semantics<parallel>], iteration_bounds = array<i64: 1>, scalar_prefetch = 0 : i64, scratch_operands = 0 : i64, tpu.core_type = #tpu.core_type<tc>, window_params = [{transform_indices = @transform_0, window_bounds = array<i64: 1, 64, 6, 8, 128>}, {pipeline_mode = #tpu.pipeline_mode<synchronous>, transform_indices = @transform_1, window_bounds = array<i64: 1024, 128>}, {pipeline_mode = #tpu.pipeline_mode<synchronous>, transform_indices = @transform_2, window_bounds = array<i64: 31, 5, 1, 128>}, {pipeline_mode = #tpu.pipeline_mode<synchronous>, transform_indices = @transform_3, window_bounds = array<i64: 1024, 128>}, {pipeline_mode = #tpu.pipeline_mode<synchronous>, transform_indices = @transform_4, window_bounds = array<i64: 1, 4, 1, 128>}, {pipeline_mode = #tpu.pipeline_mode<synchronous>, transform_indices = @transform_5, window_bounds = array<i64: 1024, 128>}, {pipeline_mode = #tpu.pipeline_mode<synchronous>, transform_indices = @transform_6, window_bounds = array<i64: 1, 3, 1, 128>}, {pipeline_mode = #tpu.pipeline_mode<synchronous>, transform_indices = @transform_7, window_bounds = array<i64: 1024, 128>}, {pipeline_mode = #tpu.pipeline_mode<synchronous>, transform_indices = @transform_8, window_bounds = array<i64: 1, 2, 1, 128>}, {transform_indices = @transform_9, window_bounds = array<i64: 1, 2, 2, 8, 128>}]} {
    %c0 = arith.constant 0 : index
    %c0_0 = arith.constant 0 : index
    %c0_1 = arith.constant 0 : index
    %c0_2 = arith.constant 0 : index
    %c0_3 = arith.constant 0 : index
    %0 = vector.load %arg1[%c0, %c0_0, %c0_1, %c0_2, %c0_3] : memref<1x64x6x8x128xbf16, #tpu.memory_space<vmem>>, vector<1x64x6x8x128xbf16>
    %1 = vector.shape_cast %0 : vector<1x64x6x8x128xbf16> to vector<64x6x8x128xbf16>
    %2 = vector.shape_cast %1 : vector<64x6x8x128xbf16> to vector<32x2x6x8x128xbf16>
    %3 = vector.extract_strided_slice %2 {offsets = [0, 0, 0, 0, 0], sizes = [31, 1, 5, 8, 128], strides = [1, 1, 1, 1, 1]} : vector<32x2x6x8x128xbf16> to vector<31x1x5x8x128xbf16>
    %4 = vector.shape_cast %3 : vector<31x1x5x8x128xbf16> to vector<31x5x8x128xbf16>
    %5 = vector.extract_strided_slice %2 {offsets = [0, 0, 1, 0, 0], sizes = [31, 1, 5, 8, 128], strides = [1, 1, 1, 1, 1]} : vector<32x2x6x8x128xbf16> to vector<31x1x5x8x128xbf16>
    %6 = vector.shape_cast %5 : vector<31x1x5x8x128xbf16> to vector<31x5x8x128xbf16>
    %7 = vector.extract_strided_slice %2 {offsets = [0, 1, 0, 0, 0], sizes = [31, 1, 5, 8, 128], strides = [1, 1, 1, 1, 1]} : vector<32x2x6x8x128xbf16> to vector<31x1x5x8x128xbf16>
    %8 = vector.shape_cast %7 : vector<31x1x5x8x128xbf16> to vector<31x5x8x128xbf16>
    %9 = vector.extract_strided_slice %2 {offsets = [0, 1, 1, 0, 0], sizes = [31, 1, 5, 8, 128], strides = [1, 1, 1, 1, 1]} : vector<32x2x6x8x128xbf16> to vector<31x1x5x8x128xbf16>
    %10 = vector.shape_cast %9 : vector<31x1x5x8x128xbf16> to vector<31x5x8x128xbf16>
    %11 = vector.extract_strided_slice %2 {offsets = [1, 0, 0, 0, 0], sizes = [31, 1, 5, 8, 128], strides = [1, 1, 1, 1, 1]} : vector<32x2x6x8x128xbf16> to vector<31x1x5x8x128xbf16>
    %12 = vector.shape_cast %11 : vector<31x1x5x8x128xbf16> to vector<31x5x8x128xbf16>
    %13 = vector.extract_strided_slice %2 {offsets = [1, 0, 1, 0, 0], sizes = [31, 1, 5, 8, 128], strides = [1, 1, 1, 1, 1]} : vector<32x2x6x8x128xbf16> to vector<31x1x5x8x128xbf16>
    %14 = vector.shape_cast %13 : vector<31x1x5x8x128xbf16> to vector<31x5x8x128xbf16>
    %15 = vector.extract_strided_slice %2 {offsets = [1, 1, 0, 0, 0], sizes = [31, 1, 5, 8, 128], strides = [1, 1, 1, 1, 1]} : vector<32x2x6x8x128xbf16> to vector<31x1x5x8x128xbf16>
    %16 = vector.shape_cast %15 : vector<31x1x5x8x128xbf16> to vector<31x5x8x128xbf16>
    %17 = vector.extract_strided_slice %2 {offsets = [1, 1, 1, 0, 0], sizes = [31, 1, 5, 8, 128], strides = [1, 1, 1, 1, 1]} : vector<32x2x6x8x128xbf16> to vector<31x1x5x8x128xbf16>
    %18 = vector.shape_cast %17 : vector<31x1x5x8x128xbf16> to vector<31x5x8x128xbf16>
    %19 = tpu.concatenate %4, %6, %8, %10, %12, %14, %16, %18 in 3 : vector<31x5x8x128xbf16>, vector<31x5x8x128xbf16>, vector<31x5x8x128xbf16>, vector<31x5x8x128xbf16>, vector<31x5x8x128xbf16>, vector<31x5x8x128xbf16>, vector<31x5x8x128xbf16>, vector<31x5x8x128xbf16> -> vector<31x5x8x1024xbf16>
    %20 = vector.shape_cast %19 : vector<31x5x8x1024xbf16> to vector<1240x1024xbf16>
    %c0_4 = arith.constant 0 : index
    %c0_5 = arith.constant 0 : index
    %21 = vector.load %arg2[%c0_4, %c0_5] : memref<1024x128xbf16, #tpu.memory_space<vmem>>, vector<1024x128xbf16>
    %cst = arith.constant dense<0.000000e+00> : vector<1240x128xf32>
    %22 = tpu.matmul %20, %21, %cst {dimension_numbers = #tpu.dot_dimension_numbers<[1], [0], [0], [1], [0, 0, 1, 1], [], []>} : vector<1240x1024xbf16>, vector<1024x128xbf16>, vector<1240x128xf32> -> vector<1240x128xf32>
    %23 = vector.shape_cast %22 : vector<1240x128xf32> to vector<31x5x8x128xf32>
    %c0_6 = arith.constant 0 : index
    %c0_7 = arith.constant 0 : index
    %c0_8 = arith.constant 0 : index
    %c0_9 = arith.constant 0 : index
    %24 = vector.load %arg3[%c0_6, %c0_7, %c0_8, %c0_9] : memref<31x5x1x128xf32, #tpu.memory_space<vmem>>, vector<31x5x1x128xf32>
    %25 = vector.broadcast %24 : vector<31x5x1x128xf32> to vector<31x5x8x128xf32>
    %26 = arith.addf %23, %25 : vector<31x5x8x128xf32>
    %cst_10 = arith.constant 0.000000e+00 : f32
    %27 = vector.broadcast %cst_10 : f32 to vector<31x5x8x128xf32>
    %28 = arith.maximumf %26, %27 : vector<31x5x8x128xf32>
    %29 = arith.truncf %28 : vector<31x5x8x128xf32> to vector<31x5x8x128xbf16>
    %30 = vector.extract_strided_slice %29 {offsets = [0, 0, 0, 0], sizes = [30, 5, 8, 128], strides = [1, 1, 1, 1]} : vector<31x5x8x128xbf16> to vector<30x5x8x128xbf16>
    %31 = vector.shape_cast %30 : vector<30x5x8x128xbf16> to vector<15x2x5x8x128xbf16>
    %32 = vector.extract_strided_slice %31 {offsets = [0, 0, 0, 0, 0], sizes = [14, 1, 4, 8, 128], strides = [1, 1, 1, 1, 1]} : vector<15x2x5x8x128xbf16> to vector<14x1x4x8x128xbf16>
    %33 = vector.shape_cast %32 : vector<14x1x4x8x128xbf16> to vector<14x4x8x128xbf16>
    %34 = vector.extract_strided_slice %31 {offsets = [0, 0, 1, 0, 0], sizes = [14, 1, 4, 8, 128], strides = [1, 1, 1, 1, 1]} : vector<15x2x5x8x128xbf16> to vector<14x1x4x8x128xbf16>
    %35 = vector.shape_cast %34 : vector<14x1x4x8x128xbf16> to vector<14x4x8x128xbf16>
    %36 = vector.extract_strided_slice %31 {offsets = [0, 1, 0, 0, 0], sizes = [14, 1, 4, 8, 128], strides = [1, 1, 1, 1, 1]} : vector<15x2x5x8x128xbf16> to vector<14x1x4x8x128xbf16>
    %37 = vector.shape_cast %36 : vector<14x1x4x8x128xbf16> to vector<14x4x8x128xbf16>
    %38 = vector.extract_strided_slice %31 {offsets = [0, 1, 1, 0, 0], sizes = [14, 1, 4, 8, 128], strides = [1, 1, 1, 1, 1]} : vector<15x2x5x8x128xbf16> to vector<14x1x4x8x128xbf16>
    %39 = vector.shape_cast %38 : vector<14x1x4x8x128xbf16> to vector<14x4x8x128xbf16>
    %40 = vector.extract_strided_slice %31 {offsets = [1, 0, 0, 0, 0], sizes = [14, 1, 4, 8, 128], strides = [1, 1, 1, 1, 1]} : vector<15x2x5x8x128xbf16> to vector<14x1x4x8x128xbf16>
    %41 = vector.shape_cast %40 : vector<14x1x4x8x128xbf16> to vector<14x4x8x128xbf16>
    %42 = vector.extract_strided_slice %31 {offsets = [1, 0, 1, 0, 0], sizes = [14, 1, 4, 8, 128], strides = [1, 1, 1, 1, 1]} : vector<15x2x5x8x128xbf16> to vector<14x1x4x8x128xbf16>
    %43 = vector.shape_cast %42 : vector<14x1x4x8x128xbf16> to vector<14x4x8x128xbf16>
    %44 = vector.extract_strided_slice %31 {offsets = [1, 1, 0, 0, 0], sizes = [14, 1, 4, 8, 128], strides = [1, 1, 1, 1, 1]} : vector<15x2x5x8x128xbf16> to vector<14x1x4x8x128xbf16>
    %45 = vector.shape_cast %44 : vector<14x1x4x8x128xbf16> to vector<14x4x8x128xbf16>
    %46 = vector.extract_strided_slice %31 {offsets = [1, 1, 1, 0, 0], sizes = [14, 1, 4, 8, 128], strides = [1, 1, 1, 1, 1]} : vector<15x2x5x8x128xbf16> to vector<14x1x4x8x128xbf16>
    %47 = vector.shape_cast %46 : vector<14x1x4x8x128xbf16> to vector<14x4x8x128xbf16>
    %48 = tpu.concatenate %33, %35, %37, %39, %41, %43, %45, %47 in 3 : vector<14x4x8x128xbf16>, vector<14x4x8x128xbf16>, vector<14x4x8x128xbf16>, vector<14x4x8x128xbf16>, vector<14x4x8x128xbf16>, vector<14x4x8x128xbf16>, vector<14x4x8x128xbf16>, vector<14x4x8x128xbf16> -> vector<14x4x8x1024xbf16>
    %49 = vector.shape_cast %48 : vector<14x4x8x1024xbf16> to vector<448x1024xbf16>
    %c0_11 = arith.constant 0 : index
    %c0_12 = arith.constant 0 : index
    %50 = vector.load %arg4[%c0_11, %c0_12] : memref<1024x128xbf16, #tpu.memory_space<vmem>>, vector<1024x128xbf16>
    %cst_13 = arith.constant dense<0.000000e+00> : vector<448x128xf32>
    %51 = tpu.matmul %49, %50, %cst_13 {dimension_numbers = #tpu.dot_dimension_numbers<[1], [0], [0], [1], [0, 0, 1, 1], [], []>} : vector<448x1024xbf16>, vector<1024x128xbf16>, vector<448x128xf32> -> vector<448x128xf32>
    %52 = vector.shape_cast %51 : vector<448x128xf32> to vector<14x4x8x128xf32>
    %c0_14 = arith.constant 0 : index
    %c0_15 = arith.constant 0 : index
    %c0_16 = arith.constant 0 : index
    %c0_17 = arith.constant 0 : index
    %53 = vector.load %arg5[%c0_14, %c0_15, %c0_16, %c0_17] : memref<1x4x1x128xf32, #tpu.memory_space<vmem>>, vector<1x4x1x128xf32>
    %54 = vector.broadcast %53 : vector<1x4x1x128xf32> to vector<14x4x8x128xf32>
    %55 = arith.addf %52, %54 : vector<14x4x8x128xf32>
    %cst_18 = arith.constant 0.000000e+00 : f32
    %56 = vector.broadcast %cst_18 : f32 to vector<14x4x8x128xf32>
    %57 = arith.maximumf %55, %56 : vector<14x4x8x128xf32>
    %58 = arith.truncf %57 : vector<14x4x8x128xf32> to vector<14x4x8x128xbf16>
    %59 = vector.shape_cast %58 : vector<14x4x8x128xbf16> to vector<7x2x4x8x128xbf16>
    %60 = vector.extract_strided_slice %59 {offsets = [0, 0, 0, 0, 0], sizes = [6, 1, 3, 8, 128], strides = [1, 1, 1, 1, 1]} : vector<7x2x4x8x128xbf16> to vector<6x1x3x8x128xbf16>
    %61 = vector.shape_cast %60 : vector<6x1x3x8x128xbf16> to vector<6x3x8x128xbf16>
    %62 = vector.extract_strided_slice %59 {offsets = [0, 0, 1, 0, 0], sizes = [6, 1, 3, 8, 128], strides = [1, 1, 1, 1, 1]} : vector<7x2x4x8x128xbf16> to vector<6x1x3x8x128xbf16>
    %63 = vector.shape_cast %62 : vector<6x1x3x8x128xbf16> to vector<6x3x8x128xbf16>
    %64 = vector.extract_strided_slice %59 {offsets = [0, 1, 0, 0, 0], sizes = [6, 1, 3, 8, 128], strides = [1, 1, 1, 1, 1]} : vector<7x2x4x8x128xbf16> to vector<6x1x3x8x128xbf16>
    %65 = vector.shape_cast %64 : vector<6x1x3x8x128xbf16> to vector<6x3x8x128xbf16>
    %66 = vector.extract_strided_slice %59 {offsets = [0, 1, 1, 0, 0], sizes = [6, 1, 3, 8, 128], strides = [1, 1, 1, 1, 1]} : vector<7x2x4x8x128xbf16> to vector<6x1x3x8x128xbf16>
    %67 = vector.shape_cast %66 : vector<6x1x3x8x128xbf16> to vector<6x3x8x128xbf16>
    %68 = vector.extract_strided_slice %59 {offsets = [1, 0, 0, 0, 0], sizes = [6, 1, 3, 8, 128], strides = [1, 1, 1, 1, 1]} : vector<7x2x4x8x128xbf16> to vector<6x1x3x8x128xbf16>
    %69 = vector.shape_cast %68 : vector<6x1x3x8x128xbf16> to vector<6x3x8x128xbf16>
    %70 = vector.extract_strided_slice %59 {offsets = [1, 0, 1, 0, 0], sizes = [6, 1, 3, 8, 128], strides = [1, 1, 1, 1, 1]} : vector<7x2x4x8x128xbf16> to vector<6x1x3x8x128xbf16>
    %71 = vector.shape_cast %70 : vector<6x1x3x8x128xbf16> to vector<6x3x8x128xbf16>
    %72 = vector.extract_strided_slice %59 {offsets = [1, 1, 0, 0, 0], sizes = [6, 1, 3, 8, 128], strides = [1, 1, 1, 1, 1]} : vector<7x2x4x8x128xbf16> to vector<6x1x3x8x128xbf16>
    %73 = vector.shape_cast %72 : vector<6x1x3x8x128xbf16> to vector<6x3x8x128xbf16>
    %74 = vector.extract_strided_slice %59 {offsets = [1, 1, 1, 0, 0], sizes = [6, 1, 3, 8, 128], strides = [1, 1, 1, 1, 1]} : vector<7x2x4x8x128xbf16> to vector<6x1x3x8x128xbf16>
    %75 = vector.shape_cast %74 : vector<6x1x3x8x128xbf16> to vector<6x3x8x128xbf16>
    %76 = tpu.concatenate %61, %63, %65, %67, %69, %71, %73, %75 in 3 : vector<6x3x8x128xbf16>, vector<6x3x8x128xbf16>, vector<6x3x8x128xbf16>, vector<6x3x8x128xbf16>, vector<6x3x8x128xbf16>, vector<6x3x8x128xbf16>, vector<6x3x8x128xbf16>, vector<6x3x8x128xbf16> -> vector<6x3x8x1024xbf16>
    %77 = vector.shape_cast %76 : vector<6x3x8x1024xbf16> to vector<144x1024xbf16>
    %c0_19 = arith.constant 0 : index
    %c0_20 = arith.constant 0 : index
    %78 = vector.load %arg6[%c0_19, %c0_20] : memref<1024x128xbf16, #tpu.memory_space<vmem>>, vector<1024x128xbf16>
    %cst_21 = arith.constant dense<0.000000e+00> : vector<144x128xf32>
    %79 = tpu.matmul %77, %78, %cst_21 {dimension_numbers = #tpu.dot_dimension_numbers<[1], [0], [0], [1], [0, 0, 1, 1], [], []>} : vector<144x1024xbf16>, vector<1024x128xbf16>, vector<144x128xf32> -> vector<144x128xf32>
    %80 = vector.shape_cast %79 : vector<144x128xf32> to vector<6x3x8x128xf32>
    %c0_22 = arith.constant 0 : index
    %c0_23 = arith.constant 0 : index
    %c0_24 = arith.constant 0 : index
    %c0_25 = arith.constant 0 : index
    %81 = vector.load %arg7[%c0_22, %c0_23, %c0_24, %c0_25] : memref<1x3x1x128xf32, #tpu.memory_space<vmem>>, vector<1x3x1x128xf32>
    %82 = vector.broadcast %81 : vector<1x3x1x128xf32> to vector<6x3x8x128xf32>
    %83 = arith.addf %80, %82 : vector<6x3x8x128xf32>
    %cst_26 = arith.constant 0.000000e+00 : f32
    %84 = vector.broadcast %cst_26 : f32 to vector<6x3x8x128xf32>
    %85 = arith.maximumf %83, %84 : vector<6x3x8x128xf32>
    %86 = arith.truncf %85 : vector<6x3x8x128xf32> to vector<6x3x8x128xbf16>
    %87 = vector.shape_cast %86 : vector<6x3x8x128xbf16> to vector<3x2x3x8x128xbf16>
    %88 = vector.extract_strided_slice %87 {offsets = [0, 0, 0, 0, 0], sizes = [2, 1, 2, 8, 128], strides = [1, 1, 1, 1, 1]} : vector<3x2x3x8x128xbf16> to vector<2x1x2x8x128xbf16>
    %89 = vector.shape_cast %88 : vector<2x1x2x8x128xbf16> to vector<2x2x8x128xbf16>
    %90 = vector.extract_strided_slice %87 {offsets = [0, 0, 1, 0, 0], sizes = [2, 1, 2, 8, 128], strides = [1, 1, 1, 1, 1]} : vector<3x2x3x8x128xbf16> to vector<2x1x2x8x128xbf16>
    %91 = vector.shape_cast %90 : vector<2x1x2x8x128xbf16> to vector<2x2x8x128xbf16>
    %92 = vector.extract_strided_slice %87 {offsets = [0, 1, 0, 0, 0], sizes = [2, 1, 2, 8, 128], strides = [1, 1, 1, 1, 1]} : vector<3x2x3x8x128xbf16> to vector<2x1x2x8x128xbf16>
    %93 = vector.shape_cast %92 : vector<2x1x2x8x128xbf16> to vector<2x2x8x128xbf16>
    %94 = vector.extract_strided_slice %87 {offsets = [0, 1, 1, 0, 0], sizes = [2, 1, 2, 8, 128], strides = [1, 1, 1, 1, 1]} : vector<3x2x3x8x128xbf16> to vector<2x1x2x8x128xbf16>
    %95 = vector.shape_cast %94 : vector<2x1x2x8x128xbf16> to vector<2x2x8x128xbf16>
    %96 = vector.extract_strided_slice %87 {offsets = [1, 0, 0, 0, 0], sizes = [2, 1, 2, 8, 128], strides = [1, 1, 1, 1, 1]} : vector<3x2x3x8x128xbf16> to vector<2x1x2x8x128xbf16>
    %97 = vector.shape_cast %96 : vector<2x1x2x8x128xbf16> to vector<2x2x8x128xbf16>
    %98 = vector.extract_strided_slice %87 {offsets = [1, 0, 1, 0, 0], sizes = [2, 1, 2, 8, 128], strides = [1, 1, 1, 1, 1]} : vector<3x2x3x8x128xbf16> to vector<2x1x2x8x128xbf16>
    %99 = vector.shape_cast %98 : vector<2x1x2x8x128xbf16> to vector<2x2x8x128xbf16>
    %100 = vector.extract_strided_slice %87 {offsets = [1, 1, 0, 0, 0], sizes = [2, 1, 2, 8, 128], strides = [1, 1, 1, 1, 1]} : vector<3x2x3x8x128xbf16> to vector<2x1x2x8x128xbf16>
    %101 = vector.shape_cast %100 : vector<2x1x2x8x128xbf16> to vector<2x2x8x128xbf16>
    %102 = vector.extract_strided_slice %87 {offsets = [1, 1, 1, 0, 0], sizes = [2, 1, 2, 8, 128], strides = [1, 1, 1, 1, 1]} : vector<3x2x3x8x128xbf16> to vector<2x1x2x8x128xbf16>
    %103 = vector.shape_cast %102 : vector<2x1x2x8x128xbf16> to vector<2x2x8x128xbf16>
    %104 = tpu.concatenate %89, %91, %93, %95, %97, %99, %101, %103 in 3 : vector<2x2x8x128xbf16>, vector<2x2x8x128xbf16>, vector<2x2x8x128xbf16>, vector<2x2x8x128xbf16>, vector<2x2x8x128xbf16>, vector<2x2x8x128xbf16>, vector<2x2x8x128xbf16>, vector<2x2x8x128xbf16> -> vector<2x2x8x1024xbf16>
    %105 = vector.shape_cast %104 : vector<2x2x8x1024xbf16> to vector<32x1024xbf16>
    %c0_27 = arith.constant 0 : index
    %c0_28 = arith.constant 0 : index
    %106 = vector.load %arg8[%c0_27, %c0_28] : memref<1024x128xbf16, #tpu.memory_space<vmem>>, vector<1024x128xbf16>
    %cst_29 = arith.constant dense<0.000000e+00> : vector<32x128xf32>
    %107 = tpu.matmul %105, %106, %cst_29 {dimension_numbers = #tpu.dot_dimension_numbers<[1], [0], [0], [1], [0, 0, 1, 1], [], []>} : vector<32x1024xbf16>, vector<1024x128xbf16>, vector<32x128xf32> -> vector<32x128xf32>
    %108 = vector.shape_cast %107 : vector<32x128xf32> to vector<2x2x8x128xf32>
    %c0_30 = arith.constant 0 : index
    %c0_31 = arith.constant 0 : index
    %c0_32 = arith.constant 0 : index
    %c0_33 = arith.constant 0 : index
    %109 = vector.load %arg9[%c0_30, %c0_31, %c0_32, %c0_33] : memref<1x2x1x128xf32, #tpu.memory_space<vmem>>, vector<1x2x1x128xf32>
    %110 = vector.broadcast %109 : vector<1x2x1x128xf32> to vector<2x2x8x128xf32>
    %111 = arith.addf %108, %110 : vector<2x2x8x128xf32>
    %cst_34 = arith.constant 0.000000e+00 : f32
    %112 = vector.broadcast %cst_34 : f32 to vector<2x2x8x128xf32>
    %113 = arith.maximumf %111, %112 : vector<2x2x8x128xf32>
    %c0_35 = arith.constant 0 : index
    %c0_36 = arith.constant 0 : index
    %c0_37 = arith.constant 0 : index
    %c0_38 = arith.constant 0 : index
    %c0_39 = arith.constant 0 : index
    %114 = vector.load %arg10[%c0_35, %c0_36, %c0_37, %c0_38, %c0_39] : memref<1x2x2x8x128xf32, #tpu.memory_space<vmem>>, vector<1x2x2x8x128xf32>
    %115 = vector.shape_cast %114 : vector<1x2x2x8x128xf32> to vector<2x2x8x128xf32>
    %116 = vector.shape_cast %113 : vector<2x2x8x128xf32> to vector<1x2x2x8x128xf32>
    tpu.vector_store %arg10[%c0_35, %c0_36, %c0_37, %c0_38, %c0_39], %116 {strides = array<i32>} : memref<1x2x2x8x128xf32, #tpu.memory_space<vmem>>, vector<1x2x2x8x128xf32>,
    return
  }
  func.func @transform_0(%arg0: i32) -> (i32, i32, i32, i32, i32) {
    %c0_i32 = arith.constant 0 : i32
    %c0_i32_0 = arith.constant 0 : i32
    %c0_i32_1 = arith.constant 0 : i32
    %c0_i32_2 = arith.constant 0 : i32
    %c0_i32_3 = arith.constant 0 : i32
    return %arg0, %c0_i32, %c0_i32_0, %c0_i32_1, %c0_i32_2 : i32, i32, i32, i32, i32
  }
  func.func @transform_1(%arg0: i32) -> (i32, i32) {
    %c0_i32 = arith.constant 0 : i32
    %c0_i32_0 = arith.constant 0 : i32
    %c0_i32_1 = arith.constant 0 : i32
    return %c0_i32, %c0_i32_0 : i32, i32
  }
  func.func @transform_2(%arg0: i32) -> (i32, i32, i32, i32) {
    %c0_i32 = arith.constant 0 : i32
    %c0_i32_0 = arith.constant 0 : i32
    %c0_i32_1 = arith.constant 0 : i32
    %c0_i32_2 = arith.constant 0 : i32
    %c0_i32_3 = arith.constant 0 : i32
    return %c0_i32, %c0_i32_0, %c0_i32_1, %c0_i32_2 : i32, i32, i32, i32
  }
  func.func @transform_3(%arg0: i32) -> (i32, i32) {
    %c0_i32 = arith.constant 0 : i32
    %c0_i32_0 = arith.constant 0 : i32
    %c0_i32_1 = arith.constant 0 : i32
    return %c0_i32, %c0_i32_0 : i32, i32
  }
  func.func @transform_4(%arg0: i32) -> (i32, i32, i32, i32) {
    %c0_i32 = arith.constant 0 : i32
    %c0_i32_0 = arith.constant 0 : i32
    %c0_i32_1 = arith.constant 0 : i32
    %c0_i32_2 = arith.constant 0 : i32
    %c0_i32_3 = arith.constant 0 : i32
    return %c0_i32, %c0_i32_0, %c0_i32_1, %c0_i32_2 : i32, i32, i32, i32
  }
  func.func @transform_5(%arg0: i32) -> (i32, i32) {
    %c0_i32 = arith.constant 0 : i32
    %c0_i32_0 = arith.constant 0 : i32
    %c0_i32_1 = arith.constant 0 : i32
    return %c0_i32, %c0_i32_0 : i32, i32
  }
  func.func @transform_6(%arg0: i32) -> (i32, i32, i32, i32) {
    %c0_i32 = arith.constant 0 : i32
    %c0_i32_0 = arith.constant 0 : i32
    %c0_i32_1 = arith.constant 0 : i32
    %c0_i32_2 = arith.constant 0 : i32
    %c0_i32_3 = arith.constant 0 : i32
    return %c0_i32, %c0_i32_0, %c0_i32_1, %c0_i32_2 : i32, i32, i32, i32
  }
  func.func @transform_7(%arg0: i32) -> (i32, i32) {
    %c0_i32 = arith.constant 0 : i32
    %c0_i32_0 = arith.constant 0 : i32
    %c0_i32_1 = arith.constant 0 : i32
    return %c0_i32, %c0_i32_0 : i32, i32
  }
  func.func @transform_8(%arg0: i32) -> (i32, i32, i32, i32) {
    %c0_i32 = arith.constant 0 : i32
    %c0_i32_0 = arith.constant 0 : i32
    %c0_i32_1 = arith.constant 0 : i32
    %c0_i32_2 = arith.constant 0 : i32
    %c0_i32_3 = arith.constant 0 : i32
    return %c0_i32, %c0_i32_0, %c0_i32_1, %c0_i32_2 : i32, i32, i32, i32
  }
  func.func @transform_9(%arg0: i32) -> (i32, i32, i32, i32, i32) {
    %c0_i32 = arith.constant 0 : i32
    %c0_i32_0 = arith.constant 0 : i32
    %c0_i32_1 = arith.constant 0 : i32
    %c0_i32_2 = arith.constant 0 : i32
    %c0_i32_3 = arith.constant 0 : i32
    return %arg0, %c0_i32, %c0_i32_0, %c0_i32_1, %c0_i32_2 : i32, i32, i32, i32, i32
  }
}

</mosaic_0001>

<llo_original>
// kernel: _lambda_.1
$region0: #{_lambda_.1}
  #allocation0 [shape = 'u32[]', space=smem, size = 0x4, offset = 0x4, fixed_abs, tag = 'smem constant byte address 0x4 - core index']
  #allocation1 [shape = 'u32[144,128]{1,0:T(1,128)}', space=vmem, size = 0x12000, scoped, tag = 'internal scratch']
  %s0 = inlined_call_operand.vmem [shape: bf16[1,64,6,8,128], index: 0, kind: input, shape index: {}]
  %s1 = inlined_call_operand.vmem [shape: bf16[1024,128], index: 1, kind: input, shape index: {}]
  %s2 = inlined_call_operand.vmem [shape: f32[31,5,1,128], index: 2, kind: input, shape index: {}]
  %s3 = inlined_call_operand.vmem [shape: bf16[1024,128], index: 3, kind: input, shape index: {}]
  %s4 = inlined_call_operand.vmem [shape: f32[1,4,1,128], index: 4, kind: input, shape index: {}]
  %s5 = inlined_call_operand.vmem [shape: bf16[1024,128], index: 5, kind: input, shape index: {}]
  %s6 = inlined_call_operand.vmem [shape: f32[1,3,1,128], index: 6, kind: input, shape index: {}]
  %s7 = inlined_call_operand.vmem [shape: bf16[1024,128], index: 7, kind: input, shape index: {}]
  %s8 = inlined_call_operand.vmem [shape: f32[1,2,1,128], index: 8, kind: input, shape index: {}]
  %s9 = inlined_call_operand.vmem [shape: f32[1,2,2,8,128], index: 9, kind: output, shape index: {}]
  %s10 = sld [smem:[#allocation0]]
  $region46: #{_lambda_.1} parent=0
    _
  %s12 = ssub.s32 1, %s10
  %s13 = scalar_select 0, %s12, %s10
  // Predicated region
  $region2: #{_lambda_.1} parent=0 // pred_check
    _
  $region3: #{_lambda_.1} parent=0 // pred_check_branch
    %15 = sbr.rel (0) target = $region5
  $region4: #{_lambda_.1} parent=0 // pred_region
    _
  $region5: #{_lambda_.1} parent=0 // pred_fallthru
    _
  // Predicated region
  $region6: #{_lambda_.1} parent=0 // pred_check
    _
  $region7: #{_lambda_.1} parent=0 // pred_check_branch
    %17 = sbr.rel (0) target = $region9
  $region8: #{_lambda_.1} parent=0 // pred_region
    _
  $region9: #{_lambda_.1} parent=0 // pred_fallthru
    _
  // Predicated region
  $region10: #{_lambda_.1} parent=0 // pred_check
    _
  $region11: #{_lambda_.1} parent=0 // pred_check_branch
    %19 = sbr.rel (0) target = $region13
  $region12: #{_lambda_.1} parent=0 // pred_region
    _
  $region13: #{_lambda_.1} parent=0 // pred_fallthru
    _
  // Predicated region
  $region14: #{_lambda_.1} parent=0 // pred_check
    _
  $region15: #{_lambda_.1} parent=0 // pred_check_branch
    %21 = sbr.rel (0) target = $region17
  $region16: #{_lambda_.1} parent=0 // pred_region
    _
  $region17: #{_lambda_.1} parent=0 // pred_fallthru
    _
  // Predicated region
  $region18: #{_lambda_.1} parent=0 // pred_check
    _
  $region19: #{_lambda_.1} parent=0 // pred_check_branch
    %23 = sbr.rel (0) target = $region21
  $region20: #{_lambda_.1} parent=0 // pred_region
    _
  $region21: #{_lambda_.1} parent=0 // pred_fallthru
    _
  // Predicated region
  $region22: #{_lambda_.1} parent=0 // pred_check
    _
  $region23: #{_lambda_.1} parent=0 // pred_check_branch
    %25 = sbr.rel (0) target = $region25
  $region24: #{_lambda_.1} parent=0 // pred_region
    _
  $region25: #{_lambda_.1} parent=0 // pred_fallthru
    _
  // Predicated region
  $region26: #{_lambda_.1} parent=0 // pred_check
    _
  $region27: #{_lambda_.1} parent=0 // pred_check_branch
    %27 = sbr.rel (0) target = $region29
  $region28: #{_lambda_.1} parent=0 // pred_region
    _
  $region29: #{_lambda_.1} parent=0 // pred_fallthru
    _
  // Predicated region
  $region30: #{_lambda_.1} parent=0 // pred_check
    _
  $region31: #{_lambda_.1} parent=0 // pred_check_branch
    %29 = sbr.rel (0) target = $region33
  $region32: #{_lambda_.1} parent=0 // pred_region
    _
  $region33: #{_lambda_.1} parent=0 // pred_fallthru
    _
  // Predicated region
  $region34: #{_lambda_.1} parent=0 // pred_check
    _
  $region35: #{_lambda_.1} parent=0 // pred_check_branch
    %31 = sbr.rel (0) target = $region37
  $region36: #{_lambda_.1} parent=0 // pred_region
    _
  $region37: #{_lambda_.1} parent=0 // pred_fallthru
    _
  %v33 = vld [vmem:[%s0] sm:$0xf]
  %v34 = vld [vmem:[%s0 + $0x4] sm:$0xf]
  %v35 = vld [vmem:[%s0 + $0x8] sm:$0xf]
  %v36 = vld [vmem:[%s0 + $0xc] sm:$0xf]
  %v37 = vld [vmem:[%s0 + $0x10] sm:$0xf]
  %v38 = vld [vmem:[%s0 + $0x14] sm:$0xf]
  %v39 = vld [vmem:[%s0 + $0x18] sm:$0xf]
  %v40 = vld [vmem:[%s0 + $0x1c] sm:$0xf]
  %v41 = vld [vmem:[%s0 + $0x20] sm:$0xf]
  %v42 = vld [vmem:[%s0 + $0x24] sm:$0xf]
  %v43 = vld [vmem:[%s0 + $0x28] sm:$0xf]
  %v44 = vld [vmem:[%s0 + $0x2c] sm:$0xf]
  %v45 = vld [vmem:[%s0 + $0x30] sm:$0xf]
  %v46 = vld [vmem:[%s0 + $0x34] sm:$0xf]
  %v47 = vld [vmem:[%s0 + $0x38] sm:$0xf]
  %v48 = vld [vmem:[%s0 + $0x3c] sm:$0xf]
  %v49 = vld [vmem:[%s0 + $0x40] sm:$0xf]
  %v50 = vld [vmem:[%s0 + $0x44] sm:$0xf]
  %v51 = vld [vmem:[%s0 + $0x48] sm:$0xf]
  %v52 = vld [vmem:[%s0 + $0x4c] sm:$0xf]
  %v53 = vld [vmem:[%s0 + $0x50] sm:$0xf]
  %v54 = vld [vmem:[%s0 + $0x54] sm:$0xf]
  %v55 = vld [vmem:[%s0 + $0x58] sm:$0xf]
  %v56 = vld [vmem:[%s0 + $0x5c] sm:$0xf]
  %v57 = vld [vmem:[%s0 + $0x60] sm:$0xf]
  %v58 = vld [vmem:[%s0 + $0x64] sm:$0xf]
  %v59 = vld [vmem:[%s0 + $0x68] sm:$0xf]
  %v60 = vld [vmem:[%s0 + $0x6c] sm:$0xf]
  %v61 = vld [vmem:[%s0 + $0x70] sm:$0xf]
  %v62 = vld [vmem:[%s0 + $0x74] sm:$0xf]
  %v63 = vld [vmem:[%s0 + $0x78] sm:$0xf]
  %v64 = vld [vmem:[%s0 + $0x7c] sm:$0xf]
  %v65 = vld [vmem:[%s0 + $0x80] sm:$0xf]
  %v66 = vld [vmem:[%s0 + $0x84] sm:$0xf]
  %v67 = vld [vmem:[%s0 + $0x88] sm:$0xf]
  %v68 = vld [vmem:[%s0 + $0x8c] sm:$0xf]
  %v69 = vld [vmem:[%s0 + $0x90] sm:$0xf]
  %v70 = vld [vmem:[%s0 + $0x94] sm:$0xf]
  %v71 = vld [vmem:[%s0 + $0x98] sm:$0xf]
  %v72 = vld [vmem:[%s0 + $0x9c] sm:$0xf]
  %v73 = vld [vmem:[%s0 + $0xa0] sm:$0xf]
  %v74 = vld [vmem:[%s0 + $0xa4] sm:$0xf]
  %v75 = vld [vmem:[%s0 + $0xa8] sm:$0xf]
  %v76 = vld [vmem:[%s0 + $0xac] sm:$0xf]
  %v77 = vld [vmem:[%s0 + $0xb0] sm:$0xf]
  %v78 = vld [vmem:[%s0 + $0xb4] sm:$0xf]
  %v79 = vld [vmem:[%s0 + $0xb8] sm:$0xf]
  %v80 = vld [vmem:[%s0 + $0xbc] sm:$0xf]
  %v81 = vld [vmem:[%s0 + $0xc0] sm:$0xf]
  %v82 = vld [vmem:[%s0 + $0xc4] sm:$0xf]
  %v83 = vld [vmem:[%s0 + $0xc8] sm:$0xf]
  %v84 = vld [vmem:[%s0 + $0xcc] sm:$0xf]
  %v85 = vld [vmem:[%s0 + $0xd0] sm:$0xf]
  %v86 = vld [vmem:[%s0 + $0xd4] sm:$0xf]
  %v87 = vld [vmem:[%s0 + $0xd8] sm:$0xf]
  %v88 = vld [vmem:[%s0 + $0xdc] sm:$0xf]
  %v89 = vld [vmem:[%s0 + $0xe0] sm:$0xf]
  %v90 = vld [vmem:[%s0 + $0xe4] sm:$0xf]
  %v91 = vld [vmem:[%s0 + $0xe8] sm:$0xf]
  %v92 = vld [vmem:[%s0 + $0xec] sm:$0xf]
  %v93 = vld [vmem:[%s0 + $0xf0] sm:$0xf]
  %v94 = vld [vmem:[%s0 + $0xf4] sm:$0xf]
  %v95 = vld [vmem:[%s0 + $0xf8] sm:$0xf]
  %v96 = vld [vmem:[%s0 + $0xfc] sm:$0xf]
  %v97 = vld [vmem:[%s0 + $0x100] sm:$0xf]
  %v98 = vld [vmem:[%s0 + $0x104] sm:$0xf]
  %v99 = vld [vmem:[%s0 + $0x108] sm:$0xf]
  %v100 = vld [vmem:[%s0 + $0x10c] sm:$0xf]
  %v101 = vld [vmem:[%s0 + $0x110] sm:$0xf]
  %v102 = vld [vmem:[%s0 + $0x114] sm:$0xf]
  %v103 = vld [vmem:[%s0 + $0x118] sm:$0xf]
  %v104 = vld [vmem:[%s0 + $0x11c] sm:$0xf]
  %v105 = vld [vmem:[%s0 + $0x120] sm:$0xf]
  %v106 = vld [vmem:[%s0 + $0x124] sm:$0xf]
  %v107 = vld [vmem:[%s0 + $0x128] sm:$0xf]
  %v108 = vld [vmem:[%s0 + $0x12c] sm:$0xf]
  %v109 = vld [vmem:[%s0 + $0x130] sm:$0xf]
  %v110 = vld [vmem:[%s0 + $0x134] sm:$0xf]
  %v111 = vld [vmem:[%s0 + $0x138] sm:$0xf]
  %v112 = vld [vmem:[%s0 + $0x13c] sm:$0xf]
  %v113 = vld [vmem:[%s0 + $0x140] sm:$0xf]
  %v114 = vld [vmem:[%s0 + $0x144] sm:$0xf]
  %v115 = vld [vmem:[%s0 + $0x148] sm:$0xf]
  %v116 = vld [vmem:[%s0 + $0x14c] sm:$0xf]
  %v117 = vld [vmem:[%s0 + $0x150] sm:$0xf]
  %v118 = vld [vmem:[%s0 + $0x154] sm:$0xf]
  %v119 = vld [vmem:[%s0 + $0x158] sm:$0xf]
  %v120 = vld [vmem:[%s0 + $0x15c] sm:$0xf]
  %v121 = vld [vmem:[%s0 + $0x160] sm:$0xf]
  %v122 = vld [vmem:[%s0 + $0x164] sm:$0xf]
  %v123 = vld [vmem:[%s0 + $0x168] sm:$0xf]
  %v124 = vld [vmem:[%s0 + $0x16c] sm:$0xf]
  %v125 = vld [vmem:[%s0 + $0x170] sm:$0xf]
  %v126 = vld [vmem:[%s0 + $0x174] sm:$0xf]
  %v127 = vld [vmem:[%s0 + $0x178] sm:$0xf]
  %v128 = vld [vmem:[%s0 + $0x17c] sm:$0xf]
  %v129 = vld [vmem:[%s0 + $0x180] sm:$0xf]
  %v130 = vld [vmem:[%s0 + $0x184] sm:$0xf]
  %v131 = vld [vmem:[%s0 + $0x188] sm:$0xf]
  %v132 = vld [vmem:[%s0 + $0x18c] sm:$0xf]
  %v133 = vld [vmem:[%s0 + $0x190] sm:$0xf]
  %v134 = vld [vmem:[%s0 + $0x194] sm:$0xf]
  %v135 = vld [vmem:[%s0 + $0x198] sm:$0xf]
  %v136 = vld [vmem:[%s0 + $0x19c] sm:$0xf]
  %v137 = vld [vmem:[%s0 + $0x1a0] sm:$0xf]
  %v138 = vld [vmem:[%s0 + $0x1a4] sm:$0xf]
  %v139 = vld [vmem:[%s0 + $0x1a8] sm:$0xf]
  %v140 = vld [vmem:[%s0 + $0x1ac] sm:$0xf]
  %v141 = vld [vmem:[%s0 + $0x1b0] sm:$0xf]
  %v142 = vld [vmem:[%s0 + $0x1b4] sm:$0xf]
  %v143 = vld [vmem:[%s0 + $0x1b8] sm:$0xf]
  %v144 = vld [vmem:[%s0 + $0x1bc] sm:$0xf]
  %v145 = vld [vmem:[%s0 + $0x1c0] sm:$0xf]
  %v146 = vld [vmem:[%s0 + $0x1c4] sm:$0xf]
  %v147 = vld [vmem:[%s0 + $0x1c8] sm:$0xf]
  %v148 = vld [vmem:[%s0 + $0x1cc] sm:$0xf]
  %v149 = vld [vmem:[%s0 + $0x1d0] sm:$0xf]
  %v150 = vld [vmem:[%s0 + $0x1d4] sm:$0xf]
  %v151 = vld [vmem:[%s0 + $0x1d8] sm:$0xf]
  %v152 = vld [vmem:[%s0 + $0x1dc] sm:$0xf]
  %v153 = vld [vmem:[%s0 + $0x1e0] sm:$0xf]
  %v154 = vld [vmem:[%s0 + $0x1e4] sm:$0xf]
  %v155 = vld [vmem:[%s0 + $0x1e8] sm:$0xf]
  %v156 = vld [vmem:[%s0 + $0x1ec] sm:$0xf]
  %v157 = vld [vmem:[%s0 + $0x1f0] sm:$0xf]
  %v158 = vld [vmem:[%s0 + $0x1f4] sm:$0xf]
  %v159 = vld [vmem:[%s0 + $0x1f8] sm:$0xf]
  %v160 = vld [vmem:[%s0 + $0x1fc] sm:$0xf]
  %v161 = vld [vmem:[%s0 + $0x200] sm:$0xf]
  %v162 = vld [vmem:[%s0 + $0x204] sm:$0xf]
  %v163 = vld [vmem:[%s0 + $0x208] sm:$0xf]
  %v164 = vld [vmem:[%s0 + $0x20c] sm:$0xf]
  %v165 = vld [vmem:[%s0 + $0x210] sm:$0xf]
  %v166 = vld [vmem:[%s0 + $0x214] sm:$0xf]
  %v167 = vld [vmem:[%s0 + $0x218] sm:$0xf]
  %v168 = vld [vmem:[%s0 + $0x21c] sm:$0xf]
  %v169 = vld [vmem:[%s0 + $0x220] sm:$0xf]
  %v170 = vld [vmem:[%s0 + $0x224] sm:$0xf]
  %v171 = vld [vmem:[%s0 + $0x228] sm:$0xf]
  %v172 = vld [vmem:[%s0 + $0x22c] sm:$0xf]
  %v173 = vld [vmem:[%s0 + $0x230] sm:$0xf]
  %v174 = vld [vmem:[%s0 + $0x234] sm:$0xf]
  %v175 = vld [vmem:[%s0 + $0x238] sm:$0xf]
  %v176 = vld [vmem:[%s0 + $0x23c] sm:$0xf]
  %v177 = vld [vmem:[%s0 + $0x240] sm:$0xf]
  %v178 = vld [vmem:[%s0 + $0x244] sm:$0xf]
  %v179 = vld [vmem:[%s0 + $0x248] sm:$0xf]
  %v180 = vld [vmem:[%s0 + $0x24c] sm:$0xf]
  %v181 = vld [vmem:[%s0 + $0x250] sm:$0xf]
  %v182 = vld [vmem:[%s0 + $0x254] sm:$0xf]
  %v183 = vld [vmem:[%s0 + $0x258] sm:$0xf]
  %v184 = vld [vmem:[%s0 + $0x25c] sm:$0xf]
  %v185 = vld [vmem:[%s0 + $0x260] sm:$0xf]
  %v186 = vld [vmem:[%s0 + $0x264] sm:$0xf]
  %v187 = vld [vmem:[%s0 + $0x268] sm:$0xf]
  %v188 = vld [vmem:[%s0 + $0x26c] sm:$0xf]
  %v189 = vld [vmem:[%s0 + $0x270] sm:$0xf]
  %v190 = vld [vmem:[%s0 + $0x274] sm:$0xf]
  %v191 = vld [vmem:[%s0 + $0x278] sm:$0xf]
  %v192 = vld [vmem:[%s0 + $0x27c] sm:$0xf]
  %v193 = vld [vmem:[%s0 + $0x280] sm:$0xf]
  %v194 = vld [vmem:[%s0 + $0x284] sm:$0xf]
  %v195 = vld [vmem:[%s0 + $0x288] sm:$0xf]
  %v196 = vld [vmem:[%s0 + $0x28c] sm:$0xf]
  %v197 = vld [vmem:[%s0 + $0x290] sm:$0xf]
  %v198 = vld [vmem:[%s0 + $0x294] sm:$0xf]
  %v199 = vld [vmem:[%s0 + $0x298] sm:$0xf]
  %v200 = vld [vmem:[%s0 + $0x29c] sm:$0xf]
  %v201 = vld [vmem:[%s0 + $0x2a0] sm:$0xf]
  %v202 = vld [vmem:[%s0 + $0x2a4] sm:$0xf]
  %v203 = vld [vmem:[%s0 + $0x2a8] sm:$0xf]
  %v204 = vld [vmem:[%s0 + $0x2ac] sm:$0xf]
  %v205 = vld [vmem:[%s0 + $0x2b0] sm:$0xf]
  %v206 = vld [vmem:[%s0 + $0x2b4] sm:$0xf]
  %v207 = vld [vmem:[%s0 + $0x2b8] sm:$0xf]
  %v208 = vld [vmem:[%s0 + $0x2bc] sm:$0xf]
  %v209 = vld [vmem:[%s0 + $0x2c0] sm:$0xf]
  %v210 = vld [vmem:[%s0 + $0x2c4] sm:$0xf]
  %v211 = vld [vmem:[%s0 + $0x2c8] sm:$0xf]
  %v212 = vld [vmem:[%s0 + $0x2cc] sm:$0xf]
  %v213 = vld [vmem:[%s0 + $0x2d0] sm:$0xf]
  %v214 = vld [vmem:[%s0 + $0x2d4] sm:$0xf]
  %v215 = vld [vmem:[%s0 + $0x2d8] sm:$0xf]
  %v216 = vld [vmem:[%s0 + $0x2dc] sm:$0xf]
  %v217 = vld [vmem:[%s0 + $0x2e0] sm:$0xf]
  %v218 = vld [vmem:[%s0 + $0x2e4] sm:$0xf]
  %v219 = vld [vmem:[%s0 + $0x2e8] sm:$0xf]
  %v220 = vld [vmem:[%s0 + $0x2ec] sm:$0xf]
  %v221 = vld [vmem:[%s0 + $0x2f0] sm:$0xf]
  %v222 = vld [vmem:[%s0 + $0x2f4] sm:$0xf]
  %v223 = vld [vmem:[%s0 + $0x2f8] sm:$0xf]
  %v224 = vld [vmem:[%s0 + $0x2fc] sm:$0xf]
  %v225 = vld [vmem:[%s0 + $0x300] sm:$0xf]
  %v226 = vld [vmem:[%s0 + $0x304] sm:$0xf]
  %v227 = vld [vmem:[%s0 + $0x308] sm:$0xf]
  %v228 = vld [vmem:[%s0 + $0x30c] sm:$0xf]
  %v229 = vld [vmem:[%s0 + $0x310] sm:$0xf]
  %v230 = vld [vmem:[%s0 + $0x314] sm:$0xf]
  %v231 = vld [vmem:[%s0 + $0x318] sm:$0xf]
  %v232 = vld [vmem:[%s0 + $0x31c] sm:$0xf]
  %v233 = vld [vmem:[%s0 + $0x320] sm:$0xf]
  %v234 = vld [vmem:[%s0 + $0x324] sm:$0xf]
  %v235 = vld [vmem:[%s0 + $0x328] sm:$0xf]
  %v236 = vld [vmem:[%s0 + $0x32c] sm:$0xf]
  %v237 = vld [vmem:[%s0 + $0x330] sm:$0xf]
  %v238 = vld [vmem:[%s0 + $0x334] sm:$0xf]
  %v239 = vld [vmem:[%s0 + $0x338] sm:$0xf]
  %v240 = vld [vmem:[%s0 + $0x33c] sm:$0xf]
  %v241 = vld [vmem:[%s0 + $0x340] sm:$0xf]
  %v242 = vld [vmem:[%s0 + $0x344] sm:$0xf]
  %v243 = vld [vmem:[%s0 + $0x348] sm:$0xf]
  %v244 = vld [vmem:[%s0 + $0x34c] sm:$0xf]
  %v245 = vld [vmem:[%s0 + $0x350] sm:$0xf]
  %v246 = vld [vmem:[%s0 + $0x354] sm:$0xf]
  %v247 = vld [vmem:[%s0 + $0x358] sm:$0xf]
  %v248 = vld [vmem:[%s0 + $0x35c] sm:$0xf]
  %v249 = vld [vmem:[%s0 + $0x360] sm:$0xf]
  %v250 = vld [vmem:[%s0 + $0x364] sm:$0xf]
  %v251 = vld [vmem:[%s0 + $0x368] sm:$0xf]
  %v252 = vld [vmem:[%s0 + $0x36c] sm:$0xf]
  %v253 = vld [vmem:[%s0 + $0x370] sm:$0xf]
  %v254 = vld [vmem:[%s0 + $0x374] sm:$0xf]
  %v255 = vld [vmem:[%s0 + $0x378] sm:$0xf]
  %v256 = vld [vmem:[%s0 + $0x37c] sm:$0xf]
  %v257 = vld [vmem:[%s0 + $0x380] sm:$0xf]
  %v258 = vld [vmem:[%s0 + $0x384] sm:$0xf]
  %v259 = vld [vmem:[%s0 + $0x388] sm:$0xf]
  %v260 = vld [vmem:[%s0 + $0x38c] sm:$0xf]
  %v261 = vld [vmem:[%s0 + $0x390] sm:$0xf]
  %v262 = vld [vmem:[%s0 + $0x394] sm:$0xf]
  %v263 = vld [vmem:[%s0 + $0x398] sm:$0xf]
  %v264 = vld [vmem:[%s0 + $0x39c] sm:$0xf]
  %v265 = vld [vmem:[%s0 + $0x3a0] sm:$0xf]
  %v266 = vld [vmem:[%s0 + $0x3a4] sm:$0xf]
  %v267 = vld [vmem:[%s0 + $0x3a8] sm:$0xf]
  %v268 = vld [vmem:[%s0 + $0x3ac] sm:$0xf]
  %v269 = vld [vmem:[%s0 + $0x3b0] sm:$0xf]
  %v270 = vld [vmem:[%s0 + $0x3b4] sm:$0xf]
  %v271 = vld [vmem:[%s0 + $0x3b8] sm:$0xf]
  %v272 = vld [vmem:[%s0 + $0x3bc] sm:$0xf]
  %v273 = vld [vmem:[%s0 + $0x3c0] sm:$0xf]
  %v274 = vld [vmem:[%s0 + $0x3c4] sm:$0xf]
  %v275 = vld [vmem:[%s0 + $0x3c8] sm:$0xf]
  %v276 = vld [vmem:[%s0 + $0x3cc] sm:$0xf]
  %v277 = vld [vmem:[%s0 + $0x3d0] sm:$0xf]
  %v278 = vld [vmem:[%s0 + $0x3d4] sm:$0xf]
  %v279 = vld [vmem:[%s0 + $0x3d8] sm:$0xf]
  %v280 = vld [vmem:[%s0 + $0x3dc] sm:$0xf]
  %v281 = vld [vmem:[%s0 + $0x3e0] sm:$0xf]
  %v282 = vld [vmem:[%s0 + $0x3e4] sm:$0xf]
  %v283 = vld [vmem:[%s0 + $0x3e8] sm:$0xf]
  %v284 = vld [vmem:[%s0 + $0x3ec] sm:$0xf]
  %v285 = vld [vmem:[%s0 + $0x3f0] sm:$0xf]
  %v286 = vld [vmem:[%s0 + $0x3f4] sm:$0xf]
  %v287 = vld [vmem:[%s0 + $0x3f8] sm:$0xf]
  %v288 = vld [vmem:[%s0 + $0x3fc] sm:$0xf]
  %v289 = vld [vmem:[%s0 + $0x400] sm:$0xf]
  %v290 = vld [vmem:[%s0 + $0x404] sm:$0xf]
  %v291 = vld [vmem:[%s0 + $0x408] sm:$0xf]
  %v292 = vld [vmem:[%s0 + $0x40c] sm:$0xf]
  %v293 = vld [vmem:[%s0 + $0x410] sm:$0xf]
  %v294 = vld [vmem:[%s0 + $0x414] sm:$0xf]
  %v295 = vld [vmem:[%s0 + $0x418] sm:$0xf]
  %v296 = vld [vmem:[%s0 + $0x41c] sm:$0xf]
  %v297 = vld [vmem:[%s0 + $0x420] sm:$0xf]
  %v298 = vld [vmem:[%s0 + $0x424] sm:$0xf]
  %v299 = vld [vmem:[%s0 + $0x428] sm:$0xf]
  %v300 = vld [vmem:[%s0 + $0x42c] sm:$0xf]
  %v301 = vld [vmem:[%s0 + $0x430] sm:$0xf]
  %v302 = vld [vmem:[%s0 + $0x434] sm:$0xf]
  %v303 = vld [vmem:[%s0 + $0x438] sm:$0xf]
  %v304 = vld [vmem:[%s0 + $0x43c] sm:$0xf]
  %v305 = vld [vmem:[%s0 + $0x440] sm:$0xf]
  %v306 = vld [vmem:[%s0 + $0x444] sm:$0xf]
  %v307 = vld [vmem:[%s0 + $0x448] sm:$0xf]
  %v308 = vld [vmem:[%s0 + $0x44c] sm:$0xf]
  %v309 = vld [vmem:[%s0 + $0x450] sm:$0xf]
  %v310 = vld [vmem:[%s0 + $0x454] sm:$0xf]
  %v311 = vld [vmem:[%s0 + $0x458] sm:$0xf]
  %v312 = vld [vmem:[%s0 + $0x45c] sm:$0xf]
  %v313 = vld [vmem:[%s0 + $0x460] sm:$0xf]
  %v314 = vld [vmem:[%s0 + $0x464] sm:$0xf]
  %v315 = vld [vmem:[%s0 + $0x468] sm:$0xf]
  %v316 = vld [vmem:[%s0 + $0x46c] sm:$0xf]
  %v317 = vld [vmem:[%s0 + $0x470] sm:$0xf]
  %v318 = vld [vmem:[%s0 + $0x474] sm:$0xf]
  %v319 = vld [vmem:[%s0 + $0x478] sm:$0xf]
  %v320 = vld [vmem:[%s0 + $0x47c] sm:$0xf]
  %v321 = vld [vmem:[%s0 + $0x480] sm:$0xf]
  %v322 = vld [vmem:[%s0 + $0x484] sm:$0xf]
  %v323 = vld [vmem:[%s0 + $0x488] sm:$0xf]
  %v324 = vld [vmem:[%s0 + $0x48c] sm:$0xf]
  %v325 = vld [vmem:[%s0 + $0x490] sm:$0xf]
  %v326 = vld [vmem:[%s0 + $0x494] sm:$0xf]
  %v327 = vld [vmem:[%s0 + $0x498] sm:$0xf]
  %v328 = vld [vmem:[%s0 + $0x49c] sm:$0xf]
  %v329 = vld [vmem:[%s0 + $0x4a0] sm:$0xf]
  %v330 = vld [vmem:[%s0 + $0x4a4] sm:$0xf]
  %v331 = vld [vmem:[%s0 + $0x4a8] sm:$0xf]
  %v332 = vld [vmem:[%s0 + $0x4ac] sm:$0xf]
  %v333 = vld [vmem:[%s0 + $0x4b0] sm:$0xf]
  %v334 = vld [vmem:[%s0 + $0x4b4] sm:$0xf]
  %v335 = vld [vmem:[%s0 + $0x4b8] sm:$0xf]
  %v336 = vld [vmem:[%s0 + $0x4bc] sm:$0xf]
  %v337 = vld [vmem:[%s0 + $0x4c0] sm:$0xf]
  %v338 = vld [vmem:[%s0 + $0x4c4] sm:$0xf]
  %v339 = vld [vmem:[%s0 + $0x4c8] sm:$0xf]
  %v340 = vld [vmem:[%s0 + $0x4cc] sm:$0xf]
  %v341 = vld [vmem:[%s0 + $0x4d0] sm:$0xf]
  %v342 = vld [vmem:[%s0 + $0x4d4] sm:$0xf]
  %v343 = vld [vmem:[%s0 + $0x4d8] sm:$0xf]
  %v344 = vld [vmem:[%s0 + $0x4dc] sm:$0xf]
  %v345 = vld [vmem:[%s0 + $0x4e0] sm:$0xf]
  %v346 = vld [vmem:[%s0 + $0x4e4] sm:$0xf]
  %v347 = vld [vmem:[%s0 + $0x4e8] sm:$0xf]
  %v348 = vld [vmem:[%s0 + $0x4ec] sm:$0xf]
  %v349 = vld [vmem:[%s0 + $0x4f0] sm:$0xf]
  %v350 = vld [vmem:[%s0 + $0x4f4] sm:$0xf]
  %v351 = vld [vmem:[%s0 + $0x4f8] sm:$0xf]
  %v352 = vld [vmem:[%s0 + $0x4fc] sm:$0xf]
  %v353 = vld [vmem:[%s0 + $0x500] sm:$0xf]
  %v354 = vld [vmem:[%s0 + $0x504] sm:$0xf]
  %v355 = vld [vmem:[%s0 + $0x508] sm:$0xf]
  %v356 = vld [vmem:[%s0 + $0x50c] sm:$0xf]
  %v357 = vld [vmem:[%s0 + $0x510] sm:$0xf]
  %v358 = vld [vmem:[%s0 + $0x514] sm:$0xf]
  %v359 = vld [vmem:[%s0 + $0x518] sm:$0xf]
  %v360 = vld [vmem:[%s0 + $0x51c] sm:$0xf]
  %v361 = vld [vmem:[%s0 + $0x520] sm:$0xf]
  %v362 = vld [vmem:[%s0 + $0x524] sm:$0xf]
  %v363 = vld [vmem:[%s0 + $0x528] sm:$0xf]
  %v364 = vld [vmem:[%s0 + $0x52c] sm:$0xf]
  %v365 = vld [vmem:[%s0 + $0x530] sm:$0xf]
  %v366 = vld [vmem:[%s0 + $0x534] sm:$0xf]
  %v367 = vld [vmem:[%s0 + $0x538] sm:$0xf]
  %v368 = vld [vmem:[%s0 + $0x53c] sm:$0xf]
  %v369 = vld [vmem:[%s0 + $0x540] sm:$0xf]
  %v370 = vld [vmem:[%s0 + $0x544] sm:$0xf]
  %v371 = vld [vmem:[%s0 + $0x548] sm:$0xf]
  %v372 = vld [vmem:[%s0 + $0x54c] sm:$0xf]
  %v373 = vld [vmem:[%s0 + $0x550] sm:$0xf]
  %v374 = vld [vmem:[%s0 + $0x554] sm:$0xf]
  %v375 = vld [vmem:[%s0 + $0x558] sm:$0xf]
  %v376 = vld [vmem:[%s0 + $0x55c] sm:$0xf]
  %v377 = vld [vmem:[%s0 + $0x560] sm:$0xf]
  %v378 = vld [vmem:[%s0 + $0x564] sm:$0xf]
  %v379 = vld [vmem:[%s0 + $0x568] sm:$0xf]
  %v380 = vld [vmem:[%s0 + $0x56c] sm:$0xf]
  %v381 = vld [vmem:[%s0 + $0x570] sm:$0xf]
  %v382 = vld [vmem:[%s0 + $0x574] sm:$0xf]
  %v383 = vld [vmem:[%s0 + $0x578] sm:$0xf]
  %v384 = vld [vmem:[%s0 + $0x57c] sm:$0xf]
  %v385 = vld [vmem:[%s0 + $0x580] sm:$0xf]
  %v386 = vld [vmem:[%s0 + $0x584] sm:$0xf]
  %v387 = vld [vmem:[%s0 + $0x588] sm:$0xf]
  %v388 = vld [vmem:[%s0 + $0x58c] sm:$0xf]
  %v389 = vld [vmem:[%s0 + $0x590] sm:$0xf]
  %v390 = vld [vmem:[%s0 + $0x594] sm:$0xf]
  %v391 = vld [vmem:[%s0 + $0x598] sm:$0xf]
  %v392 = vld [vmem:[%s0 + $0x59c] sm:$0xf]
  %v393 = vld [vmem:[%s0 + $0x5a0] sm:$0xf]
  %v394 = vld [vmem:[%s0 + $0x5a4] sm:$0xf]
  %v395 = vld [vmem:[%s0 + $0x5a8] sm:$0xf]
  %v396 = vld [vmem:[%s0 + $0x5ac] sm:$0xf]
  %v397 = vld [vmem:[%s0 + $0x5b0] sm:$0xf]
  %v398 = vld [vmem:[%s0 + $0x5b4] sm:$0xf]
  %v399 = vld [vmem:[%s0 + $0x5b8] sm:$0xf]
  %v400 = vld [vmem:[%s0 + $0x5bc] sm:$0xf]
  %v401 = vld [vmem:[%s0 + $0x5c0] sm:$0xf]
  %v402 = vld [vmem:[%s0 + $0x5c4] sm:$0xf]
  %v403 = vld [vmem:[%s0 + $0x5c8] sm:$0xf]
  %v404 = vld [vmem:[%s0 + $0x5cc] sm:$0xf]
  %v405 = vld [vmem:[%s0 + $0x5d0] sm:$0xf]
  %v406 = vld [vmem:[%s0 + $0x5d4] sm:$0xf]
  %v407 = vld [vmem:[%s0 + $0x5d8] sm:$0xf]
  %v408 = vld [vmem:[%s0 + $0x5dc] sm:$0xf]
  %v409 = vld [vmem:[%s0 + $0x5e0] sm:$0xf]
  %v410 = vld [vmem:[%s0 + $0x5e4] sm:$0xf]
  %v411 = vld [vmem:[%s0 + $0x5e8] sm:$0xf]
  %v412 = vld [vmem:[%s0 + $0x5ec] sm:$0xf]
  %v413 = vld [vmem:[%s0 + $0x5f0] sm:$0xf]
  %v414 = vld [vmem:[%s0 + $0x5f4] sm:$0xf]
  %v415 = vld [vmem:[%s0 + $0x5f8] sm:$0xf]
  %v416 = vld [vmem:[%s0 + $0x5fc] sm:$0xf]
  %v801 = vunpack.c.l.b16 %v33
  %v802 = vunpack.c.l.b16 %v34
  %v803 = vunpack.c.l.b16 %v39
  %v804 = vunpack.c.l.b16 %v40
  %v805 = vunpack.c.l.b16 %v45
  %v806 = vunpack.c.l.b16 %v46
  %v807 = vunpack.c.l.b16 %v51
  %v808 = vunpack.c.l.b16 %v52
  %v809 = vunpack.c.l.b16 %v35
  %v810 = vunpack.c.l.b16 %v41
  %v811 = vunpack.c.l.b16 %v47
  %v812 = vunpack.c.l.b16 %v53
  %v813 = vunpack.c.l.b16 %v36
  %v814 = vunpack.c.l.b16 %v42
  %v815 = vunpack.c.l.b16 %v48
  %v816 = vunpack.c.l.b16 %v54
  %v817 = vunpack.c.l.b16 %v37
  %v818 = vunpack.c.l.b16 %v43
  %v819 = vunpack.c.l.b16 %v49
  %v820 = vunpack.c.l.b16 %v55
  %v821 = vunpack.c.l.b16 %v38
  %v822 = vunpack.c.l.b16 %v44
  %v823 = vunpack.c.l.b16 %v50
  %v824 = vunpack.c.l.b16 %v56
  %v825 = vunpack.c.l.b16 %v57
  %v826 = vunpack.c.l.b16 %v58
  %v827 = vunpack.c.l.b16 %v63
  %v828 = vunpack.c.l.b16 %v64
  %v829 = vunpack.c.l.b16 %v59
  %v830 = vunpack.c.l.b16 %v65
  %v831 = vunpack.c.l.b16 %v60
  %v832 = vunpack.c.l.b16 %v66
  %v833 = vunpack.c.l.b16 %v61
  %v834 = vunpack.c.l.b16 %v67
  %v835 = vunpack.c.l.b16 %v62
  %v836 = vunpack.c.l.b16 %v68
  %v837 = vunpack.c.l.b16 %v69
  %v838 = vunpack.c.l.b16 %v70
  %v839 = vunpack.c.l.b16 %v75
  %v840 = vunpack.c.l.b16 %v76
  %v841 = vunpack.c.l.b16 %v71
  %v842 = vunpack.c.l.b16 %v77
  %v843 = vunpack.c.l.b16 %v72
  %v844 = vunpack.c.l.b16 %v78
  %v845 = vunpack.c.l.b16 %v73
  %v846 = vunpack.c.l.b16 %v79
  %v847 = vunpack.c.l.b16 %v74
  %v848 = vunpack.c.l.b16 %v80
  %v849 = vunpack.c.l.b16 %v81
  %v850 = vunpack.c.l.b16 %v82
  %v851 = vunpack.c.l.b16 %v87
  %v852 = vunpack.c.l.b16 %v88
  %v853 = vunpack.c.l.b16 %v83
  %v854 = vunpack.c.l.b16 %v89
  %v855 = vunpack.c.l.b16 %v84
  %v856 = vunpack.c.l.b16 %v90
  %v857 = vunpack.c.l.b16 %v85
  %v858 = vunpack.c.l.b16 %v91
  %v859 = vunpack.c.l.b16 %v86
  %v860 = vunpack.c.l.b16 %v92
  %v861 = vunpack.c.l.b16 %v93
  %v862 = vunpack.c.l.b16 %v94
  %v863 = vunpack.c.l.b16 %v99
  %v864 = vunpack.c.l.b16 %v100
  %v865 = vunpack.c.l.b16 %v95
  %v866 = vunpack.c.l.b16 %v101
  %v867 = vunpack.c.l.b16 %v96
  %v868 = vunpack.c.l.b16 %v102
  %v869 = vunpack.c.l.b16 %v97
  %v870 = vunpack.c.l.b16 %v103
  %v871 = vunpack.c.l.b16 %v98
  %v872 = vunpack.c.l.b16 %v104
  %v873 = vunpack.c.l.b16 %v105
  %v874 = vunpack.c.l.b16 %v106
  %v875 = vunpack.c.l.b16 %v111
  %v876 = vunpack.c.l.b16 %v112
  %v877 = vunpack.c.l.b16 %v107
  %v878 = vunpack.c.l.b16 %v113
  %v879 = vunpack.c.l.b16 %v108
  %v880 = vunpack.c.l.b16 %v114
  %v881 = vunpack.c.l.b16 %v109
  %v882 = vunpack.c.l.b16 %v115
  %v883 = vunpack.c.l.b16 %v110
  %v884 = vunpack.c.l.b16 %v116
  %v885 = vunpack.c.l.b16 %v117
  %v886 = vunpack.c.l.b16 %v118
  %v887 = vunpack.c.l.b16 %v123
  %v888 = vunpack.c.l.b16 %v124
  %v889 = vunpack.c.l.b16 %v119
  %v890 = vunpack.c.l.b16 %v125
  %v891 = vunpack.c.l.b16 %v120
  %v892 = vunpack.c.l.b16 %v126
  %v893 = vunpack.c.l.b16 %v121
  %v894 = vunpack.c.l.b16 %v127
  %v895 = vunpack.c.l.b16 %v122
  %v896 = vunpack.c.l.b16 %v128
  %v897 = vunpack.c.l.b16 %v129
  %v898 = vunpack.c.l.b16 %v130
  %v899 = vunpack.c.l.b16 %v135
  %v900 = vunpack.c.l.b16 %v136
  %v901 = vunpack.c.l.b16 %v131
  %v902 = vunpack.c.l.b16 %v137
  %v903 = vunpack.c.l.b16 %v132
  %v904 = vunpack.c.l.b16 %v138
  %v905 = vunpack.c.l.b16 %v133
  %v906 = vunpack.c.l.b16 %v139
  %v907 = vunpack.c.l.b16 %v134
  %v908 = vunpack.c.l.b16 %v140
  %v909 = vunpack.c.l.b16 %v141
  %v910 = vunpack.c.l.b16 %v142
  %v911 = vunpack.c.l.b16 %v147
  %v912 = vunpack.c.l.b16 %v148
  %v913 = vunpack.c.l.b16 %v143
  %v914 = vunpack.c.l.b16 %v149
  %v915 = vunpack.c.l.b16 %v144
  %v916 = vunpack.c.l.b16 %v150
  %v917 = vunpack.c.l.b16 %v145
  %v918 = vunpack.c.l.b16 %v151
  %v919 = vunpack.c.l.b16 %v146
  %v920 = vunpack.c.l.b16 %v152
  %v921 = vunpack.c.l.b16 %v153
  %v922 = vunpack.c.l.b16 %v154
  %v923 = vunpack.c.l.b16 %v159
  %v924 = vunpack.c.l.b16 %v160
  %v925 = vunpack.c.l.b16 %v155
  %v926 = vunpack.c.l.b16 %v161
  %v927 = vunpack.c.l.b16 %v156
  %v928 = vunpack.c.l.b16 %v162
  %v929 = vunpack.c.l.b16 %v157
  %v930 = vunpack.c.l.b16 %v163
  %v931 = vunpack.c.l.b16 %v158
  %v932 = vunpack.c.l.b16 %v164
  %v933 = vunpack.c.l.b16 %v165
  %v934 = vunpack.c.l.b16 %v166
  %v935 = vunpack.c.l.b16 %v171
  %v936 = vunpack.c.l.b16 %v172
  %v937 = vunpack.c.l.b16 %v167
  %v938 = vunpack.c.l.b16 %v173
  %v939 = vunpack.c.l.b16 %v168
  %v940 = vunpack.c.l.b16 %v174
  %v941 = vunpack.c.l.b16 %v169
  %v942 = vunpack.c.l.b16 %v175
  %v943 = vunpack.c.l.b16 %v170
  %v944 = vunpack.c.l.b16 %v176
  %v945 = vunpack.c.l.b16 %v177
  %v946 = vunpack.c.l.b16 %v178
  %v947 = vunpack.c.l.b16 %v183
  %v948 = vunpack.c.l.b16 %v184
  %v949 = vunpack.c.l.b16 %v179
  %v950 = vunpack.c.l.b16 %v185
  %v951 = vunpack.c.l.b16 %v180
  %v952 = vunpack.c.l.b16 %v186
  %v953 = vunpack.c.l.b16 %v181
  %v954 = vunpack.c.l.b16 %v187
  %v955 = vunpack.c.l.b16 %v182
  %v956 = vunpack.c.l.b16 %v188
  %v957 = vunpack.c.l.b16 %v189
  %v958 = vunpack.c.l.b16 %v190
  %v959 = vunpack.c.l.b16 %v195
  %v960 = vunpack.c.l.b16 %v196
  %v961 = vunpack.c.l.b16 %v191
  %v962 = vunpack.c.l.b16 %v197
  %v963 = vunpack.c.l.b16 %v192
  %v964 = vunpack.c.l.b16 %v198
  %v965 = vunpack.c.l.b16 %v193
  %v966 = vunpack.c.l.b16 %v199
  %v967 = vunpack.c.l.b16 %v194
  %v968 = vunpack.c.l.b16 %v200
  %v969 = vunpack.c.l.b16 %v201
  %v970 = vunpack.c.l.b16 %v202
  %v971 = vunpack.c.l.b16 %v207
  %v972 = vunpack.c.l.b16 %v208
  %v973 = vunpack.c.l.b16 %v203
  %v974 = vunpack.c.l.b16 %v209
  %v975 = vunpack.c.l.b16 %v204
  %v976 = vunpack.c.l.b16 %v210
  %v977 = vunpack.c.l.b16 %v205
  %v978 = vunpack.c.l.b16 %v211
  %v979 = vunpack.c.l.b16 %v206
  %v980 = vunpack.c.l.b16 %v212
  %v981 = vunpack.c.l.b16 %v213
  %v982 = vunpack.c.l.b16 %v214
  %v983 = vunpack.c.l.b16 %v219
  %v984 = vunpack.c.l.b16 %v220
  %v985 = vunpack.c.l.b16 %v215
  %v986 = vunpack.c.l.b16 %v221
  %v987 = vunpack.c.l.b16 %v216
  %v988 = vunpack.c.l.b16 %v222
  %v989 = vunpack.c.l.b16 %v217
  %v990 = vunpack.c.l.b16 %v223
  %v991 = vunpack.c.l.b16 %v218
  %v992 = vunpack.c.l.b16 %v224
  %v993 = vunpack.c.l.b16 %v225
  %v994 = vunpack.c.l.b16 %v226
  %v995 = vunpack.c.l.b16 %v231
  %v996 = vunpack.c.l.b16 %v232
  %v997 = vunpack.c.l.b16 %v227
  %v998 = vunpack.c.l.b16 %v233
  %v999 = vunpack.c.l.b16 %v228
  %v1000 = vunpack.c.l.b16 %v234
  %v1001 = vunpack.c.l.b16 %v229
  %v1002 = vunpack.c.l.b16 %v235
  %v1003 = vunpack.c.l.b16 %v230
  %v1004 = vunpack.c.l.b16 %v236
  %v1005 = vunpack.c.l.b16 %v237
  %v1006 = vunpack.c.l.b16 %v238
  %v1007 = vunpack.c.l.b16 %v243
  %v1008 = vunpack.c.l.b16 %v244
  %v1009 = vunpack.c.l.b16 %v239
  %v1010 = vunpack.c.l.b16 %v245
  %v1011 = vunpack.c.l.b16 %v240
  %v1012 = vunpack.c.l.b16 %v246
  %v1013 = vunpack.c.l.b16 %v241
  %v1014 = vunpack.c.l.b16 %v247
  %v1015 = vunpack.c.l.b16 %v242
  %v1016 = vunpack.c.l.b16 %v248
  %v1017 = vunpack.c.l.b16 %v249
  %v1018 = vunpack.c.l.b16 %v250
  %v1019 = vunpack.c.l.b16 %v255
  %v1020 = vunpack.c.l.b16 %v256
  %v1021 = vunpack.c.l.b16 %v251
  %v1022 = vunpack.c.l.b16 %v257
  %v1023 = vunpack.c.l.b16 %v252
  %v1024 = vunpack.c.l.b16 %v258
  %v1025 = vunpack.c.l.b16 %v253
  %v1026 = vunpack.c.l.b16 %v259
  %v1027 = vunpack.c.l.b16 %v254
  %v1028 = vunpack.c.l.b16 %v260
  %v1029 = vunpack.c.l.b16 %v261
  %v1030 = vunpack.c.l.b16 %v262
  %v1031 = vunpack.c.l.b16 %v267
  %v1032 = vunpack.c.l.b16 %v268
  %v1033 = vunpack.c.l.b16 %v263
  %v1034 = vunpack.c.l.b16 %v269
  %v1035 = vunpack.c.l.b16 %v264
  %v1036 = vunpack.c.l.b16 %v270
  %v1037 = vunpack.c.l.b16 %v265
  %v1038 = vunpack.c.l.b16 %v271
  %v1039 = vunpack.c.l.b16 %v266
  %v1040 = vunpack.c.l.b16 %v272
  %v1041 = vunpack.c.l.b16 %v273
  %v1042 = vunpack.c.l.b16 %v274
  %v1043 = vunpack.c.l.b16 %v279
  %v1044 = vunpack.c.l.b16 %v280
  %v1045 = vunpack.c.l.b16 %v275
  %v1046 = vunpack.c.l.b16 %v281
  %v1047 = vunpack.c.l.b16 %v276
  %v1048 = vunpack.c.l.b16 %v282
  %v1049 = vunpack.c.l.b16 %v277
  %v1050 = vunpack.c.l.b16 %v283
  %v1051 = vunpack.c.l.b16 %v278
  %v1052 = vunpack.c.l.b16 %v284
  %v1053 = vunpack.c.l.b16 %v285
  %v1054 = vunpack.c.l.b16 %v286
  %v1055 = vunpack.c.l.b16 %v291
  %v1056 = vunpack.c.l.b16 %v292
  %v1057 = vunpack.c.l.b16 %v287
  %v1058 = vunpack.c.l.b16 %v293
  %v1059 = vunpack.c.l.b16 %v288
  %v1060 = vunpack.c.l.b16 %v294
  %v1061 = vunpack.c.l.b16 %v289
  %v1062 = vunpack.c.l.b16 %v295
  %v1063 = vunpack.c.l.b16 %v290
  %v1064 = vunpack.c.l.b16 %v296
  %v1065 = vunpack.c.l.b16 %v297
  %v1066 = vunpack.c.l.b16 %v298
  %v1067 = vunpack.c.l.b16 %v303
  %v1068 = vunpack.c.l.b16 %v304
  %v1069 = vunpack.c.l.b16 %v299
  %v1070 = vunpack.c.l.b16 %v305
  %v1071 = vunpack.c.l.b16 %v300
  %v1072 = vunpack.c.l.b16 %v306
  %v1073 = vunpack.c.l.b16 %v301
  %v1074 = vunpack.c.l.b16 %v307
  %v1075 = vunpack.c.l.b16 %v302
  %v1076 = vunpack.c.l.b16 %v308
  %v1077 = vunpack.c.l.b16 %v309
  %v1078 = vunpack.c.l.b16 %v310
  %v1079 = vunpack.c.l.b16 %v315
  %v1080 = vunpack.c.l.b16 %v316
  %v1081 = vunpack.c.l.b16 %v311
  %v1082 = vunpack.c.l.b16 %v317
  %v1083 = vunpack.c.l.b16 %v312
  %v1084 = vunpack.c.l.b16 %v318
  %v1085 = vunpack.c.l.b16 %v313
  %v1086 = vunpack.c.l.b16 %v319
  %v1087 = vunpack.c.l.b16 %v314
  %v1088 = vunpack.c.l.b16 %v320
  %v1089 = vunpack.c.l.b16 %v321
  %v1090 = vunpack.c.l.b16 %v322
  %v1091 = vunpack.c.l.b16 %v327
  %v1092 = vunpack.c.l.b16 %v328
  %v1093 = vunpack.c.l.b16 %v323
  %v1094 = vunpack.c.l.b16 %v329
  %v1095 = vunpack.c.l.b16 %v324
  %v1096 = vunpack.c.l.b16 %v330
  %v1097 = vunpack.c.l.b16 %v325
  %v1098 = vunpack.c.l.b16 %v331
  %v1099 = vunpack.c.l.b16 %v326
  %v1100 = vunpack.c.l.b16 %v332
  %v1101 = vunpack.c.l.b16 %v333
  %v1102 = vunpack.c.l.b16 %v334
  %v1103 = vunpack.c.l.b16 %v339
  %v1104 = vunpack.c.l.b16 %v340
  %v1105 = vunpack.c.l.b16 %v335
  %v1106 = vunpack.c.l.b16 %v341
  %v1107 = vunpack.c.l.b16 %v336
  %v1108 = vunpack.c.l.b16 %v342
  %v1109 = vunpack.c.l.b16 %v337
  %v1110 = vunpack.c.l.b16 %v343
  %v1111 = vunpack.c.l.b16 %v338
  %v1112 = vunpack.c.l.b16 %v344
  %v1113 = vunpack.c.l.b16 %v345
  %v1114 = vunpack.c.l.b16 %v346
  %v1115 = vunpack.c.l.b16 %v351
  %v1116 = vunpack.c.l.b16 %v352
  %v1117 = vunpack.c.l.b16 %v347
  %v1118 = vunpack.c.l.b16 %v353
  %v1119 = vunpack.c.l.b16 %v348
  %v1120 = vunpack.c.l.b16 %v354
  %v1121 = vunpack.c.l.b16 %v349
  %v1122 = vunpack.c.l.b16 %v355
  %v1123 = vunpack.c.l.b16 %v350
  %v1124 = vunpack.c.l.b16 %v356
  %v1125 = vunpack.c.l.b16 %v357
  %v1126 = vunpack.c.l.b16 %v358
  %v1127 = vunpack.c.l.b16 %v363
  %v1128 = vunpack.c.l.b16 %v364
  %v1129 = vunpack.c.l.b16 %v359
  %v1130 = vunpack.c.l.b16 %v365
  %v1131 = vunpack.c.l.b16 %v360
  %v1132 = vunpack.c.l.b16 %v366
  %v1133 = vunpack.c.l.b16 %v361
  %v1134 = vunpack.c.l.b16 %v367
  %v1135 = vunpack.c.l.b16 %v362
  %v1136 = vunpack.c.l.b16 %v368
  %v1137 = vunpack.c.l.b16 %v369
  %v1138 = vunpack.c.l.b16 %v370
  %v1139 = vunpack.c.l.b16 %v375
  %v1140 = vunpack.c.l.b16 %v376
  %v1141 = vunpack.c.l.b16 %v371
  %v1142 = vunpack.c.l.b16 %v377
  %v1143 = vunpack.c.l.b16 %v372
  %v1144 = vunpack.c.l.b16 %v378
  %v1145 = vunpack.c.l.b16 %v373
  %v1146 = vunpack.c.l.b16 %v379
  %v1147 = vunpack.c.l.b16 %v374
  %v1148 = vunpack.c.l.b16 %v380
  %v1149 = vunpack.c.l.b16 %v381
  %v1150 = vunpack.c.l.b16 %v382
  %v1151 = vunpack.c.l.b16 %v387
  %v1152 = vunpack.c.l.b16 %v388
  %v1153 = vunpack.c.l.b16 %v383
  %v1154 = vunpack.c.l.b16 %v389
  %v1155 = vunpack.c.l.b16 %v384
  %v1156 = vunpack.c.l.b16 %v390
  %v1157 = vunpack.c.l.b16 %v385
  %v1158 = vunpack.c.l.b16 %v391
  %v1159 = vunpack.c.l.b16 %v386
  %v1160 = vunpack.c.l.b16 %v392
  %v1161 = vunpack.c.l.b16 %v393
  %v1162 = vunpack.c.l.b16 %v394
  %v1163 = vunpack.c.l.b16 %v399
  %v1164 = vunpack.c.l.b16 %v400
  %v1165 = vunpack.c.l.b16 %v395
  %v1166 = vunpack.c.l.b16 %v401
  %v1167 = vunpack.c.l.b16 %v396
  %v1168 = vunpack.c.l.b16 %v402
  %v1169 = vunpack.c.l.b16 %v397
  %v1170 = vunpack.c.l.b16 %v403
  %v1171 = vunpack.c.l.b16 %v398
  %v1172 = vunpack.c.l.b16 %v404
  %v1173 = vunpack.c.l.b16 %v405
  %v1174 = vunpack.c.l.b16 %v406
  %v1175 = vunpack.c.l.b16 %v411
  %v1176 = vunpack.c.l.b16 %v412
  %v1177 = vunpack.c.l.b16 %v407
  %v1178 = vunpack.c.l.b16 %v413
  %v1179 = vunpack.c.l.b16 %v408
  %v1180 = vunpack.c.l.b16 %v414
  %v1181 = vunpack.c.l.b16 %v409
  %v1182 = vunpack.c.l.b16 %v415
  %v1183 = vunpack.c.l.b16 %v410
  %v1184 = vunpack.c.l.b16 %v416
  %v1185 = vld [vmem:[%s1] sm:$0xf]
  %v1186 = vld [vmem:[%s1 + $0x4] sm:$0xf]
  %v1187 = vld [vmem:[%s1 + $0x8] sm:$0xf]
  %v1188 = vld [vmem:[%s1 + $0xc] sm:$0xf]
  %v1189 = vld [vmem:[%s1 + $0x10] sm:$0xf]
  %v1190 = vld [vmem:[%s1 + $0x14] sm:$0xf]
  %v1191 = vld [vmem:[%s1 + $0x18] sm:$0xf]
  %v1192 = vld [vmem:[%s1 + $0x1c] sm:$0xf]
  %v1193 = vld [vmem:[%s1 + $0x20] sm:$0xf]
  %v1194 = vld [vmem:[%s1 + $0x24] sm:$0xf]
  %v1195 = vld [vmem:[%s1 + $0x28] sm:$0xf]
  %v1196 = vld [vmem:[%s1 + $0x2c] sm:$0xf]
  %v1197 = vld [vmem:[%s1 + $0x30] sm:$0xf]
  %v1198 = vld [vmem:[%s1 + $0x34] sm:$0xf]
  %v1199 = vld [vmem:[%s1 + $0x38] sm:$0xf]
  %v1200 = vld [vmem:[%s1 + $0x3c] sm:$0xf]
  %v1201 = vld [vmem:[%s1 + $0x40] sm:$0xf]
  %v1202 = vld [vmem:[%s1 + $0x44] sm:$0xf]
  %v1203 = vld [vmem:[%s1 + $0x48] sm:$0xf]
  %v1204 = vld [vmem:[%s1 + $0x4c] sm:$0xf]
  %v1205 = vld [vmem:[%s1 + $0x50] sm:$0xf]
  %v1206 = vld [vmem:[%s1 + $0x54] sm:$0xf]
  %v1207 = vld [vmem:[%s1 + $0x58] sm:$0xf]
  %v1208 = vld [vmem:[%s1 + $0x5c] sm:$0xf]
  %v1209 = vld [vmem:[%s1 + $0x60] sm:$0xf]
  %v1210 = vld [vmem:[%s1 + $0x64] sm:$0xf]
  %v1211 = vld [vmem:[%s1 + $0x68] sm:$0xf]
  %v1212 = vld [vmem:[%s1 + $0x6c] sm:$0xf]
  %v1213 = vld [vmem:[%s1 + $0x70] sm:$0xf]
  %v1214 = vld [vmem:[%s1 + $0x74] sm:$0xf]
  %v1215 = vld [vmem:[%s1 + $0x78] sm:$0xf]
  %v1216 = vld [vmem:[%s1 + $0x7c] sm:$0xf]
  %v1217 = vld [vmem:[%s1 + $0x80] sm:$0xf]
  %v1218 = vld [vmem:[%s1 + $0x84] sm:$0xf]
  %v1219 = vld [vmem:[%s1 + $0x88] sm:$0xf]
  %v1220 = vld [vmem:[%s1 + $0x8c] sm:$0xf]
  %v1221 = vld [vmem:[%s1 + $0x90] sm:$0xf]
  %v1222 = vld [vmem:[%s1 + $0x94] sm:$0xf]
  %v1223 = vld [vmem:[%s1 + $0x98] sm:$0xf]
  %v1224 = vld [vmem:[%s1 + $0x9c] sm:$0xf]
  %v1225 = vld [vmem:[%s1 + $0xa0] sm:$0xf]
  %v1226 = vld [vmem:[%s1 + $0xa4] sm:$0xf]
  %v1227 = vld [vmem:[%s1 + $0xa8] sm:$0xf]
  %v1228 = vld [vmem:[%s1 + $0xac] sm:$0xf]
  %v1229 = vld [vmem:[%s1 + $0xb0] sm:$0xf]
  %v1230 = vld [vmem:[%s1 + $0xb4] sm:$0xf]
  %v1231 = vld [vmem:[%s1 + $0xb8] sm:$0xf]
  %v1232 = vld [vmem:[%s1 + $0xbc] sm:$0xf]
  %v1233 = vld [vmem:[%s1 + $0xc0] sm:$0xf]
  %v1234 = vld [vmem:[%s1 + $0xc4] sm:$0xf]
  %v1235 = vld [vmem:[%s1 + $0xc8] sm:$0xf]
  %v1236 = vld [vmem:[%s1 + $0xcc] sm:$0xf]
  %v1237 = vld [vmem:[%s1 + $0xd0] sm:$0xf]
  %v1238 = vld [vmem:[%s1 + $0xd4] sm:$0xf]
  %v1239 = vld [vmem:[%s1 + $0xd8] sm:$0xf]
  %v1240 = vld [vmem:[%s1 + $0xdc] sm:$0xf]
  %v1241 = vld [vmem:[%s1 + $0xe0] sm:$0xf]
  %v1242 = vld [vmem:[%s1 + $0xe4] sm:$0xf]
  %v1243 = vld [vmem:[%s1 + $0xe8] sm:$0xf]
  %v1244 = vld [vmem:[%s1 + $0xec] sm:$0xf]
  %v1245 = vld [vmem:[%s1 + $0xf0] sm:$0xf]
  %v1246 = vld [vmem:[%s1 + $0xf4] sm:$0xf]
  %v1247 = vld [vmem:[%s1 + $0xf8] sm:$0xf]
  %v1248 = vld [vmem:[%s1 + $0xfc] sm:$0xf]
  %v1249 = vld [vmem:[%s1 + $0x100] sm:$0xf]
  %v1250 = vld [vmem:[%s1 + $0x104] sm:$0xf]
  %v1251 = vld [vmem:[%s1 + $0x108] sm:$0xf]
  %v1252 = vld [vmem:[%s1 + $0x10c] sm:$0xf]
  %v1253 = vld [vmem:[%s1 + $0x110] sm:$0xf]
  %v1254 = vld [vmem:[%s1 + $0x114] sm:$0xf]
  %v1255 = vld [vmem:[%s1 + $0x118] sm:$0xf]
  %v1256 = vld [vmem:[%s1 + $0x11c] sm:$0xf]
  %v1257 = vld [vmem:[%s1 + $0x120] sm:$0xf]
  %v1258 = vld [vmem:[%s1 + $0x124] sm:$0xf]
  %v1259 = vld [vmem:[%s1 + $0x128] sm:$0xf]
  %v1260 = vld [vmem:[%s1 + $0x12c] sm:$0xf]
  %v1261 = vld [vmem:[%s1 + $0x130] sm:$0xf]
  %v1262 = vld [vmem:[%s1 + $0x134] sm:$0xf]
  %v1263 = vld [vmem:[%s1 + $0x138] sm:$0xf]
  %v1264 = vld [vmem:[%s1 + $0x13c] sm:$0xf]
  %v1265 = vld [vmem:[%s1 + $0x140] sm:$0xf]
  %v1266 = vld [vmem:[%s1 + $0x144] sm:$0xf]
  %v1267 = vld [vmem:[%s1 + $0x148] sm:$0xf]
  %v1268 = vld [vmem:[%s1 + $0x14c] sm:$0xf]
  %v1269 = vld [vmem:[%s1 + $0x150] sm:$0xf]
  %v1270 = vld [vmem:[%s1 + $0x154] sm:$0xf]
  %v1271 = vld [vmem:[%s1 + $0x158] sm:$0xf]
  %v1272 = vld [vmem:[%s1 + $0x15c] sm:$0xf]
  %v1273 = vld [vmem:[%s1 + $0x160] sm:$0xf]
  %v1274 = vld [vmem:[%s1 + $0x164] sm:$0xf]
  %v1275 = vld [vmem:[%s1 + $0x168] sm:$0xf]
  %v1276 = vld [vmem:[%s1 + $0x16c] sm:$0xf]
  %v1277 = vld [vmem:[%s1 + $0x170] sm:$0xf]
  %v1278 = vld [vmem:[%s1 + $0x174] sm:$0xf]
  %v1279 = vld [vmem:[%s1 + $0x178] sm:$0xf]
  %v1280 = vld [vmem:[%s1 + $0x17c] sm:$0xf]
  %v1281 = vld [vmem:[%s1 + $0x180] sm:$0xf]
  %v1282 = vld [vmem:[%s1 + $0x184] sm:$0xf]
  %v1283 = vld [vmem:[%s1 + $0x188] sm:$0xf]
  %v1284 = vld [vmem:[%s1 + $0x18c] sm:$0xf]
  %v1285 = vld [vmem:[%s1 + $0x190] sm:$0xf]
  %v1286 = vld [vmem:[%s1 + $0x194] sm:$0xf]
  %v1287 = vld [vmem:[%s1 + $0x198] sm:$0xf]
  %v1288 = vld [vmem:[%s1 + $0x19c] sm:$0xf]
  %v1289 = vld [vmem:[%s1 + $0x1a0] sm:$0xf]
  %v1290 = vld [vmem:[%s1 + $0x1a4] sm:$0xf]
  %v1291 = vld [vmem:[%s1 + $0x1a8] sm:$0xf]
  %v1292 = vld [vmem:[%s1 + $0x1ac] sm:$0xf]
  %v1293 = vld [vmem:[%s1 + $0x1b0] sm:$0xf]
  %v1294 = vld [vmem:[%s1 + $0x1b4] sm:$0xf]
  %v1295 = vld [vmem:[%s1 + $0x1b8] sm:$0xf]
  %v1296 = vld [vmem:[%s1 + $0x1bc] sm:$0xf]
  %v1297 = vld [vmem:[%s1 + $0x1c0] sm:$0xf]
  %v1298 = vld [vmem:[%s1 + $0x1c4] sm:$0xf]
  %v1299 = vld [vmem:[%s1 + $0x1c8] sm:$0xf]
  %v1300 = vld [vmem:[%s1 + $0x1cc] sm:$0xf]
  %v1301 = vld [vmem:[%s1 + $0x1d0] sm:$0xf]
  %v1302 = vld [vmem:[%s1 + $0x1d4] sm:$0xf]
  %v1303 = vld [vmem:[%s1 + $0x1d8] sm:$0xf]
  %v1304 = vld [vmem:[%s1 + $0x1dc] sm:$0xf]
  %v1305 = vld [vmem:[%s1 + $0x1e0] sm:$0xf]
  %v1306 = vld [vmem:[%s1 + $0x1e4] sm:$0xf]
  %v1307 = vld [vmem:[%s1 + $0x1e8] sm:$0xf]
  %v1308 = vld [vmem:[%s1 + $0x1ec] sm:$0xf]
  %v1309 = vld [vmem:[%s1 + $0x1f0] sm:$0xf]
  %v1310 = vld [vmem:[%s1 + $0x1f4] sm:$0xf]
  %v1311 = vld [vmem:[%s1 + $0x1f8] sm:$0xf]
  %v1312 = vld [vmem:[%s1 + $0x1fc] sm:$0xf]
  %v1313 = vpack.c.b16 %v802, %v801
  %v1314 = vpack.c.b16 %v809, %v802
  %v1315 = vpack.c.b16 %v804, %v803
  %v1316 = vpack.c.b16 %v810, %v804
  %v1317 = vpack.c.b16 %v806, %v805
  %v1318 = vpack.c.b16 %v811, %v806
  %v1319 = vpack.c.b16 %v808, %v807
  %v1320 = vpack.c.b16 %v812, %v808
  %v1321 = vpack.c.b16 %v813, %v809
  %v1322 = vpack.c.b16 %v817, %v813
  %v1323 = vpack.c.b16 %v814, %v810
  %v1324 = vpack.c.b16 %v818, %v814
  %v1325 = vpack.c.b16 %v815, %v811
  %v1326 = vpack.c.b16 %v819, %v815
  %v1327 = vpack.c.b16 %v816, %v812
  %v1328 = vpack.c.b16 %v820, %v816
  %v1329 = vpack.c.b16 %v805, %v817
  %v1330 = vpack.c.b16 %v806, %v821
  %v1331 = vpack.c.b16 %v807, %v818
  %v1332 = vpack.c.b16 %v808, %v822
  %v1333 = vpack.c.b16 %v825, %v819
  %v1334 = vpack.c.b16 %v826, %v823
  %v1335 = vpack.c.b16 %v827, %v820
  %v1336 = vpack.c.b16 %v828, %v824
  %v1337 = vpack.c.b16 %v829, %v826
  %v1338 = vpack.c.b16 %v831, %v829
  %v1339 = vpack.c.b16 %v830, %v828
  %v1340 = vpack.c.b16 %v832, %v830
  %v1341 = vpack.c.b16 %v823, %v819
  %v1342 = vpack.c.b16 %v824, %v820
  %v1343 = vpack.c.b16 %v833, %v831
  %v1344 = vpack.c.b16 %v835, %v833
  %v1345 = vpack.c.b16 %v834, %v832
  %v1346 = vpack.c.b16 %v836, %v834
  %v1347 = vpack.c.b16 %v826, %v825
  %v1348 = vpack.c.b16 %v828, %v827
  %v1349 = vpack.c.b16 %v838, %v837
  %v1350 = vpack.c.b16 %v841, %v838
  %v1351 = vpack.c.b16 %v840, %v839
  %v1352 = vpack.c.b16 %v842, %v840
  %v1353 = vpack.c.b16 %v843, %v841
  %v1354 = vpack.c.b16 %v845, %v843
  %v1355 = vpack.c.b16 %v844, %v842
  %v1356 = vpack.c.b16 %v846, %v844
  %v1357 = vpack.c.b16 %v837, %v833
  %v1358 = vpack.c.b16 %v838, %v835
  %v1359 = vpack.c.b16 %v839, %v834
  %v1360 = vpack.c.b16 %v840, %v836
  %v1361 = vpack.c.b16 %v849, %v845
  %v1362 = vpack.c.b16 %v850, %v847
  %v1363 = vpack.c.b16 %v851, %v846
  %v1364 = vpack.c.b16 %v852, %v848
  %v1365 = vpack.c.b16 %v853, %v850
  %v1366 = vpack.c.b16 %v855, %v853
  %v1367 = vpack.c.b16 %v854, %v852
  %v1368 = vpack.c.b16 %v856, %v854
  %v1369 = vpack.c.b16 %v847, %v845
  %v1370 = vpack.c.b16 %v848, %v846
  %v1371 = vpack.c.b16 %v857, %v855
  %v1372 = vpack.c.b16 %v859, %v857
  %v1373 = vpack.c.b16 %v858, %v856
  %v1374 = vpack.c.b16 %v860, %v858
  %v1375 = vpack.c.b16 %v850, %v849
  %v1376 = vpack.c.b16 %v852, %v851
  %v1377 = vpack.c.b16 %v862, %v861
  %v1378 = vpack.c.b16 %v865, %v862
  %v1379 = vpack.c.b16 %v864, %v863
  %v1380 = vpack.c.b16 %v866, %v864
  %v1381 = vpack.c.b16 %v867, %v865
  %v1382 = vpack.c.b16 %v869, %v867
  %v1383 = vpack.c.b16 %v868, %v866
  %v1384 = vpack.c.b16 %v870, %v868
  %v1385 = vpack.c.b16 %v861, %v857
  %v1386 = vpack.c.b16 %v862, %v859
  %v1387 = vpack.c.b16 %v863, %v858
  %v1388 = vpack.c.b16 %v864, %v860
  %v1389 = vpack.c.b16 %v873, %v869
  %v1390 = vpack.c.b16 %v874, %v871
  %v1391 = vpack.c.b16 %v875, %v870
  %v1392 = vpack.c.b16 %v876, %v872
  %v1393 = vpack.c.b16 %v877, %v874
  %v1394 = vpack.c.b16 %v879, %v877
  %v1395 = vpack.c.b16 %v878, %v876
  %v1396 = vpack.c.b16 %v880, %v878
  %v1397 = vpack.c.b16 %v871, %v869
  %v1398 = vpack.c.b16 %v872, %v870
  %v1399 = vpack.c.b16 %v881, %v879
  %v1400 = vpack.c.b16 %v883, %v881
  %v1401 = vpack.c.b16 %v882, %v880
  %v1402 = vpack.c.b16 %v884, %v882
  %v1403 = vpack.c.b16 %v874, %v873
  %v1404 = vpack.c.b16 %v876, %v875
  %v1405 = vpack.c.b16 %v886, %v885
  %v1406 = vpack.c.b16 %v889, %v886
  %v1407 = vpack.c.b16 %v888, %v887
  %v1408 = vpack.c.b16 %v890, %v888
  %v1409 = vpack.c.b16 %v891, %v889
  %v1410 = vpack.c.b16 %v893, %v891
  %v1411 = vpack.c.b16 %v892, %v890
  %v1412 = vpack.c.b16 %v894, %v892
  %v1413 = vpack.c.b16 %v885, %v881
  %v1414 = vpack.c.b16 %v886, %v883
  %v1415 = vpack.c.b16 %v887, %v882
  %v1416 = vpack.c.b16 %v888, %v884
  %v1417 = vpack.c.b16 %v897, %v893
  %v1418 = vpack.c.b16 %v898, %v895
  %v1419 = vpack.c.b16 %v899, %v894
  %v1420 = vpack.c.b16 %v900, %v896
  %v1421 = vpack.c.b16 %v901, %v898
  %v1422 = vpack.c.b16 %v903, %v901
  %v1423 = vpack.c.b16 %v902, %v900
  %v1424 = vpack.c.b16 %v904, %v902
  %v1425 = vpack.c.b16 %v895, %v893
  %v1426 = vpack.c.b16 %v896, %v894
  %v1427 = vpack.c.b16 %v905, %v903
  %v1428 = vpack.c.b16 %v907, %v905
  %v1429 = vpack.c.b16 %v906, %v904
  %v1430 = vpack.c.b16 %v908, %v906
  %v1431 = vpack.c.b16 %v898, %v897
  %v1432 = vpack.c.b16 %v900, %v899
  %v1433 = vpack.c.b16 %v910, %v909
  %v1434 = vpack.c.b16 %v913, %v910
  %v1435 = vpack.c.b16 %v912, %v911
  %v1436 = vpack.c.b16 %v914, %v912
  %v1437 = vpack.c.b16 %v915, %v913
  %v1438 = vpack.c.b16 %v917, %v915
  %v1439 = vpack.c.b16 %v916, %v914
  %v1440 = vpack.c.b16 %v918, %v916
  %v1441 = vpack.c.b16 %v909, %v905
  %v1442 = vpack.c.b16 %v910, %v907
  %v1443 = vpack.c.b16 %v911, %v906
  %v1444 = vpack.c.b16 %v912, %v908
  %v1445 = vpack.c.b16 %v921, %v917
  %v1446 = vpack.c.b16 %v922, %v919
  %v1447 = vpack.c.b16 %v923, %v918
  %v1448 = vpack.c.b16 %v924, %v920
  %v1449 = vpack.c.b16 %v925, %v922
  %v1450 = vpack.c.b16 %v927, %v925
  %v1451 = vpack.c.b16 %v926, %v924
  %v1452 = vpack.c.b16 %v928, %v926
  %v1453 = vpack.c.b16 %v919, %v917
  %v1454 = vpack.c.b16 %v920, %v918
  %v1455 = vpack.c.b16 %v929, %v927
  %v1456 = vpack.c.b16 %v931, %v929
  %v1457 = vpack.c.b16 %v930, %v928
  %v1458 = vpack.c.b16 %v932, %v930
  %v1459 = vpack.c.b16 %v922, %v921
  %v1460 = vpack.c.b16 %v924, %v923
  %v1461 = vpack.c.b16 %v934, %v933
  %v1462 = vpack.c.b16 %v937, %v934
  %v1463 = vpack.c.b16 %v936, %v935
  %v1464 = vpack.c.b16 %v938, %v936
  %v1465 = vpack.c.b16 %v939, %v937
  %v1466 = vpack.c.b16 %v941, %v939
  %v1467 = vpack.c.b16 %v940, %v938
  %v1468 = vpack.c.b16 %v942, %v940
  %v1469 = vpack.c.b16 %v933, %v929
  %v1470 = vpack.c.b16 %v934, %v931
  %v1471 = vpack.c.b16 %v935, %v930
  %v1472 = vpack.c.b16 %v936, %v932
  %v1473 = vpack.c.b16 %v945, %v941
  %v1474 = vpack.c.b16 %v946, %v943
  %v1475 = vpack.c.b16 %v947, %v942
  %v1476 = vpack.c.b16 %v948, %v944
  %v1477 = vpack.c.b16 %v949, %v946
  %v1478 = vpack.c.b16 %v951, %v949
  %v1479 = vpack.c.b16 %v950, %v948
  %v1480 = vpack.c.b16 %v952, %v950
  %v1481 = vpack.c.b16 %v943, %v941
  %v1482 = vpack.c.b16 %v944, %v942
  %v1483 = vpack.c.b16 %v953, %v951
  %v1484 = vpack.c.b16 %v955, %v953
  %v1485 = vpack.c.b16 %v954, %v952
  %v1486 = vpack.c.b16 %v956, %v954
  %v1487 = vpack.c.b16 %v946, %v945
  %v1488 = vpack.c.b16 %v948, %v947
  %v1489 = vpack.c.b16 %v958, %v957
  %v1490 = vpack.c.b16 %v961, %v958
  %v1491 = vpack.c.b16 %v960, %v959
  %v1492 = vpack.c.b16 %v962, %v960
  %v1493 = vpack.c.b16 %v963, %v961
  %v1494 = vpack.c.b16 %v965, %v963
  %v1495 = vpack.c.b16 %v964, %v962
  %v1496 = vpack.c.b16 %v966, %v964
  %v1497 = vpack.c.b16 %v957, %v953
  %v1498 = vpack.c.b16 %v958, %v955
  %v1499 = vpack.c.b16 %v959, %v954
  %v1500 = vpack.c.b16 %v960, %v956
  %v1501 = vpack.c.b16 %v969, %v965
  %v1502 = vpack.c.b16 %v970, %v967
  %v1503 = vpack.c.b16 %v971, %v966
  %v1504 = vpack.c.b16 %v972, %v968
  %v1505 = vpack.c.b16 %v973, %v970
  %v1506 = vpack.c.b16 %v975, %v973
  %v1507 = vpack.c.b16 %v974, %v972
  %v1508 = vpack.c.b16 %v976, %v974
  %v1509 = vpack.c.b16 %v967, %v965
  %v1510 = vpack.c.b16 %v968, %v966
  %v1511 = vpack.c.b16 %v977, %v975
  %v1512 = vpack.c.b16 %v979, %v977
  %v1513 = vpack.c.b16 %v978, %v976
  %v1514 = vpack.c.b16 %v980, %v978
  %v1515 = vpack.c.b16 %v970, %v969
  %v1516 = vpack.c.b16 %v972, %v971
  %v1517 = vpack.c.b16 %v982, %v981
  %v1518 = vpack.c.b16 %v985, %v982
  %v1519 = vpack.c.b16 %v984, %v983
  %v1520 = vpack.c.b16 %v986, %v984
  %v1521 = vpack.c.b16 %v987, %v985
  %v1522 = vpack.c.b16 %v989, %v987
  %v1523 = vpack.c.b16 %v988, %v986
  %v1524 = vpack.c.b16 %v990, %v988
  %v1525 = vpack.c.b16 %v981, %v977
  %v1526 = vpack.c.b16 %v982, %v979
  %v1527 = vpack.c.b16 %v983, %v978
  %v1528 = vpack.c.b16 %v984, %v980
  %v1529 = vpack.c.b16 %v993, %v989
  %v1530 = vpack.c.b16 %v994, %v991
  %v1531 = vpack.c.b16 %v995, %v990
  %v1532 = vpack.c.b16 %v996, %v992
  %v1533 = vpack.c.b16 %v997, %v994
  %v1534 = vpack.c.b16 %v999, %v997
  %v1535 = vpack.c.b16 %v998, %v996
  %v1536 = vpack.c.b16 %v1000, %v998
  %v1537 = vpack.c.b16 %v991, %v989
  %v1538 = vpack.c.b16 %v992, %v990
  %v1539 = vpack.c.b16 %v1001, %v999
  %v1540 = vpack.c.b16 %v1003, %v1001
  %v1541 = vpack.c.b16 %v1002, %v1000
  %v1542 = vpack.c.b16 %v1004, %v1002
  %v1543 = vpack.c.b16 %v994, %v993
  %v1544 = vpack.c.b16 %v996, %v995
  %v1545 = vpack.c.b16 %v1006, %v1005
  %v1546 = vpack.c.b16 %v1009, %v1006
  %v1547 = vpack.c.b16 %v1008, %v1007
  %v1548 = vpack.c.b16 %v1010, %v1008
  %v1549 = vpack.c.b16 %v1011, %v1009
  %v1550 = vpack.c.b16 %v1013, %v1011
  %v1551 = vpack.c.b16 %v1012, %v1010
  %v1552 = vpack.c.b16 %v1014, %v1012
  %v1553 = vpack.c.b16 %v1005, %v1001
  %v1554 = vpack.c.b16 %v1006, %v1003
  %v1555 = vpack.c.b16 %v1007, %v1002
  %v1556 = vpack.c.b16 %v1008, %v1004
  %v1557 = vpack.c.b16 %v1017, %v1013
  %v1558 = vpack.c.b16 %v1018, %v1015
  %v1559 = vpack.c.b16 %v1019, %v1014
  %v1560 = vpack.c.b16 %v1020, %v1016
  %v1561 = vpack.c.b16 %v1021, %v1018
  %v1562 = vpack.c.b16 %v1023, %v1021
  %v1563 = vpack.c.b16 %v1022, %v1020
  %v1564 = vpack.c.b16 %v1024, %v1022
  %v1565 = vpack.c.b16 %v1015, %v1013
  %v1566 = vpack.c.b16 %v1016, %v1014
  %v1567 = vpack.c.b16 %v1025, %v1023
  %v1568 = vpack.c.b16 %v1027, %v1025
  %v1569 = vpack.c.b16 %v1026, %v1024
  %v1570 = vpack.c.b16 %v1028, %v1026
  %v1571 = vpack.c.b16 %v1018, %v1017
  %v1572 = vpack.c.b16 %v1020, %v1019
  %v1573 = vpack.c.b16 %v1030, %v1029
  %v1574 = vpack.c.b16 %v1033, %v1030
  %v1575 = vpack.c.b16 %v1032, %v1031
  %v1576 = vpack.c.b16 %v1034, %v1032
  %v1577 = vpack.c.b16 %v1035, %v1033
  %v1578 = vpack.c.b16 %v1037, %v1035
  %v1579 = vpack.c.b16 %v1036, %v1034
  %v1580 = vpack.c.b16 %v1038, %v1036
  %v1581 = vpack.c.b16 %v1029, %v1025
  %v1582 = vpack.c.b16 %v1030, %v1027
  %v1583 = vpack.c.b16 %v1031, %v1026
  %v1584 = vpack.c.b16 %v1032, %v1028
  %v1585 = vpack.c.b16 %v1041, %v1037
  %v1586 = vpack.c.b16 %v1042, %v1039
  %v1587 = vpack.c.b16 %v1043, %v1038
  %v1588 = vpack.c.b16 %v1044, %v1040
  %v1589 = vpack.c.b16 %v1045, %v1042
  %v1590 = vpack.c.b16 %v1047, %v1045
  %v1591 = vpack.c.b16 %v1046, %v1044
  %v1592 = vpack.c.b16 %v1048, %v1046
  %v1593 = vpack.c.b16 %v1039, %v1037
  %v1594 = vpack.c.b16 %v1040, %v1038
  %v1595 = vpack.c.b16 %v1049, %v1047
  %v1596 = vpack.c.b16 %v1051, %v1049
  %v1597 = vpack.c.b16 %v1050, %v1048
  %v1598 = vpack.c.b16 %v1052, %v1050
  %v1599 = vpack.c.b16 %v1042, %v1041
  %v1600 = vpack.c.b16 %v1044, %v1043
  %v1601 = vpack.c.b16 %v1054, %v1053
  %v1602 = vpack.c.b16 %v1057, %v1054
  %v1603 = vpack.c.b16 %v1056, %v1055
  %v1604 = vpack.c.b16 %v1058, %v1056
  %v1605 = vpack.c.b16 %v1059, %v1057
  %v1606 = vpack.c.b16 %v1061, %v1059
  %v1607 = vpack.c.b16 %v1060, %v1058
  %v1608 = vpack.c.b16 %v1062, %v1060
  %v1609 = vpack.c.b16 %v1053, %v1049
  %v1610 = vpack.c.b16 %v1054, %v1051
  %v1611 = vpack.c.b16 %v1055, %v1050
  %v1612 = vpack.c.b16 %v1056, %v1052
  %v1613 = vpack.c.b16 %v1065, %v1061
  %v1614 = vpack.c.b16 %v1066, %v1063
  %v1615 = vpack.c.b16 %v1067, %v1062
  %v1616 = vpack.c.b16 %v1068, %v1064
  %v1617 = vpack.c.b16 %v1069, %v1066
  %v1618 = vpack.c.b16 %v1071, %v1069
  %v1619 = vpack.c.b16 %v1070, %v1068
  %v1620 = vpack.c.b16 %v1072, %v1070
  %v1621 = vpack.c.b16 %v1063, %v1061
  %v1622 = vpack.c.b16 %v1064, %v1062
  %v1623 = vpack.c.b16 %v1073, %v1071
  %v1624 = vpack.c.b16 %v1075, %v1073
  %v1625 = vpack.c.b16 %v1074, %v1072
  %v1626 = vpack.c.b16 %v1076, %v1074
  %v1627 = vpack.c.b16 %v1066, %v1065
  %v1628 = vpack.c.b16 %v1068, %v1067
  %v1629 = vpack.c.b16 %v1078, %v1077
  %v1630 = vpack.c.b16 %v1081, %v1078
  %v1631 = vpack.c.b16 %v1080, %v1079
  %v1632 = vpack.c.b16 %v1082, %v1080
  %v1633 = vpack.c.b16 %v1083, %v1081
  %v1634 = vpack.c.b16 %v1085, %v1083
  %v1635 = vpack.c.b16 %v1084, %v1082
  %v1636 = vpack.c.b16 %v1086, %v1084
  %v1637 = vpack.c.b16 %v1077, %v1073
  %v1638 = vpack.c.b16 %v1078, %v1075
  %v1639 = vpack.c.b16 %v1079, %v1074
  %v1640 = vpack.c.b16 %v1080, %v1076
  %v1641 = vpack.c.b16 %v1089, %v1085
  %v1642 = vpack.c.b16 %v1090, %v1087
  %v1643 = vpack.c.b16 %v1091, %v1086
  %v1644 = vpack.c.b16 %v1092, %v1088
  %v1645 = vpack.c.b16 %v1093, %v1090
  %v1646 = vpack.c.b16 %v1095, %v1093
  %v1647 = vpack.c.b16 %v1094, %v1092
  %v1648 = vpack.c.b16 %v1096, %v1094
  %v1649 = vpack.c.b16 %v1087, %v1085
  %v1650 = vpack.c.b16 %v1088, %v1086
  %v1651 = vpack.c.b16 %v1097, %v1095
  %v1652 = vpack.c.b16 %v1099, %v1097
  %v1653 = vpack.c.b16 %v1098, %v1096
  %v1654 = vpack.c.b16 %v1100, %v1098
  %v1655 = vpack.c.b16 %v1090, %v1089
  %v1656 = vpack.c.b16 %v1092, %v1091
  %v1657 = vpack.c.b16 %v1102, %v1101
  %v1658 = vpack.c.b16 %v1105, %v1102
  %v1659 = vpack.c.b16 %v1104, %v1103
  %v1660 = vpack.c.b16 %v1106, %v1104
  %v1661 = vpack.c.b16 %v1107, %v1105
  %v1662 = vpack.c.b16 %v1109, %v1107
  %v1663 = vpack.c.b16 %v1108, %v1106
  %v1664 = vpack.c.b16 %v1110, %v1108
  %v1665 = vpack.c.b16 %v1101, %v1097
  %v1666 = vpack.c.b16 %v1102, %v1099
  %v1667 = vpack.c.b16 %v1103, %v1098
  %v1668 = vpack.c.b16 %v1104, %v1100
  %v1669 = vpack.c.b16 %v1113, %v1109
  %v1670 = vpack.c.b16 %v1114, %v1111
  %v1671 = vpack.c.b16 %v1115, %v1110
  %v1672 = vpack.c.b16 %v1116, %v1112
  %v1673 = vpack.c.b16 %v1117, %v1114
  %v1674 = vpack.c.b16 %v1119, %v1117
  %v1675 = vpack.c.b16 %v1118, %v1116
  %v1676 = vpack.c.b16 %v1120, %v1118
  %v1677 = vpack.c.b16 %v1111, %v1109
  %v1678 = vpack.c.b16 %v1112, %v1110
  %v1679 = vpack.c.b16 %v1121, %v1119
  %v1680 = vpack.c.b16 %v1123, %v1121
  %v1681 = vpack.c.b16 %v1122, %v1120
  %v1682 = vpack.c.b16 %v1124, %v1122
  %v1683 = vpack.c.b16 %v1114, %v1113
  %v1684 = vpack.c.b16 %v1116, %v1115
  %v1685 = vpack.c.b16 %v1126, %v1125
  %v1686 = vpack.c.b16 %v1129, %v1126
  %v1687 = vpack.c.b16 %v1128, %v1127
  %v1688 = vpack.c.b16 %v1130, %v1128
  %v1689 = vpack.c.b16 %v1131, %v1129
  %v1690 = vpack.c.b16 %v1133, %v1131
  %v1691 = vpack.c.b16 %v1132, %v1130
  %v1692 = vpack.c.b16 %v1134, %v1132
  %v1693 = vpack.c.b16 %v1125, %v1121
  %v1694 = vpack.c.b16 %v1126, %v1123
  %v1695 = vpack.c.b16 %v1127, %v1122
  %v1696 = vpack.c.b16 %v1128, %v1124
  %v1697 = vpack.c.b16 %v1137, %v1133
  %v1698 = vpack.c.b16 %v1138, %v1135
  %v1699 = vpack.c.b16 %v1139, %v1134
  %v1700 = vpack.c.b16 %v1140, %v1136
  %v1701 = vpack.c.b16 %v1141, %v1138
  %v1702 = vpack.c.b16 %v1143, %v1141
  %v1703 = vpack.c.b16 %v1142, %v1140
  %v1704 = vpack.c.b16 %v1144, %v1142
  %v1705 = vpack.c.b16 %v1135, %v1133
  %v1706 = vpack.c.b16 %v1136, %v1134
  %v1707 = vpack.c.b16 %v1145, %v1143
  %v1708 = vpack.c.b16 %v1147, %v1145
  %v1709 = vpack.c.b16 %v1146, %v1144
  %v1710 = vpack.c.b16 %v1148, %v1146
  %v1711 = vpack.c.b16 %v1138, %v1137
  %v1712 = vpack.c.b16 %v1140, %v1139
  %v1713 = vpack.c.b16 %v1150, %v1149
  %v1714 = vpack.c.b16 %v1153, %v1150
  %v1715 = vpack.c.b16 %v1152, %v1151
  %v1716 = vpack.c.b16 %v1154, %v1152
  %v1717 = vpack.c.b16 %v1155, %v1153
  %v1718 = vpack.c.b16 %v1157, %v1155
  %v1719 = vpack.c.b16 %v1156, %v1154
  %v1720 = vpack.c.b16 %v1158, %v1156
  %v1721 = vpack.c.b16 %v1149, %v1145
  %v1722 = vpack.c.b16 %v1150, %v1147
  %v1723 = vpack.c.b16 %v1151, %v1146
  %v1724 = vpack.c.b16 %v1152, %v1148
  %v1725 = vpack.c.b16 %v1161, %v1157
  %v1726 = vpack.c.b16 %v1162, %v1159
  %v1727 = vpack.c.b16 %v1163, %v1158
  %v1728 = vpack.c.b16 %v1164, %v1160
  %v1729 = vpack.c.b16 %v1165, %v1162
  %v1730 = vpack.c.b16 %v1167, %v1165
  %v1731 = vpack.c.b16 %v1166, %v1164
  %v1732 = vpack.c.b16 %v1168, %v1166
  %v1733 = vpack.c.b16 %v1159, %v1157
  %v1734 = vpack.c.b16 %v1160, %v1158
  %v1735 = vpack.c.b16 %v1169, %v1167
  %v1736 = vpack.c.b16 %v1171, %v1169
  %v1737 = vpack.c.b16 %v1170, %v1168
  %v1738 = vpack.c.b16 %v1172, %v1170
  %v1739 = vpack.c.b16 %v1162, %v1161
  %v1740 = vpack.c.b16 %v1164, %v1163
  %v1741 = vpack.c.b16 %v1174, %v1173
  %v1742 = vpack.c.b16 %v1177, %v1174
  %v1743 = vpack.c.b16 %v1176, %v1175
  %v1744 = vpack.c.b16 %v1178, %v1176
  %v1745 = vpack.c.b16 %v1179, %v1177
  %v1746 = vpack.c.b16 %v1181, %v1179
  %v1747 = vpack.c.b16 %v1180, %v1178
  %v1748 = vpack.c.b16 %v1182, %v1180
  %v1749 = vpack.c.b16 %v1169, %v1169
  %v1750 = vpack.c.b16 %v1171, %v1171
  %v1751 = vpack.c.b16 %v1170, %v1170
  %v1752 = vpack.c.b16 %v1172, %v1172
  %v1753 = vpack.c.b16 %v1181, %v1181
  %v1754 = vpack.c.b16 %v1183, %v1183
  %v1755 = vpack.c.b16 %v1182, %v1182
  %v1756 = vpack.c.b16 %v1184, %v1184
  %v2329 = vunpack.c.l.b16 %v1185
  %v2330 = vunpack.c.l.b16 %v1186
  %v2331 = vunpack.c.l.b16 %v1187
  %v2332 = vunpack.c.l.b16 %v1188
  %v2333 = vunpack.c.l.b16 %v1189
  %v2334 = vunpack.c.l.b16 %v1190
  %v2335 = vunpack.c.l.b16 %v1191
  %v2336 = vunpack.c.l.b16 %v1192
  %v2337 = vunpack.c.l.b16 %v1193
  %v2338 = vunpack.c.l.b16 %v1194
  %v2339 = vunpack.c.l.b16 %v1195
  %v2340 = vunpack.c.l.b16 %v1196
  %v2341 = vunpack.c.l.b16 %v1197
  %v2342 = vunpack.c.l.b16 %v1198
  %v2343 = vunpack.c.l.b16 %v1199
  %v2344 = vunpack.c.l.b16 %v1200
  %v2345 = vunpack.c.l.b16 %v1201
  %v2346 = vunpack.c.l.b16 %v1202
  %v2347 = vunpack.c.l.b16 %v1203
  %v2348 = vunpack.c.l.b16 %v1204
  %v2349 = vunpack.c.l.b16 %v1205
  %v2350 = vunpack.c.l.b16 %v1206
  %v2351 = vunpack.c.l.b16 %v1207
  %v2352 = vunpack.c.l.b16 %v1208
  %v2353 = vunpack.c.l.b16 %v1209
  %v2354 = vunpack.c.l.b16 %v1210
  %v2355 = vunpack.c.l.b16 %v1211
  %v2356 = vunpack.c.l.b16 %v1212
  %v2357 = vunpack.c.l.b16 %v1213
  %v2358 = vunpack.c.l.b16 %v1214
  %v2359 = vunpack.c.l.b16 %v1215
  %v2360 = vunpack.c.l.b16 %v1216
  %v2361 = vunpack.c.l.b16 %v1217
  %v2362 = vunpack.c.l.b16 %v1218
  %v2363 = vunpack.c.l.b16 %v1219
  %v2364 = vunpack.c.l.b16 %v1220
  %v2365 = vunpack.c.l.b16 %v1221
  %v2366 = vunpack.c.l.b16 %v1222
  %v2367 = vunpack.c.l.b16 %v1223
  %v2368 = vunpack.c.l.b16 %v1224
  %v2369 = vunpack.c.l.b16 %v1225
  %v2370 = vunpack.c.l.b16 %v1226
  %v2371 = vunpack.c.l.b16 %v1227
  %v2372 = vunpack.c.l.b16 %v1228
  %v2373 = vunpack.c.l.b16 %v1229
  %v2374 = vunpack.c.l.b16 %v1230
  %v2375 = vunpack.c.l.b16 %v1231
  %v2376 = vunpack.c.l.b16 %v1232
  %v2377 = vunpack.c.l.b16 %v1233
  %v2378 = vunpack.c.l.b16 %v1234
  %v2379 = vunpack.c.l.b16 %v1235
  %v2380 = vunpack.c.l.b16 %v1236
  %v2381 = vunpack.c.l.b16 %v1237
  %v2382 = vunpack.c.l.b16 %v1238
  %v2383 = vunpack.c.l.b16 %v1239
  %v2384 = vunpack.c.l.b16 %v1240
  %v2385 = vunpack.c.l.b16 %v1241
  %v2386 = vunpack.c.l.b16 %v1242
  %v2387 = vunpack.c.l.b16 %v1243
  %v2388 = vunpack.c.l.b16 %v1244
  %v2389 = vunpack.c.l.b16 %v1245
  %v2390 = vunpack.c.l.b16 %v1246
  %v2391 = vunpack.c.l.b16 %v1247
  %v2392 = vunpack.c.l.b16 %v1248
  %v2393 = vunpack.c.l.b16 %v1249
  %v2394 = vunpack.c.l.b16 %v1250
  %v2395 = vunpack.c.l.b16 %v1251
  %v2396 = vunpack.c.l.b16 %v1252
  %v2397 = vunpack.c.l.b16 %v1253
  %v2398 = vunpack.c.l.b16 %v1254
  %v2399 = vunpack.c.l.b16 %v1255
  %v2400 = vunpack.c.l.b16 %v1256
  %v2401 = vunpack.c.l.b16 %v1257
  %v2402 = vunpack.c.l.b16 %v1258
  %v2403 = vunpack.c.l.b16 %v1259
  %v2404 = vunpack.c.l.b16 %v1260
  %v2405 = vunpack.c.l.b16 %v1261
  %v2406 = vunpack.c.l.b16 %v1262
  %v2407 = vunpack.c.l.b16 %v1263
  %v2408 = vunpack.c.l.b16 %v1264
  %v2409 = vunpack.c.l.b16 %v1265
  %v2410 = vunpack.c.l.b16 %v1266
  %v2411 = vunpack.c.l.b16 %v1267
  %v2412 = vunpack.c.l.b16 %v1268
  %v2413 = vunpack.c.l.b16 %v1269
  %v2414 = vunpack.c.l.b16 %v1270
  %v2415 = vunpack.c.l.b16 %v1271
  %v2416 = vunpack.c.l.b16 %v1272
  %v2417 = vunpack.c.l.b16 %v1273
  %v2418 = vunpack.c.l.b16 %v1274
  %v2419 = vunpack.c.l.b16 %v1275
  %v2420 = vunpack.c.l.b16 %v1276
  %v2421 = vunpack.c.l.b16 %v1277
  %v2422 = vunpack.c.l.b16 %v1278
  %v2423 = vunpack.c.l.b16 %v1279
  %v2424 = vunpack.c.l.b16 %v1280
  %v2425 = vunpack.c.l.b16 %v1281
  %v2426 = vunpack.c.l.b16 %v1282
  %v2427 = vunpack.c.l.b16 %v1283
  %v2428 = vunpack.c.l.b16 %v1284
  %v2429 = vunpack.c.l.b16 %v1285
  %v2430 = vunpack.c.l.b16 %v1286
  %v2431 = vunpack.c.l.b16 %v1287
  %v2432 = vunpack.c.l.b16 %v1288
  %v2433 = vunpack.c.l.b16 %v1289
  %v2434 = vunpack.c.l.b16 %v1290
  %v2435 = vunpack.c.l.b16 %v1291
  %v2436 = vunpack.c.l.b16 %v1292
  %v2437 = vunpack.c.l.b16 %v1293
  %v2438 = vunpack.c.l.b16 %v1294
  %v2439 = vunpack.c.l.b16 %v1295
  %v2440 = vunpack.c.l.b16 %v1296
  %v2441 = vunpack.c.l.b16 %v1297
  %v2442 = vunpack.c.l.b16 %v1298
  %v2443 = vunpack.c.l.b16 %v1299
  %v2444 = vunpack.c.l.b16 %v1300
  %v2445 = vunpack.c.l.b16 %v1301
  %v2446 = vunpack.c.l.b16 %v1302
  %v2447 = vunpack.c.l.b16 %v1303
  %v2448 = vunpack.c.l.b16 %v1304
  %v2449 = vunpack.c.l.b16 %v1305
  %v2450 = vunpack.c.l.b16 %v1306
  %v2451 = vunpack.c.l.b16 %v1307
  %v2452 = vunpack.c.l.b16 %v1308
  %v2453 = vunpack.c.l.b16 %v1309
  %v2454 = vunpack.c.l.b16 %v1310
  %v2455 = vunpack.c.l.b16 %v1311
  %v2456 = vunpack.c.l.b16 %v1312
  %v2457 = vpack.c.b16 %v2330, %v2329
  %v2458 = vpack.c.b16 %v2332, %v2331
  %v2459 = vpack.c.b16 %v2334, %v2333
  %v2460 = vpack.c.b16 %v2336, %v2335
  %v2461 = vpack.c.b16 %v2338, %v2337
  %v2462 = vpack.c.b16 %v2340, %v2339
  %v2463 = vpack.c.b16 %v2342, %v2341
  %v2464 = vpack.c.b16 %v2344, %v2343
  %v2465 = vpack.c.b16 %v2346, %v2345
  %v2466 = vpack.c.b16 %v2348, %v2347
  %v2467 = vpack.c.b16 %v2350, %v2349
  %v2468 = vpack.c.b16 %v2352, %v2351
  %v2469 = vpack.c.b16 %v2354, %v2353
  %v2470 = vpack.c.b16 %v2356, %v2355
  %v2471 = vpack.c.b16 %v2358, %v2357
  %v2472 = vpack.c.b16 %v2360, %v2359
  %v2473 = vpack.c.b16 %v2362, %v2361
  %v2474 = vpack.c.b16 %v2364, %v2363
  %v2475 = vpack.c.b16 %v2366, %v2365
  %v2476 = vpack.c.b16 %v2368, %v2367
  %v2477 = vpack.c.b16 %v2370, %v2369
  %v2478 = vpack.c.b16 %v2372, %v2371
  %v2479 = vpack.c.b16 %v2374, %v2373
  %v2480 = vpack.c.b16 %v2376, %v2375
  %v2481 = vpack.c.b16 %v2378, %v2377
  %v2482 = vpack.c.b16 %v2380, %v2379
  %v2483 = vpack.c.b16 %v2382, %v2381
  %v2484 = vpack.c.b16 %v2384, %v2383
  %v2485 = vpack.c.b16 %v2386, %v2385
  %v2486 = vpack.c.b16 %v2388, %v2387
  %v2487 = vpack.c.b16 %v2390, %v2389
  %v2488 = vpack.c.b16 %v2392, %v2391
  %v2489 = vpack.c.b16 %v2394, %v2393
  %v2490 = vpack.c.b16 %v2396, %v2395
  %v2491 = vpack.c.b16 %v2398, %v2397
  %v2492 = vpack.c.b16 %v2400, %v2399
  %v2493 = vpack.c.b16 %v2402, %v2401
  %v2494 = vpack.c.b16 %v2404, %v2403
  %v2495 = vpack.c.b16 %v2406, %v2405
  %v2496 = vpack.c.b16 %v2408, %v2407
  %v2497 = vpack.c.b16 %v2410, %v2409
  %v2498 = vpack.c.b16 %v2412, %v2411
  %v2499 = vpack.c.b16 %v2414, %v2413
  %v2500 = vpack.c.b16 %v2416, %v2415
  %v2501 = vpack.c.b16 %v2418, %v2417
  %v2502 = vpack.c.b16 %v2420, %v2419
  %v2503 = vpack.c.b16 %v2422, %v2421
  %v2504 = vpack.c.b16 %v2424, %v2423
  %v2505 = vpack.c.b16 %v2426, %v2425
  %v2506 = vpack.c.b16 %v2428, %v2427
  %v2507 = vpack.c.b16 %v2430, %v2429
  %v2508 = vpack.c.b16 %v2432, %v2431
  %v2509 = vpack.c.b16 %v2434, %v2433
  %v2510 = vpack.c.b16 %v2436, %v2435
  %v2511 = vpack.c.b16 %v2438, %v2437
  %v2512 = vpack.c.b16 %v2440, %v2439
  %v2513 = vpack.c.b16 %v2442, %v2441
  %v2514 = vpack.c.b16 %v2444, %v2443
  %v2515 = vpack.c.b16 %v2446, %v2445
  %v2516 = vpack.c.b16 %v2448, %v2447
  %v2517 = vpack.c.b16 %v2450, %v2449
  %v2518 = vpack.c.b16 %v2452, %v2451
  %v2519 = vpack.c.b16 %v2454, %v2453
  %v2520 = vpack.c.b16 %v2456, %v2455
  %2585 = vmatprep.subr.bf16.mxu0 0
  %2586 = vmatpush1.bf16.msra.mxu0 %v2457
  %2587 = vmatprep.subr.bf16.mxu0 0
  %2588 = vmatpush1.bf16.msra.mxu0 %v2458
  %2589 = vmatprep.subr.bf16.mxu0 0
  %2590 = vmatpush1.bf16.msra.mxu0 %v2459
  %2591 = vmatprep.subr.bf16.mxu0 0
  %2592 = vmatpush1.bf16.msra.mxu0 %v2460
  %2593 = vmatprep.subr.bf16.mxu0 0
  %2594 = vmatpush1.bf16.msra.mxu0 %v2461
  %2595 = vmatprep.subr.bf16.mxu0 0
  %2596 = vmatpush1.bf16.msra.mxu0 %v2462
  %2597 = vmatprep.subr.bf16.mxu0 0
  %2598 = vmatpush1.bf16.msra.mxu0 %v2463
  %2599 = vmatprep.subr.bf16.mxu0 0
  %2600 = vmatpush1.bf16.msra.mxu0 %v2464
  %2601 = vmatprep.subr.bf16.mxu0 0
  %2602 = vmatpush1.bf16.msra.mxu0 %v2465
  %2603 = vmatprep.subr.bf16.mxu0 0
  %2604 = vmatpush1.bf16.msra.mxu0 %v2466
  %2605 = vmatprep.subr.bf16.mxu0 0
  %2606 = vmatpush1.bf16.msra.mxu0 %v2467
  %2607 = vmatprep.subr.bf16.mxu0 0
  %2608 = vmatpush1.bf16.msra.mxu0 %v2468
  %2609 = vmatprep.subr.bf16.mxu0 0
  %2610 = vmatpush1.bf16.msra.mxu0 %v2469
  %2611 = vmatprep.subr.bf16.mxu0 0
  %2612 = vmatpush1.bf16.msra.mxu0 %v2470
  %2613 = vmatprep.subr.bf16.mxu0 0
  %2614 = vmatpush1.bf16.msra.mxu0 %v2471
  %2615 = vmatprep.subr.bf16.mxu0 0
  %2616 = vmatpush1.bf16.msra.mxu0 %v2472
  %2617 = vmatprep.mubr.bf16.mxu0 %v1314
  %2618 = vmatmul.mubr.bf16.gmra.mrb[0].mxu0 %v1313
  %v2619 = vpop.f32.mrb[0].mxu0
  %v2620 = vadd.f32 0.0, %v2619
  %v2621 = vpop.f32.mrb[0].mxu0
  %v2622 = vpop.f32.mrb[0].mxu0
  %v2623 = vadd.f32 0.0, %v2622
  %v2624 = vpop.f32.mrb[0].mxu0
  %2625 = vmatprep.mubr.bf16.mxu0 %v1322
  %2626 = vmatmul.mubr.bf16.gmra.mrb[0].mxu0 %v1321
  %v2627 = vpop.f32.mrb[0].mxu0
  %v2628 = vadd.f32 0.0, %v2627
  %v2629 = vpop.f32.mrb[0].mxu0
  %v2630 = vpop.f32.mrb[0].mxu0
  %v2631 = vadd.f32 0.0, %v2630
  %v2632 = vpop.f32.mrb[0].mxu0
  %2633 = vmatprep.mubr.bf16.mxu0 %v1330
  %2634 = vmatmul.mubr.bf16.gmra.mrb[0].mxu0 %v1329
  %v2635 = vpop.f32.mrb[0].mxu0
  %v2636 = vadd.f32 0.0, %v2635
  %v2637 = vpop.f32.mrb[0].mxu0
  %v2638 = vpop.f32.mrb[0].mxu0
  %v2639 = vadd.f32 0.0, %v2638
  %v2640 = vpop.f32.mrb[0].mxu0
  %2641 = vmatprep.mubr.bf16.mxu0 %v1325
  %2642 = vmatmul.mubr.bf16.gmra.mrb[0].mxu0 %v1318
  %v2643 = vpop.f32.mrb[0].mxu0
  %v2644 = vadd.f32 0.0, %v2643
  %v2645 = vpop.f32.mrb[0].mxu0
  %v2646 = vpop.f32.mrb[0].mxu0
  %v2647 = vadd.f32 0.0, %v2646
  %v2648 = vpop.f32.mrb[0].mxu0
  %2649 = vmatprep.mubr.bf16.mxu0 %v1341
  %2650 = vmatmul.mubr.bf16.gmra.mrb[0].mxu0 %v1326
  %v2651 = vpop.f32.mrb[0].mxu0
  %v2652 = vadd.f32 0.0, %v2651
  %v2653 = vpop.f32.mrb[0].mxu0
  %v2654 = vpop.f32.mrb[0].mxu0
  %v2655 = vadd.f32 0.0, %v2654
  %v2656 = vpop.f32.mrb[0].mxu0
  %2657 = vmatprep.mubr.bf16.mxu0 %v1337
  %2658 = vmatmul.mubr.bf16.gmra.mrb[0].mxu0 %v1347
  %v2659 = vpop.f32.mrb[0].mxu0
  %v2660 = vadd.f32 0.0, %v2659
  %v2661 = vpop.f32.mrb[0].mxu0
  %v2662 = vpop.f32.mrb[0].mxu0
  %v2663 = vadd.f32 0.0, %v2662
  %v2664 = vpop.f32.mrb[0].mxu0
  %2665 = vmatprep.mubr.bf16.mxu0 %v1343
  %2666 = vmatmul.mubr.bf16.gmra.mrb[0].mxu0 %v1338
  %v2667 = vpop.f32.mrb[0].mxu0
  %v2668 = vadd.f32 0.0, %v2667
  %v2669 = vpop.f32.mrb[0].mxu0
  %v2670 = vpop.f32.mrb[0].mxu0
  %v2671 = vadd.f32 0.0, %v2670
  %v2672 = vpop.f32.mrb[0].mxu0
  %2673 = vmatprep.mubr.bf16.mxu0 %v1358
  %2674 = vmatmul.mubr.bf16.gmra.mrb[0].mxu0 %v1357
  %v2675 = vpop.f32.mrb[0].mxu0
  %v2676 = vadd.f32 0.0, %v2675
  %v2677 = vpop.f32.mrb[0].mxu0
  %v2678 = vpop.f32.mrb[0].mxu0
  %v2679 = vadd.f32 0.0, %v2678
  %v2680 = vpop.f32.mrb[0].mxu0
  %2681 = vmatprep.mubr.bf16.mxu0 %v1353
  %2682 = vmatmul.mubr.bf16.gmra.mrb[0].mxu0 %v1350
  %v2683 = vpop.f32.mrb[0].mxu0
  %v2684 = vadd.f32 0.0, %v2683
  %v2685 = vpop.f32.mrb[0].mxu0
  %v2686 = vpop.f32.mrb[0].mxu0
  %v2687 = vadd.f32 0.0, %v2686
  %v2688 = vpop.f32.mrb[0].mxu0
  %2689 = vmatprep.mubr.bf16.mxu0 %v1369
  %2690 = vmatmul.mubr.bf16.gmra.mrb[0].mxu0 %v1354
  %v2691 = vpop.f32.mrb[0].mxu0
  %v2692 = vadd.f32 0.0, %v2691
  %v2693 = vpop.f32.mrb[0].mxu0
  %v2694 = vpop.f32.mrb[0].mxu0
  %v2695 = vadd.f32 0.0, %v2694
  %v2696 = vpop.f32.mrb[0].mxu0
  %2697 = vmatprep.mubr.bf16.mxu0 %v1365
  %2698 = vmatmul.mubr.bf16.gmra.mrb[0].mxu0 %v1375
  %v2699 = vpop.f32.mrb[0].mxu0
  %v2700 = vadd.f32 0.0, %v2699
  %v2701 = vpop.f32.mrb[0].mxu0
  %v2702 = vpop.f32.mrb[0].mxu0
  %v2703 = vadd.f32 0.0, %v2702
  %v2704 = vpop.f32.mrb[0].mxu0
  %2705 = vmatprep.mubr.bf16.mxu0 %v1371
  %2706 = vmatmul.mubr.bf16.gmra.mrb[0].mxu0 %v1366
  %v2707 = vpop.f32.mrb[0].mxu0
  %v2708 = vadd.f32 0.0, %v2707
  %v2709 = vpop.f32.mrb[0].mxu0
  %v2710 = vpop.f32.mrb[0].mxu0
  %v2711 = vadd.f32 0.0, %v2710
  %v2712 = vpop.f32.mrb[0].mxu0
  %2713 = vmatprep.mubr.bf16.mxu0 %v1386
  %2714 = vmatmul.mubr.bf16.gmra.mrb[0].mxu0 %v1385
  %v2715 = vpop.f32.mrb[0].mxu0
  %v2716 = vadd.f32 0.0, %v2715
  %v2717 = vpop.f32.mrb[0].mxu0
  %v2718 = vpop.f32.mrb[0].mxu0
  %v2719 = vadd.f32 0.0, %v2718
  %v2720 = vpop.f32.mrb[0].mxu0
  %2721 = vmatprep.mubr.bf16.mxu0 %v1381
  %2722 = vmatmul.mubr.bf16.gmra.mrb[0].mxu0 %v1378
  %v2723 = vpop.f32.mrb[0].mxu0
  %v2724 = vadd.f32 0.0, %v2723
  %v2725 = vpop.f32.mrb[0].mxu0
  %v2726 = vpop.f32.mrb[0].mxu0
  %v2727 = vadd.f32 0.0, %v2726
  %v2728 = vpop.f32.mrb[0].mxu0
  %2729 = vmatprep.mubr.bf16.mxu0 %v1397
  %2730 = vmatmul.mubr.bf16.gmra.mrb[0].mxu0 %v1382
  %v2731 = vpop.f32.mrb[0].mxu0
  %v2732 = vadd.f32 0.0, %v2731
  %v2733 = vpop.f32.mrb[0].mxu0
  %v2734 = vpop.f32.mrb[0].mxu0
  %v2735 = vadd.f32 0.0, %v2734
  %v2736 = vpop.f32.mrb[0].mxu0
  %2737 = vmatprep.mubr.bf16.mxu0 %v1393
  %2738 = vmatmul.mubr.bf16.gmra.mrb[0].mxu0 %v1403
  %v2739 = vpop.f32.mrb[0].mxu0
  %v2740 = vadd.f32 0.0, %v2739
  %v2741 = vpop.f32.mrb[0].mxu0
  %v2742 = vpop.f32.mrb[0].mxu0
  %v2743 = vadd.f32 0.0, %v2742
  %v2744 = vpop.f32.mrb[0].mxu0
  %2745 = vmatprep.mubr.bf16.mxu0 %v1399
  %2746 = vmatmul.mubr.bf16.gmra.mrb[0].mxu0 %v1394
  %v2747 = vpop.f32.mrb[0].mxu0
  %v2748 = vadd.f32 0.0, %v2747
  %v2749 = vpop.f32.mrb[0].mxu0
  %v2750 = vpop.f32.mrb[0].mxu0
  %v2751 = vadd.f32 0.0, %v2750
  %v2752 = vpop.f32.mrb[0].mxu0
  %2753 = vmatprep.mubr.bf16.mxu0 %v1414
  %2754 = vmatmul.mubr.bf16.gmra.mrb[0].mxu0 %v1413
  %v2755 = vpop.f32.mrb[0].mxu0
  %v2756 = vadd.f32 0.0, %v2755
  %v2757 = vpop.f32.mrb[0].mxu0
  %v2758 = vpop.f32.mrb[0].mxu0
  %v2759 = vadd.f32 0.0, %v2758
  %v2760 = vpop.f32.mrb[0].mxu0
  %2761 = vmatprep.mubr.bf16.mxu0 %v1409
  %2762 = vmatmul.mubr.bf16.gmra.mrb[0].mxu0 %v1406
  %v2763 = vpop.f32.mrb[0].mxu0
  %v2764 = vadd.f32 0.0, %v2763
  %v2765 = vpop.f32.mrb[0].mxu0
  %v2766 = vpop.f32.mrb[0].mxu0
  %v2767 = vadd.f32 0.0, %v2766
  %v2768 = vpop.f32.mrb[0].mxu0
  %2769 = vmatprep.mubr.bf16.mxu0 %v1425
  %2770 = vmatmul.mubr.bf16.gmra.mrb[0].mxu0 %v1410
  %v2771 = vpop.f32.mrb[0].mxu0
  %v2772 = vadd.f32 0.0, %v2771
  %v2773 = vpop.f32.mrb[0].mxu0
  %v2774 = vpop.f32.mrb[0].mxu0
  %v2775 = vadd.f32 0.0, %v2774
  %v2776 = vpop.f32.mrb[0].mxu0
  %2777 = vmatprep.mubr.bf16.mxu0 %v1421
  %2778 = vmatmul.mubr.bf16.gmra.mrb[0].mxu0 %v1431
  %v2779 = vpop.f32.mrb[0].mxu0
  %v2780 = vadd.f32 0.0, %v2779
  %v2781 = vpop.f32.mrb[0].mxu0
  %v2782 = vpop.f32.mrb[0].mxu0
  %v2783 = vadd.f32 0.0, %v2782
  %v2784 = vpop.f32.mrb[0].mxu0
  %2785 = vmatprep.mubr.bf16.mxu0 %v1427
  %2786 = vmatmul.mubr.bf16.gmra.mrb[0].mxu0 %v1422
  %v2787 = vpop.f32.mrb[0].mxu0
  %v2788 = vadd.f32 0.0, %v2787
  %v2789 = vpop.f32.mrb[0].mxu0
  %v2790 = vpop.f32.mrb[0].mxu0
  %v2791 = vadd.f32 0.0, %v2790
  %v2792 = vpop.f32.mrb[0].mxu0
  %2793 = vmatprep.mubr.bf16.mxu0 %v1442
  %2794 = vmatmul.mubr.bf16.gmra.mrb[0].mxu0 %v1441
  %v2795 = vpop.f32.mrb[0].mxu0
  %v2796 = vadd.f32 0.0, %v2795
  %v2797 = vpop.f32.mrb[0].mxu0
  %v2798 = vpop.f32.mrb[0].mxu0
  %v2799 = vadd.f32 0.0, %v2798
  %v2800 = vpop.f32.mrb[0].mxu0
  %2801 = vmatprep.mubr.bf16.mxu0 %v1437
  %2802 = vmatmul.mubr.bf16.gmra.mrb[0].mxu0 %v1434
  %v2803 = vpop.f32.mrb[0].mxu0
  %v2804 = vadd.f32 0.0, %v2803
  %v2805 = vpop.f32.mrb[0].mxu0
  %v2806 = vpop.f32.mrb[0].mxu0
  %v2807 = vadd.f32 0.0, %v2806
  %v2808 = vpop.f32.mrb[0].mxu0
  %2809 = vmatprep.mubr.bf16.mxu0 %v1453
  %2810 = vmatmul.mubr.bf16.gmra.mrb[0].mxu0 %v1438
  %v2811 = vpop.f32.mrb[0].mxu0
  %v2812 = vadd.f32 0.0, %v2811
  %v2813 = vpop.f32.mrb[0].mxu0
  %v2814 = vpop.f32.mrb[0].mxu0
  %v2815 = vadd.f32 0.0, %v2814
  %v2816 = vpop.f32.mrb[0].mxu0
  %2817 = vmatprep.mubr.bf16.mxu0 %v1449
  %2818 = vmatmul.mubr.bf16.gmra.mrb[0].mxu0 %v1459
  %v2819 = vpop.f32.mrb[0].mxu0
  %v2820 = vadd.f32 0.0, %v2819
  %v2821 = vpop.f32.mrb[0].mxu0
  %v2822 = vpop.f32.mrb[0].mxu0
  %v2823 = vadd.f32 0.0, %v2822
  %v2824 = vpop.f32.mrb[0].mxu0
  %2825 = vmatprep.mubr.bf16.mxu0 %v1455
  %2826 = vmatmul.mubr.bf16.gmra.mrb[0].mxu0 %v1450
  %v2827 = vpop.f32.mrb[0].mxu0
  %v2828 = vadd.f32 0.0, %v2827
  %v2829 = vpop.f32.mrb[0].mxu0
  %v2830 = vpop.f32.mrb[0].mxu0
  %v2831 = vadd.f32 0.0, %v2830
  %v2832 = vpop.f32.mrb[0].mxu0
  %2833 = vmatprep.mubr.bf16.mxu0 %v1470
  %2834 = vmatmul.mubr.bf16.gmra.mrb[0].mxu0 %v1469
  %v2835 = vpop.f32.mrb[0].mxu0
  %v2836 = vadd.f32 0.0, %v2835
  %v2837 = vpop.f32.mrb[0].mxu0
  %v2838 = vpop.f32.mrb[0].mxu0
  %v2839 = vadd.f32 0.0, %v2838
  %v2840 = vpop.f32.mrb[0].mxu0
  %2841 = vmatprep.mubr.bf16.mxu0 %v1465
  %2842 = vmatmul.mubr.bf16.gmra.mrb[0].mxu0 %v1462
  %v2843 = vpop.f32.mrb[0].mxu0
  %v2844 = vadd.f32 0.0, %v2843
  %v2845 = vpop.f32.mrb[0].mxu0
  %v2846 = vpop.f32.mrb[0].mxu0
  %v2847 = vadd.f32 0.0, %v2846
  %v2848 = vpop.f32.mrb[0].mxu0
  %2849 = vmatprep.mubr.bf16.mxu0 %v1481
  %2850 = vmatmul.mubr.bf16.gmra.mrb[0].mxu0 %v1466
  %v2851 = vpop.f32.mrb[0].mxu0
  %v2852 = vadd.f32 0.0, %v2851
  %v2853 = vpop.f32.mrb[0].mxu0
  %v2854 = vpop.f32.mrb[0].mxu0
  %v2855 = vadd.f32 0.0, %v2854
  %v2856 = vpop.f32.mrb[0].mxu0
  %2857 = vmatprep.mubr.bf16.mxu0 %v1477
  %2858 = vmatmul.mubr.bf16.gmra.mrb[0].mxu0 %v1487
  %v2859 = vpop.f32.mrb[0].mxu0
  %v2860 = vadd.f32 0.0, %v2859
  %v2861 = vpop.f32.mrb[0].mxu0
  %v2862 = vpop.f32.mrb[0].mxu0
  %v2863 = vadd.f32 0.0, %v2862
  %v2864 = vpop.f32.mrb[0].mxu0
  %2865 = vmatprep.mubr.bf16.mxu0 %v1483
  %2866 = vmatmul.mubr.bf16.gmra.mrb[0].mxu0 %v1478
  %v2867 = vpop.f32.mrb[0].mxu0
  %v2868 = vadd.f32 0.0, %v2867
  %v2869 = vpop.f32.mrb[0].mxu0
  %v2870 = vpop.f32.mrb[0].mxu0
  %v2871 = vadd.f32 0.0, %v2870
  %v2872 = vpop.f32.mrb[0].mxu0
  %2873 = vmatprep.mubr.bf16.mxu0 %v1498
  %2874 = vmatmul.mubr.bf16.gmra.mrb[0].mxu0 %v1497
  %v2875 = vpop.f32.mrb[0].mxu0
  %v2876 = vadd.f32 0.0, %v2875
  %v2877 = vpop.f32.mrb[0].mxu0
  %v2878 = vpop.f32.mrb[0].mxu0
  %v2879 = vadd.f32 0.0, %v2878
  %v2880 = vpop.f32.mrb[0].mxu0
  %2881 = vmatprep.mubr.bf16.mxu0 %v1493
  %2882 = vmatmul.mubr.bf16.gmra.mrb[0].mxu0 %v1490
  %v2883 = vpop.f32.mrb[0].mxu0
  %v2884 = vadd.f32 0.0, %v2883
  %v2885 = vpop.f32.mrb[0].mxu0
  %v2886 = vpop.f32.mrb[0].mxu0
  %v2887 = vadd.f32 0.0, %v2886
  %v2888 = vpop.f32.mrb[0].mxu0
  %2889 = vmatprep.mubr.bf16.mxu0 %v1509
  %2890 = vmatmul.mubr.bf16.gmra.mrb[0].mxu0 %v1494
  %v2891 = vpop.f32.mrb[0].mxu0
  %v2892 = vadd.f32 0.0, %v2891
  %v2893 = vpop.f32.mrb[0].mxu0
  %v2894 = vpop.f32.mrb[0].mxu0
  %v2895 = vadd.f32 0.0, %v2894
  %v2896 = vpop.f32.mrb[0].mxu0
  %2897 = vmatprep.mubr.bf16.mxu0 %v1505
  %2898 = vmatmul.mubr.bf16.gmra.mrb[0].mxu0 %v1515
  %v2899 = vpop.f32.mrb[0].mxu0
  %v2900 = vadd.f32 0.0, %v2899
  %v2901 = vpop.f32.mrb[0].mxu0
  %v2902 = vpop.f32.mrb[0].mxu0
  %v2903 = vadd.f32 0.0, %v2902
  %v2904 = vpop.f32.mrb[0].mxu0
  %2905 = vmatprep.mubr.bf16.mxu0 %v1511
  %2906 = vmatmul.mubr.bf16.gmra.mrb[0].mxu0 %v1506
  %v2907 = vpop.f32.mrb[0].mxu0
  %v2908 = vadd.f32 0.0, %v2907
  %v2909 = vpop.f32.mrb[0].mxu0
  %v2910 = vpop.f32.mrb[0].mxu0
  %v2911 = vadd.f32 0.0, %v2910
  %v2912 = vpop.f32.mrb[0].mxu0
  %2913 = vmatprep.mubr.bf16.mxu0 %v1526
  %2914 = vmatmul.mubr.bf16.gmra.mrb[0].mxu0 %v1525
  %v2915 = vpop.f32.mrb[0].mxu0
  %v2916 = vadd.f32 0.0, %v2915
  %v2917 = vpop.f32.mrb[0].mxu0
  %v2918 = vpop.f32.mrb[0].mxu0
  %v2919 = vadd.f32 0.0, %v2918
  %v2920 = vpop.f32.mrb[0].mxu0
  %2921 = vmatprep.mubr.bf16.mxu0 %v1521
  %2922 = vmatmul.mubr.bf16.gmra.mrb[0].mxu0 %v1518
  %v2923 = vpop.f32.mrb[0].mxu0
  %v2924 = vadd.f32 0.0, %v2923
  %v2925 = vpop.f32.mrb[0].mxu0
  %v2926 = vpop.f32.mrb[0].mxu0
  %v2927 = vadd.f32 0.0, %v2926
  %v2928 = vpop.f32.mrb[0].mxu0
  %2929 = vmatprep.mubr.bf16.mxu0 %v1537
  %2930 = vmatmul.mubr.bf16.gmra.mrb[0].mxu0 %v1522
  %v2931 = vpop.f32.mrb[0].mxu0
  %v2932 = vadd.f32 0.0, %v2931
  %v2933 = vpop.f32.mrb[0].mxu0
  %v2934 = vpop.f32.mrb[0].mxu0
  %v2935 = vadd.f32 0.0, %v2934
  %v2936 = vpop.f32.mrb[0].mxu0
  %2937 = vmatprep.mubr.bf16.mxu0 %v1533
  %2938 = vmatmul.mubr.bf16.gmra.mrb[0].mxu0 %v1543
  %v2939 = vpop.f32.mrb[0].mxu0
  %v2940 = vadd.f32 0.0, %v2939
  %v2941 = vpop.f32.mrb[0].mxu0
  %v2942 = vpop.f32.mrb[0].mxu0
  %v2943 = vadd.f32 0.0, %v2942
  %v2944 = vpop.f32.mrb[0].mxu0
  %2945 = vmatprep.mubr.bf16.mxu0 %v1539
  %2946 = vmatmul.mubr.bf16.gmra.mrb[0].mxu0 %v1534
  %v2947 = vpop.f32.mrb[0].mxu0
  %v2948 = vadd.f32 0.0, %v2947
  %v2949 = vpop.f32.mrb[0].mxu0
  %v2950 = vpop.f32.mrb[0].mxu0
  %v2951 = vadd.f32 0.0, %v2950
  %v2952 = vpop.f32.mrb[0].mxu0
  %2953 = vmatprep.mubr.bf16.mxu0 %v1554
  %2954 = vmatmul.mubr.bf16.gmra.mrb[0].mxu0 %v1553
  %v2955 = vpop.f32.mrb[0].mxu0
  %v2956 = vadd.f32 0.0, %v2955
  %v2957 = vpop.f32.mrb[0].mxu0
  %v2958 = vpop.f32.mrb[0].mxu0
  %v2959 = vadd.f32 0.0, %v2958
  %v2960 = vpop.f32.mrb[0].mxu0
  %2961 = vmatprep.mubr.bf16.mxu0 %v1549
  %2962 = vmatmul.mubr.bf16.gmra.mrb[0].mxu0 %v1546
  %v2963 = vpop.f32.mrb[0].mxu0
  %v2964 = vadd.f32 0.0, %v2963
  %v2965 = vpop.f32.mrb[0].mxu0
  %v2966 = vpop.f32.mrb[0].mxu0
  %v2967 = vadd.f32 0.0, %v2966
  %v2968 = vpop.f32.mrb[0].mxu0
  %2969 = vmatprep.mubr.bf16.mxu0 %v1565
  %2970 = vmatmul.mubr.bf16.gmra.mrb[0].mxu0 %v1550
  %v2971 = vpop.f32.mrb[0].mxu0
  %v2972 = vadd.f32 0.0, %v2971
  %v2973 = vpop.f32.mrb[0].mxu0
  %v2974 = vpop.f32.mrb[0].mxu0
  %v2975 = vadd.f32 0.0, %v2974
  %v2976 = vpop.f32.mrb[0].mxu0
  %2977 = vmatprep.mubr.bf16.mxu0 %v1561
  %2978 = vmatmul.mubr.bf16.gmra.mrb[0].mxu0 %v1571
  %v2979 = vpop.f32.mrb[0].mxu0
  %v2980 = vadd.f32 0.0, %v2979
  %v2981 = vpop.f32.mrb[0].mxu0
  %v2982 = vpop.f32.mrb[0].mxu0
  %v2983 = vadd.f32 0.0, %v2982
  %v2984 = vpop.f32.mrb[0].mxu0
  %2985 = vmatprep.mubr.bf16.mxu0 %v1567
  %2986 = vmatmul.mubr.bf16.gmra.mrb[0].mxu0 %v1562
  %v2987 = vpop.f32.mrb[0].mxu0
  %v2988 = vadd.f32 0.0, %v2987
  %v2989 = vpop.f32.mrb[0].mxu0
  %v2990 = vpop.f32.mrb[0].mxu0
  %v2991 = vadd.f32 0.0, %v2990
  %v2992 = vpop.f32.mrb[0].mxu0
  %2993 = vmatprep.mubr.bf16.mxu0 %v1582
  %2994 = vmatmul.mubr.bf16.gmra.mrb[0].mxu0 %v1581
  %v2995 = vpop.f32.mrb[0].mxu0
  %v2996 = vadd.f32 0.0, %v2995
  %v2997 = vpop.f32.mrb[0].mxu0
  %v2998 = vpop.f32.mrb[0].mxu0
  %v2999 = vadd.f32 0.0, %v2998
  %v3000 = vpop.f32.mrb[0].mxu0
  %3001 = vmatprep.mubr.bf16.mxu0 %v1577
  %3002 = vmatmul.mubr.bf16.gmra.mrb[0].mxu0 %v1574
  %v3003 = vpop.f32.mrb[0].mxu0
  %v3004 = vadd.f32 0.0, %v3003
  %v3005 = vpop.f32.mrb[0].mxu0
  %v3006 = vpop.f32.mrb[0].mxu0
  %v3007 = vadd.f32 0.0, %v3006
  %v3008 = vpop.f32.mrb[0].mxu0
  %3009 = vmatprep.mubr.bf16.mxu0 %v1593
  %3010 = vmatmul.mubr.bf16.gmra.mrb[0].mxu0 %v1578
  %v3011 = vpop.f32.mrb[0].mxu0
  %v3012 = vadd.f32 0.0, %v3011
  %v3013 = vpop.f32.mrb[0].mxu0
  %v3014 = vpop.f32.mrb[0].mxu0
  %v3015 = vadd.f32 0.0, %v3014
  %v3016 = vpop.f32.mrb[0].mxu0
  %3017 = vmatprep.mubr.bf16.mxu0 %v1589
  %3018 = vmatmul.mubr.bf16.gmra.mrb[0].mxu0 %v1599
  %v3019 = vpop.f32.mrb[0].mxu0
  %v3020 = vadd.f32 0.0, %v3019
  %v3021 = vpop.f32.mrb[0].mxu0
  %v3022 = vpop.f32.mrb[0].mxu0
  %v3023 = vadd.f32 0.0, %v3022
  %v3024 = vpop.f32.mrb[0].mxu0
  %3025 = vmatprep.mubr.bf16.mxu0 %v1595
  %3026 = vmatmul.mubr.bf16.gmra.mrb[0].mxu0 %v1590
  %v3027 = vpop.f32.mrb[0].mxu0
  %v3028 = vadd.f32 0.0, %v3027
  %v3029 = vpop.f32.mrb[0].mxu0
  %v3030 = vpop.f32.mrb[0].mxu0
  %v3031 = vadd.f32 0.0, %v3030
  %v3032 = vpop.f32.mrb[0].mxu0
  %3033 = vmatprep.mubr.bf16.mxu0 %v1610
  %3034 = vmatmul.mubr.bf16.gmra.mrb[0].mxu0 %v1609
  %v3035 = vpop.f32.mrb[0].mxu0
  %v3036 = vadd.f32 0.0, %v3035
  %v3037 = vpop.f32.mrb[0].mxu0
  %v3038 = vpop.f32.mrb[0].mxu0
  %v3039 = vadd.f32 0.0, %v3038
  %v3040 = vpop.f32.mrb[0].mxu0
  %3041 = vmatprep.mubr.bf16.mxu0 %v1605
  %3042 = vmatmul.mubr.bf16.gmra.mrb[0].mxu0 %v1602
  %v3043 = vpop.f32.mrb[0].mxu0
  %v3044 = vadd.f32 0.0, %v3043
  %v3045 = vpop.f32.mrb[0].mxu0
  %v3046 = vpop.f32.mrb[0].mxu0
  %v3047 = vadd.f32 0.0, %v3046
  %v3048 = vpop.f32.mrb[0].mxu0
  %3049 = vmatprep.mubr.bf16.mxu0 %v1621
  %3050 = vmatmul.mubr.bf16.gmra.mrb[0].mxu0 %v1606
  %v3051 = vpop.f32.mrb[0].mxu0
  %v3052 = vadd.f32 0.0, %v3051
  %v3053 = vpop.f32.mrb[0].mxu0
  %v3054 = vpop.f32.mrb[0].mxu0
  %v3055 = vadd.f32 0.0, %v3054
  %v3056 = vpop.f32.mrb[0].mxu0
  %3057 = vmatprep.mubr.bf16.mxu0 %v1617
  %3058 = vmatmul.mubr.bf16.gmra.mrb[0].mxu0 %v1627
  %v3059 = vpop.f32.mrb[0].mxu0
  %v3060 = vadd.f32 0.0, %v3059
  %v3061 = vpop.f32.mrb[0].mxu0
  %v3062 = vpop.f32.mrb[0].mxu0
  %v3063 = vadd.f32 0.0, %v3062
  %v3064 = vpop.f32.mrb[0].mxu0
  %3065 = vmatprep.mubr.bf16.mxu0 %v1623
  %3066 = vmatmul.mubr.bf16.gmra.mrb[0].mxu0 %v1618
  %v3067 = vpop.f32.mrb[0].mxu0
  %v3068 = vadd.f32 0.0, %v3067
  %v3069 = vpop.f32.mrb[0].mxu0
  %v3070 = vpop.f32.mrb[0].mxu0
  %v3071 = vadd.f32 0.0, %v3070
  %v3072 = vpop.f32.mrb[0].mxu0
  %3073 = vmatprep.mubr.bf16.mxu0 %v1638
  %3074 = vmatmul.mubr.bf16.gmra.mrb[0].mxu0 %v1637
  %v3075 = vpop.f32.mrb[0].mxu0
  %v3076 = vadd.f32 0.0, %v3075
  %v3077 = vpop.f32.mrb[0].mxu0
  %v3078 = vpop.f32.mrb[0].mxu0
  %v3079 = vadd.f32 0.0, %v3078
  %v3080 = vpop.f32.mrb[0].mxu0
  %3081 = vmatprep.mubr.bf16.mxu0 %v1633
  %3082 = vmatmul.mubr.bf16.gmra.mrb[0].mxu0 %v1630
  %v3083 = vpop.f32.mrb[0].mxu0
  %v3084 = vadd.f32 0.0, %v3083
  %v3085 = vpop.f32.mrb[0].mxu0
  %v3086 = vpop.f32.mrb[0].mxu0
  %v3087 = vadd.f32 0.0, %v3086
  %v3088 = vpop.f32.mrb[0].mxu0
  %3089 = vmatprep.mubr.bf16.mxu0 %v1649
  %3090 = vmatmul.mubr.bf16.gmra.mrb[0].mxu0 %v1634
  %v3091 = vpop.f32.mrb[0].mxu0
  %v3092 = vadd.f32 0.0, %v3091
  %v3093 = vpop.f32.mrb[0].mxu0
  %v3094 = vpop.f32.mrb[0].mxu0
  %v3095 = vadd.f32 0.0, %v3094
  %v3096 = vpop.f32.mrb[0].mxu0
  %3097 = vmatprep.mubr.bf16.mxu0 %v1645
  %3098 = vmatmul.mubr.bf16.gmra.mrb[0].mxu0 %v1655
  %v3099 = vpop.f32.mrb[0].mxu0
  %v3100 = vadd.f32 0.0, %v3099
  %v3101 = vpop.f32.mrb[0].mxu0
  %v3102 = vpop.f32.mrb[0].mxu0
  %v3103 = vadd.f32 0.0, %v3102
  %v3104 = vpop.f32.mrb[0].mxu0
  %3105 = vmatprep.mubr.bf16.mxu0 %v1651
  %3106 = vmatmul.mubr.bf16.gmra.mrb[0].mxu0 %v1646
  %v3107 = vpop.f32.mrb[0].mxu0
  %v3108 = vadd.f32 0.0, %v3107
  %v3109 = vpop.f32.mrb[0].mxu0
  %v3110 = vpop.f32.mrb[0].mxu0
  %v3111 = vadd.f32 0.0, %v3110
  %v3112 = vpop.f32.mrb[0].mxu0
  %3113 = vmatprep.mubr.bf16.mxu0 %v1666
  %3114 = vmatmul.mubr.bf16.gmra.mrb[0].mxu0 %v1665
  %v3115 = vpop.f32.mrb[0].mxu0
  %v3116 = vadd.f32 0.0, %v3115
  %v3117 = vpop.f32.mrb[0].mxu0
  %v3118 = vpop.f32.mrb[0].mxu0
  %v3119 = vadd.f32 0.0, %v3118
  %v3120 = vpop.f32.mrb[0].mxu0
  %3121 = vmatprep.mubr.bf16.mxu0 %v1661
  %3122 = vmatmul.mubr.bf16.gmra.mrb[0].mxu0 %v1658
  %v3123 = vpop.f32.mrb[0].mxu0
  %v3124 = vadd.f32 0.0, %v3123
  %v3125 = vpop.f32.mrb[0].mxu0
  %v3126 = vpop.f32.mrb[0].mxu0
  %v3127 = vadd.f32 0.0, %v3126
  %v3128 = vpop.f32.mrb[0].mxu0
  %3129 = vmatprep.mubr.bf16.mxu0 %v1677
  %3130 = vmatmul.mubr.bf16.gmra.mrb[0].mxu0 %v1662
  %v3131 = vpop.f32.mrb[0].mxu0
  %v3132 = vadd.f32 0.0, %v3131
  %v3133 = vpop.f32.mrb[0].mxu0
  %v3134 = vpop.f32.mrb[0].mxu0
  %v3135 = vadd.f32 0.0, %v3134
  %v3136 = vpop.f32.mrb[0].mxu0
  %3137 = vmatprep.mubr.bf16.mxu0 %v1673
  %3138 = vmatmul.mubr.bf16.gmra.mrb[0].mxu0 %v1683
  %v3139 = vpop.f32.mrb[0].mxu0
  %v3140 = vadd.f32 0.0, %v3139
  %v3141 = vpop.f32.mrb[0].mxu0
  %v3142 = vpop.f32.mrb[0].mxu0
  %v3143 = vadd.f32 0.0, %v3142
  %v3144 = vpop.f32.mrb[0].mxu0
  %3145 = vmatprep.mubr.bf16.mxu0 %v1679
  %3146 = vmatmul.mubr.bf16.gmra.mrb[0].mxu0 %v1674
  %v3147 = vpop.f32.mrb[0].mxu0
  %v3148 = vadd.f32 0.0, %v3147
  %v3149 = vpop.f32.mrb[0].mxu0
  %v3150 = vpop.f32.mrb[0].mxu0
  %v3151 = vadd.f32 0.0, %v3150
  %v3152 = vpop.f32.mrb[0].mxu0
  %3153 = vmatprep.mubr.bf16.mxu0 %v1694
  %3154 = vmatmul.mubr.bf16.gmra.mrb[0].mxu0 %v1693
  %v3155 = vpop.f32.mrb[0].mxu0
  %v3156 = vadd.f32 0.0, %v3155
  %v3157 = vpop.f32.mrb[0].mxu0
  %v3158 = vpop.f32.mrb[0].mxu0
  %v3159 = vadd.f32 0.0, %v3158
  %v3160 = vpop.f32.mrb[0].mxu0
  %3161 = vmatprep.mubr.bf16.mxu0 %v1689
  %3162 = vmatmul.mubr.bf16.gmra.mrb[0].mxu0 %v1686
  %v3163 = vpop.f32.mrb[0].mxu0
  %v3164 = vadd.f32 0.0, %v3163
  %v3165 = vpop.f32.mrb[0].mxu0
  %v3166 = vpop.f32.mrb[0].mxu0
  %v3167 = vadd.f32 0.0, %v3166
  %v3168 = vpop.f32.mrb[0].mxu0
  %3169 = vmatprep.mubr.bf16.mxu0 %v1705
  %3170 = vmatmul.mubr.bf16.gmra.mrb[0].mxu0 %v1690
  %v3171 = vpop.f32.mrb[0].mxu0
  %v3172 = vadd.f32 0.0, %v3171
  %v3173 = vpop.f32.mrb[0].mxu0
  %v3174 = vpop.f32.mrb[0].mxu0
  %v3175 = vadd.f32 0.0, %v3174
  %v3176 = vpop.f32.mrb[0].mxu0
  %3177 = vmatprep.mubr.bf16.mxu0 %v1701
  %3178 = vmatmul.mubr.bf16.gmra.mrb[0].mxu0 %v1711
  %v3179 = vpop.f32.mrb[0].mxu0
  %v3180 = vadd.f32 0.0, %v3179
  %v3181 = vpop.f32.mrb[0].mxu0
  %v3182 = vpop.f32.mrb[0].mxu0
  %v3183 = vadd.f32 0.0, %v3182
  %v3184 = vpop.f32.mrb[0].mxu0
  %3185 = vmatprep.mubr.bf16.mxu0 %v1707
  %3186 = vmatmul.mubr.bf16.gmra.mrb[0].mxu0 %v1702
  %v3187 = vpop.f32.mrb[0].mxu0
  %v3188 = vadd.f32 0.0, %v3187
  %v3189 = vpop.f32.mrb[0].mxu0
  %v3190 = vpop.f32.mrb[0].mxu0
  %v3191 = vadd.f32 0.0, %v3190
  %v3192 = vpop.f32.mrb[0].mxu0
  %3193 = vmatprep.mubr.bf16.mxu0 %v1722
  %3194 = vmatmul.mubr.bf16.gmra.mrb[0].mxu0 %v1721
  %v3195 = vpop.f32.mrb[0].mxu0
  %v3196 = vadd.f32 0.0, %v3195
  %v3197 = vpop.f32.mrb[0].mxu0
  %v3198 = vpop.f32.mrb[0].mxu0
  %v3199 = vadd.f32 0.0, %v3198
  %v3200 = vpop.f32.mrb[0].mxu0
  %3201 = vmatprep.mubr.bf16.mxu0 %v1717
  %3202 = vmatmul.mubr.bf16.gmra.mrb[0].mxu0 %v1714
  %v3203 = vpop.f32.mrb[0].mxu0
  %v3204 = vadd.f32 0.0, %v3203
  %v3205 = vpop.f32.mrb[0].mxu0
  %v3206 = vpop.f32.mrb[0].mxu0
  %v3207 = vadd.f32 0.0, %v3206
  %v3208 = vpop.f32.mrb[0].mxu0
  %3209 = vmatprep.mubr.bf16.mxu0 %v1733
  %3210 = vmatmul.mubr.bf16.gmra.mrb[0].mxu0 %v1718
  %v3211 = vpop.f32.mrb[0].mxu0
  %v3212 = vadd.f32 0.0, %v3211
  %v3213 = vpop.f32.mrb[0].mxu0
  %v3214 = vpop.f32.mrb[0].mxu0
  %v3215 = vadd.f32 0.0, %v3214
  %v3216 = vpop.f32.mrb[0].mxu0
  %3217 = vmatprep.mubr.bf16.mxu0 %v1729
  %3218 = vmatmul.mubr.bf16.gmra.mrb[0].mxu0 %v1739
  %v3219 = vpop.f32.mrb[0].mxu0
  %v3220 = vpop.f32.mrb[0].mxu0
  %v3221 = vpop.f32.mrb[0].mxu0
  %v3222 = vpop.f32.mrb[0].mxu0
  %3223 = vmatprep.mubr.bf16.mxu0 %v1735
  %3224 = vmatmul.mubr.bf16.gmra.mrb[0].mxu0 %v1730
  %v3225 = vpop.f32.mrb[0].mxu0
  %v3226 = vpop.f32.mrb[0].mxu0
  %v3227 = vpop.f32.mrb[0].mxu0
  %v3228 = vpop.f32.mrb[0].mxu0
  %3229 = vmatprep.mubr.bf16.mxu0 %v1750
  %3230 = vmatmul.mubr.bf16.gmra.mrb[0].mxu0 %v1749
  %v3231 = vpop.f32.mrb[0].mxu0
  %v3232 = vpop.f32.mrb[0].mxu0
  %v3233 = vpop.f32.mrb[0].mxu0
  %v3234 = vpop.f32.mrb[0].mxu0
  %3235 = vdwg.mxu0
  %3236 = vmatprep.subr.bf16.mxu0 0
  %3237 = vmatpush1.bf16.msra.mxu0 %v2473
  %3238 = vmatprep.subr.bf16.mxu0 0
  %3239 = vmatpush1.bf16.msra.mxu0 %v2474
  %3240 = vmatprep.subr.bf16.mxu0 0
  %3241 = vmatpush1.bf16.msra.mxu0 %v2475
  %3242 = vmatprep.subr.bf16.mxu0 0
  %3243 = vmatpush1.bf16.msra.mxu0 %v2476
  %3244 = vmatprep.subr.bf16.mxu0 0
  %3245 = vmatpush1.bf16.msra.mxu0 %v2477
  %3246 = vmatprep.subr.bf16.mxu0 0
  %3247 = vmatpush1.bf16.msra.mxu0 %v2478
  %3248 = vmatprep.subr.bf16.mxu0 0
  %3249 = vmatpush1.bf16.msra.mxu0 %v2479
  %3250 = vmatprep.subr.bf16.mxu0 0
  %3251 = vmatpush1.bf16.msra.mxu0 %v2480
  %3252 = vmatprep.subr.bf16.mxu0 0
  %3253 = vmatpush1.bf16.msra.mxu0 %v2481
  %3254 = vmatprep.subr.bf16.mxu0 0
  %3255 = vmatpush1.bf16.msra.mxu0 %v2482
  %3256 = vmatprep.subr.bf16.mxu0 0
  %3257 = vmatpush1.bf16.msra.mxu0 %v2483
  %3258 = vmatprep.subr.bf16.mxu0 0
  %3259 = vmatpush1.bf16.msra.mxu0 %v2484
  %3260 = vmatprep.subr.bf16.mxu0 0
  %3261 = vmatpush1.bf16.msra.mxu0 %v2485
  %3262 = vmatprep.subr.bf16.mxu0 0
  %3263 = vmatpush1.bf16.msra.mxu0 %v2486
  %3264 = vmatprep.subr.bf16.mxu0 0
  %3265 = vmatpush1.bf16.msra.mxu0 %v2487
  %3266 = vmatprep.subr.bf16.mxu0 0
  %3267 = vmatpush1.bf16.msra.mxu0 %v2488
  %3268 = vmatprep.mubr.bf16.mxu0 %v1316
  %3269 = vmatmul.mubr.bf16.gmra.mrb[0].mxu0 %v1315
  %v3270 = vpop.f32.mrb[0].mxu0
  %v3271 = vadd.f32 %v2620, %v3270
  %v3272 = vpop.f32.mrb[0].mxu0
  %v3273 = vpop.f32.mrb[0].mxu0
  %v3274 = vadd.f32 %v2623, %v3273
  %v3275 = vpop.f32.mrb[0].mxu0
  %3276 = vmatprep.mubr.bf16.mxu0 %v1324
  %3277 = vmatmul.mubr.bf16.gmra.mrb[0].mxu0 %v1323
  %v3278 = vpop.f32.mrb[0].mxu0
  %v3279 = vadd.f32 %v2628, %v3278
  %v3280 = vpop.f32.mrb[0].mxu0
  %v3281 = vpop.f32.mrb[0].mxu0
  %v3282 = vadd.f32 %v2631, %v3281
  %v3283 = vpop.f32.mrb[0].mxu0
  %3284 = vmatprep.mubr.bf16.mxu0 %v1332
  %3285 = vmatmul.mubr.bf16.gmra.mrb[0].mxu0 %v1331
  %v3286 = vpop.f32.mrb[0].mxu0
  %v3287 = vadd.f32 %v2636, %v3286
  %v3288 = vpop.f32.mrb[0].mxu0
  %v3289 = vpop.f32.mrb[0].mxu0
  %v3290 = vadd.f32 %v2639, %v3289
  %v3291 = vpop.f32.mrb[0].mxu0
  %3292 = vmatprep.mubr.bf16.mxu0 %v1327
  %3293 = vmatmul.mubr.bf16.gmra.mrb[0].mxu0 %v1320
  %v3294 = vpop.f32.mrb[0].mxu0
  %v3295 = vadd.f32 %v2644, %v3294
  %v3296 = vpop.f32.mrb[0].mxu0
  %v3297 = vpop.f32.mrb[0].mxu0
  %v3298 = vadd.f32 %v2647, %v3297
  %v3299 = vpop.f32.mrb[0].mxu0
  %3300 = vmatprep.mubr.bf16.mxu0 %v1342
  %3301 = vmatmul.mubr.bf16.gmra.mrb[0].mxu0 %v1328
  %v3302 = vpop.f32.mrb[0].mxu0
  %v3303 = vadd.f32 %v2652, %v3302
  %v3304 = vpop.f32.mrb[0].mxu0
  %v3305 = vpop.f32.mrb[0].mxu0
  %v3306 = vadd.f32 %v2655, %v3305
  %v3307 = vpop.f32.mrb[0].mxu0
  %3308 = vmatprep.mubr.bf16.mxu0 %v1339
  %3309 = vmatmul.mubr.bf16.gmra.mrb[0].mxu0 %v1348
  %v3310 = vpop.f32.mrb[0].mxu0
  %v3311 = vadd.f32 %v2660, %v3310
  %v3312 = vpop.f32.mrb[0].mxu0
  %v3313 = vpop.f32.mrb[0].mxu0
  %v3314 = vadd.f32 %v2663, %v3313
  %v3315 = vpop.f32.mrb[0].mxu0
  %3316 = vmatprep.mubr.bf16.mxu0 %v1345
  %3317 = vmatmul.mubr.bf16.gmra.mrb[0].mxu0 %v1340
  %v3318 = vpop.f32.mrb[0].mxu0
  %v3319 = vadd.f32 %v2668, %v3318
  %v3320 = vpop.f32.mrb[0].mxu0
  %v3321 = vpop.f32.mrb[0].mxu0
  %v3322 = vadd.f32 %v2671, %v3321
  %v3323 = vpop.f32.mrb[0].mxu0
  %3324 = vmatprep.mubr.bf16.mxu0 %v1360
  %3325 = vmatmul.mubr.bf16.gmra.mrb[0].mxu0 %v1359
  %v3326 = vpop.f32.mrb[0].mxu0
  %v3327 = vadd.f32 %v2676, %v3326
  %v3328 = vpop.f32.mrb[0].mxu0
  %v3329 = vpop.f32.mrb[0].mxu0
  %v3330 = vadd.f32 %v2679, %v3329
  %v3331 = vpop.f32.mrb[0].mxu0
  %3332 = vmatprep.mubr.bf16.mxu0 %v1355
  %3333 = vmatmul.mubr.bf16.gmra.mrb[0].mxu0 %v1352
  %v3334 = vpop.f32.mrb[0].mxu0
  %v3335 = vadd.f32 %v2684, %v3334
  %v3336 = vpop.f32.mrb[0].mxu0
  %v3337 = vpop.f32.mrb[0].mxu0
  %v3338 = vadd.f32 %v2687, %v3337
  %v3339 = vpop.f32.mrb[0].mxu0
  %3340 = vmatprep.mubr.bf16.mxu0 %v1370
  %3341 = vmatmul.mubr.bf16.gmra.mrb[0].mxu0 %v1356
  %v3342 = vpop.f32.mrb[0].mxu0
  %v3343 = vadd.f32 %v2692, %v3342
  %v3344 = vpop.f32.mrb[0].mxu0
  %v3345 = vpop.f32.mrb[0].mxu0
  %v3346 = vadd.f32 %v2695, %v3345
  %v3347 = vpop.f32.mrb[0].mxu0
  %3348 = vmatprep.mubr.bf16.mxu0 %v1367
  %3349 = vmatmul.mubr.bf16.gmra.mrb[0].mxu0 %v1376
  %v3350 = vpop.f32.mrb[0].mxu0
  %v3351 = vadd.f32 %v2700, %v3350
  %v3352 = vpop.f32.mrb[0].mxu0
  %v3353 = vpop.f32.mrb[0].mxu0
  %v3354 = vadd.f32 %v2703, %v3353
  %v3355 = vpop.f32.mrb[0].mxu0
  %3356 = vmatprep.mubr.bf16.mxu0 %v1373
  %3357 = vmatmul.mubr.bf16.gmra.mrb[0].mxu0 %v1368
  %v3358 = vpop.f32.mrb[0].mxu0
  %v3359 = vadd.f32 %v2708, %v3358
  %v3360 = vpop.f32.mrb[0].mxu0
  %v3361 = vpop.f32.mrb[0].mxu0
  %v3362 = vadd.f32 %v2711, %v3361
  %v3363 = vpop.f32.mrb[0].mxu0
  %3364 = vmatprep.mubr.bf16.mxu0 %v1388
  %3365 = vmatmul.mubr.bf16.gmra.mrb[0].mxu0 %v1387
  %v3366 = vpop.f32.mrb[0].mxu0
  %v3367 = vadd.f32 %v2716, %v3366
  %v3368 = vpop.f32.mrb[0].mxu0
  %v3369 = vpop.f32.mrb[0].mxu0
  %v3370 = vadd.f32 %v2719, %v3369
  %v3371 = vpop.f32.mrb[0].mxu0
  %3372 = vmatprep.mubr.bf16.mxu0 %v1383
  %3373 = vmatmul.mubr.bf16.gmra.mrb[0].mxu0 %v1380
  %v3374 = vpop.f32.mrb[0].mxu0
  %v3375 = vadd.f32 %v2724, %v3374
  %v3376 = vpop.f32.mrb[0].mxu0
  %v3377 = vpop.f32.mrb[0].mxu0
  %v3378 = vadd.f32 %v2727, %v3377
  %v3379 = vpop.f32.mrb[0].mxu0
  %3380 = vmatprep.mubr.bf16.mxu0 %v1398
  %3381 = vmatmul.mubr.bf16.gmra.mrb[0].mxu0 %v1384
  %v3382 = vpop.f32.mrb[0].mxu0
  %v3383 = vadd.f32 %v2732, %v3382
  %v3384 = vpop.f32.mrb[0].mxu0
  %v3385 = vpop.f32.mrb[0].mxu0
  %v3386 = vadd.f32 %v2735, %v3385
  %v3387 = vpop.f32.mrb[0].mxu0
  %3388 = vmatprep.mubr.bf16.mxu0 %v1395
  %3389 = vmatmul.mubr.bf16.gmra.mrb[0].mxu0 %v1404
  %v3390 = vpop.f32.mrb[0].mxu0
  %v3391 = vadd.f32 %v2740, %v3390
  %v3392 = vpop.f32.mrb[0].mxu0
  %v3393 = vpop.f32.mrb[0].mxu0
  %v3394 = vadd.f32 %v2743, %v3393
  %v3395 = vpop.f32.mrb[0].mxu0
  %3396 = vmatprep.mubr.bf16.mxu0 %v1401
  %3397 = vmatmul.mubr.bf16.gmra.mrb[0].mxu0 %v1396
  %v3398 = vpop.f32.mrb[0].mxu0
  %v3399 = vadd.f32 %v2748, %v3398
  %v3400 = vpop.f32.mrb[0].mxu0
  %v3401 = vpop.f32.mrb[0].mxu0
  %v3402 = vadd.f32 %v2751, %v3401
  %v3403 = vpop.f32.mrb[0].mxu0
  %3404 = vmatprep.mubr.bf16.mxu0 %v1416
  %3405 = vmatmul.mubr.bf16.gmra.mrb[0].mxu0 %v1415
  %v3406 = vpop.f32.mrb[0].mxu0
  %v3407 = vadd.f32 %v2756, %v3406
  %v3408 = vpop.f32.mrb[0].mxu0
  %v3409 = vpop.f32.mrb[0].mxu0
  %v3410 = vadd.f32 %v2759, %v3409
  %v3411 = vpop.f32.mrb[0].mxu0
  %3412 = vmatprep.mubr.bf16.mxu0 %v1411
  %3413 = vmatmul.mubr.bf16.gmra.mrb[0].mxu0 %v1408
  %v3414 = vpop.f32.mrb[0].mxu0
  %v3415 = vadd.f32 %v2764, %v3414
  %v3416 = vpop.f32.mrb[0].mxu0
  %v3417 = vpop.f32.mrb[0].mxu0
  %v3418 = vadd.f32 %v2767, %v3417
  %v3419 = vpop.f32.mrb[0].mxu0
  %3420 = vmatprep.mubr.bf16.mxu0 %v1426
  %3421 = vmatmul.mubr.bf16.gmra.mrb[0].mxu0 %v1412
  %v3422 = vpop.f32.mrb[0].mxu0
  %v3423 = vadd.f32 %v2772, %v3422
  %v3424 = vpop.f32.mrb[0].mxu0
  %v3425 = vpop.f32.mrb[0].mxu0
  %v3426 = vadd.f32 %v2775, %v3425
  %v3427 = vpop.f32.mrb[0].mxu0
  %3428 = vmatprep.mubr.bf16.mxu0 %v1423
  %3429 = vmatmul.mubr.bf16.gmra.mrb[0].mxu0 %v1432
  %v3430 = vpop.f32.mrb[0].mxu0
  %v3431 = vadd.f32 %v2780, %v3430
  %v3432 = vpop.f32.mrb[0].mxu0
  %v3433 = vpop.f32.mrb[0].mxu0
  %v3434 = vadd.f32 %v2783, %v3433
  %v3435 = vpop.f32.mrb[0].mxu0
  %3436 = vmatprep.mubr.bf16.mxu0 %v1429
  %3437 = vmatmul.mubr.bf16.gmra.mrb[0].mxu0 %v1424
  %v3438 = vpop.f32.mrb[0].mxu0
  %v3439 = vadd.f32 %v2788, %v3438
  %v3440 = vpop.f32.mrb[0].mxu0
  %v3441 = vpop.f32.mrb[0].mxu0
  %v3442 = vadd.f32 %v2791, %v3441
  %v3443 = vpop.f32.mrb[0].mxu0
  %3444 = vmatprep.mubr.bf16.mxu0 %v1444
  %3445 = vmatmul.mubr.bf16.gmra.mrb[0].mxu0 %v1443
  %v3446 = vpop.f32.mrb[0].mxu0
  %v3447 = vadd.f32 %v2796, %v3446
  %v3448 = vpop.f32.mrb[0].mxu0
  %v3449 = vpop.f32.mrb[0].mxu0
  %v3450 = vadd.f32 %v2799, %v3449
  %v3451 = vpop.f32.mrb[0].mxu0
  %3452 = vmatprep.mubr.bf16.mxu0 %v1439
  %3453 = vmatmul.mubr.bf16.gmra.mrb[0].mxu0 %v1436
  %v3454 = vpop.f32.mrb[0].mxu0
  %v3455 = vadd.f32 %v2804, %v3454
  %v3456 = vpop.f32.mrb[0].mxu0
  %v3457 = vpop.f32.mrb[0].mxu0
  %v3458 = vadd.f32 %v2807, %v3457
  %v3459 = vpop.f32.mrb[0].mxu0
  %3460 = vmatprep.mubr.bf16.mxu0 %v1454
  %3461 = vmatmul.mubr.bf16.gmra.mrb[0].mxu0 %v1440
  %v3462 = vpop.f32.mrb[0].mxu0
  %v3463 = vadd.f32 %v2812, %v3462
  %v3464 = vpop.f32.mrb[0].mxu0
  %v3465 = vpop.f32.mrb[0].mxu0
  %v3466 = vadd.f32 %v2815, %v3465
  %v3467 = vpop.f32.mrb[0].mxu0
  %3468 = vmatprep.mubr.bf16.mxu0 %v1451
  %3469 = vmatmul.mubr.bf16.gmra.mrb[0].mxu0 %v1460
  %v3470 = vpop.f32.mrb[0].mxu0
  %v3471 = vadd.f32 %v2820, %v3470
  %v3472 = vpop.f32.mrb[0].mxu0
  %v3473 = vpop.f32.mrb[0].mxu0
  %v3474 = vadd.f32 %v2823, %v3473
  %v3475 = vpop.f32.mrb[0].mxu0
  %3476 = vmatprep.mubr.bf16.mxu0 %v1457
  %3477 = vmatmul.mubr.bf16.gmra.mrb[0].mxu0 %v1452
  %v3478 = vpop.f32.mrb[0].mxu0
  %v3479 = vadd.f32 %v2828, %v3478
  %v3480 = vpop.f32.mrb[0].mxu0
  %v3481 = vpop.f32.mrb[0].mxu0
  %v3482 = vadd.f32 %v2831, %v3481
  %v3483 = vpop.f32.mrb[0].mxu0
  %3484 = vmatprep.mubr.bf16.mxu0 %v1472
  %3485 = vmatmul.mubr.bf16.gmra.mrb[0].mxu0 %v1471
  %v3486 = vpop.f32.mrb[0].mxu0
  %v3487 = vadd.f32 %v2836, %v3486
  %v3488 = vpop.f32.mrb[0].mxu0
  %v3489 = vpop.f32.mrb[0].mxu0
  %v3490 = vadd.f32 %v2839, %v3489
  %v3491 = vpop.f32.mrb[0].mxu0
  %3492 = vmatprep.mubr.bf16.mxu0 %v1467
  %3493 = vmatmul.mubr.bf16.gmra.mrb[0].mxu0 %v1464
  %v3494 = vpop.f32.mrb[0].mxu0
  %v3495 = vadd.f32 %v2844, %v3494
  %v3496 = vpop.f32.mrb[0].mxu0
  %v3497 = vpop.f32.mrb[0].mxu0
  %v3498 = vadd.f32 %v2847, %v3497
  %v3499 = vpop.f32.mrb[0].mxu0
  %3500 = vmatprep.mubr.bf16.mxu0 %v1482
  %3501 = vmatmul.mubr.bf16.gmra.mrb[0].mxu0 %v1468
  %v3502 = vpop.f32.mrb[0].mxu0
  %v3503 = vadd.f32 %v2852, %v3502
  %v3504 = vpop.f32.mrb[0].mxu0
  %v3505 = vpop.f32.mrb[0].mxu0
  %v3506 = vadd.f32 %v2855, %v3505
  %v3507 = vpop.f32.mrb[0].mxu0
  %3508 = vmatprep.mubr.bf16.mxu0 %v1479
  %3509 = vmatmul.mubr.bf16.gmra.mrb[0].mxu0 %v1488
  %v3510 = vpop.f32.mrb[0].mxu0
  %v3511 = vadd.f32 %v2860, %v3510
  %v3512 = vpop.f32.mrb[0].mxu0
  %v3513 = vpop.f32.mrb[0].mxu0
  %v3514 = vadd.f32 %v2863, %v3513
  %v3515 = vpop.f32.mrb[0].mxu0
  %3516 = vmatprep.mubr.bf16.mxu0 %v1485
  %3517 = vmatmul.mubr.bf16.gmra.mrb[0].mxu0 %v1480
  %v3518 = vpop.f32.mrb[0].mxu0
  %v3519 = vadd.f32 %v2868, %v3518
  %v3520 = vpop.f32.mrb[0].mxu0
  %v3521 = vpop.f32.mrb[0].mxu0
  %v3522 = vadd.f32 %v2871, %v3521
  %v3523 = vpop.f32.mrb[0].mxu0
  %3524 = vmatprep.mubr.bf16.mxu0 %v1500
  %3525 = vmatmul.mubr.bf16.gmra.mrb[0].mxu0 %v1499
  %v3526 = vpop.f32.mrb[0].mxu0
  %v3527 = vadd.f32 %v2876, %v3526
  %v3528 = vpop.f32.mrb[0].mxu0
  %v3529 = vpop.f32.mrb[0].mxu0
  %v3530 = vadd.f32 %v2879, %v3529
  %v3531 = vpop.f32.mrb[0].mxu0
  %3532 = vmatprep.mubr.bf16.mxu0 %v1495
  %3533 = vmatmul.mubr.bf16.gmra.mrb[0].mxu0 %v1492
  %v3534 = vpop.f32.mrb[0].mxu0
  %v3535 = vadd.f32 %v2884, %v3534
  %v3536 = vpop.f32.mrb[0].mxu0
  %v3537 = vpop.f32.mrb[0].mxu0
  %v3538 = vadd.f32 %v2887, %v3537
  %v3539 = vpop.f32.mrb[0].mxu0
  %3540 = vmatprep.mubr.bf16.mxu0 %v1510
  %3541 = vmatmul.mubr.bf16.gmra.mrb[0].mxu0 %v1496
  %v3542 = vpop.f32.mrb[0].mxu0
  %v3543 = vadd.f32 %v2892, %v3542
  %v3544 = vpop.f32.mrb[0].mxu0
  %v3545 = vpop.f32.mrb[0].mxu0
  %v3546 = vadd.f32 %v2895, %v3545
  %v3547 = vpop.f32.mrb[0].mxu0
  %3548 = vmatprep.mubr.bf16.mxu0 %v1507
  %3549 = vmatmul.mubr.bf16.gmra.mrb[0].mxu0 %v1516
  %v3550 = vpop.f32.mrb[0].mxu0
  %v3551 = vadd.f32 %v2900, %v3550
  %v3552 = vpop.f32.mrb[0].mxu0
  %v3553 = vpop.f32.mrb[0].mxu0
  %v3554 = vadd.f32 %v2903, %v3553
  %v3555 = vpop.f32.mrb[0].mxu0
  %3556 = vmatprep.mubr.bf16.mxu0 %v1513
  %3557 = vmatmul.mubr.bf16.gmra.mrb[0].mxu0 %v1508
  %v3558 = vpop.f32.mrb[0].mxu0
  %v3559 = vadd.f32 %v2908, %v3558
  %v3560 = vpop.f32.mrb[0].mxu0
  %v3561 = vpop.f32.mrb[0].mxu0
  %v3562 = vadd.f32 %v2911, %v3561
  %v3563 = vpop.f32.mrb[0].mxu0
  %3564 = vmatprep.mubr.bf16.mxu0 %v1528
  %3565 = vmatmul.mubr.bf16.gmra.mrb[0].mxu0 %v1527
  %v3566 = vpop.f32.mrb[0].mxu0
  %v3567 = vadd.f32 %v2916, %v3566
  %v3568 = vpop.f32.mrb[0].mxu0
  %v3569 = vpop.f32.mrb[0].mxu0
  %v3570 = vadd.f32 %v2919, %v3569
  %v3571 = vpop.f32.mrb[0].mxu0
  %3572 = vmatprep.mubr.bf16.mxu0 %v1523
  %3573 = vmatmul.mubr.bf16.gmra.mrb[0].mxu0 %v1520
  %v3574 = vpop.f32.mrb[0].mxu0
  %v3575 = vadd.f32 %v2924, %v3574
  %v3576 = vpop.f32.mrb[0].mxu0
  %v3577 = vpop.f32.mrb[0].mxu0
  %v3578 = vadd.f32 %v2927, %v3577
  %v3579 = vpop.f32.mrb[0].mxu0
  %3580 = vmatprep.mubr.bf16.mxu0 %v1538
  %3581 = vmatmul.mubr.bf16.gmra.mrb[0].mxu0 %v1524
  %v3582 = vpop.f32.mrb[0].mxu0
  %v3583 = vadd.f32 %v2932, %v3582
  %v3584 = vpop.f32.mrb[0].mxu0
  %v3585 = vpop.f32.mrb[0].mxu0
  %v3586 = vadd.f32 %v2935, %v3585
  %v3587 = vpop.f32.mrb[0].mxu0
  %3588 = vmatprep.mubr.bf16.mxu0 %v1535
  %3589 = vmatmul.mubr.bf16.gmra.mrb[0].mxu0 %v1544
  %v3590 = vpop.f32.mrb[0].mxu0
  %v3591 = vadd.f32 %v2940, %v3590
  %v3592 = vpop.f32.mrb[0].mxu0
  %v3593 = vpop.f32.mrb[0].mxu0
  %v3594 = vadd.f32 %v2943, %v3593
  %v3595 = vpop.f32.mrb[0].mxu0
  %3596 = vmatprep.mubr.bf16.mxu0 %v1541
  %3597 = vmatmul.mubr.bf16.gmra.mrb[0].mxu0 %v1536
  %v3598 = vpop.f32.mrb[0].mxu0
  %v3599 = vadd.f32 %v2948, %v3598
  %v3600 = vpop.f32.mrb[0].mxu0
  %v3601 = vpop.f32.mrb[0].mxu0
  %v3602 = vadd.f32 %v2951, %v3601
  %v3603 = vpop.f32.mrb[0].mxu0
  %3604 = vmatprep.mubr.bf16.mxu0 %v1556
  %3605 = vmatmul.mubr.bf16.gmra.mrb[0].mxu0 %v1555
  %v3606 = vpop.f32.mrb[0].mxu0
  %v3607 = vadd.f32 %v2956, %v3606
  %v3608 = vpop.f32.mrb[0].mxu0
  %v3609 = vpop.f32.mrb[0].mxu0
  %v3610 = vadd.f32 %v2959, %v3609
  %v3611 = vpop.f32.mrb[0].mxu0
  %3612 = vmatprep.mubr.bf16.mxu0 %v1551
  %3613 = vmatmul.mubr.bf16.gmra.mrb[0].mxu0 %v1548
  %v3614 = vpop.f32.mrb[0].mxu0
  %v3615 = vadd.f32 %v2964, %v3614
  %v3616 = vpop.f32.mrb[0].mxu0
  %v3617 = vpop.f32.mrb[0].mxu0
  %v3618 = vadd.f32 %v2967, %v3617
  %v3619 = vpop.f32.mrb[0].mxu0
  %3620 = vmatprep.mubr.bf16.mxu0 %v1566
  %3621 = vmatmul.mubr.bf16.gmra.mrb[0].mxu0 %v1552
  %v3622 = vpop.f32.mrb[0].mxu0
  %v3623 = vadd.f32 %v2972, %v3622
  %v3624 = vpop.f32.mrb[0].mxu0
  %v3625 = vpop.f32.mrb[0].mxu0
  %v3626 = vadd.f32 %v2975, %v3625
  %v3627 = vpop.f32.mrb[0].mxu0
  %3628 = vmatprep.mubr.bf16.mxu0 %v1563
  %3629 = vmatmul.mubr.bf16.gmra.mrb[0].mxu0 %v1572
  %v3630 = vpop.f32.mrb[0].mxu0
  %v3631 = vadd.f32 %v2980, %v3630
  %v3632 = vpop.f32.mrb[0].mxu0
  %v3633 = vpop.f32.mrb[0].mxu0
  %v3634 = vadd.f32 %v2983, %v3633
  %v3635 = vpop.f32.mrb[0].mxu0
  %3636 = vmatprep.mubr.bf16.mxu0 %v1569
  %3637 = vmatmul.mubr.bf16.gmra.mrb[0].mxu0 %v1564
  %v3638 = vpop.f32.mrb[0].mxu0
  %v3639 = vadd.f32 %v2988, %v3638
  %v3640 = vpop.f32.mrb[0].mxu0
  %v3641 = vpop.f32.mrb[0].mxu0
  %v3642 = vadd.f32 %v2991, %v3641
  %v3643 = vpop.f32.mrb[0].mxu0
  %3644 = vmatprep.mubr.bf16.mxu0 %v1584
  %3645 = vmatmul.mubr.bf16.gmra.mrb[0].mxu0 %v1583
  %v3646 = vpop.f32.mrb[0].mxu0
  %v3647 = vadd.f32 %v2996, %v3646
  %v3648 = vpop.f32.mrb[0].mxu0
  %v3649 = vpop.f32.mrb[0].mxu0
  %v3650 = vadd.f32 %v2999, %v3649
  %v3651 = vpop.f32.mrb[0].mxu0
  %3652 = vmatprep.mubr.bf16.mxu0 %v1579
  %3653 = vmatmul.mubr.bf16.gmra.mrb[0].mxu0 %v1576
  %v3654 = vpop.f32.mrb[0].mxu0
  %v3655 = vadd.f32 %v3004, %v3654
  %v3656 = vpop.f32.mrb[0].mxu0
  %v3657 = vpop.f32.mrb[0].mxu0
  %v3658 = vadd.f32 %v3007, %v3657
  %v3659 = vpop.f32.mrb[0].mxu0
  %3660 = vmatprep.mubr.bf16.mxu0 %v1594
  %3661 = vmatmul.mubr.bf16.gmra.mrb[0].mxu0 %v1580
  %v3662 = vpop.f32.mrb[0].mxu0
  %v3663 = vadd.f32 %v3012, %v3662
  %v3664 = vpop.f32.mrb[0].mxu0
  %v3665 = vpop.f32.mrb[0].mxu0
  %v3666 = vadd.f32 %v3015, %v3665
  %v3667 = vpop.f32.mrb[0].mxu0
  %3668 = vmatprep.mubr.bf16.mxu0 %v1591
  %3669 = vmatmul.mubr.bf16.gmra.mrb[0].mxu0 %v1600
  %v3670 = vpop.f32.mrb[0].mxu0
  %v3671 = vadd.f32 %v3020, %v3670
  %v3672 = vpop.f32.mrb[0].mxu0
  %v3673 = vpop.f32.mrb[0].mxu0
  %v3674 = vadd.f32 %v3023, %v3673
  %v3675 = vpop.f32.mrb[0].mxu0
  %3676 = vmatprep.mubr.bf16.mxu0 %v1597
  %3677 = vmatmul.mubr.bf16.gmra.mrb[0].mxu0 %v1592
  %v3678 = vpop.f32.mrb[0].mxu0
  %v3679 = vadd.f32 %v3028, %v3678
  %v3680 = vpop.f32.mrb[0].mxu0
  %v3681 = vpop.f32.mrb[0].mxu0
  %v3682 = vadd.f32 %v3031, %v3681
  %v3683 = vpop.f32.mrb[0].mxu0
  %3684 = vmatprep.mubr.bf16.mxu0 %v1612
  %3685 = vmatmul.mubr.bf16.gmra.mrb[0].mxu0 %v1611
  %v3686 = vpop.f32.mrb[0].mxu0
  %v3687 = vadd.f32 %v3036, %v3686
  %v3688 = vpop.f32.mrb[0].mxu0
  %v3689 = vpop.f32.mrb[0].mxu0
  %v3690 = vadd.f32 %v3039, %v3689
  %v3691 = vpop.f32.mrb[0].mxu0
  %3692 = vmatprep.mubr.bf16.mxu0 %v1607
  %3693 = vmatmul.mubr.bf16.gmra.mrb[0].mxu0 %v1604
  %v3694 = vpop.f32.mrb[0].mxu0
  %v3695 = vadd.f32 %v3044, %v3694
  %v3696 = vpop.f32.mrb[0].mxu0
  %v3697 = vpop.f32.mrb[0].mxu0
  %v3698 = vadd.f32 %v3047, %v3697
  %v3699 = vpop.f32.mrb[0].mxu0
  %3700 = vmatprep.mubr.bf16.mxu0 %v1622
  %3701 = vmatmul.mubr.bf16.gmra.mrb[0].mxu0 %v1608
  %v3702 = vpop.f32.mrb[0].mxu0
  %v3703 = vadd.f32 %v3052, %v3702
  %v3704 = vpop.f32.mrb[0].mxu0
  %v3705 = vpop.f32.mrb[0].mxu0
  %v3706 = vadd.f32 %v3055, %v3705
  %v3707 = vpop.f32.mrb[0].mxu0
  %3708 = vmatprep.mubr.bf16.mxu0 %v1619
  %3709 = vmatmul.mubr.bf16.gmra.mrb[0].mxu0 %v1628
  %v3710 = vpop.f32.mrb[0].mxu0
  %v3711 = vadd.f32 %v3060, %v3710
  %v3712 = vpop.f32.mrb[0].mxu0
  %v3713 = vpop.f32.mrb[0].mxu0
  %v3714 = vadd.f32 %v3063, %v3713
  %v3715 = vpop.f32.mrb[0].mxu0
  %3716 = vmatprep.mubr.bf16.mxu0 %v1625
  %3717 = vmatmul.mubr.bf16.gmra.mrb[0].mxu0 %v1620
  %v3718 = vpop.f32.mrb[0].mxu0
  %v3719 = vadd.f32 %v3068, %v3718
  %v3720 = vpop.f32.mrb[0].mxu0
  %v3721 = vpop.f32.mrb[0].mxu0
  %v3722 = vadd.f32 %v3071, %v3721
  %v3723 = vpop.f32.mrb[0].mxu0
  %3724 = vmatprep.mubr.bf16.mxu0 %v1640
  %3725 = vmatmul.mubr.bf16.gmra.mrb[0].mxu0 %v1639
  %v3726 = vpop.f32.mrb[0].mxu0
  %v3727 = vadd.f32 %v3076, %v3726
  %v3728 = vpop.f32.mrb[0].mxu0
  %v3729 = vpop.f32.mrb[0].mxu0
  %v3730 = vadd.f32 %v3079, %v3729
  %v3731 = vpop.f32.mrb[0].mxu0
  %3732 = vmatprep.mubr.bf16.mxu0 %v1635
  %3733 = vmatmul.mubr.bf16.gmra.mrb[0].mxu0 %v1632
  %v3734 = vpop.f32.mrb[0].mxu0
  %v3735 = vadd.f32 %v3084, %v3734
  %v3736 = vpop.f32.mrb[0].mxu0
  %v3737 = vpop.f32.mrb[0].mxu0
  %v3738 = vadd.f32 %v3087, %v3737
  %v3739 = vpop.f32.mrb[0].mxu0
  %3740 = vmatprep.mubr.bf16.mxu0 %v1650
  %3741 = vmatmul.mubr.bf16.gmra.mrb[0].mxu0 %v1636
  %v3742 = vpop.f32.mrb[0].mxu0
  %v3743 = vadd.f32 %v3092, %v3742
  %v3744 = vpop.f32.mrb[0].mxu0
  %v3745 = vpop.f32.mrb[0].mxu0
  %v3746 = vadd.f32 %v3095, %v3745
  %v3747 = vpop.f32.mrb[0].mxu0
  %3748 = vmatprep.mubr.bf16.mxu0 %v1647
  %3749 = vmatmul.mubr.bf16.gmra.mrb[0].mxu0 %v1656
  %v3750 = vpop.f32.mrb[0].mxu0
  %v3751 = vadd.f32 %v3100, %v3750
  %v3752 = vpop.f32.mrb[0].mxu0
  %v3753 = vpop.f32.mrb[0].mxu0
  %v3754 = vadd.f32 %v3103, %v3753
  %v3755 = vpop.f32.mrb[0].mxu0
  %3756 = vmatprep.mubr.bf16.mxu0 %v1653
  %3757 = vmatmul.mubr.bf16.gmra.mrb[0].mxu0 %v1648
  %v3758 = vpop.f32.mrb[0].mxu0
  %v3759 = vadd.f32 %v3108, %v3758
  %v3760 = vpop.f32.mrb[0].mxu0
  %v3761 = vpop.f32.mrb[0].mxu0
  %v3762 = vadd.f32 %v3111, %v3761
  %v3763 = vpop.f32.mrb[0].mxu0
  %3764 = vmatprep.mubr.bf16.mxu0 %v1668
  %3765 = vmatmul.mubr.bf16.gmra.mrb[0].mxu0 %v1667
  %v3766 = vpop.f32.mrb[0].mxu0
  %v3767 = vadd.f32 %v3116, %v3766
  %v3768 = vpop.f32.mrb[0].mxu0
  %v3769 = vpop.f32.mrb[0].mxu0
  %v3770 = vadd.f32 %v3119, %v3769
  %v3771 = vpop.f32.mrb[0].mxu0
  %3772 = vmatprep.mubr.bf16.mxu0 %v1663
  %3773 = vmatmul.mubr.bf16.gmra.mrb[0].mxu0 %v1660
  %v3774 = vpop.f32.mrb[0].mxu0
  %v3775 = vadd.f32 %v3124, %v3774
  %v3776 = vpop.f32.mrb[0].mxu0
  %v3777 = vpop.f32.mrb[0].mxu0
  %v3778 = vadd.f32 %v3127, %v3777
  %v3779 = vpop.f32.mrb[0].mxu0
  %3780 = vmatprep.mubr.bf16.mxu0 %v1678
  %3781 = vmatmul.mubr.bf16.gmra.mrb[0].mxu0 %v1664
  %v3782 = vpop.f32.mrb[0].mxu0
  %v3783 = vadd.f32 %v3132, %v3782
  %v3784 = vpop.f32.mrb[0].mxu0
  %v3785 = vpop.f32.mrb[0].mxu0
  %v3786 = vadd.f32 %v3135, %v3785
  %v3787 = vpop.f32.mrb[0].mxu0
  %3788 = vmatprep.mubr.bf16.mxu0 %v1675
  %3789 = vmatmul.mubr.bf16.gmra.mrb[0].mxu0 %v1684
  %v3790 = vpop.f32.mrb[0].mxu0
  %v3791 = vadd.f32 %v3140, %v3790
  %v3792 = vpop.f32.mrb[0].mxu0
  %v3793 = vpop.f32.mrb[0].mxu0
  %v3794 = vadd.f32 %v3143, %v3793
  %v3795 = vpop.f32.mrb[0].mxu0
  %3796 = vmatprep.mubr.bf16.mxu0 %v1681
  %3797 = vmatmul.mubr.bf16.gmra.mrb[0].mxu0 %v1676
  %v3798 = vpop.f32.mrb[0].mxu0
  %v3799 = vadd.f32 %v3148, %v3798
  %v3800 = vpop.f32.mrb[0].mxu0
  %v3801 = vpop.f32.mrb[0].mxu0
  %v3802 = vadd.f32 %v3151, %v3801
  %v3803 = vpop.f32.mrb[0].mxu0
  %3804 = vmatprep.mubr.bf16.mxu0 %v1696
  %3805 = vmatmul.mubr.bf16.gmra.mrb[0].mxu0 %v1695
  %v3806 = vpop.f32.mrb[0].mxu0
  %v3807 = vadd.f32 %v3156, %v3806
  %v3808 = vpop.f32.mrb[0].mxu0
  %v3809 = vpop.f32.mrb[0].mxu0
  %v3810 = vadd.f32 %v3159, %v3809
  %v3811 = vpop.f32.mrb[0].mxu0
  %3812 = vmatprep.mubr.bf16.mxu0 %v1691
  %3813 = vmatmul.mubr.bf16.gmra.mrb[0].mxu0 %v1688
  %v3814 = vpop.f32.mrb[0].mxu0
  %v3815 = vadd.f32 %v3164, %v3814
  %v3816 = vpop.f32.mrb[0].mxu0
  %v3817 = vpop.f32.mrb[0].mxu0
  %v3818 = vadd.f32 %v3167, %v3817
  %v3819 = vpop.f32.mrb[0].mxu0
  %3820 = vmatprep.mubr.bf16.mxu0 %v1706
  %3821 = vmatmul.mubr.bf16.gmra.mrb[0].mxu0 %v1692
  %v3822 = vpop.f32.mrb[0].mxu0
  %v3823 = vadd.f32 %v3172, %v3822
  %v3824 = vpop.f32.mrb[0].mxu0
  %v3825 = vpop.f32.mrb[0].mxu0
  %v3826 = vadd.f32 %v3175, %v3825
  %v3827 = vpop.f32.mrb[0].mxu0
  %3828 = vmatprep.mubr.bf16.mxu0 %v1703
  %3829 = vmatmul.mubr.bf16.gmra.mrb[0].mxu0 %v1712
  %v3830 = vpop.f32.mrb[0].mxu0
  %v3831 = vadd.f32 %v3180, %v3830
  %v3832 = vpop.f32.mrb[0].mxu0
  %v3833 = vpop.f32.mrb[0].mxu0
  %v3834 = vadd.f32 %v3183, %v3833
  %v3835 = vpop.f32.mrb[0].mxu0
  %3836 = vmatprep.mubr.bf16.mxu0 %v1709
  %3837 = vmatmul.mubr.bf16.gmra.mrb[0].mxu0 %v1704
  %v3838 = vpop.f32.mrb[0].mxu0
  %v3839 = vadd.f32 %v3188, %v3838
  %v3840 = vpop.f32.mrb[0].mxu0
  %v3841 = vpop.f32.mrb[0].mxu0
  %v3842 = vadd.f32 %v3191, %v3841
  %v3843 = vpop.f32.mrb[0].mxu0
  %3844 = vmatprep.mubr.bf16.mxu0 %v1724
  %3845 = vmatmul.mubr.bf16.gmra.mrb[0].mxu0 %v1723
  %v3846 = vpop.f32.mrb[0].mxu0
  %v3847 = vadd.f32 %v3196, %v3846
  %v3848 = vpop.f32.mrb[0].mxu0
  %v3849 = vpop.f32.mrb[0].mxu0
  %v3850 = vadd.f32 %v3199, %v3849
  %v3851 = vpop.f32.mrb[0].mxu0
  %3852 = vmatprep.mubr.bf16.mxu0 %v1719
  %3853 = vmatmul.mubr.bf16.gmra.mrb[0].mxu0 %v1716
  %v3854 = vpop.f32.mrb[0].mxu0
  %v3855 = vadd.f32 %v3204, %v3854
  %v3856 = vpop.f32.mrb[0].mxu0
  %v3857 = vpop.f32.mrb[0].mxu0
  %v3858 = vadd.f32 %v3207, %v3857
  %v3859 = vpop.f32.mrb[0].mxu0
  %3860 = vmatprep.mubr.bf16.mxu0 %v1734
  %3861 = vmatmul.mubr.bf16.gmra.mrb[0].mxu0 %v1720
  %v3862 = vpop.f32.mrb[0].mxu0
  %v3863 = vadd.f32 %v3212, %v3862
  %v3864 = vpop.f32.mrb[0].mxu0
  %v3865 = vpop.f32.mrb[0].mxu0
  %v3866 = vadd.f32 %v3215, %v3865
  %v3867 = vpop.f32.mrb[0].mxu0
  %3868 = vmatprep.mubr.bf16.mxu0 %v1731
  %3869 = vmatmul.mubr.bf16.gmra.mrb[0].mxu0 %v1740
  %v3870 = vpop.f32.mrb[0].mxu0
  %v3871 = vpop.f32.mrb[0].mxu0
  %v3872 = vpop.f32.mrb[0].mxu0
  %v3873 = vpop.f32.mrb[0].mxu0
  %3874 = vmatprep.mubr.bf16.mxu0 %v1737
  %3875 = vmatmul.mubr.bf16.gmra.mrb[0].mxu0 %v1732
  %v3876 = vpop.f32.mrb[0].mxu0
  %v3877 = vpop.f32.mrb[0].mxu0
  %v3878 = vpop.f32.mrb[0].mxu0
  %v3879 = vpop.f32.mrb[0].mxu0
  %3880 = vmatprep.mubr.bf16.mxu0 %v1752
  %3881 = vmatmul.mubr.bf16.gmra.mrb[0].mxu0 %v1751
  %v3882 = vpop.f32.mrb[0].mxu0
  %v3883 = vpop.f32.mrb[0].mxu0
  %v3884 = vpop.f32.mrb[0].mxu0
  %v3885 = vpop.f32.mrb[0].mxu0
  %3886 = vdwg.mxu0
  %3887 = vmatprep.subr.bf16.mxu0 0
  %3888 = vmatpush1.bf16.msra.mxu0 %v2489
  %3889 = vmatprep.subr.bf16.mxu0 0
  %3890 = vmatpush1.bf16.msra.mxu0 %v2490
  %3891 = vmatprep.subr.bf16.mxu0 0
  %3892 = vmatpush1.bf16.msra.mxu0 %v2491
  %3893 = vmatprep.subr.bf16.mxu0 0
  %3894 = vmatpush1.bf16.msra.mxu0 %v2492
  %3895 = vmatprep.subr.bf16.mxu0 0
  %3896 = vmatpush1.bf16.msra.mxu0 %v2493
  %3897 = vmatprep.subr.bf16.mxu0 0
  %3898 = vmatpush1.bf16.msra.mxu0 %v2494
  %3899 = vmatprep.subr.bf16.mxu0 0
  %3900 = vmatpush1.bf16.msra.mxu0 %v2495
  %3901 = vmatprep.subr.bf16.mxu0 0
  %3902 = vmatpush1.bf16.msra.mxu0 %v2496
  %3903 = vmatprep.subr.bf16.mxu0 0
  %3904 = vmatpush1.bf16.msra.mxu0 %v2497
  %3905 = vmatprep.subr.bf16.mxu0 0
  %3906 = vmatpush1.bf16.msra.mxu0 %v2498
  %3907 = vmatprep.subr.bf16.mxu0 0
  %3908 = vmatpush1.bf16.msra.mxu0 %v2499
  %3909 = vmatprep.subr.bf16.mxu0 0
  %3910 = vmatpush1.bf16.msra.mxu0 %v2500
  %3911 = vmatprep.subr.bf16.mxu0 0
  %3912 = vmatpush1.bf16.msra.mxu0 %v2501
  %3913 = vmatprep.subr.bf16.mxu0 0
  %3914 = vmatpush1.bf16.msra.mxu0 %v2502
  %3915 = vmatprep.subr.bf16.mxu0 0
  %3916 = vmatpush1.bf16.msra.mxu0 %v2503
  %3917 = vmatprep.subr.bf16.mxu0 0
  %3918 = vmatpush1.bf16.msra.mxu0 %v2504
  %3919 = vmatprep.mubr.bf16.mxu0 %v1318
  %3920 = vmatmul.mubr.bf16.gmra.mrb[0].mxu0 %v1317
  %v3921 = vpop.f32.mrb[0].mxu0
  %v3922 = vadd.f32 %v3271, %v3921
  %v3923 = vpop.f32.mrb[0].mxu0
  %v3924 = vpop.f32.mrb[0].mxu0
  %v3925 = vadd.f32 %v3274, %v3924
  %v3926 = vpop.f32.mrb[0].mxu0
  %3927 = vmatprep.mubr.bf16.mxu0 %v1326
  %3928 = vmatmul.mubr.bf16.gmra.mrb[0].mxu0 %v1325
  %v3929 = vpop.f32.mrb[0].mxu0
  %v3930 = vadd.f32 %v3279, %v3929
  %v3931 = vpop.f32.mrb[0].mxu0
  %v3932 = vpop.f32.mrb[0].mxu0
  %v3933 = vadd.f32 %v3282, %v3932
  %v3934 = vpop.f32.mrb[0].mxu0
  %3935 = vmatprep.mubr.bf16.mxu0 %v1334
  %3936 = vmatmul.mubr.bf16.gmra.mrb[0].mxu0 %v1333
  %v3937 = vpop.f32.mrb[0].mxu0
  %v3938 = vadd.f32 %v3287, %v3937
  %v3939 = vpop.f32.mrb[0].mxu0
  %v3940 = vpop.f32.mrb[0].mxu0
  %v3941 = vadd.f32 %v3290, %v3940
  %v3942 = vpop.f32.mrb[0].mxu0
  %3943 = vmatprep.mubr.bf16.mxu0 %v1338
  %3944 = vmatmul.mubr.bf16.gmra.mrb[0].mxu0 %v1337
  %v3945 = vpop.f32.mrb[0].mxu0
  %v3946 = vadd.f32 %v3295, %v3945
  %v3947 = vpop.f32.mrb[0].mxu0
  %v3948 = vpop.f32.mrb[0].mxu0
  %v3949 = vadd.f32 %v3298, %v3948
  %v3950 = vpop.f32.mrb[0].mxu0
  %3951 = vmatprep.mubr.bf16.mxu0 %v1344
  %3952 = vmatmul.mubr.bf16.gmra.mrb[0].mxu0 %v1343
  %v3953 = vpop.f32.mrb[0].mxu0
  %v3954 = vadd.f32 %v3303, %v3953
  %v3955 = vpop.f32.mrb[0].mxu0
  %v3956 = vpop.f32.mrb[0].mxu0
  %v3957 = vadd.f32 %v3306, %v3956
  %v3958 = vpop.f32.mrb[0].mxu0
  %3959 = vmatprep.mubr.bf16.mxu0 %v1350
  %3960 = vmatmul.mubr.bf16.gmra.mrb[0].mxu0 %v1349
  %v3961 = vpop.f32.mrb[0].mxu0
  %v3962 = vadd.f32 %v3311, %v3961
  %v3963 = vpop.f32.mrb[0].mxu0
  %v3964 = vpop.f32.mrb[0].mxu0
  %v3965 = vadd.f32 %v3314, %v3964
  %v3966 = vpop.f32.mrb[0].mxu0
  %3967 = vmatprep.mubr.bf16.mxu0 %v1354
  %3968 = vmatmul.mubr.bf16.gmra.mrb[0].mxu0 %v1353
  %v3969 = vpop.f32.mrb[0].mxu0
  %v3970 = vadd.f32 %v3319, %v3969
  %v3971 = vpop.f32.mrb[0].mxu0
  %v3972 = vpop.f32.mrb[0].mxu0
  %v3973 = vadd.f32 %v3322, %v3972
  %v3974 = vpop.f32.mrb[0].mxu0
  %3975 = vmatprep.mubr.bf16.mxu0 %v1362
  %3976 = vmatmul.mubr.bf16.gmra.mrb[0].mxu0 %v1361
  %v3977 = vpop.f32.mrb[0].mxu0
  %v3978 = vadd.f32 %v3327, %v3977
  %v3979 = vpop.f32.mrb[0].mxu0
  %v3980 = vpop.f32.mrb[0].mxu0
  %v3981 = vadd.f32 %v3330, %v3980
  %v3982 = vpop.f32.mrb[0].mxu0
  %3983 = vmatprep.mubr.bf16.mxu0 %v1366
  %3984 = vmatmul.mubr.bf16.gmra.mrb[0].mxu0 %v1365
  %v3985 = vpop.f32.mrb[0].mxu0
  %v3986 = vadd.f32 %v3335, %v3985
  %v3987 = vpop.f32.mrb[0].mxu0
  %v3988 = vpop.f32.mrb[0].mxu0
  %v3989 = vadd.f32 %v3338, %v3988
  %v3990 = vpop.f32.mrb[0].mxu0
  %3991 = vmatprep.mubr.bf16.mxu0 %v1372
  %3992 = vmatmul.mubr.bf16.gmra.mrb[0].mxu0 %v1371
  %v3993 = vpop.f32.mrb[0].mxu0
  %v3994 = vadd.f32 %v3343, %v3993
  %v3995 = vpop.f32.mrb[0].mxu0
  %v3996 = vpop.f32.mrb[0].mxu0
  %v3997 = vadd.f32 %v3346, %v3996
  %v3998 = vpop.f32.mrb[0].mxu0
  %3999 = vmatprep.mubr.bf16.mxu0 %v1378
  %4000 = vmatmul.mubr.bf16.gmra.mrb[0].mxu0 %v1377
  %v4001 = vpop.f32.mrb[0].mxu0
  %v4002 = vadd.f32 %v3351, %v4001
  %v4003 = vpop.f32.mrb[0].mxu0
  %v4004 = vpop.f32.mrb[0].mxu0
  %v4005 = vadd.f32 %v3354, %v4004
  %v4006 = vpop.f32.mrb[0].mxu0
  %4007 = vmatprep.mubr.bf16.mxu0 %v1382
  %4008 = vmatmul.mubr.bf16.gmra.mrb[0].mxu0 %v1381
  %v4009 = vpop.f32.mrb[0].mxu0
  %v4010 = vadd.f32 %v3359, %v4009
  %v4011 = vpop.f32.mrb[0].mxu0
  %v4012 = vpop.f32.mrb[0].mxu0
  %v4013 = vadd.f32 %v3362, %v4012
  %v4014 = vpop.f32.mrb[0].mxu0
  %4015 = vmatprep.mubr.bf16.mxu0 %v1390
  %4016 = vmatmul.mubr.bf16.gmra.mrb[0].mxu0 %v1389
  %v4017 = vpop.f32.mrb[0].mxu0
  %v4018 = vadd.f32 %v3367, %v4017
  %v4019 = vpop.f32.mrb[0].mxu0
  %v4020 = vpop.f32.mrb[0].mxu0
  %v4021 = vadd.f32 %v3370, %v4020
  %v4022 = vpop.f32.mrb[0].mxu0
  %4023 = vmatprep.mubr.bf16.mxu0 %v1394
  %4024 = vmatmul.mubr.bf16.gmra.mrb[0].mxu0 %v1393
  %v4025 = vpop.f32.mrb[0].mxu0
  %v4026 = vadd.f32 %v3375, %v4025
  %v4027 = vpop.f32.mrb[0].mxu0
  %v4028 = vpop.f32.mrb[0].mxu0
  %v4029 = vadd.f32 %v3378, %v4028
  %v4030 = vpop.f32.mrb[0].mxu0
  %4031 = vmatprep.mubr.bf16.mxu0 %v1400
  %4032 = vmatmul.mubr.bf16.gmra.mrb[0].mxu0 %v1399
  %v4033 = vpop.f32.mrb[0].mxu0
  %v4034 = vadd.f32 %v3383, %v4033
  %v4035 = vpop.f32.mrb[0].mxu0
  %v4036 = vpop.f32.mrb[0].mxu0
  %v4037 = vadd.f32 %v3386, %v4036
  %v4038 = vpop.f32.mrb[0].mxu0
  %4039 = vmatprep.mubr.bf16.mxu0 %v1406
  %4040 = vmatmul.mubr.bf16.gmra.mrb[0].mxu0 %v1405
  %v4041 = vpop.f32.mrb[0].mxu0
  %v4042 = vadd.f32 %v3391, %v4041
  %v4043 = vpop.f32.mrb[0].mxu0
  %v4044 = vpop.f32.mrb[0].mxu0
  %v4045 = vadd.f32 %v3394, %v4044
  %v4046 = vpop.f32.mrb[0].mxu0
  %4047 = vmatprep.mubr.bf16.mxu0 %v1410
  %4048 = vmatmul.mubr.bf16.gmra.mrb[0].mxu0 %v1409
  %v4049 = vpop.f32.mrb[0].mxu0
  %v4050 = vadd.f32 %v3399, %v4049
  %v4051 = vpop.f32.mrb[0].mxu0
  %v4052 = vpop.f32.mrb[0].mxu0
  %v4053 = vadd.f32 %v3402, %v4052
  %v4054 = vpop.f32.mrb[0].mxu0
  %4055 = vmatprep.mubr.bf16.mxu0 %v1418
  %4056 = vmatmul.mubr.bf16.gmra.mrb[0].mxu0 %v1417
  %v4057 = vpop.f32.mrb[0].mxu0
  %v4058 = vadd.f32 %v3407, %v4057
  %v4059 = vpop.f32.mrb[0].mxu0
  %v4060 = vpop.f32.mrb[0].mxu0
  %v4061 = vadd.f32 %v3410, %v4060
  %v4062 = vpop.f32.mrb[0].mxu0
  %4063 = vmatprep.mubr.bf16.mxu0 %v1422
  %4064 = vmatmul.mubr.bf16.gmra.mrb[0].mxu0 %v1421
  %v4065 = vpop.f32.mrb[0].mxu0
  %v4066 = vadd.f32 %v3415, %v4065
  %v4067 = vpop.f32.mrb[0].mxu0
  %v4068 = vpop.f32.mrb[0].mxu0
  %v4069 = vadd.f32 %v3418, %v4068
  %v4070 = vpop.f32.mrb[0].mxu0
  %4071 = vmatprep.mubr.bf16.mxu0 %v1428
  %4072 = vmatmul.mubr.bf16.gmra.mrb[0].mxu0 %v1427
  %v4073 = vpop.f32.mrb[0].mxu0
  %v4074 = vadd.f32 %v3423, %v4073
  %v4075 = vpop.f32.mrb[0].mxu0
  %v4076 = vpop.f32.mrb[0].mxu0
  %v4077 = vadd.f32 %v3426, %v4076
  %v4078 = vpop.f32.mrb[0].mxu0
  %4079 = vmatprep.mubr.bf16.mxu0 %v1434
  %4080 = vmatmul.mubr.bf16.gmra.mrb[0].mxu0 %v1433
  %v4081 = vpop.f32.mrb[0].mxu0
  %v4082 = vadd.f32 %v3431, %v4081
  %v4083 = vpop.f32.mrb[0].mxu0
  %v4084 = vpop.f32.mrb[0].mxu0
  %v4085 = vadd.f32 %v3434, %v4084
  %v4086 = vpop.f32.mrb[0].mxu0
  %4087 = vmatprep.mubr.bf16.mxu0 %v1438
  %4088 = vmatmul.mubr.bf16.gmra.mrb[0].mxu0 %v1437
  %v4089 = vpop.f32.mrb[0].mxu0
  %v4090 = vadd.f32 %v3439, %v4089
  %v4091 = vpop.f32.mrb[0].mxu0
  %v4092 = vpop.f32.mrb[0].mxu0
  %v4093 = vadd.f32 %v3442, %v4092
  %v4094 = vpop.f32.mrb[0].mxu0
  %4095 = vmatprep.mubr.bf16.mxu0 %v1446
  %4096 = vmatmul.mubr.bf16.gmra.mrb[0].mxu0 %v1445
  %v4097 = vpop.f32.mrb[0].mxu0
  %v4098 = vadd.f32 %v3447, %v4097
  %v4099 = vpop.f32.mrb[0].mxu0
  %v4100 = vpop.f32.mrb[0].mxu0
  %v4101 = vadd.f32 %v3450, %v4100
  %v4102 = vpop.f32.mrb[0].mxu0
  %4103 = vmatprep.mubr.bf16.mxu0 %v1450
  %4104 = vmatmul.mubr.bf16.gmra.mrb[0].mxu0 %v1449
  %v4105 = vpop.f32.mrb[0].mxu0
  %v4106 = vadd.f32 %v3455, %v4105
  %v4107 = vpop.f32.mrb[0].mxu0
  %v4108 = vpop.f32.mrb[0].mxu0
  %v4109 = vadd.f32 %v3458, %v4108
  %v4110 = vpop.f32.mrb[0].mxu0
  %4111 = vmatprep.mubr.bf16.mxu0 %v1456
  %4112 = vmatmul.mubr.bf16.gmra.mrb[0].mxu0 %v1455
  %v4113 = vpop.f32.mrb[0].mxu0
  %v4114 = vadd.f32 %v3463, %v4113
  %v4115 = vpop.f32.mrb[0].mxu0
  %v4116 = vpop.f32.mrb[0].mxu0
  %v4117 = vadd.f32 %v3466, %v4116
  %v4118 = vpop.f32.mrb[0].mxu0
  %4119 = vmatprep.mubr.bf16.mxu0 %v1462
  %4120 = vmatmul.mubr.bf16.gmra.mrb[0].mxu0 %v1461
  %v4121 = vpop.f32.mrb[0].mxu0
  %v4122 = vadd.f32 %v3471, %v4121
  %v4123 = vpop.f32.mrb[0].mxu0
  %v4124 = vpop.f32.mrb[0].mxu0
  %v4125 = vadd.f32 %v3474, %v4124
  %v4126 = vpop.f32.mrb[0].mxu0
  %4127 = vmatprep.mubr.bf16.mxu0 %v1466
  %4128 = vmatmul.mubr.bf16.gmra.mrb[0].mxu0 %v1465
  %v4129 = vpop.f32.mrb[0].mxu0
  %v4130 = vadd.f32 %v3479, %v4129
  %v4131 = vpop.f32.mrb[0].mxu0
  %v4132 = vpop.f32.mrb[0].mxu0
  %v4133 = vadd.f32 %v3482, %v4132
  %v4134 = vpop.f32.mrb[0].mxu0
  %4135 = vmatprep.mubr.bf16.mxu0 %v1474
  %4136 = vmatmul.mubr.bf16.gmra.mrb[0].mxu0 %v1473
  %v4137 = vpop.f32.mrb[0].mxu0
  %v4138 = vadd.f32 %v3487, %v4137
  %v4139 = vpop.f32.mrb[0].mxu0
  %v4140 = vpop.f32.mrb[0].mxu0
  %v4141 = vadd.f32 %v3490, %v4140
  %v4142 = vpop.f32.mrb[0].mxu0
  %4143 = vmatprep.mubr.bf16.mxu0 %v1478
  %4144 = vmatmul.mubr.bf16.gmra.mrb[0].mxu0 %v1477
  %v4145 = vpop.f32.mrb[0].mxu0
  %v4146 = vadd.f32 %v3495, %v4145
  %v4147 = vpop.f32.mrb[0].mxu0
  %v4148 = vpop.f32.mrb[0].mxu0
  %v4149 = vadd.f32 %v3498, %v4148
  %v4150 = vpop.f32.mrb[0].mxu0
  %4151 = vmatprep.mubr.bf16.mxu0 %v1484
  %4152 = vmatmul.mubr.bf16.gmra.mrb[0].mxu0 %v1483
  %v4153 = vpop.f32.mrb[0].mxu0
  %v4154 = vadd.f32 %v3503, %v4153
  %v4155 = vpop.f32.mrb[0].mxu0
  %v4156 = vpop.f32.mrb[0].mxu0
  %v4157 = vadd.f32 %v3506, %v4156
  %v4158 = vpop.f32.mrb[0].mxu0
  %4159 = vmatprep.mubr.bf16.mxu0 %v1490
  %4160 = vmatmul.mubr.bf16.gmra.mrb[0].mxu0 %v1489
  %v4161 = vpop.f32.mrb[0].mxu0
  %v4162 = vadd.f32 %v3511, %v4161
  %v4163 = vpop.f32.mrb[0].mxu0
  %v4164 = vpop.f32.mrb[0].mxu0
  %v4165 = vadd.f32 %v3514, %v4164
  %v4166 = vpop.f32.mrb[0].mxu0
  %4167 = vmatprep.mubr.bf16.mxu0 %v1494
  %4168 = vmatmul.mubr.bf16.gmra.mrb[0].mxu0 %v1493
  %v4169 = vpop.f32.mrb[0].mxu0
  %v4170 = vadd.f32 %v3519, %v4169
  %v4171 = vpop.f32.mrb[0].mxu0
  %v4172 = vpop.f32.mrb[0].mxu0
  %v4173 = vadd.f32 %v3522, %v4172
  %v4174 = vpop.f32.mrb[0].mxu0
  %4175 = vmatprep.mubr.bf16.mxu0 %v1502
  %4176 = vmatmul.mubr.bf16.gmra.mrb[0].mxu0 %v1501
  %v4177 = vpop.f32.mrb[0].mxu0
  %v4178 = vadd.f32 %v3527, %v4177
  %v4179 = vpop.f32.mrb[0].mxu0
  %v4180 = vpop.f32.mrb[0].mxu0
  %v4181 = vadd.f32 %v3530, %v4180
  %v4182 = vpop.f32.mrb[0].mxu0
  %4183 = vmatprep.mubr.bf16.mxu0 %v1506
  %4184 = vmatmul.mubr.bf16.gmra.mrb[0].mxu0 %v1505
  %v4185 = vpop.f32.mrb[0].mxu0
  %v4186 = vadd.f32 %v3535, %v4185
  %v4187 = vpop.f32.mrb[0].mxu0
  %v4188 = vpop.f32.mrb[0].mxu0
  %v4189 = vadd.f32 %v3538, %v4188
  %v4190 = vpop.f32.mrb[0].mxu0
  %4191 = vmatprep.mubr.bf16.mxu0 %v1512
  %4192 = vmatmul.mubr.bf16.gmra.mrb[0].mxu0 %v1511
  %v4193 = vpop.f32.mrb[0].mxu0
  %v4194 = vadd.f32 %v3543, %v4193
  %v4195 = vpop.f32.mrb[0].mxu0
  %v4196 = vpop.f32.mrb[0].mxu0
  %v4197 = vadd.f32 %v3546, %v4196
  %v4198 = vpop.f32.mrb[0].mxu0
  %4199 = vmatprep.mubr.bf16.mxu0 %v1518
  %4200 = vmatmul.mubr.bf16.gmra.mrb[0].mxu0 %v1517
  %v4201 = vpop.f32.mrb[0].mxu0
  %v4202 = vadd.f32 %v3551, %v4201
  %v4203 = vpop.f32.mrb[0].mxu0
  %v4204 = vpop.f32.mrb[0].mxu0
  %v4205 = vadd.f32 %v3554, %v4204
  %v4206 = vpop.f32.mrb[0].mxu0
  %4207 = vmatprep.mubr.bf16.mxu0 %v1522
  %4208 = vmatmul.mubr.bf16.gmra.mrb[0].mxu0 %v1521
  %v4209 = vpop.f32.mrb[0].mxu0
  %v4210 = vadd.f32 %v3559, %v4209
  %v4211 = vpop.f32.mrb[0].mxu0
  %v4212 = vpop.f32.mrb[0].mxu0
  %v4213 = vadd.f32 %v3562, %v4212
  %v4214 = vpop.f32.mrb[0].mxu0
  %4215 = vmatprep.mubr.bf16.mxu0 %v1530
  %4216 = vmatmul.mubr.bf16.gmra.mrb[0].mxu0 %v1529
  %v4217 = vpop.f32.mrb[0].mxu0
  %v4218 = vadd.f32 %v3567, %v4217
  %v4219 = vpop.f32.mrb[0].mxu0
  %v4220 = vpop.f32.mrb[0].mxu0
  %v4221 = vadd.f32 %v3570, %v4220
  %v4222 = vpop.f32.mrb[0].mxu0
  %4223 = vmatprep.mubr.bf16.mxu0 %v1534
  %4224 = vmatmul.mubr.bf16.gmra.mrb[0].mxu0 %v1533
  %v4225 = vpop.f32.mrb[0].mxu0
  %v4226 = vadd.f32 %v3575, %v4225
  %v4227 = vpop.f32.mrb[0].mxu0
  %v4228 = vpop.f32.mrb[0].mxu0
  %v4229 = vadd.f32 %v3578, %v4228
  %v4230 = vpop.f32.mrb[0].mxu0
  %4231 = vmatprep.mubr.bf16.mxu0 %v1540
  %4232 = vmatmul.mubr.bf16.gmra.mrb[0].mxu0 %v1539
  %v4233 = vpop.f32.mrb[0].mxu0
  %v4234 = vadd.f32 %v3583, %v4233
  %v4235 = vpop.f32.mrb[0].mxu0
  %v4236 = vpop.f32.mrb[0].mxu0
  %v4237 = vadd.f32 %v3586, %v4236
  %v4238 = vpop.f32.mrb[0].mxu0
  %4239 = vmatprep.mubr.bf16.mxu0 %v1546
  %4240 = vmatmul.mubr.bf16.gmra.mrb[0].mxu0 %v1545
  %v4241 = vpop.f32.mrb[0].mxu0
  %v4242 = vadd.f32 %v3591, %v4241
  %v4243 = vpop.f32.mrb[0].mxu0
  %v4244 = vpop.f32.mrb[0].mxu0
  %v4245 = vadd.f32 %v3594, %v4244
  %v4246 = vpop.f32.mrb[0].mxu0
  %4247 = vmatprep.mubr.bf16.mxu0 %v1550
  %4248 = vmatmul.mubr.bf16.gmra.mrb[0].mxu0 %v1549
  %v4249 = vpop.f32.mrb[0].mxu0
  %v4250 = vadd.f32 %v3599, %v4249
  %v4251 = vpop.f32.mrb[0].mxu0
  %v4252 = vpop.f32.mrb[0].mxu0
  %v4253 = vadd.f32 %v3602, %v4252
  %v4254 = vpop.f32.mrb[0].mxu0
  %4255 = vmatprep.mubr.bf16.mxu0 %v1558
  %4256 = vmatmul.mubr.bf16.gmra.mrb[0].mxu0 %v1557
  %v4257 = vpop.f32.mrb[0].mxu0
  %v4258 = vadd.f32 %v3607, %v4257
  %v4259 = vpop.f32.mrb[0].mxu0
  %v4260 = vpop.f32.mrb[0].mxu0
  %v4261 = vadd.f32 %v3610, %v4260
  %v4262 = vpop.f32.mrb[0].mxu0
  %4263 = vmatprep.mubr.bf16.mxu0 %v1562
  %4264 = vmatmul.mubr.bf16.gmra.mrb[0].mxu0 %v1561
  %v4265 = vpop.f32.mrb[0].mxu0
  %v4266 = vadd.f32 %v3615, %v4265
  %v4267 = vpop.f32.mrb[0].mxu0
  %v4268 = vpop.f32.mrb[0].mxu0
  %v4269 = vadd.f32 %v3618, %v4268
  %v4270 = vpop.f32.mrb[0].mxu0
  %4271 = vmatprep.mubr.bf16.mxu0 %v1568
  %4272 = vmatmul.mubr.bf16.gmra.mrb[0].mxu0 %v1567
  %v4273 = vpop.f32.mrb[0].mxu0
  %v4274 = vadd.f32 %v3623, %v4273
  %v4275 = vpop.f32.mrb[0].mxu0
  %v4276 = vpop.f32.mrb[0].mxu0
  %v4277 = vadd.f32 %v3626, %v4276
  %v4278 = vpop.f32.mrb[0].mxu0
  %4279 = vmatprep.mubr.bf16.mxu0 %v1574
  %4280 = vmatmul.mubr.bf16.gmra.mrb[0].mxu0 %v1573
  %v4281 = vpop.f32.mrb[0].mxu0
  %v4282 = vadd.f32 %v3631, %v4281
  %v4283 = vpop.f32.mrb[0].mxu0
  %v4284 = vpop.f32.mrb[0].mxu0
  %v4285 = vadd.f32 %v3634, %v4284
  %v4286 = vpop.f32.mrb[0].mxu0
  %4287 = vmatprep.mubr.bf16.mxu0 %v1578
  %4288 = vmatmul.mubr.bf16.gmra.mrb[0].mxu0 %v1577
  %v4289 = vpop.f32.mrb[0].mxu0
  %v4290 = vadd.f32 %v3639, %v4289
  %v4291 = vpop.f32.mrb[0].mxu0
  %v4292 = vpop.f32.mrb[0].mxu0
  %v4293 = vadd.f32 %v3642, %v4292
  %v4294 = vpop.f32.mrb[0].mxu0
  %4295 = vmatprep.mubr.bf16.mxu0 %v1586
  %4296 = vmatmul.mubr.bf16.gmra.mrb[0].mxu0 %v1585
  %v4297 = vpop.f32.mrb[0].mxu0
  %v4298 = vadd.f32 %v3647, %v4297
  %v4299 = vpop.f32.mrb[0].mxu0
  %v4300 = vpop.f32.mrb[0].mxu0
  %v4301 = vadd.f32 %v3650, %v4300
  %v4302 = vpop.f32.mrb[0].mxu0
  %4303 = vmatprep.mubr.bf16.mxu0 %v1590
  %4304 = vmatmul.mubr.bf16.gmra.mrb[0].mxu0 %v1589
  %v4305 = vpop.f32.mrb[0].mxu0
  %v4306 = vadd.f32 %v3655, %v4305
  %v4307 = vpop.f32.mrb[0].mxu0
  %v4308 = vpop.f32.mrb[0].mxu0
  %v4309 = vadd.f32 %v3658, %v4308
  %v4310 = vpop.f32.mrb[0].mxu0
  %4311 = vmatprep.mubr.bf16.mxu0 %v1596
  %4312 = vmatmul.mubr.bf16.gmra.mrb[0].mxu0 %v1595
  %v4313 = vpop.f32.mrb[0].mxu0
  %v4314 = vadd.f32 %v3663, %v4313
  %v4315 = vpop.f32.mrb[0].mxu0
  %v4316 = vpop.f32.mrb[0].mxu0
  %v4317 = vadd.f32 %v3666, %v4316
  %v4318 = vpop.f32.mrb[0].mxu0
  %4319 = vmatprep.mubr.bf16.mxu0 %v1602
  %4320 = vmatmul.mubr.bf16.gmra.mrb[0].mxu0 %v1601
  %v4321 = vpop.f32.mrb[0].mxu0
  %v4322 = vadd.f32 %v3671, %v4321
  %v4323 = vpop.f32.mrb[0].mxu0
  %v4324 = vpop.f32.mrb[0].mxu0
  %v4325 = vadd.f32 %v3674, %v4324
  %v4326 = vpop.f32.mrb[0].mxu0
  %4327 = vmatprep.mubr.bf16.mxu0 %v1606
  %4328 = vmatmul.mubr.bf16.gmra.mrb[0].mxu0 %v1605
  %v4329 = vpop.f32.mrb[0].mxu0
  %v4330 = vadd.f32 %v3679, %v4329
  %v4331 = vpop.f32.mrb[0].mxu0
  %v4332 = vpop.f32.mrb[0].mxu0
  %v4333 = vadd.f32 %v3682, %v4332
  %v4334 = vpop.f32.mrb[0].mxu0
  %4335 = vmatprep.mubr.bf16.mxu0 %v1614
  %4336 = vmatmul.mubr.bf16.gmra.mrb[0].mxu0 %v1613
  %v4337 = vpop.f32.mrb[0].mxu0
  %v4338 = vadd.f32 %v3687, %v4337
  %v4339 = vpop.f32.mrb[0].mxu0
  %v4340 = vpop.f32.mrb[0].mxu0
  %v4341 = vadd.f32 %v3690, %v4340
  %v4342 = vpop.f32.mrb[0].mxu0
  %4343 = vmatprep.mubr.bf16.mxu0 %v1618
  %4344 = vmatmul.mubr.bf16.gmra.mrb[0].mxu0 %v1617
  %v4345 = vpop.f32.mrb[0].mxu0
  %v4346 = vadd.f32 %v3695, %v4345
  %v4347 = vpop.f32.mrb[0].mxu0
  %v4348 = vpop.f32.mrb[0].mxu0
  %v4349 = vadd.f32 %v3698, %v4348
  %v4350 = vpop.f32.mrb[0].mxu0
  %4351 = vmatprep.mubr.bf16.mxu0 %v1624
  %4352 = vmatmul.mubr.bf16.gmra.mrb[0].mxu0 %v1623
  %v4353 = vpop.f32.mrb[0].mxu0
  %v4354 = vadd.f32 %v3703, %v4353
  %v4355 = vpop.f32.mrb[0].mxu0
  %v4356 = vpop.f32.mrb[0].mxu0
  %v4357 = vadd.f32 %v3706, %v4356
  %v4358 = vpop.f32.mrb[0].mxu0
  %4359 = vmatprep.mubr.bf16.mxu0 %v1630
  %4360 = vmatmul.mubr.bf16.gmra.mrb[0].mxu0 %v1629
  %v4361 = vpop.f32.mrb[0].mxu0
  %v4362 = vadd.f32 %v3711, %v4361
  %v4363 = vpop.f32.mrb[0].mxu0
  %v4364 = vpop.f32.mrb[0].mxu0
  %v4365 = vadd.f32 %v3714, %v4364
  %v4366 = vpop.f32.mrb[0].mxu0
  %4367 = vmatprep.mubr.bf16.mxu0 %v1634
  %4368 = vmatmul.mubr.bf16.gmra.mrb[0].mxu0 %v1633
  %v4369 = vpop.f32.mrb[0].mxu0
  %v4370 = vadd.f32 %v3719, %v4369
  %v4371 = vpop.f32.mrb[0].mxu0
  %v4372 = vpop.f32.mrb[0].mxu0
  %v4373 = vadd.f32 %v3722, %v4372
  %v4374 = vpop.f32.mrb[0].mxu0
  %4375 = vmatprep.mubr.bf16.mxu0 %v1642
  %4376 = vmatmul.mubr.bf16.gmra.mrb[0].mxu0 %v1641
  %v4377 = vpop.f32.mrb[0].mxu0
  %v4378 = vadd.f32 %v3727, %v4377
  %v4379 = vpop.f32.mrb[0].mxu0
  %v4380 = vpop.f32.mrb[0].mxu0
  %v4381 = vadd.f32 %v3730, %v4380
  %v4382 = vpop.f32.mrb[0].mxu0
  %4383 = vmatprep.mubr.bf16.mxu0 %v1646
  %4384 = vmatmul.mubr.bf16.gmra.mrb[0].mxu0 %v1645
  %v4385 = vpop.f32.mrb[0].mxu0
  %v4386 = vadd.f32 %v3735, %v4385
  %v4387 = vpop.f32.mrb[0].mxu0
  %v4388 = vpop.f32.mrb[0].mxu0
  %v4389 = vadd.f32 %v3738, %v4388
  %v4390 = vpop.f32.mrb[0].mxu0
  %4391 = vmatprep.mubr.bf16.mxu0 %v1652
  %4392 = vmatmul.mubr.bf16.gmra.mrb[0].mxu0 %v1651
  %v4393 = vpop.f32.mrb[0].mxu0
  %v4394 = vadd.f32 %v3743, %v4393
  %v4395 = vpop.f32.mrb[0].mxu0
  %v4396 = vpop.f32.mrb[0].mxu0
  %v4397 = vadd.f32 %v3746, %v4396
  %v4398 = vpop.f32.mrb[0].mxu0
  %4399 = vmatprep.mubr.bf16.mxu0 %v1658
  %4400 = vmatmul.mubr.bf16.gmra.mrb[0].mxu0 %v1657
  %v4401 = vpop.f32.mrb[0].mxu0
  %v4402 = vadd.f32 %v3751, %v4401
  %v4403 = vpop.f32.mrb[0].mxu0
  %v4404 = vpop.f32.mrb[0].mxu0
  %v4405 = vadd.f32 %v3754, %v4404
  %v4406 = vpop.f32.mrb[0].mxu0
  %4407 = vmatprep.mubr.bf16.mxu0 %v1662
  %4408 = vmatmul.mubr.bf16.gmra.mrb[0].mxu0 %v1661
  %v4409 = vpop.f32.mrb[0].mxu0
  %v4410 = vadd.f32 %v3759, %v4409
  %v4411 = vpop.f32.mrb[0].mxu0
  %v4412 = vpop.f32.mrb[0].mxu0
  %v4413 = vadd.f32 %v3762, %v4412
  %v4414 = vpop.f32.mrb[0].mxu0
  %4415 = vmatprep.mubr.bf16.mxu0 %v1670
  %4416 = vmatmul.mubr.bf16.gmra.mrb[0].mxu0 %v1669
  %v4417 = vpop.f32.mrb[0].mxu0
  %v4418 = vadd.f32 %v3767, %v4417
  %v4419 = vpop.f32.mrb[0].mxu0
  %v4420 = vpop.f32.mrb[0].mxu0
  %v4421 = vadd.f32 %v3770, %v4420
  %v4422 = vpop.f32.mrb[0].mxu0
  %4423 = vmatprep.mubr.bf16.mxu0 %v1674
  %4424 = vmatmul.mubr.bf16.gmra.mrb[0].mxu0 %v1673
  %v4425 = vpop.f32.mrb[0].mxu0
  %v4426 = vadd.f32 %v3775, %v4425
  %v4427 = vpop.f32.mrb[0].mxu0
  %v4428 = vpop.f32.mrb[0].mxu0
  %v4429 = vadd.f32 %v3778, %v4428
  %v4430 = vpop.f32.mrb[0].mxu0
  %4431 = vmatprep.mubr.bf16.mxu0 %v1680
  %4432 = vmatmul.mubr.bf16.gmra.mrb[0].mxu0 %v1679
  %v4433 = vpop.f32.mrb[0].mxu0
  %v4434 = vadd.f32 %v3783, %v4433
  %v4435 = vpop.f32.mrb[0].mxu0
  %v4436 = vpop.f32.mrb[0].mxu0
  %v4437 = vadd.f32 %v3786, %v4436
  %v4438 = vpop.f32.mrb[0].mxu0
  %4439 = vmatprep.mubr.bf16.mxu0 %v1686
  %4440 = vmatmul.mubr.bf16.gmra.mrb[0].mxu0 %v1685
  %v4441 = vpop.f32.mrb[0].mxu0
  %v4442 = vadd.f32 %v3791, %v4441
  %v4443 = vpop.f32.mrb[0].mxu0
  %v4444 = vpop.f32.mrb[0].mxu0
  %v4445 = vadd.f32 %v3794, %v4444
  %v4446 = vpop.f32.mrb[0].mxu0
  %4447 = vmatprep.mubr.bf16.mxu0 %v1690
  %4448 = vmatmul.mubr.bf16.gmra.mrb[0].mxu0 %v1689
  %v4449 = vpop.f32.mrb[0].mxu0
  %v4450 = vadd.f32 %v3799, %v4449
  %v4451 = vpop.f32.mrb[0].mxu0
  %v4452 = vpop.f32.mrb[0].mxu0
  %v4453 = vadd.f32 %v3802, %v4452
  %v4454 = vpop.f32.mrb[0].mxu0
  %4455 = vmatprep.mubr.bf16.mxu0 %v1698
  %4456 = vmatmul.mubr.bf16.gmra.mrb[0].mxu0 %v1697
  %v4457 = vpop.f32.mrb[0].mxu0
  %v4458 = vadd.f32 %v3807, %v4457
  %v4459 = vpop.f32.mrb[0].mxu0
  %v4460 = vpop.f32.mrb[0].mxu0
  %v4461 = vadd.f32 %v3810, %v4460
  %v4462 = vpop.f32.mrb[0].mxu0
  %4463 = vmatprep.mubr.bf16.mxu0 %v1702
  %4464 = vmatmul.mubr.bf16.gmra.mrb[0].mxu0 %v1701
  %v4465 = vpop.f32.mrb[0].mxu0
  %v4466 = vadd.f32 %v3815, %v4465
  %v4467 = vpop.f32.mrb[0].mxu0
  %v4468 = vpop.f32.mrb[0].mxu0
  %v4469 = vadd.f32 %v3818, %v4468
  %v4470 = vpop.f32.mrb[0].mxu0
  %4471 = vmatprep.mubr.bf16.mxu0 %v1708
  %4472 = vmatmul.mubr.bf16.gmra.mrb[0].mxu0 %v1707
  %v4473 = vpop.f32.mrb[0].mxu0
  %v4474 = vadd.f32 %v3823, %v4473
  %v4475 = vpop.f32.mrb[0].mxu0
  %v4476 = vpop.f32.mrb[0].mxu0
  %v4477 = vadd.f32 %v3826, %v4476
  %v4478 = vpop.f32.mrb[0].mxu0
  %4479 = vmatprep.mubr.bf16.mxu0 %v1714
  %4480 = vmatmul.mubr.bf16.gmra.mrb[0].mxu0 %v1713
  %v4481 = vpop.f32.mrb[0].mxu0
  %v4482 = vadd.f32 %v3831, %v4481
  %v4483 = vpop.f32.mrb[0].mxu0
  %v4484 = vpop.f32.mrb[0].mxu0
  %v4485 = vadd.f32 %v3834, %v4484
  %v4486 = vpop.f32.mrb[0].mxu0
  %4487 = vmatprep.mubr.bf16.mxu0 %v1718
  %4488 = vmatmul.mubr.bf16.gmra.mrb[0].mxu0 %v1717
  %v4489 = vpop.f32.mrb[0].mxu0
  %v4490 = vadd.f32 %v3839, %v4489
  %v4491 = vpop.f32.mrb[0].mxu0
  %v4492 = vpop.f32.mrb[0].mxu0
  %v4493 = vadd.f32 %v3842, %v4492
  %v4494 = vpop.f32.mrb[0].mxu0
  %4495 = vmatprep.mubr.bf16.mxu0 %v1726
  %4496 = vmatmul.mubr.bf16.gmra.mrb[0].mxu0 %v1725
  %v4497 = vpop.f32.mrb[0].mxu0
  %v4498 = vadd.f32 %v3847, %v4497
  %v4499 = vpop.f32.mrb[0].mxu0
  %v4500 = vpop.f32.mrb[0].mxu0
  %v4501 = vadd.f32 %v3850, %v4500
  %v4502 = vpop.f32.mrb[0].mxu0
  %4503 = vmatprep.mubr.bf16.mxu0 %v1730
  %4504 = vmatmul.mubr.bf16.gmra.mrb[0].mxu0 %v1729
  %v4505 = vpop.f32.mrb[0].mxu0
  %v4506 = vadd.f32 %v3855, %v4505
  %v4507 = vpop.f32.mrb[0].mxu0
  %v4508 = vpop.f32.mrb[0].mxu0
  %v4509 = vadd.f32 %v3858, %v4508
  %v4510 = vpop.f32.mrb[0].mxu0
  %4511 = vmatprep.mubr.bf16.mxu0 %v1736
  %4512 = vmatmul.mubr.bf16.gmra.mrb[0].mxu0 %v1735
  %v4513 = vpop.f32.mrb[0].mxu0
  %v4514 = vadd.f32 %v3863, %v4513
  %v4515 = vpop.f32.mrb[0].mxu0
  %v4516 = vpop.f32.mrb[0].mxu0
  %v4517 = vadd.f32 %v3866, %v4516
  %v4518 = vpop.f32.mrb[0].mxu0
  %4519 = vmatprep.mubr.bf16.mxu0 %v1742
  %4520 = vmatmul.mubr.bf16.gmra.mrb[0].mxu0 %v1741
  %v4521 = vpop.f32.mrb[0].mxu0
  %v4522 = vpop.f32.mrb[0].mxu0
  %v4523 = vpop.f32.mrb[0].mxu0
  %v4524 = vpop.f32.mrb[0].mxu0
  %4525 = vmatprep.mubr.bf16.mxu0 %v1746
  %4526 = vmatmul.mubr.bf16.gmra.mrb[0].mxu0 %v1745
  %v4527 = vpop.f32.mrb[0].mxu0
  %v4528 = vpop.f32.mrb[0].mxu0
  %v4529 = vpop.f32.mrb[0].mxu0
  %v4530 = vpop.f32.mrb[0].mxu0
  %4531 = vmatprep.mubr.bf16.mxu0 %v1754
  %4532 = vmatmul.mubr.bf16.gmra.mrb[0].mxu0 %v1753
  %v4533 = vpop.f32.mrb[0].mxu0
  %v4534 = vpop.f32.mrb[0].mxu0
  %v4535 = vpop.f32.mrb[0].mxu0
  %v4536 = vpop.f32.mrb[0].mxu0
  %4537 = vdwg.mxu0
  %4538 = vmatprep.subr.bf16.mxu0 0
  %4539 = vmatpush1.bf16.msra.mxu0 %v2505
  %4540 = vmatprep.subr.bf16.mxu0 0
  %4541 = vmatpush1.bf16.msra.mxu0 %v2506
  %4542 = vmatprep.subr.bf16.mxu0 0
  %4543 = vmatpush1.bf16.msra.mxu0 %v2507
  %4544 = vmatprep.subr.bf16.mxu0 0
  %4545 = vmatpush1.bf16.msra.mxu0 %v2508
  %4546 = vmatprep.subr.bf16.mxu0 0
  %4547 = vmatpush1.bf16.msra.mxu0 %v2509
  %4548 = vmatprep.subr.bf16.mxu0 0
  %4549 = vmatpush1.bf16.msra.mxu0 %v2510
  %4550 = vmatprep.subr.bf16.mxu0 0
  %4551 = vmatpush1.bf16.msra.mxu0 %v2511
  %4552 = vmatprep.subr.bf16.mxu0 0
  %4553 = vmatpush1.bf16.msra.mxu0 %v2512
  %4554 = vmatprep.subr.bf16.mxu0 0
  %4555 = vmatpush1.bf16.msra.mxu0 %v2513
  %4556 = vmatprep.subr.bf16.mxu0 0
  %4557 = vmatpush1.bf16.msra.mxu0 %v2514
  %4558 = vmatprep.subr.bf16.mxu0 0
  %4559 = vmatpush1.bf16.msra.mxu0 %v2515
  %4560 = vmatprep.subr.bf16.mxu0 0
  %4561 = vmatpush1.bf16.msra.mxu0 %v2516
  %4562 = vmatprep.subr.bf16.mxu0 0
  %4563 = vmatpush1.bf16.msra.mxu0 %v2517
  %4564 = vmatprep.subr.bf16.mxu0 0
  %4565 = vmatpush1.bf16.msra.mxu0 %v2518
  %4566 = vmatprep.subr.bf16.mxu0 0
  %4567 = vmatpush1.bf16.msra.mxu0 %v2519
  %4568 = vmatprep.subr.bf16.mxu0 0
  %4569 = vmatpush1.bf16.msra.mxu0 %v2520
  %4570 = vmatprep.mubr.bf16.mxu0 %v1320
  %4571 = vmatmul.mubr.bf16.gmra.mrb[0].mxu0 %v1319
  %v4572 = vpop.f32.mrb[0].mxu0
  %v4573 = vadd.f32 %v3922, %v4572
  %v4574 = vpop.f32.mrb[0].mxu0
  %v4575 = vpop.f32.mrb[0].mxu0
  %v4576 = vadd.f32 %v3925, %v4575
  %v4577 = vpop.f32.mrb[0].mxu0
  %4578 = vmatprep.mubr.bf16.mxu0 %v1328
  %4579 = vmatmul.mubr.bf16.gmra.mrb[0].mxu0 %v1327
  %v4580 = vpop.f32.mrb[0].mxu0
  %v4581 = vadd.f32 %v3930, %v4580
  %v4582 = vpop.f32.mrb[0].mxu0
  %v4583 = vpop.f32.mrb[0].mxu0
  %v4584 = vadd.f32 %v3933, %v4583
  %v4585 = vpop.f32.mrb[0].mxu0
  %4586 = vmatprep.mubr.bf16.mxu0 %v1336
  %4587 = vmatmul.mubr.bf16.gmra.mrb[0].mxu0 %v1335
  %v4588 = vpop.f32.mrb[0].mxu0
  %v4589 = vadd.f32 %v3938, %v4588
  %v4590 = vpop.f32.mrb[0].mxu0
  %v4591 = vpop.f32.mrb[0].mxu0
  %v4592 = vadd.f32 %v3941, %v4591
  %v4593 = vpop.f32.mrb[0].mxu0
  %4594 = vmatprep.mubr.bf16.mxu0 %v1340
  %4595 = vmatmul.mubr.bf16.gmra.mrb[0].mxu0 %v1339
  %v4596 = vpop.f32.mrb[0].mxu0
  %v4597 = vadd.f32 %v3946, %v4596
  %v4598 = vpop.f32.mrb[0].mxu0
  %v4599 = vpop.f32.mrb[0].mxu0
  %v4600 = vadd.f32 %v3949, %v4599
  %v4601 = vpop.f32.mrb[0].mxu0
  %4602 = vmatprep.mubr.bf16.mxu0 %v1346
  %4603 = vmatmul.mubr.bf16.gmra.mrb[0].mxu0 %v1345
  %v4604 = vpop.f32.mrb[0].mxu0
  %v4605 = vadd.f32 %v3954, %v4604
  %v4606 = vpop.f32.mrb[0].mxu0
  %v4607 = vpop.f32.mrb[0].mxu0
  %v4608 = vadd.f32 %v3957, %v4607
  %v4609 = vpop.f32.mrb[0].mxu0
  %4610 = vmatprep.mubr.bf16.mxu0 %v1352
  %4611 = vmatmul.mubr.bf16.gmra.mrb[0].mxu0 %v1351
  %v4612 = vpop.f32.mrb[0].mxu0
  %v4613 = vadd.f32 %v3962, %v4612
  %v4614 = vpop.f32.mrb[0].mxu0
  %v4615 = vpop.f32.mrb[0].mxu0
  %v4616 = vadd.f32 %v3965, %v4615
  %v4617 = vpop.f32.mrb[0].mxu0
  %4618 = vmatprep.mubr.bf16.mxu0 %v1356
  %4619 = vmatmul.mubr.bf16.gmra.mrb[0].mxu0 %v1355
  %v4620 = vpop.f32.mrb[0].mxu0
  %v4621 = vadd.f32 %v3970, %v4620
  %v4622 = vpop.f32.mrb[0].mxu0
  %v4623 = vpop.f32.mrb[0].mxu0
  %v4624 = vadd.f32 %v3973, %v4623
  %v4625 = vpop.f32.mrb[0].mxu0
  %4626 = vmatprep.mubr.bf16.mxu0 %v1364
  %4627 = vmatmul.mubr.bf16.gmra.mrb[0].mxu0 %v1363
  %v4628 = vpop.f32.mrb[0].mxu0
  %v4629 = vadd.f32 %v3978, %v4628
  %v4630 = vpop.f32.mrb[0].mxu0
  %v4631 = vpop.f32.mrb[0].mxu0
  %v4632 = vadd.f32 %v3981, %v4631
  %v4633 = vpop.f32.mrb[0].mxu0
  %4634 = vmatprep.mubr.bf16.mxu0 %v1368
  %4635 = vmatmul.mubr.bf16.gmra.mrb[0].mxu0 %v1367
  %v4636 = vpop.f32.mrb[0].mxu0
  %v4637 = vadd.f32 %v3986, %v4636
  %v4638 = vpop.f32.mrb[0].mxu0
  %v4639 = vpop.f32.mrb[0].mxu0
  %v4640 = vadd.f32 %v3989, %v4639
  %v4641 = vpop.f32.mrb[0].mxu0
  %4642 = vmatprep.mubr.bf16.mxu0 %v1374
  %4643 = vmatmul.mubr.bf16.gmra.mrb[0].mxu0 %v1373
  %v4644 = vpop.f32.mrb[0].mxu0
  %v4645 = vadd.f32 %v3994, %v4644
  %v4646 = vpop.f32.mrb[0].mxu0
  %v4647 = vpop.f32.mrb[0].mxu0
  %v4648 = vadd.f32 %v3997, %v4647
  %v4649 = vpop.f32.mrb[0].mxu0
  %4650 = vmatprep.mubr.bf16.mxu0 %v1380
  %4651 = vmatmul.mubr.bf16.gmra.mrb[0].mxu0 %v1379
  %v4652 = vpop.f32.mrb[0].mxu0
  %v4653 = vadd.f32 %v4002, %v4652
  %v4654 = vpop.f32.mrb[0].mxu0
  %v4655 = vpop.f32.mrb[0].mxu0
  %v4656 = vadd.f32 %v4005, %v4655
  %v4657 = vpop.f32.mrb[0].mxu0
  %4658 = vmatprep.mubr.bf16.mxu0 %v1384
  %4659 = vmatmul.mubr.bf16.gmra.mrb[0].mxu0 %v1383
  %v4660 = vpop.f32.mrb[0].mxu0
  %v4661 = vadd.f32 %v4010, %v4660
  %v4662 = vpop.f32.mrb[0].mxu0
  %v4663 = vpop.f32.mrb[0].mxu0
  %v4664 = vadd.f32 %v4013, %v4663
  %v4665 = vpop.f32.mrb[0].mxu0
  %4666 = vmatprep.mubr.bf16.mxu0 %v1392
  %4667 = vmatmul.mubr.bf16.gmra.mrb[0].mxu0 %v1391
  %v4668 = vpop.f32.mrb[0].mxu0
  %v4669 = vadd.f32 %v4018, %v4668
  %v4670 = vpop.f32.mrb[0].mxu0
  %v4671 = vpop.f32.mrb[0].mxu0
  %v4672 = vadd.f32 %v4021, %v4671
  %v4673 = vpop.f32.mrb[0].mxu0
  %4674 = vmatprep.mubr.bf16.mxu0 %v1396
  %4675 = vmatmul.mubr.bf16.gmra.mrb[0].mxu0 %v1395
  %v4676 = vpop.f32.mrb[0].mxu0
  %v4677 = vadd.f32 %v4026, %v4676
  %v4678 = vpop.f32.mrb[0].mxu0
  %v4679 = vpop.f32.mrb[0].mxu0
  %v4680 = vadd.f32 %v4029, %v4679
  %v4681 = vpop.f32.mrb[0].mxu0
  %4682 = vmatprep.mubr.bf16.mxu0 %v1402
  %4683 = vmatmul.mubr.bf16.gmra.mrb[0].mxu0 %v1401
  %v4684 = vpop.f32.mrb[0].mxu0
  %v4685 = vadd.f32 %v4034, %v4684
  %v4686 = vpop.f32.mrb[0].mxu0
  %v4687 = vpop.f32.mrb[0].mxu0
  %v4688 = vadd.f32 %v4037, %v4687
  %v4689 = vpop.f32.mrb[0].mxu0
  %4690 = vmatprep.mubr.bf16.mxu0 %v1408
  %4691 = vmatmul.mubr.bf16.gmra.mrb[0].mxu0 %v1407
  %v4692 = vpop.f32.mrb[0].mxu0
  %v4693 = vadd.f32 %v4042, %v4692
  %v4694 = vpop.f32.mrb[0].mxu0
  %v4695 = vpop.f32.mrb[0].mxu0
  %v4696 = vadd.f32 %v4045, %v4695
  %v4697 = vpop.f32.mrb[0].mxu0
  %4698 = vmatprep.mubr.bf16.mxu0 %v1412
  %4699 = vmatmul.mubr.bf16.gmra.mrb[0].mxu0 %v1411
  %v4700 = vpop.f32.mrb[0].mxu0
  %v4701 = vadd.f32 %v4050, %v4700
  %v4702 = vpop.f32.mrb[0].mxu0
  %v4703 = vpop.f32.mrb[0].mxu0
  %v4704 = vadd.f32 %v4053, %v4703
  %v4705 = vpop.f32.mrb[0].mxu0
  %4706 = vmatprep.mubr.bf16.mxu0 %v1420
  %4707 = vmatmul.mubr.bf16.gmra.mrb[0].mxu0 %v1419
  %v4708 = vpop.f32.mrb[0].mxu0
  %v4709 = vadd.f32 %v4058, %v4708
  %v4710 = vpop.f32.mrb[0].mxu0
  %v4711 = vpop.f32.mrb[0].mxu0
  %v4712 = vadd.f32 %v4061, %v4711
  %v4713 = vpop.f32.mrb[0].mxu0
  %4714 = vmatprep.mubr.bf16.mxu0 %v1424
  %4715 = vmatmul.mubr.bf16.gmra.mrb[0].mxu0 %v1423
  %v4716 = vpop.f32.mrb[0].mxu0
  %v4717 = vadd.f32 %v4066, %v4716
  %v4718 = vpop.f32.mrb[0].mxu0
  %v4719 = vpop.f32.mrb[0].mxu0
  %v4720 = vadd.f32 %v4069, %v4719
  %v4721 = vpop.f32.mrb[0].mxu0
  %4722 = vmatprep.mubr.bf16.mxu0 %v1430
  %4723 = vmatmul.mubr.bf16.gmra.mrb[0].mxu0 %v1429
  %v4724 = vpop.f32.mrb[0].mxu0
  %v4725 = vadd.f32 %v4074, %v4724
  %v4726 = vpop.f32.mrb[0].mxu0
  %v4727 = vpop.f32.mrb[0].mxu0
  %v4728 = vadd.f32 %v4077, %v4727
  %v4729 = vpop.f32.mrb[0].mxu0
  %4730 = vmatprep.mubr.bf16.mxu0 %v1436
  %4731 = vmatmul.mubr.bf16.gmra.mrb[0].mxu0 %v1435
  %v4732 = vpop.f32.mrb[0].mxu0
  %v4733 = vadd.f32 %v4082, %v4732
  %v4734 = vpop.f32.mrb[0].mxu0
  %v4735 = vpop.f32.mrb[0].mxu0
  %v4736 = vadd.f32 %v4085, %v4735
  %v4737 = vpop.f32.mrb[0].mxu0
  %4738 = vmatprep.mubr.bf16.mxu0 %v1440
  %4739 = vmatmul.mubr.bf16.gmra.mrb[0].mxu0 %v1439
  %v4740 = vpop.f32.mrb[0].mxu0
  %v4741 = vadd.f32 %v4090, %v4740
  %v4742 = vpop.f32.mrb[0].mxu0
  %v4743 = vpop.f32.mrb[0].mxu0
  %v4744 = vadd.f32 %v4093, %v4743
  %v4745 = vpop.f32.mrb[0].mxu0
  %4746 = vmatprep.mubr.bf16.mxu0 %v1448
  %4747 = vmatmul.mubr.bf16.gmra.mrb[0].mxu0 %v1447
  %v4748 = vpop.f32.mrb[0].mxu0
  %v4749 = vadd.f32 %v4098, %v4748
  %v4750 = vpop.f32.mrb[0].mxu0
  %v4751 = vpop.f32.mrb[0].mxu0
  %v4752 = vadd.f32 %v4101, %v4751
  %v4753 = vpop.f32.mrb[0].mxu0
  %4754 = vmatprep.mubr.bf16.mxu0 %v1452
  %4755 = vmatmul.mubr.bf16.gmra.mrb[0].mxu0 %v1451
  %v4756 = vpop.f32.mrb[0].mxu0
  %v4757 = vadd.f32 %v4106, %v4756
  %v4758 = vpop.f32.mrb[0].mxu0
  %v4759 = vpop.f32.mrb[0].mxu0
  %v4760 = vadd.f32 %v4109, %v4759
  %v4761 = vpop.f32.mrb[0].mxu0
  %4762 = vmatprep.mubr.bf16.mxu0 %v1458
  %4763 = vmatmul.mubr.bf16.gmra.mrb[0].mxu0 %v1457
  %v4764 = vpop.f32.mrb[0].mxu0
  %v4765 = vadd.f32 %v4114, %v4764
  %v4766 = vpop.f32.mrb[0].mxu0
  %v4767 = vpop.f32.mrb[0].mxu0
  %v4768 = vadd.f32 %v4117, %v4767
  %v4769 = vpop.f32.mrb[0].mxu0
  %4770 = vmatprep.mubr.bf16.mxu0 %v1464
  %4771 = vmatmul.mubr.bf16.gmra.mrb[0].mxu0 %v1463
  %v4772 = vpop.f32.mrb[0].mxu0
  %v4773 = vadd.f32 %v4122, %v4772
  %v4774 = vpop.f32.mrb[0].mxu0
  %v4775 = vpop.f32.mrb[0].mxu0
  %v4776 = vadd.f32 %v4125, %v4775
  %v4777 = vpop.f32.mrb[0].mxu0
  %4778 = vmatprep.mubr.bf16.mxu0 %v1468
  %4779 = vmatmul.mubr.bf16.gmra.mrb[0].mxu0 %v1467
  %v4780 = vpop.f32.mrb[0].mxu0
  %v4781 = vadd.f32 %v4130, %v4780
  %v4782 = vpop.f32.mrb[0].mxu0
  %v4783 = vpop.f32.mrb[0].mxu0
  %v4784 = vadd.f32 %v4133, %v4783
  %v4785 = vpop.f32.mrb[0].mxu0
  %4786 = vmatprep.mubr.bf16.mxu0 %v1476
  %4787 = vmatmul.mubr.bf16.gmra.mrb[0].mxu0 %v1475
  %v4788 = vpop.f32.mrb[0].mxu0
  %v4789 = vadd.f32 %v4138, %v4788
  %v4790 = vpop.f32.mrb[0].mxu0
  %v4791 = vpop.f32.mrb[0].mxu0
  %v4792 = vadd.f32 %v4141, %v4791
  %v4793 = vpop.f32.mrb[0].mxu0
  %4794 = vmatprep.mubr.bf16.mxu0 %v1480
  %4795 = vmatmul.mubr.bf16.gmra.mrb[0].mxu0 %v1479
  %v4796 = vpop.f32.mrb[0].mxu0
  %v4797 = vadd.f32 %v4146, %v4796
  %v4798 = vpop.f32.mrb[0].mxu0
  %v4799 = vpop.f32.mrb[0].mxu0
  %v4800 = vadd.f32 %v4149, %v4799
  %v4801 = vpop.f32.mrb[0].mxu0
  %4802 = vmatprep.mubr.bf16.mxu0 %v1486
  %4803 = vmatmul.mubr.bf16.gmra.mrb[0].mxu0 %v1485
  %v4804 = vpop.f32.mrb[0].mxu0
  %v4805 = vadd.f32 %v4154, %v4804
  %v4806 = vpop.f32.mrb[0].mxu0
  %v4807 = vpop.f32.mrb[0].mxu0
  %v4808 = vadd.f32 %v4157, %v4807
  %v4809 = vpop.f32.mrb[0].mxu0
  %4810 = vmatprep.mubr.bf16.mxu0 %v1492
  %4811 = vmatmul.mubr.bf16.gmra.mrb[0].mxu0 %v1491
  %v4812 = vpop.f32.mrb[0].mxu0
  %v4813 = vadd.f32 %v4162, %v4812
  %v4814 = vpop.f32.mrb[0].mxu0
  %v4815 = vpop.f32.mrb[0].mxu0
  %v4816 = vadd.f32 %v4165, %v4815
  %v4817 = vpop.f32.mrb[0].mxu0
  %4818 = vmatprep.mubr.bf16.mxu0 %v1496
  %4819 = vmatmul.mubr.bf16.gmra.mrb[0].mxu0 %v1495
  %v4820 = vpop.f32.mrb[0].mxu0
  %v4821 = vadd.f32 %v4170, %v4820
  %v4822 = vpop.f32.mrb[0].mxu0
  %v4823 = vpop.f32.mrb[0].mxu0
  %v4824 = vadd.f32 %v4173, %v4823
  %v4825 = vpop.f32.mrb[0].mxu0
  %4826 = vmatprep.mubr.bf16.mxu0 %v1504
  %4827 = vmatmul.mubr.bf16.gmra.mrb[0].mxu0 %v1503
  %v4828 = vpop.f32.mrb[0].mxu0
  %v4829 = vadd.f32 %v4178, %v4828
  %v4830 = vpop.f32.mrb[0].mxu0
  %v4831 = vpop.f32.mrb[0].mxu0
  %v4832 = vadd.f32 %v4181, %v4831
  %v4833 = vpop.f32.mrb[0].mxu0
  %4834 = vmatprep.mubr.bf16.mxu0 %v1508
  %4835 = vmatmul.mubr.bf16.gmra.mrb[0].mxu0 %v1507
  %v4836 = vpop.f32.mrb[0].mxu0
  %v4837 = vadd.f32 %v4186, %v4836
  %v4838 = vpop.f32.mrb[0].mxu0
  %v4839 = vpop.f32.mrb[0].mxu0
  %v4840 = vadd.f32 %v4189, %v4839
  %v4841 = vpop.f32.mrb[0].mxu0
  %4842 = vmatprep.mubr.bf16.mxu0 %v1514
  %4843 = vmatmul.mubr.bf16.gmra.mrb[0].mxu0 %v1513
  %v4844 = vpop.f32.mrb[0].mxu0
  %v4845 = vadd.f32 %v4194, %v4844
  %v4846 = vpop.f32.mrb[0].mxu0
  %v4847 = vpop.f32.mrb[0].mxu0
  %v4848 = vadd.f32 %v4197, %v4847
  %v4849 = vpop.f32.mrb[0].mxu0
  %4850 = vmatprep.mubr.bf16.mxu0 %v1520
  %4851 = vmatmul.mubr.bf16.gmra.mrb[0].mxu0 %v1519
  %v4852 = vpop.f32.mrb[0].mxu0
  %v4853 = vadd.f32 %v4202, %v4852
  %v4854 = vpop.f32.mrb[0].mxu0
  %v4855 = vpop.f32.mrb[0].mxu0
  %v4856 = vadd.f32 %v4205, %v4855
  %v4857 = vpop.f32.mrb[0].mxu0
  %4858 = vmatprep.mubr.bf16.mxu0 %v1524
  %4859 = vmatmul.mubr.bf16.gmra.mrb[0].mxu0 %v1523
  %v4860 = vpop.f32.mrb[0].mxu0
  %v4861 = vadd.f32 %v4210, %v4860
  %v4862 = vpop.f32.mrb[0].mxu0
  %v4863 = vpop.f32.mrb[0].mxu0
  %v4864 = vadd.f32 %v4213, %v4863
  %v4865 = vpop.f32.mrb[0].mxu0
  %4866 = vmatprep.mubr.bf16.mxu0 %v1532
  %4867 = vmatmul.mubr.bf16.gmra.mrb[0].mxu0 %v1531
  %v4868 = vpop.f32.mrb[0].mxu0
  %v4869 = vadd.f32 %v4218, %v4868
  %v4870 = vpop.f32.mrb[0].mxu0
  %v4871 = vpop.f32.mrb[0].mxu0
  %v4872 = vadd.f32 %v4221, %v4871
  %v4873 = vpop.f32.mrb[0].mxu0
  %4874 = vmatprep.mubr.bf16.mxu0 %v1536
  %4875 = vmatmul.mubr.bf16.gmra.mrb[0].mxu0 %v1535
  %v4876 = vpop.f32.mrb[0].mxu0
  %v4877 = vadd.f32 %v4226, %v4876
  %v4878 = vpop.f32.mrb[0].mxu0
  %v4879 = vpop.f32.mrb[0].mxu0
  %v4880 = vadd.f32 %v4229, %v4879
  %v4881 = vpop.f32.mrb[0].mxu0
  %4882 = vmatprep.mubr.bf16.mxu0 %v1542
  %4883 = vmatmul.mubr.bf16.gmra.mrb[0].mxu0 %v1541
  %v4884 = vpop.f32.mrb[0].mxu0
  %v4885 = vadd.f32 %v4234, %v4884
  %v4886 = vpop.f32.mrb[0].mxu0
  %v4887 = vpop.f32.mrb[0].mxu0
  %v4888 = vadd.f32 %v4237, %v4887
  %v4889 = vpop.f32.mrb[0].mxu0
  %4890 = vmatprep.mubr.bf16.mxu0 %v1548
  %4891 = vmatmul.mubr.bf16.gmra.mrb[0].mxu0 %v1547
  %v4892 = vpop.f32.mrb[0].mxu0
  %v4893 = vadd.f32 %v4242, %v4892
  %v4894 = vpop.f32.mrb[0].mxu0
  %v4895 = vpop.f32.mrb[0].mxu0
  %v4896 = vadd.f32 %v4245, %v4895
  %v4897 = vpop.f32.mrb[0].mxu0
  %4898 = vmatprep.mubr.bf16.mxu0 %v1552
  %4899 = vmatmul.mubr.bf16.gmra.mrb[0].mxu0 %v1551
  %v4900 = vpop.f32.mrb[0].mxu0
  %v4901 = vadd.f32 %v4250, %v4900
  %v4902 = vpop.f32.mrb[0].mxu0
  %v4903 = vpop.f32.mrb[0].mxu0
  %v4904 = vadd.f32 %v4253, %v4903
  %v4905 = vpop.f32.mrb[0].mxu0
  %4906 = vmatprep.mubr.bf16.mxu0 %v1560
  %4907 = vmatmul.mubr.bf16.gmra.mrb[0].mxu0 %v1559
  %v4908 = vpop.f32.mrb[0].mxu0
  %v4909 = vadd.f32 %v4258, %v4908
  %v4910 = vpop.f32.mrb[0].mxu0
  %v4911 = vpop.f32.mrb[0].mxu0
  %v4912 = vadd.f32 %v4261, %v4911
  %v4913 = vpop.f32.mrb[0].mxu0
  %4914 = vmatprep.mubr.bf16.mxu0 %v1564
  %4915 = vmatmul.mubr.bf16.gmra.mrb[0].mxu0 %v1563
  %v4916 = vpop.f32.mrb[0].mxu0
  %v4917 = vadd.f32 %v4266, %v4916
  %v4918 = vpop.f32.mrb[0].mxu0
  %v4919 = vpop.f32.mrb[0].mxu0
  %v4920 = vadd.f32 %v4269, %v4919
  %v4921 = vpop.f32.mrb[0].mxu0
  %4922 = vmatprep.mubr.bf16.mxu0 %v1570
  %4923 = vmatmul.mubr.bf16.gmra.mrb[0].mxu0 %v1569
  %v4924 = vpop.f32.mrb[0].mxu0
  %v4925 = vadd.f32 %v4274, %v4924
  %v4926 = vpop.f32.mrb[0].mxu0
  %v4927 = vpop.f32.mrb[0].mxu0
  %v4928 = vadd.f32 %v4277, %v4927
  %v4929 = vpop.f32.mrb[0].mxu0
  %4930 = vmatprep.mubr.bf16.mxu0 %v1576
  %4931 = vmatmul.mubr.bf16.gmra.mrb[0].mxu0 %v1575
  %v4932 = vpop.f32.mrb[0].mxu0
  %v4933 = vadd.f32 %v4282, %v4932
  %v4934 = vpop.f32.mrb[0].mxu0
  %v4935 = vpop.f32.mrb[0].mxu0
  %v4936 = vadd.f32 %v4285, %v4935
  %v4937 = vpop.f32.mrb[0].mxu0
  %4938 = vmatprep.mubr.bf16.mxu0 %v1580
  %4939 = vmatmul.mubr.bf16.gmra.mrb[0].mxu0 %v1579
  %v4940 = vpop.f32.mrb[0].mxu0
  %v4941 = vadd.f32 %v4290, %v4940
  %v4942 = vpop.f32.mrb[0].mxu0
  %v4943 = vpop.f32.mrb[0].mxu0
  %v4944 = vadd.f32 %v4293, %v4943
  %v4945 = vpop.f32.mrb[0].mxu0
  %4946 = vmatprep.mubr.bf16.mxu0 %v1588
  %4947 = vmatmul.mubr.bf16.gmra.mrb[0].mxu0 %v1587
  %v4948 = vpop.f32.mrb[0].mxu0
  %v4949 = vadd.f32 %v4298, %v4948
  %v4950 = vpop.f32.mrb[0].mxu0
  %v4951 = vpop.f32.mrb[0].mxu0
  %v4952 = vadd.f32 %v4301, %v4951
  %v4953 = vpop.f32.mrb[0].mxu0
  %4954 = vmatprep.mubr.bf16.mxu0 %v1592
  %4955 = vmatmul.mubr.bf16.gmra.mrb[0].mxu0 %v1591
  %v4956 = vpop.f32.mrb[0].mxu0
  %v4957 = vadd.f32 %v4306, %v4956
  %v4958 = vpop.f32.mrb[0].mxu0
  %v4959 = vpop.f32.mrb[0].mxu0
  %v4960 = vadd.f32 %v4309, %v4959
  %v4961 = vpop.f32.mrb[0].mxu0
  %4962 = vmatprep.mubr.bf16.mxu0 %v1598
  %4963 = vmatmul.mubr.bf16.gmra.mrb[0].mxu0 %v1597
  %v4964 = vpop.f32.mrb[0].mxu0
  %v4965 = vadd.f32 %v4314, %v4964
  %v4966 = vpop.f32.mrb[0].mxu0
  %v4967 = vpop.f32.mrb[0].mxu0
  %v4968 = vadd.f32 %v4317, %v4967
  %v4969 = vpop.f32.mrb[0].mxu0
  %4970 = vmatprep.mubr.bf16.mxu0 %v1604
  %4971 = vmatmul.mubr.bf16.gmra.mrb[0].mxu0 %v1603
  %v4972 = vpop.f32.mrb[0].mxu0
  %v4973 = vadd.f32 %v4322, %v4972
  %v4974 = vpop.f32.mrb[0].mxu0
  %v4975 = vpop.f32.mrb[0].mxu0
  %v4976 = vadd.f32 %v4325, %v4975
  %v4977 = vpop.f32.mrb[0].mxu0
  %4978 = vmatprep.mubr.bf16.mxu0 %v1608
  %4979 = vmatmul.mubr.bf16.gmra.mrb[0].mxu0 %v1607
  %v4980 = vpop.f32.mrb[0].mxu0
  %v4981 = vadd.f32 %v4330, %v4980
  %v4982 = vpop.f32.mrb[0].mxu0
  %v4983 = vpop.f32.mrb[0].mxu0
  %v4984 = vadd.f32 %v4333, %v4983
  %v4985 = vpop.f32.mrb[0].mxu0
  %4986 = vmatprep.mubr.bf16.mxu0 %v1616
  %4987 = vmatmul.mubr.bf16.gmra.mrb[0].mxu0 %v1615
  %v4988 = vpop.f32.mrb[0].mxu0
  %v4989 = vadd.f32 %v4338, %v4988
  %v4990 = vpop.f32.mrb[0].mxu0
  %v4991 = vpop.f32.mrb[0].mxu0
  %v4992 = vadd.f32 %v4341, %v4991
  %v4993 = vpop.f32.mrb[0].mxu0
  %4994 = vmatprep.mubr.bf16.mxu0 %v1620
  %4995 = vmatmul.mubr.bf16.gmra.mrb[0].mxu0 %v1619
  %v4996 = vpop.f32.mrb[0].mxu0
  %v4997 = vadd.f32 %v4346, %v4996
  %v4998 = vpop.f32.mrb[0].mxu0
  %v4999 = vpop.f32.mrb[0].mxu0
  %v5000 = vadd.f32 %v4349, %v4999
  %v5001 = vpop.f32.mrb[0].mxu0
  %5002 = vmatprep.mubr.bf16.mxu0 %v1626
  %5003 = vmatmul.mubr.bf16.gmra.mrb[0].mxu0 %v1625
  %v5004 = vpop.f32.mrb[0].mxu0
  %v5005 = vadd.f32 %v4354, %v5004
  %v5006 = vpop.f32.mrb[0].mxu0
  %v5007 = vpop.f32.mrb[0].mxu0
  %v5008 = vadd.f32 %v4357, %v5007
  %v5009 = vpop.f32.mrb[0].mxu0
  %5010 = vmatprep.mubr.bf16.mxu0 %v1632
  %5011 = vmatmul.mubr.bf16.gmra.mrb[0].mxu0 %v1631
  %v5012 = vpop.f32.mrb[0].mxu0
  %v5013 = vadd.f32 %v4362, %v5012
  %v5014 = vpop.f32.mrb[0].mxu0
  %v5015 = vpop.f32.mrb[0].mxu0
  %v5016 = vadd.f32 %v4365, %v5015
  %v5017 = vpop.f32.mrb[0].mxu0
  %5018 = vmatprep.mubr.bf16.mxu0 %v1636
  %5019 = vmatmul.mubr.bf16.gmra.mrb[0].mxu0 %v1635
  %v5020 = vpop.f32.mrb[0].mxu0
  %v5021 = vadd.f32 %v4370, %v5020
  %v5022 = vpop.f32.mrb[0].mxu0
  %v5023 = vpop.f32.mrb[0].mxu0
  %v5024 = vadd.f32 %v4373, %v5023
  %v5025 = vpop.f32.mrb[0].mxu0
  %5026 = vmatprep.mubr.bf16.mxu0 %v1644
  %5027 = vmatmul.mubr.bf16.gmra.mrb[0].mxu0 %v1643
  %v5028 = vpop.f32.mrb[0].mxu0
  %v5029 = vadd.f32 %v4378, %v5028
  %v5030 = vpop.f32.mrb[0].mxu0
  %v5031 = vpop.f32.mrb[0].mxu0
  %v5032 = vadd.f32 %v4381, %v5031
  %v5033 = vpop.f32.mrb[0].mxu0
  %5034 = vmatprep.mubr.bf16.mxu0 %v1648
  %5035 = vmatmul.mubr.bf16.gmra.mrb[0].mxu0 %v1647
  %v5036 = vpop.f32.mrb[0].mxu0
  %v5037 = vadd.f32 %v4386, %v5036
  %v5038 = vpop.f32.mrb[0].mxu0
  %v5039 = vpop.f32.mrb[0].mxu0
  %v5040 = vadd.f32 %v4389, %v5039
  %v5041 = vpop.f32.mrb[0].mxu0
  %5042 = vmatprep.mubr.bf16.mxu0 %v1654
  %5043 = vmatmul.mubr.bf16.gmra.mrb[0].mxu0 %v1653
  %v5044 = vpop.f32.mrb[0].mxu0
  %v5045 = vadd.f32 %v4394, %v5044
  %v5046 = vpop.f32.mrb[0].mxu0
  %v5047 = vpop.f32.mrb[0].mxu0
  %v5048 = vadd.f32 %v4397, %v5047
  %v5049 = vpop.f32.mrb[0].mxu0
  %5050 = vmatprep.mubr.bf16.mxu0 %v1660
  %5051 = vmatmul.mubr.bf16.gmra.mrb[0].mxu0 %v1659
  %v5052 = vpop.f32.mrb[0].mxu0
  %v5053 = vadd.f32 %v4402, %v5052
  %v5054 = vpop.f32.mrb[0].mxu0
  %v5055 = vpop.f32.mrb[0].mxu0
  %v5056 = vadd.f32 %v4405, %v5055
  %v5057 = vpop.f32.mrb[0].mxu0
  %5058 = vmatprep.mubr.bf16.mxu0 %v1664
  %5059 = vmatmul.mubr.bf16.gmra.mrb[0].mxu0 %v1663
  %v5060 = vpop.f32.mrb[0].mxu0
  %v5061 = vadd.f32 %v4410, %v5060
  %v5062 = vpop.f32.mrb[0].mxu0
  %v5063 = vpop.f32.mrb[0].mxu0
  %v5064 = vadd.f32 %v4413, %v5063
  %v5065 = vpop.f32.mrb[0].mxu0
  %5066 = vmatprep.mubr.bf16.mxu0 %v1672
  %5067 = vmatmul.mubr.bf16.gmra.mrb[0].mxu0 %v1671
  %v5068 = vpop.f32.mrb[0].mxu0
  %v5069 = vadd.f32 %v4418, %v5068
  %v5070 = vpop.f32.mrb[0].mxu0
  %v5071 = vpop.f32.mrb[0].mxu0
  %v5072 = vadd.f32 %v4421, %v5071
  %v5073 = vpop.f32.mrb[0].mxu0
  %5074 = vmatprep.mubr.bf16.mxu0 %v1676
  %5075 = vmatmul.mubr.bf16.gmra.mrb[0].mxu0 %v1675
  %v5076 = vpop.f32.mrb[0].mxu0
  %v5077 = vadd.f32 %v4426, %v5076
  %v5078 = vpop.f32.mrb[0].mxu0
  %v5079 = vpop.f32.mrb[0].mxu0
  %v5080 = vadd.f32 %v4429, %v5079
  %v5081 = vpop.f32.mrb[0].mxu0
  %5082 = vmatprep.mubr.bf16.mxu0 %v1682
  %5083 = vmatmul.mubr.bf16.gmra.mrb[0].mxu0 %v1681
  %v5084 = vpop.f32.mrb[0].mxu0
  %v5085 = vadd.f32 %v4434, %v5084
  %v5086 = vpop.f32.mrb[0].mxu0
  %v5087 = vpop.f32.mrb[0].mxu0
  %v5088 = vadd.f32 %v4437, %v5087
  %v5089 = vpop.f32.mrb[0].mxu0
  %5090 = vmatprep.mubr.bf16.mxu0 %v1688
  %5091 = vmatmul.mubr.bf16.gmra.mrb[0].mxu0 %v1687
  %v5092 = vpop.f32.mrb[0].mxu0
  %v5093 = vadd.f32 %v4442, %v5092
  %v5094 = vpop.f32.mrb[0].mxu0
  %v5095 = vpop.f32.mrb[0].mxu0
  %v5096 = vadd.f32 %v4445, %v5095
  %v5097 = vpop.f32.mrb[0].mxu0
  %5098 = vmatprep.mubr.bf16.mxu0 %v1692
  %5099 = vmatmul.mubr.bf16.gmra.mrb[0].mxu0 %v1691
  %v5100 = vpop.f32.mrb[0].mxu0
  %v5101 = vadd.f32 %v4450, %v5100
  %v5102 = vpop.f32.mrb[0].mxu0
  %v5103 = vpop.f32.mrb[0].mxu0
  %v5104 = vadd.f32 %v4453, %v5103
  %v5105 = vpop.f32.mrb[0].mxu0
  %5106 = vmatprep.mubr.bf16.mxu0 %v1700
  %5107 = vmatmul.mubr.bf16.gmra.mrb[0].mxu0 %v1699
  %v5108 = vpop.f32.mrb[0].mxu0
  %v5109 = vadd.f32 %v4458, %v5108
  %v5110 = vpop.f32.mrb[0].mxu0
  %v5111 = vpop.f32.mrb[0].mxu0
  %v5112 = vadd.f32 %v4461, %v5111
  %v5113 = vpop.f32.mrb[0].mxu0
  %5114 = vmatprep.mubr.bf16.mxu0 %v1704
  %5115 = vmatmul.mubr.bf16.gmra.mrb[0].mxu0 %v1703
  %v5116 = vpop.f32.mrb[0].mxu0
  %v5117 = vadd.f32 %v4466, %v5116
  %v5118 = vpop.f32.mrb[0].mxu0
  %v5119 = vpop.f32.mrb[0].mxu0
  %v5120 = vadd.f32 %v4469, %v5119
  %v5121 = vpop.f32.mrb[0].mxu0
  %5122 = vmatprep.mubr.bf16.mxu0 %v1710
  %5123 = vmatmul.mubr.bf16.gmra.mrb[0].mxu0 %v1709
  %v5124 = vpop.f32.mrb[0].mxu0
  %v5125 = vadd.f32 %v4474, %v5124
  %v5126 = vpop.f32.mrb[0].mxu0
  %v5127 = vpop.f32.mrb[0].mxu0
  %v5128 = vadd.f32 %v4477, %v5127
  %v5129 = vpop.f32.mrb[0].mxu0
  %5130 = vmatprep.mubr.bf16.mxu0 %v1716
  %5131 = vmatmul.mubr.bf16.gmra.mrb[0].mxu0 %v1715
  %v5132 = vpop.f32.mrb[0].mxu0
  %v5133 = vadd.f32 %v4482, %v5132
  %v5134 = vpop.f32.mrb[0].mxu0
  %v5135 = vpop.f32.mrb[0].mxu0
  %v5136 = vadd.f32 %v4485, %v5135
  %v5137 = vpop.f32.mrb[0].mxu0
  %5138 = vmatprep.mubr.bf16.mxu0 %v1720
  %5139 = vmatmul.mubr.bf16.gmra.mrb[0].mxu0 %v1719
  %v5140 = vpop.f32.mrb[0].mxu0
  %v5141 = vadd.f32 %v4490, %v5140
  %v5142 = vpop.f32.mrb[0].mxu0
  %v5143 = vpop.f32.mrb[0].mxu0
  %v5144 = vadd.f32 %v4493, %v5143
  %v5145 = vpop.f32.mrb[0].mxu0
  %5146 = vmatprep.mubr.bf16.mxu0 %v1728
  %5147 = vmatmul.mubr.bf16.gmra.mrb[0].mxu0 %v1727
  %v5148 = vpop.f32.mrb[0].mxu0
  %v5149 = vadd.f32 %v4498, %v5148
  %v5150 = vpop.f32.mrb[0].mxu0
  %v5151 = vpop.f32.mrb[0].mxu0
  %v5152 = vadd.f32 %v4501, %v5151
  %v5153 = vpop.f32.mrb[0].mxu0
  %5154 = vmatprep.mubr.bf16.mxu0 %v1732
  %5155 = vmatmul.mubr.bf16.gmra.mrb[0].mxu0 %v1731
  %v5156 = vpop.f32.mrb[0].mxu0
  %v5157 = vadd.f32 %v4506, %v5156
  %v5158 = vpop.f32.mrb[0].mxu0
  %v5159 = vpop.f32.mrb[0].mxu0
  %v5160 = vadd.f32 %v4509, %v5159
  %v5161 = vpop.f32.mrb[0].mxu0
  %5162 = vmatprep.mubr.bf16.mxu0 %v1738
  %5163 = vmatmul.mubr.bf16.gmra.mrb[0].mxu0 %v1737
  %v5164 = vpop.f32.mrb[0].mxu0
  %v5165 = vadd.f32 %v4514, %v5164
  %v5166 = vpop.f32.mrb[0].mxu0
  %v5167 = vpop.f32.mrb[0].mxu0
  %v5168 = vadd.f32 %v4517, %v5167
  %v5169 = vpop.f32.mrb[0].mxu0
  %5170 = vmatprep.mubr.bf16.mxu0 %v1744
  %5171 = vmatmul.mubr.bf16.gmra.mrb[0].mxu0 %v1743
  %v5172 = vpop.f32.mrb[0].mxu0
  %v5173 = vpop.f32.mrb[0].mxu0
  %v5174 = vpop.f32.mrb[0].mxu0
  %v5175 = vpop.f32.mrb[0].mxu0
  %5176 = vmatprep.mubr.bf16.mxu0 %v1748
  %5177 = vmatmul.mubr.bf16.gmra.mrb[0].mxu0 %v1747
  %v5178 = vpop.f32.mrb[0].mxu0
  %v5179 = vpop.f32.mrb[0].mxu0
  %v5180 = vpop.f32.mrb[0].mxu0
  %v5181 = vpop.f32.mrb[0].mxu0
  %5182 = vmatprep.mubr.bf16.mxu0 %v1756
  %5183 = vmatmul.mubr.bf16.gmra.mrb[0].mxu0 %v1755
  %v5184 = vpop.f32.mrb[0].mxu0
  %v5185 = vpop.f32.mrb[0].mxu0
  %v5186 = vpop.f32.mrb[0].mxu0
  %v5187 = vpop.f32.mrb[0].mxu0
  %5188 = vdwg.mxu0
  %v5189 = vld [vmem:[%s2] sm:$0x1]
  %v5190 = vld [vmem:[%s2 + $0x1] sm:$0x1]
  %v5191 = vld [vmem:[%s2 + $0x2] sm:$0x1]
  %v5192 = vld [vmem:[%s2 + $0x3] sm:$0x1]
  %v5193 = vld [vmem:[%s2 + $0x4] sm:$0x1]
  %v5194 = vld [vmem:[%s2 + $0x5] sm:$0x1]
  %v5195 = vld [vmem:[%s2 + $0x6] sm:$0x1]
  %v5196 = vld [vmem:[%s2 + $0x7] sm:$0x1]
  %v5197 = vld [vmem:[%s2 + $0x8] sm:$0x1]
  %v5198 = vld [vmem:[%s2 + $0x9] sm:$0x1]
  %v5199 = vld [vmem:[%s2 + $0xa] sm:$0x1]
  %v5200 = vld [vmem:[%s2 + $0xb] sm:$0x1]
  %v5201 = vld [vmem:[%s2 + $0xc] sm:$0x1]
  %v5202 = vld [vmem:[%s2 + $0xd] sm:$0x1]
  %v5203 = vld [vmem:[%s2 + $0xe] sm:$0x1]
  %v5204 = vld [vmem:[%s2 + $0xf] sm:$0x1]
  %v5205 = vld [vmem:[%s2 + $0x10] sm:$0x1]
  %v5206 = vld [vmem:[%s2 + $0x11] sm:$0x1]
  %v5207 = vld [vmem:[%s2 + $0x12] sm:$0x1]
  %v5208 = vld [vmem:[%s2 + $0x13] sm:$0x1]
  %v5209 = vld [vmem:[%s2 + $0x14] sm:$0x1]
  %v5210 = vld [vmem:[%s2 + $0x15] sm:$0x1]
  %v5211 = vld [vmem:[%s2 + $0x16] sm:$0x1]
  %v5212 = vld [vmem:[%s2 + $0x17] sm:$0x1]
  %v5213 = vld [vmem:[%s2 + $0x18] sm:$0x1]
  %v5214 = vld [vmem:[%s2 + $0x19] sm:$0x1]
  %v5215 = vld [vmem:[%s2 + $0x1a] sm:$0x1]
  %v5216 = vld [vmem:[%s2 + $0x1b] sm:$0x1]
  %v5217 = vld [vmem:[%s2 + $0x1c] sm:$0x1]
  %v5218 = vld [vmem:[%s2 + $0x1d] sm:$0x1]
  %v5219 = vld [vmem:[%s2 + $0x1e] sm:$0x1]
  %v5220 = vld [vmem:[%s2 + $0x1f] sm:$0x1]
  %v5221 = vld [vmem:[%s2 + $0x20] sm:$0x1]
  %v5222 = vld [vmem:[%s2 + $0x21] sm:$0x1]
  %v5223 = vld [vmem:[%s2 + $0x22] sm:$0x1]
  %v5224 = vld [vmem:[%s2 + $0x23] sm:$0x1]
  %v5225 = vld [vmem:[%s2 + $0x24] sm:$0x1]
  %v5226 = vld [vmem:[%s2 + $0x25] sm:$0x1]
  %v5227 = vld [vmem:[%s2 + $0x26] sm:$0x1]
  %v5228 = vld [vmem:[%s2 + $0x27] sm:$0x1]
  %v5229 = vld [vmem:[%s2 + $0x28] sm:$0x1]
  %v5230 = vld [vmem:[%s2 + $0x29] sm:$0x1]
  %v5231 = vld [vmem:[%s2 + $0x2a] sm:$0x1]
  %v5232 = vld [vmem:[%s2 + $0x2b] sm:$0x1]
  %v5233 = vld [vmem:[%s2 + $0x2c] sm:$0x1]
  %v5234 = vld [vmem:[%s2 + $0x2d] sm:$0x1]
  %v5235 = vld [vmem:[%s2 + $0x2e] sm:$0x1]
  %v5236 = vld [vmem:[%s2 + $0x2f] sm:$0x1]
  %v5237 = vld [vmem:[%s2 + $0x30] sm:$0x1]
  %v5238 = vld [vmem:[%s2 + $0x31] sm:$0x1]
  %v5239 = vld [vmem:[%s2 + $0x32] sm:$0x1]
  %v5240 = vld [vmem:[%s2 + $0x33] sm:$0x1]
  %v5241 = vld [vmem:[%s2 + $0x34] sm:$0x1]
  %v5242 = vld [vmem:[%s2 + $0x35] sm:$0x1]
  %v5243 = vld [vmem:[%s2 + $0x36] sm:$0x1]
  %v5244 = vld [vmem:[%s2 + $0x37] sm:$0x1]
  %v5245 = vld [vmem:[%s2 + $0x38] sm:$0x1]
  %v5246 = vld [vmem:[%s2 + $0x39] sm:$0x1]
  %v5247 = vld [vmem:[%s2 + $0x3a] sm:$0x1]
  %v5248 = vld [vmem:[%s2 + $0x3b] sm:$0x1]
  %v5249 = vld [vmem:[%s2 + $0x3c] sm:$0x1]
  %v5250 = vld [vmem:[%s2 + $0x3d] sm:$0x1]
  %v5251 = vld [vmem:[%s2 + $0x3e] sm:$0x1]
  %v5252 = vld [vmem:[%s2 + $0x3f] sm:$0x1]
  %v5253 = vld [vmem:[%s2 + $0x40] sm:$0x1]
  %v5254 = vld [vmem:[%s2 + $0x41] sm:$0x1]
  %v5255 = vld [vmem:[%s2 + $0x42] sm:$0x1]
  %v5256 = vld [vmem:[%s2 + $0x43] sm:$0x1]
  %v5257 = vld [vmem:[%s2 + $0x44] sm:$0x1]
  %v5258 = vld [vmem:[%s2 + $0x45] sm:$0x1]
  %v5259 = vld [vmem:[%s2 + $0x46] sm:$0x1]
  %v5260 = vld [vmem:[%s2 + $0x47] sm:$0x1]
  %v5261 = vld [vmem:[%s2 + $0x48] sm:$0x1]
  %v5262 = vld [vmem:[%s2 + $0x49] sm:$0x1]
  %v5263 = vld [vmem:[%s2 + $0x4a] sm:$0x1]
  %v5264 = vld [vmem:[%s2 + $0x4b] sm:$0x1]
  %v5265 = vld [vmem:[%s2 + $0x4c] sm:$0x1]
  %v5266 = vld [vmem:[%s2 + $0x4d] sm:$0x1]
  %v5267 = vld [vmem:[%s2 + $0x4e] sm:$0x1]
  %v5268 = vld [vmem:[%s2 + $0x4f] sm:$0x1]
  %v5269 = vld [vmem:[%s2 + $0x50] sm:$0x1]
  %v5270 = vld [vmem:[%s2 + $0x51] sm:$0x1]
  %v5271 = vld [vmem:[%s2 + $0x52] sm:$0x1]
  %v5272 = vld [vmem:[%s2 + $0x53] sm:$0x1]
  %v5273 = vld [vmem:[%s2 + $0x54] sm:$0x1]
  %v5274 = vld [vmem:[%s2 + $0x55] sm:$0x1]
  %v5275 = vld [vmem:[%s2 + $0x56] sm:$0x1]
  %v5276 = vld [vmem:[%s2 + $0x57] sm:$0x1]
  %v5277 = vld [vmem:[%s2 + $0x58] sm:$0x1]
  %v5278 = vld [vmem:[%s2 + $0x59] sm:$0x1]
  %v5279 = vld [vmem:[%s2 + $0x5a] sm:$0x1]
  %v5280 = vld [vmem:[%s2 + $0x5b] sm:$0x1]
  %v5281 = vld [vmem:[%s2 + $0x5c] sm:$0x1]
  %v5282 = vld [vmem:[%s2 + $0x5d] sm:$0x1]
  %v5283 = vld [vmem:[%s2 + $0x5e] sm:$0x1]
  %v5284 = vld [vmem:[%s2 + $0x5f] sm:$0x1]
  %v5285 = vld [vmem:[%s2 + $0x60] sm:$0x1]
  %v5286 = vld [vmem:[%s2 + $0x61] sm:$0x1]
  %v5287 = vld [vmem:[%s2 + $0x62] sm:$0x1]
  %v5288 = vld [vmem:[%s2 + $0x63] sm:$0x1]
  %v5289 = vld [vmem:[%s2 + $0x64] sm:$0x1]
  %v5290 = vld [vmem:[%s2 + $0x65] sm:$0x1]
  %v5291 = vld [vmem:[%s2 + $0x66] sm:$0x1]
  %v5292 = vld [vmem:[%s2 + $0x67] sm:$0x1]
  %v5293 = vld [vmem:[%s2 + $0x68] sm:$0x1]
  %v5294 = vld [vmem:[%s2 + $0x69] sm:$0x1]
  %v5295 = vld [vmem:[%s2 + $0x6a] sm:$0x1]
  %v5296 = vld [vmem:[%s2 + $0x6b] sm:$0x1]
  %v5297 = vld [vmem:[%s2 + $0x6c] sm:$0x1]
  %v5298 = vld [vmem:[%s2 + $0x6d] sm:$0x1]
  %v5299 = vld [vmem:[%s2 + $0x6e] sm:$0x1]
  %v5300 = vld [vmem:[%s2 + $0x6f] sm:$0x1]
  %v5301 = vld [vmem:[%s2 + $0x70] sm:$0x1]
  %v5302 = vld [vmem:[%s2 + $0x71] sm:$0x1]
  %v5303 = vld [vmem:[%s2 + $0x72] sm:$0x1]
  %v5304 = vld [vmem:[%s2 + $0x73] sm:$0x1]
  %v5305 = vld [vmem:[%s2 + $0x74] sm:$0x1]
  %v5306 = vld [vmem:[%s2 + $0x75] sm:$0x1]
  %v5307 = vld [vmem:[%s2 + $0x76] sm:$0x1]
  %v5308 = vld [vmem:[%s2 + $0x77] sm:$0x1]
  %v5309 = vld [vmem:[%s2 + $0x78] sm:$0x1]
  %v5310 = vld [vmem:[%s2 + $0x79] sm:$0x1]
  %v5311 = vld [vmem:[%s2 + $0x7a] sm:$0x1]
  %v5312 = vld [vmem:[%s2 + $0x7b] sm:$0x1]
  %v5313 = vld [vmem:[%s2 + $0x7c] sm:$0x1]
  %v5314 = vld [vmem:[%s2 + $0x7d] sm:$0x1]
  %v5315 = vld [vmem:[%s2 + $0x7e] sm:$0x1]
  %v5316 = vld [vmem:[%s2 + $0x7f] sm:$0x1]
  %v5317 = vld [vmem:[%s2 + $0x80] sm:$0x1]
  %v5318 = vld [vmem:[%s2 + $0x81] sm:$0x1]
  %v5319 = vld [vmem:[%s2 + $0x82] sm:$0x1]
  %v5320 = vld [vmem:[%s2 + $0x83] sm:$0x1]
  %v5321 = vld [vmem:[%s2 + $0x84] sm:$0x1]
  %v5322 = vld [vmem:[%s2 + $0x85] sm:$0x1]
  %v5323 = vld [vmem:[%s2 + $0x86] sm:$0x1]
  %v5324 = vld [vmem:[%s2 + $0x87] sm:$0x1]
  %v5325 = vld [vmem:[%s2 + $0x88] sm:$0x1]
  %v5326 = vld [vmem:[%s2 + $0x89] sm:$0x1]
  %v5327 = vld [vmem:[%s2 + $0x8a] sm:$0x1]
  %v5328 = vld [vmem:[%s2 + $0x8b] sm:$0x1]
  %v5329 = vld [vmem:[%s2 + $0x8c] sm:$0x1]
  %v5330 = vld [vmem:[%s2 + $0x8d] sm:$0x1]
  %v5331 = vld [vmem:[%s2 + $0x8e] sm:$0x1]
  %v5332 = vld [vmem:[%s2 + $0x8f] sm:$0x1]
  %v5333 = vld [vmem:[%s2 + $0x90] sm:$0x1]
  %v5334 = vld [vmem:[%s2 + $0x91] sm:$0x1]
  %v5335 = vld [vmem:[%s2 + $0x92] sm:$0x1]
  %v5336 = vld [vmem:[%s2 + $0x93] sm:$0x1]
  %v5337 = vld [vmem:[%s2 + $0x94] sm:$0x1]
  %v5338 = vld [vmem:[%s2 + $0x95] sm:$0x1]
  %v5489 = vlaneseq
  %v5490 = vshrl.u32 %v5489, 7
  %v5491 = vsub.s32 0, %v5490
  %v5492 = vrot.slane %v5189, %v5491
  %v5493 = vlaneseq
  %v5494 = vshrl.u32 %v5493, 7
  %v5495 = vsub.s32 0, %v5494
  %v5496 = vrot.slane %v5190, %v5495
  %v5497 = vlaneseq
  %v5498 = vshrl.u32 %v5497, 7
  %v5499 = vsub.s32 0, %v5498
  %v5500 = vrot.slane %v5191, %v5499
  %v5501 = vlaneseq
  %v5502 = vshrl.u32 %v5501, 7
  %v5503 = vsub.s32 0, %v5502
  %v5504 = vrot.slane %v5192, %v5503
  %v5505 = vlaneseq
  %v5506 = vshrl.u32 %v5505, 7
  %v5507 = vsub.s32 0, %v5506
  %v5508 = vrot.slane %v5193, %v5507
  %v5509 = vlaneseq
  %v5510 = vshrl.u32 %v5509, 7
  %v5511 = vsub.s32 0, %v5510
  %v5512 = vrot.slane %v5194, %v5511
  %v5513 = vlaneseq
  %v5514 = vshrl.u32 %v5513, 7
  %v5515 = vsub.s32 0, %v5514
  %v5516 = vrot.slane %v5195, %v5515
  %v5517 = vlaneseq
  %v5518 = vshrl.u32 %v5517, 7
  %v5519 = vsub.s32 0, %v5518
  %v5520 = vrot.slane %v5196, %v5519
  %v5521 = vlaneseq
  %v5522 = vshrl.u32 %v5521, 7
  %v5523 = vsub.s32 0, %v5522
  %v5524 = vrot.slane %v5197, %v5523
  %v5525 = vlaneseq
  %v5526 = vshrl.u32 %v5525, 7
  %v5527 = vsub.s32 0, %v5526
  %v5528 = vrot.slane %v5198, %v5527
  %v5529 = vlaneseq
  %v5530 = vshrl.u32 %v5529, 7
  %v5531 = vsub.s32 0, %v5530
  %v5532 = vrot.slane %v5199, %v5531
  %v5533 = vlaneseq
  %v5534 = vshrl.u32 %v5533, 7
  %v5535 = vsub.s32 0, %v5534
  %v5536 = vrot.slane %v5200, %v5535
  %v5537 = vlaneseq
  %v5538 = vshrl.u32 %v5537, 7
  %v5539 = vsub.s32 0, %v5538
  %v5540 = vrot.slane %v5201, %v5539
  %v5541 = vlaneseq
  %v5542 = vshrl.u32 %v5541, 7
  %v5543 = vsub.s32 0, %v5542
  %v5544 = vrot.slane %v5202, %v5543
  %v5545 = vlaneseq
  %v5546 = vshrl.u32 %v5545, 7
  %v5547 = vsub.s32 0, %v5546
  %v5548 = vrot.slane %v5203, %v5547
  %v5549 = vlaneseq
  %v5550 = vshrl.u32 %v5549, 7
  %v5551 = vsub.s32 0, %v5550
  %v5552 = vrot.slane %v5204, %v5551
  %v5553 = vlaneseq
  %v5554 = vshrl.u32 %v5553, 7
  %v5555 = vsub.s32 0, %v5554
  %v5556 = vrot.slane %v5205, %v5555
  %v5557 = vlaneseq
  %v5558 = vshrl.u32 %v5557, 7
  %v5559 = vsub.s32 0, %v5558
  %v5560 = vrot.slane %v5206, %v5559
  %v5561 = vlaneseq
  %v5562 = vshrl.u32 %v5561, 7
  %v5563 = vsub.s32 0, %v5562
  %v5564 = vrot.slane %v5207, %v5563
  %v5565 = vlaneseq
  %v5566 = vshrl.u32 %v5565, 7
  %v5567 = vsub.s32 0, %v5566
  %v5568 = vrot.slane %v5208, %v5567
  %v5569 = vlaneseq
  %v5570 = vshrl.u32 %v5569, 7
  %v5571 = vsub.s32 0, %v5570
  %v5572 = vrot.slane %v5209, %v5571
  %v5573 = vlaneseq
  %v5574 = vshrl.u32 %v5573, 7
  %v5575 = vsub.s32 0, %v5574
  %v5576 = vrot.slane %v5210, %v5575
  %v5577 = vlaneseq
  %v5578 = vshrl.u32 %v5577, 7
  %v5579 = vsub.s32 0, %v5578
  %v5580 = vrot.slane %v5211, %v5579
  %v5581 = vlaneseq
  %v5582 = vshrl.u32 %v5581, 7
  %v5583 = vsub.s32 0, %v5582
  %v5584 = vrot.slane %v5212, %v5583
  %v5585 = vlaneseq
  %v5586 = vshrl.u32 %v5585, 7
  %v5587 = vsub.s32 0, %v5586
  %v5588 = vrot.slane %v5213, %v5587
  %v5589 = vlaneseq
  %v5590 = vshrl.u32 %v5589, 7
  %v5591 = vsub.s32 0, %v5590
  %v5592 = vrot.slane %v5214, %v5591
  %v5593 = vlaneseq
  %v5594 = vshrl.u32 %v5593, 7
  %v5595 = vsub.s32 0, %v5594
  %v5596 = vrot.slane %v5215, %v5595
  %v5597 = vlaneseq
  %v5598 = vshrl.u32 %v5597, 7
  %v5599 = vsub.s32 0, %v5598
  %v5600 = vrot.slane %v5216, %v5599
  %v5601 = vlaneseq
  %v5602 = vshrl.u32 %v5601, 7
  %v5603 = vsub.s32 0, %v5602
  %v5604 = vrot.slane %v5217, %v5603
  %v5605 = vlaneseq
  %v5606 = vshrl.u32 %v5605, 7
  %v5607 = vsub.s32 0, %v5606
  %v5608 = vrot.slane %v5218, %v5607
  %v5609 = vlaneseq
  %v5610 = vshrl.u32 %v5609, 7
  %v5611 = vsub.s32 0, %v5610
  %v5612 = vrot.slane %v5219, %v5611
  %v5613 = vlaneseq
  %v5614 = vshrl.u32 %v5613, 7
  %v5615 = vsub.s32 0, %v5614
  %v5616 = vrot.slane %v5220, %v5615
  %v5617 = vlaneseq
  %v5618 = vshrl.u32 %v5617, 7
  %v5619 = vsub.s32 0, %v5618
  %v5620 = vrot.slane %v5221, %v5619
  %v5621 = vlaneseq
  %v5622 = vshrl.u32 %v5621, 7
  %v5623 = vsub.s32 0, %v5622
  %v5624 = vrot.slane %v5222, %v5623
  %v5625 = vlaneseq
  %v5626 = vshrl.u32 %v5625, 7
  %v5627 = vsub.s32 0, %v5626
  %v5628 = vrot.slane %v5223, %v5627
  %v5629 = vlaneseq
  %v5630 = vshrl.u32 %v5629, 7
  %v5631 = vsub.s32 0, %v5630
  %v5632 = vrot.slane %v5224, %v5631
  %v5633 = vlaneseq
  %v5634 = vshrl.u32 %v5633, 7
  %v5635 = vsub.s32 0, %v5634
  %v5636 = vrot.slane %v5225, %v5635
  %v5637 = vlaneseq
  %v5638 = vshrl.u32 %v5637, 7
  %v5639 = vsub.s32 0, %v5638
  %v5640 = vrot.slane %v5226, %v5639
  %v5641 = vlaneseq
  %v5642 = vshrl.u32 %v5641, 7
  %v5643 = vsub.s32 0, %v5642
  %v5644 = vrot.slane %v5227, %v5643
  %v5645 = vlaneseq
  %v5646 = vshrl.u32 %v5645, 7
  %v5647 = vsub.s32 0, %v5646
  %v5648 = vrot.slane %v5228, %v5647
  %v5649 = vlaneseq
  %v5650 = vshrl.u32 %v5649, 7
  %v5651 = vsub.s32 0, %v5650
  %v5652 = vrot.slane %v5229, %v5651
  %v5653 = vlaneseq
  %v5654 = vshrl.u32 %v5653, 7
  %v5655 = vsub.s32 0, %v5654
  %v5656 = vrot.slane %v5230, %v5655
  %v5657 = vlaneseq
  %v5658 = vshrl.u32 %v5657, 7
  %v5659 = vsub.s32 0, %v5658
  %v5660 = vrot.slane %v5231, %v5659
  %v5661 = vlaneseq
  %v5662 = vshrl.u32 %v5661, 7
  %v5663 = vsub.s32 0, %v5662
  %v5664 = vrot.slane %v5232, %v5663
  %v5665 = vlaneseq
  %v5666 = vshrl.u32 %v5665, 7
  %v5667 = vsub.s32 0, %v5666
  %v5668 = vrot.slane %v5233, %v5667
  %v5669 = vlaneseq
  %v5670 = vshrl.u32 %v5669, 7
  %v5671 = vsub.s32 0, %v5670
  %v5672 = vrot.slane %v5234, %v5671
  %v5673 = vlaneseq
  %v5674 = vshrl.u32 %v5673, 7
  %v5675 = vsub.s32 0, %v5674
  %v5676 = vrot.slane %v5235, %v5675
  %v5677 = vlaneseq
  %v5678 = vshrl.u32 %v5677, 7
  %v5679 = vsub.s32 0, %v5678
  %v5680 = vrot.slane %v5236, %v5679
  %v5681 = vlaneseq
  %v5682 = vshrl.u32 %v5681, 7
  %v5683 = vsub.s32 0, %v5682
  %v5684 = vrot.slane %v5237, %v5683
  %v5685 = vlaneseq
  %v5686 = vshrl.u32 %v5685, 7
  %v5687 = vsub.s32 0, %v5686
  %v5688 = vrot.slane %v5238, %v5687
  %v5689 = vlaneseq
  %v5690 = vshrl.u32 %v5689, 7
  %v5691 = vsub.s32 0, %v5690
  %v5692 = vrot.slane %v5239, %v5691
  %v5693 = vlaneseq
  %v5694 = vshrl.u32 %v5693, 7
  %v5695 = vsub.s32 0, %v5694
  %v5696 = vrot.slane %v5240, %v5695
  %v5697 = vlaneseq
  %v5698 = vshrl.u32 %v5697, 7
  %v5699 = vsub.s32 0, %v5698
  %v5700 = vrot.slane %v5241, %v5699
  %v5701 = vlaneseq
  %v5702 = vshrl.u32 %v5701, 7
  %v5703 = vsub.s32 0, %v5702
  %v5704 = vrot.slane %v5242, %v5703
  %v5705 = vlaneseq
  %v5706 = vshrl.u32 %v5705, 7
  %v5707 = vsub.s32 0, %v5706
  %v5708 = vrot.slane %v5243, %v5707
  %v5709 = vlaneseq
  %v5710 = vshrl.u32 %v5709, 7
  %v5711 = vsub.s32 0, %v5710
  %v5712 = vrot.slane %v5244, %v5711
  %v5713 = vlaneseq
  %v5714 = vshrl.u32 %v5713, 7
  %v5715 = vsub.s32 0, %v5714
  %v5716 = vrot.slane %v5245, %v5715
  %v5717 = vlaneseq
  %v5718 = vshrl.u32 %v5717, 7
  %v5719 = vsub.s32 0, %v5718
  %v5720 = vrot.slane %v5246, %v5719
  %v5721 = vlaneseq
  %v5722 = vshrl.u32 %v5721, 7
  %v5723 = vsub.s32 0, %v5722
  %v5724 = vrot.slane %v5247, %v5723
  %v5725 = vlaneseq
  %v5726 = vshrl.u32 %v5725, 7
  %v5727 = vsub.s32 0, %v5726
  %v5728 = vrot.slane %v5248, %v5727
  %v5729 = vlaneseq
  %v5730 = vshrl.u32 %v5729, 7
  %v5731 = vsub.s32 0, %v5730
  %v5732 = vrot.slane %v5249, %v5731
  %v5733 = vlaneseq
  %v5734 = vshrl.u32 %v5733, 7
  %v5735 = vsub.s32 0, %v5734
  %v5736 = vrot.slane %v5250, %v5735
  %v5737 = vlaneseq
  %v5738 = vshrl.u32 %v5737, 7
  %v5739 = vsub.s32 0, %v5738
  %v5740 = vrot.slane %v5251, %v5739
  %v5741 = vlaneseq
  %v5742 = vshrl.u32 %v5741, 7
  %v5743 = vsub.s32 0, %v5742
  %v5744 = vrot.slane %v5252, %v5743
  %v5745 = vlaneseq
  %v5746 = vshrl.u32 %v5745, 7
  %v5747 = vsub.s32 0, %v5746
  %v5748 = vrot.slane %v5253, %v5747
  %v5749 = vlaneseq
  %v5750 = vshrl.u32 %v5749, 7
  %v5751 = vsub.s32 0, %v5750
  %v5752 = vrot.slane %v5254, %v5751
  %v5753 = vlaneseq
  %v5754 = vshrl.u32 %v5753, 7
  %v5755 = vsub.s32 0, %v5754
  %v5756 = vrot.slane %v5255, %v5755
  %v5757 = vlaneseq
  %v5758 = vshrl.u32 %v5757, 7
  %v5759 = vsub.s32 0, %v5758
  %v5760 = vrot.slane %v5256, %v5759
  %v5761 = vlaneseq
  %v5762 = vshrl.u32 %v5761, 7
  %v5763 = vsub.s32 0, %v5762
  %v5764 = vrot.slane %v5257, %v5763
  %v5765 = vlaneseq
  %v5766 = vshrl.u32 %v5765, 7
  %v5767 = vsub.s32 0, %v5766
  %v5768 = vrot.slane %v5258, %v5767
  %v5769 = vlaneseq
  %v5770 = vshrl.u32 %v5769, 7
  %v5771 = vsub.s32 0, %v5770
  %v5772 = vrot.slane %v5259, %v5771
  %v5773 = vlaneseq
  %v5774 = vshrl.u32 %v5773, 7
  %v5775 = vsub.s32 0, %v5774
  %v5776 = vrot.slane %v5260, %v5775
  %v5777 = vlaneseq
  %v5778 = vshrl.u32 %v5777, 7
  %v5779 = vsub.s32 0, %v5778
  %v5780 = vrot.slane %v5261, %v5779
  %v5781 = vlaneseq
  %v5782 = vshrl.u32 %v5781, 7
  %v5783 = vsub.s32 0, %v5782
  %v5784 = vrot.slane %v5262, %v5783
  %v5785 = vlaneseq
  %v5786 = vshrl.u32 %v5785, 7
  %v5787 = vsub.s32 0, %v5786
  %v5788 = vrot.slane %v5263, %v5787
  %v5789 = vlaneseq
  %v5790 = vshrl.u32 %v5789, 7
  %v5791 = vsub.s32 0, %v5790
  %v5792 = vrot.slane %v5264, %v5791
  %v5793 = vlaneseq
  %v5794 = vshrl.u32 %v5793, 7
  %v5795 = vsub.s32 0, %v5794
  %v5796 = vrot.slane %v5265, %v5795
  %v5797 = vlaneseq
  %v5798 = vshrl.u32 %v5797, 7
  %v5799 = vsub.s32 0, %v5798
  %v5800 = vrot.slane %v5266, %v5799
  %v5801 = vlaneseq
  %v5802 = vshrl.u32 %v5801, 7
  %v5803 = vsub.s32 0, %v5802
  %v5804 = vrot.slane %v5267, %v5803
  %v5805 = vlaneseq
  %v5806 = vshrl.u32 %v5805, 7
  %v5807 = vsub.s32 0, %v5806
  %v5808 = vrot.slane %v5268, %v5807
  %v5809 = vlaneseq
  %v5810 = vshrl.u32 %v5809, 7
  %v5811 = vsub.s32 0, %v5810
  %v5812 = vrot.slane %v5269, %v5811
  %v5813 = vlaneseq
  %v5814 = vshrl.u32 %v5813, 7
  %v5815 = vsub.s32 0, %v5814
  %v5816 = vrot.slane %v5270, %v5815
  %v5817 = vlaneseq
  %v5818 = vshrl.u32 %v5817, 7
  %v5819 = vsub.s32 0, %v5818
  %v5820 = vrot.slane %v5271, %v5819
  %v5821 = vlaneseq
  %v5822 = vshrl.u32 %v5821, 7
  %v5823 = vsub.s32 0, %v5822
  %v5824 = vrot.slane %v5272, %v5823
  %v5825 = vlaneseq
  %v5826 = vshrl.u32 %v5825, 7
  %v5827 = vsub.s32 0, %v5826
  %v5828 = vrot.slane %v5273, %v5827
  %v5829 = vlaneseq
  %v5830 = vshrl.u32 %v5829, 7
  %v5831 = vsub.s32 0, %v5830
  %v5832 = vrot.slane %v5274, %v5831
  %v5833 = vlaneseq
  %v5834 = vshrl.u32 %v5833, 7
  %v5835 = vsub.s32 0, %v5834
  %v5836 = vrot.slane %v5275, %v5835
  %v5837 = vlaneseq
  %v5838 = vshrl.u32 %v5837, 7
  %v5839 = vsub.s32 0, %v5838
  %v5840 = vrot.slane %v5276, %v5839
  %v5841 = vlaneseq
  %v5842 = vshrl.u32 %v5841, 7
  %v5843 = vsub.s32 0, %v5842
  %v5844 = vrot.slane %v5277, %v5843
  %v5845 = vlaneseq
  %v5846 = vshrl.u32 %v5845, 7
  %v5847 = vsub.s32 0, %v5846
  %v5848 = vrot.slane %v5278, %v5847
  %v5849 = vlaneseq
  %v5850 = vshrl.u32 %v5849, 7
  %v5851 = vsub.s32 0, %v5850
  %v5852 = vrot.slane %v5279, %v5851
  %v5853 = vlaneseq
  %v5854 = vshrl.u32 %v5853, 7
  %v5855 = vsub.s32 0, %v5854
  %v5856 = vrot.slane %v5280, %v5855
  %v5857 = vlaneseq
  %v5858 = vshrl.u32 %v5857, 7
  %v5859 = vsub.s32 0, %v5858
  %v5860 = vrot.slane %v5281, %v5859
  %v5861 = vlaneseq
  %v5862 = vshrl.u32 %v5861, 7
  %v5863 = vsub.s32 0, %v5862
  %v5864 = vrot.slane %v5282, %v5863
  %v5865 = vlaneseq
  %v5866 = vshrl.u32 %v5865, 7
  %v5867 = vsub.s32 0, %v5866
  %v5868 = vrot.slane %v5283, %v5867
  %v5869 = vlaneseq
  %v5870 = vshrl.u32 %v5869, 7
  %v5871 = vsub.s32 0, %v5870
  %v5872 = vrot.slane %v5284, %v5871
  %v5873 = vlaneseq
  %v5874 = vshrl.u32 %v5873, 7
  %v5875 = vsub.s32 0, %v5874
  %v5876 = vrot.slane %v5285, %v5875
  %v5877 = vlaneseq
  %v5878 = vshrl.u32 %v5877, 7
  %v5879 = vsub.s32 0, %v5878
  %v5880 = vrot.slane %v5286, %v5879
  %v5881 = vlaneseq
  %v5882 = vshrl.u32 %v5881, 7
  %v5883 = vsub.s32 0, %v5882
  %v5884 = vrot.slane %v5287, %v5883
  %v5885 = vlaneseq
  %v5886 = vshrl.u32 %v5885, 7
  %v5887 = vsub.s32 0, %v5886
  %v5888 = vrot.slane %v5288, %v5887
  %v5889 = vlaneseq
  %v5890 = vshrl.u32 %v5889, 7
  %v5891 = vsub.s32 0, %v5890
  %v5892 = vrot.slane %v5289, %v5891
  %v5893 = vlaneseq
  %v5894 = vshrl.u32 %v5893, 7
  %v5895 = vsub.s32 0, %v5894
  %v5896 = vrot.slane %v5290, %v5895
  %v5897 = vlaneseq
  %v5898 = vshrl.u32 %v5897, 7
  %v5899 = vsub.s32 0, %v5898
  %v5900 = vrot.slane %v5291, %v5899
  %v5901 = vlaneseq
  %v5902 = vshrl.u32 %v5901, 7
  %v5903 = vsub.s32 0, %v5902
  %v5904 = vrot.slane %v5292, %v5903
  %v5905 = vlaneseq
  %v5906 = vshrl.u32 %v5905, 7
  %v5907 = vsub.s32 0, %v5906
  %v5908 = vrot.slane %v5293, %v5907
  %v5909 = vlaneseq
  %v5910 = vshrl.u32 %v5909, 7
  %v5911 = vsub.s32 0, %v5910
  %v5912 = vrot.slane %v5294, %v5911
  %v5913 = vlaneseq
  %v5914 = vshrl.u32 %v5913, 7
  %v5915 = vsub.s32 0, %v5914
  %v5916 = vrot.slane %v5295, %v5915
  %v5917 = vlaneseq
  %v5918 = vshrl.u32 %v5917, 7
  %v5919 = vsub.s32 0, %v5918
  %v5920 = vrot.slane %v5296, %v5919
  %v5921 = vlaneseq
  %v5922 = vshrl.u32 %v5921, 7
  %v5923 = vsub.s32 0, %v5922
  %v5924 = vrot.slane %v5297, %v5923
  %v5925 = vlaneseq
  %v5926 = vshrl.u32 %v5925, 7
  %v5927 = vsub.s32 0, %v5926
  %v5928 = vrot.slane %v5298, %v5927
  %v5929 = vlaneseq
  %v5930 = vshrl.u32 %v5929, 7
  %v5931 = vsub.s32 0, %v5930
  %v5932 = vrot.slane %v5299, %v5931
  %v5933 = vlaneseq
  %v5934 = vshrl.u32 %v5933, 7
  %v5935 = vsub.s32 0, %v5934
  %v5936 = vrot.slane %v5300, %v5935
  %v5937 = vlaneseq
  %v5938 = vshrl.u32 %v5937, 7
  %v5939 = vsub.s32 0, %v5938
  %v5940 = vrot.slane %v5301, %v5939
  %v5941 = vlaneseq
  %v5942 = vshrl.u32 %v5941, 7
  %v5943 = vsub.s32 0, %v5942
  %v5944 = vrot.slane %v5302, %v5943
  %v5945 = vlaneseq
  %v5946 = vshrl.u32 %v5945, 7
  %v5947 = vsub.s32 0, %v5946
  %v5948 = vrot.slane %v5303, %v5947
  %v5949 = vlaneseq
  %v5950 = vshrl.u32 %v5949, 7
  %v5951 = vsub.s32 0, %v5950
  %v5952 = vrot.slane %v5304, %v5951
  %v5953 = vlaneseq
  %v5954 = vshrl.u32 %v5953, 7
  %v5955 = vsub.s32 0, %v5954
  %v5956 = vrot.slane %v5305, %v5955
  %v5957 = vlaneseq
  %v5958 = vshrl.u32 %v5957, 7
  %v5959 = vsub.s32 0, %v5958
  %v5960 = vrot.slane %v5306, %v5959
  %v5961 = vlaneseq
  %v5962 = vshrl.u32 %v5961, 7
  %v5963 = vsub.s32 0, %v5962
  %v5964 = vrot.slane %v5307, %v5963
  %v5965 = vlaneseq
  %v5966 = vshrl.u32 %v5965, 7
  %v5967 = vsub.s32 0, %v5966
  %v5968 = vrot.slane %v5308, %v5967
  %v5969 = vlaneseq
  %v5970 = vshrl.u32 %v5969, 7
  %v5971 = vsub.s32 0, %v5970
  %v5972 = vrot.slane %v5309, %v5971
  %v5973 = vlaneseq
  %v5974 = vshrl.u32 %v5973, 7
  %v5975 = vsub.s32 0, %v5974
  %v5976 = vrot.slane %v5310, %v5975
  %v5977 = vlaneseq
  %v5978 = vshrl.u32 %v5977, 7
  %v5979 = vsub.s32 0, %v5978
  %v5980 = vrot.slane %v5311, %v5979
  %v5981 = vlaneseq
  %v5982 = vshrl.u32 %v5981, 7
  %v5983 = vsub.s32 0, %v5982
  %v5984 = vrot.slane %v5312, %v5983
  %v5985 = vlaneseq
  %v5986 = vshrl.u32 %v5985, 7
  %v5987 = vsub.s32 0, %v5986
  %v5988 = vrot.slane %v5313, %v5987
  %v5989 = vlaneseq
  %v5990 = vshrl.u32 %v5989, 7
  %v5991 = vsub.s32 0, %v5990
  %v5992 = vrot.slane %v5314, %v5991
  %v5993 = vlaneseq
  %v5994 = vshrl.u32 %v5993, 7
  %v5995 = vsub.s32 0, %v5994
  %v5996 = vrot.slane %v5315, %v5995
  %v5997 = vlaneseq
  %v5998 = vshrl.u32 %v5997, 7
  %v5999 = vsub.s32 0, %v5998
  %v6000 = vrot.slane %v5316, %v5999
  %v6001 = vlaneseq
  %v6002 = vshrl.u32 %v6001, 7
  %v6003 = vsub.s32 0, %v6002
  %v6004 = vrot.slane %v5317, %v6003
  %v6005 = vlaneseq
  %v6006 = vshrl.u32 %v6005, 7
  %v6007 = vsub.s32 0, %v6006
  %v6008 = vrot.slane %v5318, %v6007
  %v6009 = vlaneseq
  %v6010 = vshrl.u32 %v6009, 7
  %v6011 = vsub.s32 0, %v6010
  %v6012 = vrot.slane %v5319, %v6011
  %v6013 = vlaneseq
  %v6014 = vshrl.u32 %v6013, 7
  %v6015 = vsub.s32 0, %v6014
  %v6016 = vrot.slane %v5320, %v6015
  %v6017 = vlaneseq
  %v6018 = vshrl.u32 %v6017, 7
  %v6019 = vsub.s32 0, %v6018
  %v6020 = vrot.slane %v5321, %v6019
  %v6021 = vlaneseq
  %v6022 = vshrl.u32 %v6021, 7
  %v6023 = vsub.s32 0, %v6022
  %v6024 = vrot.slane %v5322, %v6023
  %v6025 = vlaneseq
  %v6026 = vshrl.u32 %v6025, 7
  %v6027 = vsub.s32 0, %v6026
  %v6028 = vrot.slane %v5323, %v6027
  %v6029 = vlaneseq
  %v6030 = vshrl.u32 %v6029, 7
  %v6031 = vsub.s32 0, %v6030
  %v6032 = vrot.slane %v5324, %v6031
  %v6033 = vlaneseq
  %v6034 = vshrl.u32 %v6033, 7
  %v6035 = vsub.s32 0, %v6034
  %v6036 = vrot.slane %v5325, %v6035
  %v6037 = vlaneseq
  %v6038 = vshrl.u32 %v6037, 7
  %v6039 = vsub.s32 0, %v6038
  %v6040 = vrot.slane %v5326, %v6039
  %v6041 = vlaneseq
  %v6042 = vshrl.u32 %v6041, 7
  %v6043 = vsub.s32 0, %v6042
  %v6044 = vrot.slane %v5327, %v6043
  %v6045 = vlaneseq
  %v6046 = vshrl.u32 %v6045, 7
  %v6047 = vsub.s32 0, %v6046
  %v6048 = vrot.slane %v5328, %v6047
  %v6049 = vlaneseq
  %v6050 = vshrl.u32 %v6049, 7
  %v6051 = vsub.s32 0, %v6050
  %v6052 = vrot.slane %v5329, %v6051
  %v6053 = vlaneseq
  %v6054 = vshrl.u32 %v6053, 7
  %v6055 = vsub.s32 0, %v6054
  %v6056 = vrot.slane %v5330, %v6055
  %v6057 = vlaneseq
  %v6058 = vshrl.u32 %v6057, 7
  %v6059 = vsub.s32 0, %v6058
  %v6060 = vrot.slane %v5331, %v6059
  %v6061 = vlaneseq
  %v6062 = vshrl.u32 %v6061, 7
  %v6063 = vsub.s32 0, %v6062
  %v6064 = vrot.slane %v5332, %v6063
  %v6065 = vlaneseq
  %v6066 = vshrl.u32 %v6065, 7
  %v6067 = vsub.s32 0, %v6066
  %v6068 = vrot.slane %v5333, %v6067
  %v6069 = vlaneseq
  %v6070 = vshrl.u32 %v6069, 7
  %v6071 = vsub.s32 0, %v6070
  %v6072 = vrot.slane %v5334, %v6071
  %v6073 = vlaneseq
  %v6074 = vshrl.u32 %v6073, 7
  %v6075 = vsub.s32 0, %v6074
  %v6076 = vrot.slane %v5335, %v6075
  %v6077 = vlaneseq
  %v6078 = vshrl.u32 %v6077, 7
  %v6079 = vsub.s32 0, %v6078
  %v6080 = vrot.slane %v5336, %v6079
  %v6081 = vlaneseq
  %v6082 = vshrl.u32 %v6081, 7
  %v6083 = vsub.s32 0, %v6082
  %v6084 = vrot.slane %v5337, %v6083
  %v6085 = vlaneseq
  %v6086 = vshrl.u32 %v6085, 7
  %v6087 = vsub.s32 0, %v6086
  %v6088 = vrot.slane %v5338, %v6087
  %v6239 = vadd.f32 %v4573, %v5492
  %v6240 = vadd.f32 %v4576, %v5496
  %v6241 = vadd.f32 %v4581, %v5500
  %v6242 = vadd.f32 %v4584, %v5504
  %v6243 = vadd.f32 %v4589, %v5508
  %v6244 = vadd.f32 %v4592, %v5512
  %v6245 = vadd.f32 %v4597, %v5516
  %v6246 = vadd.f32 %v4600, %v5520
  %v6247 = vadd.f32 %v4605, %v5524
  %v6248 = vadd.f32 %v4608, %v5528
  %v6249 = vadd.f32 %v4613, %v5532
  %v6250 = vadd.f32 %v4616, %v5536
  %v6251 = vadd.f32 %v4621, %v5540
  %v6252 = vadd.f32 %v4624, %v5544
  %v6253 = vadd.f32 %v4629, %v5548
  %v6254 = vadd.f32 %v4632, %v5552
  %v6255 = vadd.f32 %v4637, %v5556
  %v6256 = vadd.f32 %v4640, %v5560
  %v6257 = vadd.f32 %v4645, %v5564
  %v6258 = vadd.f32 %v4648, %v5568
  %v6259 = vadd.f32 %v4653, %v5572
  %v6260 = vadd.f32 %v4656, %v5576
  %v6261 = vadd.f32 %v4661, %v5580
  %v6262 = vadd.f32 %v4664, %v5584
  %v6263 = vadd.f32 %v4669, %v5588
  %v6264 = vadd.f32 %v4672, %v5592
  %v6265 = vadd.f32 %v4677, %v5596
  %v6266 = vadd.f32 %v4680, %v5600
  %v6267 = vadd.f32 %v4685, %v5604
  %v6268 = vadd.f32 %v4688, %v5608
  %v6269 = vadd.f32 %v4693, %v5612
  %v6270 = vadd.f32 %v4696, %v5616
  %v6271 = vadd.f32 %v4701, %v5620
  %v6272 = vadd.f32 %v4704, %v5624
  %v6273 = vadd.f32 %v4709, %v5628
  %v6274 = vadd.f32 %v4712, %v5632
  %v6275 = vadd.f32 %v4717, %v5636
  %v6276 = vadd.f32 %v4720, %v5640
  %v6277 = vadd.f32 %v4725, %v5644
  %v6278 = vadd.f32 %v4728, %v5648
  %v6279 = vadd.f32 %v4733, %v5652
  %v6280 = vadd.f32 %v4736, %v5656
  %v6281 = vadd.f32 %v4741, %v5660
  %v6282 = vadd.f32 %v4744, %v5664
  %v6283 = vadd.f32 %v4749, %v5668
  %v6284 = vadd.f32 %v4752, %v5672
  %v6285 = vadd.f32 %v4757, %v5676
  %v6286 = vadd.f32 %v4760, %v5680
  %v6287 = vadd.f32 %v4765, %v5684
  %v6288 = vadd.f32 %v4768, %v5688
  %v6289 = vadd.f32 %v4773, %v5692
  %v6290 = vadd.f32 %v4776, %v5696
  %v6291 = vadd.f32 %v4781, %v5700
  %v6292 = vadd.f32 %v4784, %v5704
  %v6293 = vadd.f32 %v4789, %v5708
  %v6294 = vadd.f32 %v4792, %v5712
  %v6295 = vadd.f32 %v4797, %v5716
  %v6296 = vadd.f32 %v4800, %v5720
  %v6297 = vadd.f32 %v4805, %v5724
  %v6298 = vadd.f32 %v4808, %v5728
  %v6299 = vadd.f32 %v4813, %v5732
  %v6300 = vadd.f32 %v4816, %v5736
  %v6301 = vadd.f32 %v4821, %v5740
  %v6302 = vadd.f32 %v4824, %v5744
  %v6303 = vadd.f32 %v4829, %v5748
  %v6304 = vadd.f32 %v4832, %v5752
  %v6305 = vadd.f32 %v4837, %v5756
  %v6306 = vadd.f32 %v4840, %v5760
  %v6307 = vadd.f32 %v4845, %v5764
  %v6308 = vadd.f32 %v4848, %v5768
  %v6309 = vadd.f32 %v4853, %v5772
  %v6310 = vadd.f32 %v4856, %v5776
  %v6311 = vadd.f32 %v4861, %v5780
  %v6312 = vadd.f32 %v4864, %v5784
  %v6313 = vadd.f32 %v4869, %v5788
  %v6314 = vadd.f32 %v4872, %v5792
  %v6315 = vadd.f32 %v4877, %v5796
  %v6316 = vadd.f32 %v4880, %v5800
  %v6317 = vadd.f32 %v4885, %v5804
  %v6318 = vadd.f32 %v4888, %v5808
  %v6319 = vadd.f32 %v4893, %v5812
  %v6320 = vadd.f32 %v4896, %v5816
  %v6321 = vadd.f32 %v4901, %v5820
  %v6322 = vadd.f32 %v4904, %v5824
  %v6323 = vadd.f32 %v4909, %v5828
  %v6324 = vadd.f32 %v4912, %v5832
  %v6325 = vadd.f32 %v4917, %v5836
  %v6326 = vadd.f32 %v4920, %v5840
  %v6327 = vadd.f32 %v4925, %v5844
  %v6328 = vadd.f32 %v4928, %v5848
  %v6329 = vadd.f32 %v4933, %v5852
  %v6330 = vadd.f32 %v4936, %v5856
  %v6331 = vadd.f32 %v4941, %v5860
  %v6332 = vadd.f32 %v4944, %v5864
  %v6333 = vadd.f32 %v4949, %v5868
  %v6334 = vadd.f32 %v4952, %v5872
  %v6335 = vadd.f32 %v4957, %v5876
  %v6336 = vadd.f32 %v4960, %v5880
  %v6337 = vadd.f32 %v4965, %v5884
  %v6338 = vadd.f32 %v4968, %v5888
  %v6339 = vadd.f32 %v4973, %v5892
  %v6340 = vadd.f32 %v4976, %v5896
  %v6341 = vadd.f32 %v4981, %v5900
  %v6342 = vadd.f32 %v4984, %v5904
  %v6343 = vadd.f32 %v4989, %v5908
  %v6344 = vadd.f32 %v4992, %v5912
  %v6345 = vadd.f32 %v4997, %v5916
  %v6346 = vadd.f32 %v5000, %v5920
  %v6347 = vadd.f32 %v5005, %v5924
  %v6348 = vadd.f32 %v5008, %v5928
  %v6349 = vadd.f32 %v5013, %v5932
  %v6350 = vadd.f32 %v5016, %v5936
  %v6351 = vadd.f32 %v5021, %v5940
  %v6352 = vadd.f32 %v5024, %v5944
  %v6353 = vadd.f32 %v5029, %v5948
  %v6354 = vadd.f32 %v5032, %v5952
  %v6355 = vadd.f32 %v5037, %v5956
  %v6356 = vadd.f32 %v5040, %v5960
  %v6357 = vadd.f32 %v5045, %v5964
  %v6358 = vadd.f32 %v5048, %v5968
  %v6359 = vadd.f32 %v5053, %v5972
  %v6360 = vadd.f32 %v5056, %v5976
  %v6361 = vadd.f32 %v5061, %v5980
  %v6362 = vadd.f32 %v5064, %v5984
  %v6363 = vadd.f32 %v5069, %v5988
  %v6364 = vadd.f32 %v5072, %v5992
  %v6365 = vadd.f32 %v5077, %v5996
  %v6366 = vadd.f32 %v5080, %v6000
  %v6367 = vadd.f32 %v5085, %v6004
  %v6368 = vadd.f32 %v5088, %v6008
  %v6369 = vadd.f32 %v5093, %v6012
  %v6370 = vadd.f32 %v5096, %v6016
  %v6371 = vadd.f32 %v5101, %v6020
  %v6372 = vadd.f32 %v5104, %v6024
  %v6373 = vadd.f32 %v5109, %v6028
  %v6374 = vadd.f32 %v5112, %v6032
  %v6375 = vadd.f32 %v5117, %v6036
  %v6376 = vadd.f32 %v5120, %v6040
  %v6377 = vadd.f32 %v5125, %v6044
  %v6378 = vadd.f32 %v5128, %v6048
  %v6379 = vadd.f32 %v5133, %v6052
  %v6380 = vadd.f32 %v5136, %v6056
  %v6381 = vadd.f32 %v5141, %v6060
  %v6382 = vadd.f32 %v5144, %v6064
  %v6383 = vadd.f32 %v5149, %v6068
  %v6384 = vadd.f32 %v5152, %v6072
  %v6385 = vadd.f32 %v5157, %v6076
  %v6386 = vadd.f32 %v5160, %v6080
  %v6387 = vadd.f32 %v5165, %v6084
  %v6388 = vadd.f32 %v5168, %v6088
  %v6389 = vmax.f32 %v6239, 0.0
  %v6390 = vmax.f32 %v6240, 0.0
  %v6391 = vmax.f32 %v6241, 0.0
  %v6392 = vmax.f32 %v6242, 0.0
  %v6393 = vmax.f32 %v6243, 0.0
  %v6394 = vmax.f32 %v6244, 0.0
  %v6395 = vmax.f32 %v6245, 0.0
  %v6396 = vmax.f32 %v6246, 0.0
  %v6397 = vmax.f32 %v6247, 0.0
  %v6398 = vmax.f32 %v6248, 0.0
  %v6399 = vmax.f32 %v6249, 0.0
  %v6400 = vmax.f32 %v6250, 0.0
  %v6401 = vmax.f32 %v6251, 0.0
  %v6402 = vmax.f32 %v6252, 0.0
  %v6403 = vmax.f32 %v6253, 0.0
  %v6404 = vmax.f32 %v6254, 0.0
  %v6405 = vmax.f32 %v6255, 0.0
  %v6406 = vmax.f32 %v6256, 0.0
  %v6407 = vmax.f32 %v6257, 0.0
  %v6408 = vmax.f32 %v6258, 0.0
  %v6409 = vmax.f32 %v6259, 0.0
  %v6410 = vmax.f32 %v6260, 0.0
  %v6411 = vmax.f32 %v6261, 0.0
  %v6412 = vmax.f32 %v6262, 0.0
  %v6413 = vmax.f32 %v6263, 0.0
  %v6414 = vmax.f32 %v6264, 0.0
  %v6415 = vmax.f32 %v6265, 0.0
  %v6416 = vmax.f32 %v6266, 0.0
  %v6417 = vmax.f32 %v6267, 0.0
  %v6418 = vmax.f32 %v6268, 0.0
  %v6419 = vmax.f32 %v6269, 0.0
  %v6420 = vmax.f32 %v6270, 0.0
  %v6421 = vmax.f32 %v6271, 0.0
  %v6422 = vmax.f32 %v6272, 0.0
  %v6423 = vmax.f32 %v6273, 0.0
  %v6424 = vmax.f32 %v6274, 0.0
  %v6425 = vmax.f32 %v6275, 0.0
  %v6426 = vmax.f32 %v6276, 0.0
  %v6427 = vmax.f32 %v6277, 0.0
  %v6428 = vmax.f32 %v6278, 0.0
  %v6429 = vmax.f32 %v6279, 0.0
  %v6430 = vmax.f32 %v6280, 0.0
  %v6431 = vmax.f32 %v6281, 0.0
  %v6432 = vmax.f32 %v6282, 0.0
  %v6433 = vmax.f32 %v6283, 0.0
  %v6434 = vmax.f32 %v6284, 0.0
  %v6435 = vmax.f32 %v6285, 0.0
  %v6436 = vmax.f32 %v6286, 0.0
  %v6437 = vmax.f32 %v6287, 0.0
  %v6438 = vmax.f32 %v6288, 0.0
  %v6439 = vmax.f32 %v6289, 0.0
  %v6440 = vmax.f32 %v6290, 0.0
  %v6441 = vmax.f32 %v6291, 0.0
  %v6442 = vmax.f32 %v6292, 0.0
  %v6443 = vmax.f32 %v6293, 0.0
  %v6444 = vmax.f32 %v6294, 0.0
  %v6445 = vmax.f32 %v6295, 0.0
  %v6446 = vmax.f32 %v6296, 0.0
  %v6447 = vmax.f32 %v6297, 0.0
  %v6448 = vmax.f32 %v6298, 0.0
  %v6449 = vmax.f32 %v6299, 0.0
  %v6450 = vmax.f32 %v6300, 0.0
  %v6451 = vmax.f32 %v6301, 0.0
  %v6452 = vmax.f32 %v6302, 0.0
  %v6453 = vmax.f32 %v6303, 0.0
  %v6454 = vmax.f32 %v6304, 0.0
  %v6455 = vmax.f32 %v6305, 0.0
  %v6456 = vmax.f32 %v6306, 0.0
  %v6457 = vmax.f32 %v6307, 0.0
  %v6458 = vmax.f32 %v6308, 0.0
  %v6459 = vmax.f32 %v6309, 0.0
  %v6460 = vmax.f32 %v6310, 0.0
  %v6461 = vmax.f32 %v6311, 0.0
  %v6462 = vmax.f32 %v6312, 0.0
  %v6463 = vmax.f32 %v6313, 0.0
  %v6464 = vmax.f32 %v6314, 0.0
  %v6465 = vmax.f32 %v6315, 0.0
  %v6466 = vmax.f32 %v6316, 0.0
  %v6467 = vmax.f32 %v6317, 0.0
  %v6468 = vmax.f32 %v6318, 0.0
  %v6469 = vmax.f32 %v6319, 0.0
  %v6470 = vmax.f32 %v6320, 0.0
  %v6471 = vmax.f32 %v6321, 0.0
  %v6472 = vmax.f32 %v6322, 0.0
  %v6473 = vmax.f32 %v6323, 0.0
  %v6474 = vmax.f32 %v6324, 0.0
  %v6475 = vmax.f32 %v6325, 0.0
  %v6476 = vmax.f32 %v6326, 0.0
  %v6477 = vmax.f32 %v6327, 0.0
  %v6478 = vmax.f32 %v6328, 0.0
  %v6479 = vmax.f32 %v6329, 0.0
  %v6480 = vmax.f32 %v6330, 0.0
  %v6481 = vmax.f32 %v6331, 0.0
  %v6482 = vmax.f32 %v6332, 0.0
  %v6483 = vmax.f32 %v6333, 0.0
  %v6484 = vmax.f32 %v6334, 0.0
  %v6485 = vmax.f32 %v6335, 0.0
  %v6486 = vmax.f32 %v6336, 0.0
  %v6487 = vmax.f32 %v6337, 0.0
  %v6488 = vmax.f32 %v6338, 0.0
  %v6489 = vmax.f32 %v6339, 0.0
  %v6490 = vmax.f32 %v6340, 0.0
  %v6491 = vmax.f32 %v6341, 0.0
  %v6492 = vmax.f32 %v6342, 0.0
  %v6493 = vmax.f32 %v6343, 0.0
  %v6494 = vmax.f32 %v6344, 0.0
  %v6495 = vmax.f32 %v6345, 0.0
  %v6496 = vmax.f32 %v6346, 0.0
  %v6497 = vmax.f32 %v6347, 0.0
  %v6498 = vmax.f32 %v6348, 0.0
  %v6499 = vmax.f32 %v6349, 0.0
  %v6500 = vmax.f32 %v6350, 0.0
  %v6501 = vmax.f32 %v6351, 0.0
  %v6502 = vmax.f32 %v6352, 0.0
  %v6503 = vmax.f32 %v6353, 0.0
  %v6504 = vmax.f32 %v6354, 0.0
  %v6505 = vmax.f32 %v6355, 0.0
  %v6506 = vmax.f32 %v6356, 0.0
  %v6507 = vmax.f32 %v6357, 0.0
  %v6508 = vmax.f32 %v6358, 0.0
  %v6509 = vmax.f32 %v6359, 0.0
  %v6510 = vmax.f32 %v6360, 0.0
  %v6511 = vmax.f32 %v6361, 0.0
  %v6512 = vmax.f32 %v6362, 0.0
  %v6513 = vmax.f32 %v6363, 0.0
  %v6514 = vmax.f32 %v6364, 0.0
  %v6515 = vmax.f32 %v6365, 0.0
  %v6516 = vmax.f32 %v6366, 0.0
  %v6517 = vmax.f32 %v6367, 0.0
  %v6518 = vmax.f32 %v6368, 0.0
  %v6519 = vmax.f32 %v6369, 0.0
  %v6520 = vmax.f32 %v6370, 0.0
  %v6521 = vmax.f32 %v6371, 0.0
  %v6522 = vmax.f32 %v6372, 0.0
  %v6523 = vmax.f32 %v6373, 0.0
  %v6524 = vmax.f32 %v6374, 0.0
  %v6525 = vmax.f32 %v6375, 0.0
  %v6526 = vmax.f32 %v6376, 0.0
  %v6527 = vmax.f32 %v6377, 0.0
  %v6528 = vmax.f32 %v6378, 0.0
  %v6529 = vmax.f32 %v6379, 0.0
  %v6530 = vmax.f32 %v6380, 0.0
  %v6531 = vmax.f32 %v6381, 0.0
  %v6532 = vmax.f32 %v6382, 0.0
  %v6533 = vmax.f32 %v6383, 0.0
  %v6534 = vmax.f32 %v6384, 0.0
  %v6535 = vmax.f32 %v6385, 0.0
  %v6536 = vmax.f32 %v6386, 0.0
  %v6537 = vmax.f32 %v6387, 0.0
  %v6538 = vmax.f32 %v6388, 0.0
  %v6539 = vpack.c.bf16 %v6389, %v6389
  %v6540 = vpack.c.bf16 %v6390, %v6390
  %v6541 = vpack.c.bf16 %v6391, %v6391
  %v6542 = vpack.c.bf16 %v6392, %v6392
  %v6543 = vpack.c.bf16 %v6393, %v6393
  %v6544 = vpack.c.bf16 %v6394, %v6394
  %v6545 = vpack.c.bf16 %v6395, %v6395
  %v6546 = vpack.c.bf16 %v6396, %v6396
  %v6547 = vpack.c.bf16 %v6397, %v6397
  %v6548 = vpack.c.bf16 %v6398, %v6398
  %v6549 = vpack.c.bf16 %v6399, %v6399
  %v6550 = vpack.c.bf16 %v6400, %v6400
  %v6551 = vpack.c.bf16 %v6401, %v6401
  %v6552 = vpack.c.bf16 %v6402, %v6402
  %v6553 = vpack.c.bf16 %v6403, %v6403
  %v6554 = vpack.c.bf16 %v6404, %v6404
  %v6555 = vpack.c.bf16 %v6405, %v6405
  %v6556 = vpack.c.bf16 %v6406, %v6406
  %v6557 = vpack.c.bf16 %v6407, %v6407
  %v6558 = vpack.c.bf16 %v6408, %v6408
  %v6559 = vpack.c.bf16 %v6409, %v6409
  %v6560 = vpack.c.bf16 %v6410, %v6410
  %v6561 = vpack.c.bf16 %v6411, %v6411
  %v6562 = vpack.c.bf16 %v6412, %v6412
  %v6563 = vpack.c.bf16 %v6413, %v6413
  %v6564 = vpack.c.bf16 %v6414, %v6414
  %v6565 = vpack.c.bf16 %v6415, %v6415
  %v6566 = vpack.c.bf16 %v6416, %v6416
  %v6567 = vpack.c.bf16 %v6417, %v6417
  %v6568 = vpack.c.bf16 %v6418, %v6418
  %v6569 = vpack.c.bf16 %v6419, %v6419
  %v6570 = vpack.c.bf16 %v6420, %v6420
  %v6571 = vpack.c.bf16 %v6421, %v6421
  %v6572 = vpack.c.bf16 %v6422, %v6422
  %v6573 = vpack.c.bf16 %v6423, %v6423
  %v6574 = vpack.c.bf16 %v6424, %v6424
  %v6575 = vpack.c.bf16 %v6425, %v6425
  %v6576 = vpack.c.bf16 %v6426, %v6426
  %v6577 = vpack.c.bf16 %v6427, %v6427
  %v6578 = vpack.c.bf16 %v6428, %v6428
  %v6579 = vpack.c.bf16 %v6429, %v6429
  %v6580 = vpack.c.bf16 %v6430, %v6430
  %v6581 = vpack.c.bf16 %v6431, %v6431
  %v6582 = vpack.c.bf16 %v6432, %v6432
  %v6583 = vpack.c.bf16 %v6433, %v6433
  %v6584 = vpack.c.bf16 %v6434, %v6434
  %v6585 = vpack.c.bf16 %v6435, %v6435
  %v6586 = vpack.c.bf16 %v6436, %v6436
  %v6587 = vpack.c.bf16 %v6437, %v6437
  %v6588 = vpack.c.bf16 %v6438, %v6438
  %v6589 = vpack.c.bf16 %v6439, %v6439
  %v6590 = vpack.c.bf16 %v6440, %v6440
  %v6591 = vpack.c.bf16 %v6441, %v6441
  %v6592 = vpack.c.bf16 %v6442, %v6442
  %v6593 = vpack.c.bf16 %v6443, %v6443
  %v6594 = vpack.c.bf16 %v6444, %v6444
  %v6595 = vpack.c.bf16 %v6445, %v6445
  %v6596 = vpack.c.bf16 %v6446, %v6446
  %v6597 = vpack.c.bf16 %v6447, %v6447
  %v6598 = vpack.c.bf16 %v6448, %v6448
  %v6599 = vpack.c.bf16 %v6449, %v6449
  %v6600 = vpack.c.bf16 %v6450, %v6450
  %v6601 = vpack.c.bf16 %v6451, %v6451
  %v6602 = vpack.c.bf16 %v6452, %v6452
  %v6603 = vpack.c.bf16 %v6453, %v6453
  %v6604 = vpack.c.bf16 %v6454, %v6454
  %v6605 = vpack.c.bf16 %v6455, %v6455
  %v6606 = vpack.c.bf16 %v6456, %v6456
  %v6607 = vpack.c.bf16 %v6457, %v6457
  %v6608 = vpack.c.bf16 %v6458, %v6458
  %v6609 = vpack.c.bf16 %v6459, %v6459
  %v6610 = vpack.c.bf16 %v6460, %v6460
  %v6611 = vpack.c.bf16 %v6461, %v6461
  %v6612 = vpack.c.bf16 %v6462, %v6462
  %v6613 = vpack.c.bf16 %v6463, %v6463
  %v6614 = vpack.c.bf16 %v6464, %v6464
  %v6615 = vpack.c.bf16 %v6465, %v6465
  %v6616 = vpack.c.bf16 %v6466, %v6466
  %v6617 = vpack.c.bf16 %v6467, %v6467
  %v6618 = vpack.c.bf16 %v6468, %v6468
  %v6619 = vpack.c.bf16 %v6469, %v6469
  %v6620 = vpack.c.bf16 %v6470, %v6470
  %v6621 = vpack.c.bf16 %v6471, %v6471
  %v6622 = vpack.c.bf16 %v6472, %v6472
  %v6623 = vpack.c.bf16 %v6473, %v6473
  %v6624 = vpack.c.bf16 %v6474, %v6474
  %v6625 = vpack.c.bf16 %v6475, %v6475
  %v6626 = vpack.c.bf16 %v6476, %v6476
  %v6627 = vpack.c.bf16 %v6477, %v6477
  %v6628 = vpack.c.bf16 %v6478, %v6478
  %v6629 = vpack.c.bf16 %v6479, %v6479
  %v6630 = vpack.c.bf16 %v6480, %v6480
  %v6631 = vpack.c.bf16 %v6481, %v6481
  %v6632 = vpack.c.bf16 %v6482, %v6482
  %v6633 = vpack.c.bf16 %v6483, %v6483
  %v6634 = vpack.c.bf16 %v6484, %v6484
  %v6635 = vpack.c.bf16 %v6485, %v6485
  %v6636 = vpack.c.bf16 %v6486, %v6486
  %v6637 = vpack.c.bf16 %v6487, %v6487
  %v6638 = vpack.c.bf16 %v6488, %v6488
  %v6639 = vpack.c.bf16 %v6489, %v6489
  %v6640 = vpack.c.bf16 %v6490, %v6490
  %v6641 = vpack.c.bf16 %v6491, %v6491
  %v6642 = vpack.c.bf16 %v6492, %v6492
  %v6643 = vpack.c.bf16 %v6493, %v6493
  %v6644 = vpack.c.bf16 %v6494, %v6494
  %v6645 = vpack.c.bf16 %v6495, %v6495
  %v6646 = vpack.c.bf16 %v6496, %v6496
  %v6647 = vpack.c.bf16 %v6497, %v6497
  %v6648 = vpack.c.bf16 %v6498, %v6498
  %v6649 = vpack.c.bf16 %v6499, %v6499
  %v6650 = vpack.c.bf16 %v6500, %v6500
  %v6651 = vpack.c.bf16 %v6501, %v6501
  %v6652 = vpack.c.bf16 %v6502, %v6502
  %v6653 = vpack.c.bf16 %v6503, %v6503
  %v6654 = vpack.c.bf16 %v6504, %v6504
  %v6655 = vpack.c.bf16 %v6505, %v6505
  %v6656 = vpack.c.bf16 %v6506, %v6506
  %v6657 = vpack.c.bf16 %v6507, %v6507
  %v6658 = vpack.c.bf16 %v6508, %v6508
  %v6659 = vpack.c.bf16 %v6509, %v6509
  %v6660 = vpack.c.bf16 %v6510, %v6510
  %v6661 = vpack.c.bf16 %v6511, %v6511
  %v6662 = vpack.c.bf16 %v6512, %v6512
  %v6663 = vpack.c.bf16 %v6513, %v6513
  %v6664 = vpack.c.bf16 %v6514, %v6514
  %v6665 = vpack.c.bf16 %v6515, %v6515
  %v6666 = vpack.c.bf16 %v6516, %v6516
  %v6667 = vpack.c.bf16 %v6517, %v6517
  %v6668 = vpack.c.bf16 %v6518, %v6518
  %v6669 = vpack.c.bf16 %v6519, %v6519
  %v6670 = vpack.c.bf16 %v6520, %v6520
  %v6671 = vpack.c.bf16 %v6521, %v6521
  %v6672 = vpack.c.bf16 %v6522, %v6522
  %v6673 = vpack.c.bf16 %v6523, %v6523
  %v6674 = vpack.c.bf16 %v6524, %v6524
  %v6675 = vpack.c.bf16 %v6525, %v6525
  %v6676 = vpack.c.bf16 %v6526, %v6526
  %v6677 = vpack.c.bf16 %v6527, %v6527
  %v6678 = vpack.c.bf16 %v6528, %v6528
  %v6679 = vpack.c.bf16 %v6529, %v6529
  %v6680 = vpack.c.bf16 %v6530, %v6530
  %v6681 = vpack.c.bf16 %v6531, %v6531
  %v6682 = vpack.c.bf16 %v6532, %v6532
  %v6683 = vpack.c.bf16 %v6533, %v6533
  %v6684 = vpack.c.bf16 %v6534, %v6534
  %v6685 = vpack.c.bf16 %v6535, %v6535
  %v6686 = vpack.c.bf16 %v6536, %v6536
  %v6687 = vpack.c.bf16 %v6537, %v6537
  %v6688 = vpack.c.bf16 %v6538, %v6538
  %v6839 = vunpack.c.l.b16 %v6539
  %v6840 = vunpack.c.l.b16 %v6540
  %v6841 = vunpack.c.l.b16 %v6544
  %v6842 = vunpack.c.l.b16 %v6545
  %v6843 = vunpack.c.l.b16 %v6549
  %v6844 = vunpack.c.l.b16 %v6550
  %v6845 = vunpack.c.l.b16 %v6554
  %v6846 = vunpack.c.l.b16 %v6555
  %v6847 = vunpack.c.l.b16 %v6541
  %v6848 = vunpack.c.l.b16 %v6546
  %v6849 = vunpack.c.l.b16 %v6551
  %v6850 = vunpack.c.l.b16 %v6556
  %v6851 = vunpack.c.l.b16 %v6542
  %v6852 = vunpack.c.l.b16 %v6547
  %v6853 = vunpack.c.l.b16 %v6552
  %v6854 = vunpack.c.l.b16 %v6557
  %v6855 = vunpack.c.l.b16 %v6543
  %v6856 = vunpack.c.l.b16 %v6548
  %v6857 = vunpack.c.l.b16 %v6553
  %v6858 = vunpack.c.l.b16 %v6558
  %v6859 = vunpack.c.l.b16 %v6559
  %v6860 = vunpack.c.l.b16 %v6560
  %v6861 = vunpack.c.l.b16 %v6564
  %v6862 = vunpack.c.l.b16 %v6565
  %v6863 = vunpack.c.l.b16 %v6561
  %v6864 = vunpack.c.l.b16 %v6566
  %v6865 = vunpack.c.l.b16 %v6562
  %v6866 = vunpack.c.l.b16 %v6567
  %v6867 = vunpack.c.l.b16 %v6563
  %v6868 = vunpack.c.l.b16 %v6568
  %v6869 = vunpack.c.l.b16 %v6569
  %v6870 = vunpack.c.l.b16 %v6570
  %v6871 = vunpack.c.l.b16 %v6574
  %v6872 = vunpack.c.l.b16 %v6575
  %v6873 = vunpack.c.l.b16 %v6571
  %v6874 = vunpack.c.l.b16 %v6576
  %v6875 = vunpack.c.l.b16 %v6572
  %v6876 = vunpack.c.l.b16 %v6577
  %v6877 = vunpack.c.l.b16 %v6573
  %v6878 = vunpack.c.l.b16 %v6578
  %v6879 = vunpack.c.l.b16 %v6579
  %v6880 = vunpack.c.l.b16 %v6580
  %v6881 = vunpack.c.l.b16 %v6584
  %v6882 = vunpack.c.l.b16 %v6585
  %v6883 = vunpack.c.l.b16 %v6581
  %v6884 = vunpack.c.l.b16 %v6586
  %v6885 = vunpack.c.l.b16 %v6582
  %v6886 = vunpack.c.l.b16 %v6587
  %v6887 = vunpack.c.l.b16 %v6583
  %v6888 = vunpack.c.l.b16 %v6588
  %v6889 = vunpack.c.l.b16 %v6589
  %v6890 = vunpack.c.l.b16 %v6590
  %v6891 = vunpack.c.l.b16 %v6594
  %v6892 = vunpack.c.l.b16 %v6595
  %v6893 = vunpack.c.l.b16 %v6591
  %v6894 = vunpack.c.l.b16 %v6596
  %v6895 = vunpack.c.l.b16 %v6592
  %v6896 = vunpack.c.l.b16 %v6597
  %v6897 = vunpack.c.l.b16 %v6593
  %v6898 = vunpack.c.l.b16 %v6598
  %v6899 = vunpack.c.l.b16 %v6599
  %v6900 = vunpack.c.l.b16 %v6600
  %v6901 = vunpack.c.l.b16 %v6604
  %v6902 = vunpack.c.l.b16 %v6605
  %v6903 = vunpack.c.l.b16 %v6601
  %v6904 = vunpack.c.l.b16 %v6606
  %v6905 = vunpack.c.l.b16 %v6602
  %v6906 = vunpack.c.l.b16 %v6607
  %v6907 = vunpack.c.l.b16 %v6603
  %v6908 = vunpack.c.l.b16 %v6608
  %v6909 = vunpack.c.l.b16 %v6609
  %v6910 = vunpack.c.l.b16 %v6610
  %v6911 = vunpack.c.l.b16 %v6614
  %v6912 = vunpack.c.l.b16 %v6615
  %v6913 = vunpack.c.l.b16 %v6611
  %v6914 = vunpack.c.l.b16 %v6616
  %v6915 = vunpack.c.l.b16 %v6612
  %v6916 = vunpack.c.l.b16 %v6617
  %v6917 = vunpack.c.l.b16 %v6613
  %v6918 = vunpack.c.l.b16 %v6618
  %v6919 = vunpack.c.l.b16 %v6619
  %v6920 = vunpack.c.l.b16 %v6620
  %v6921 = vunpack.c.l.b16 %v6624
  %v6922 = vunpack.c.l.b16 %v6625
  %v6923 = vunpack.c.l.b16 %v6621
  %v6924 = vunpack.c.l.b16 %v6626
  %v6925 = vunpack.c.l.b16 %v6622
  %v6926 = vunpack.c.l.b16 %v6627
  %v6927 = vunpack.c.l.b16 %v6623
  %v6928 = vunpack.c.l.b16 %v6628
  %v6929 = vunpack.c.l.b16 %v6629
  %v6930 = vunpack.c.l.b16 %v6630
  %v6931 = vunpack.c.l.b16 %v6634
  %v6932 = vunpack.c.l.b16 %v6635
  %v6933 = vunpack.c.l.b16 %v6631
  %v6934 = vunpack.c.l.b16 %v6636
  %v6935 = vunpack.c.l.b16 %v6632
  %v6936 = vunpack.c.l.b16 %v6637
  %v6937 = vunpack.c.l.b16 %v6633
  %v6938 = vunpack.c.l.b16 %v6638
  %v6939 = vunpack.c.l.b16 %v6639
  %v6940 = vunpack.c.l.b16 %v6640
  %v6941 = vunpack.c.l.b16 %v6644
  %v6942 = vunpack.c.l.b16 %v6645
  %v6943 = vunpack.c.l.b16 %v6641
  %v6944 = vunpack.c.l.b16 %v6646
  %v6945 = vunpack.c.l.b16 %v6642
  %v6946 = vunpack.c.l.b16 %v6647
  %v6947 = vunpack.c.l.b16 %v6643
  %v6948 = vunpack.c.l.b16 %v6648
  %v6949 = vunpack.c.l.b16 %v6649
  %v6950 = vunpack.c.l.b16 %v6650
  %v6951 = vunpack.c.l.b16 %v6654
  %v6952 = vunpack.c.l.b16 %v6655
  %v6953 = vunpack.c.l.b16 %v6651
  %v6954 = vunpack.c.l.b16 %v6656
  %v6955 = vunpack.c.l.b16 %v6652
  %v6956 = vunpack.c.l.b16 %v6657
  %v6957 = vunpack.c.l.b16 %v6653
  %v6958 = vunpack.c.l.b16 %v6658
  %v6959 = vunpack.c.l.b16 %v6659
  %v6960 = vunpack.c.l.b16 %v6660
  %v6961 = vunpack.c.l.b16 %v6664
  %v6962 = vunpack.c.l.b16 %v6665
  %v6963 = vunpack.c.l.b16 %v6661
  %v6964 = vunpack.c.l.b16 %v6666
  %v6965 = vunpack.c.l.b16 %v6662
  %v6966 = vunpack.c.l.b16 %v6667
  %v6967 = vunpack.c.l.b16 %v6663
  %v6968 = vunpack.c.l.b16 %v6668
  %v6969 = vunpack.c.l.b16 %v6669
  %v6970 = vunpack.c.l.b16 %v6670
  %v6971 = vunpack.c.l.b16 %v6674
  %v6972 = vunpack.c.l.b16 %v6675
  %v6973 = vunpack.c.l.b16 %v6671
  %v6974 = vunpack.c.l.b16 %v6676
  %v6975 = vunpack.c.l.b16 %v6672
  %v6976 = vunpack.c.l.b16 %v6677
  %v6977 = vunpack.c.l.b16 %v6673
  %v6978 = vunpack.c.l.b16 %v6678
  %v6979 = vunpack.c.l.b16 %v6679
  %v6980 = vunpack.c.l.b16 %v6680
  %v6981 = vunpack.c.l.b16 %v6684
  %v6982 = vunpack.c.l.b16 %v6685
  %v6983 = vunpack.c.l.b16 %v6681
  %v6984 = vunpack.c.l.b16 %v6686
  %v6985 = vunpack.c.l.b16 %v6682
  %v6986 = vunpack.c.l.b16 %v6687
  %v6987 = vunpack.c.l.b16 %v6683
  %v6988 = vunpack.c.l.b16 %v6688
  %v6989 = vld [vmem:[%s3] sm:$0xf]
  %v6990 = vld [vmem:[%s3 + $0x4] sm:$0xf]
  %v6991 = vld [vmem:[%s3 + $0x8] sm:$0xf]
  %v6992 = vld [vmem:[%s3 + $0xc] sm:$0xf]
  %v6993 = vld [vmem:[%s3 + $0x10] sm:$0xf]
  %v6994 = vld [vmem:[%s3 + $0x14] sm:$0xf]
  %v6995 = vld [vmem:[%s3 + $0x18] sm:$0xf]
  %v6996 = vld [vmem:[%s3 + $0x1c] sm:$0xf]
  %v6997 = vld [vmem:[%s3 + $0x20] sm:$0xf]
  %v6998 = vld [vmem:[%s3 + $0x24] sm:$0xf]
  %v6999 = vld [vmem:[%s3 + $0x28] sm:$0xf]
  %v7000 = vld [vmem:[%s3 + $0x2c] sm:$0xf]
  %v7001 = vld [vmem:[%s3 + $0x30] sm:$0xf]
  %v7002 = vld [vmem:[%s3 + $0x34] sm:$0xf]
  %v7003 = vld [vmem:[%s3 + $0x38] sm:$0xf]
  %v7004 = vld [vmem:[%s3 + $0x3c] sm:$0xf]
  %v7005 = vld [vmem:[%s3 + $0x40] sm:$0xf]
  %v7006 = vld [vmem:[%s3 + $0x44] sm:$0xf]
  %v7007 = vld [vmem:[%s3 + $0x48] sm:$0xf]
  %v7008 = vld [vmem:[%s3 + $0x4c] sm:$0xf]
  %v7009 = vld [vmem:[%s3 + $0x50] sm:$0xf]
  %v7010 = vld [vmem:[%s3 + $0x54] sm:$0xf]
  %v7011 = vld [vmem:[%s3 + $0x58] sm:$0xf]
  %v7012 = vld [vmem:[%s3 + $0x5c] sm:$0xf]
  %v7013 = vld [vmem:[%s3 + $0x60] sm:$0xf]
  %v7014 = vld [vmem:[%s3 + $0x64] sm:$0xf]
  %v7015 = vld [vmem:[%s3 + $0x68] sm:$0xf]
  %v7016 = vld [vmem:[%s3 + $0x6c] sm:$0xf]
  %v7017 = vld [vmem:[%s3 + $0x70] sm:$0xf]
  %v7018 = vld [vmem:[%s3 + $0x74] sm:$0xf]
  %v7019 = vld [vmem:[%s3 + $0x78] sm:$0xf]
  %v7020 = vld [vmem:[%s3 + $0x7c] sm:$0xf]
  %v7021 = vld [vmem:[%s3 + $0x80] sm:$0xf]
  %v7022 = vld [vmem:[%s3 + $0x84] sm:$0xf]
  %v7023 = vld [vmem:[%s3 + $0x88] sm:$0xf]
  %v7024 = vld [vmem:[%s3 + $0x8c] sm:$0xf]
  %v7025 = vld [vmem:[%s3 + $0x90] sm:$0xf]
  %v7026 = vld [vmem:[%s3 + $0x94] sm:$0xf]
  %v7027 = vld [vmem:[%s3 + $0x98] sm:$0xf]
  %v7028 = vld [vmem:[%s3 + $0x9c] sm:$0xf]
  %v7029 = vld [vmem:[%s3 + $0xa0] sm:$0xf]
  %v7030 = vld [vmem:[%s3 + $0xa4] sm:$0xf]
  %v7031 = vld [vmem:[%s3 + $0xa8] sm:$0xf]
  %v7032 = vld [vmem:[%s3 + $0xac] sm:$0xf]
  %v7033 = vld [vmem:[%s3 + $0xb0] sm:$0xf]
  %v7034 = vld [vmem:[%s3 + $0xb4] sm:$0xf]
  %v7035 = vld [vmem:[%s3 + $0xb8] sm:$0xf]
  %v7036 = vld [vmem:[%s3 + $0xbc] sm:$0xf]
  %v7037 = vld [vmem:[%s3 + $0xc0] sm:$0xf]
  %v7038 = vld [vmem:[%s3 + $0xc4] sm:$0xf]
  %v7039 = vld [vmem:[%s3 + $0xc8] sm:$0xf]
  %v7040 = vld [vmem:[%s3 + $0xcc] sm:$0xf]
  %v7041 = vld [vmem:[%s3 + $0xd0] sm:$0xf]
  %v7042 = vld [vmem:[%s3 + $0xd4] sm:$0xf]
  %v7043 = vld [vmem:[%s3 + $0xd8] sm:$0xf]
  %v7044 = vld [vmem:[%s3 + $0xdc] sm:$0xf]
  %v7045 = vld [vmem:[%s3 + $0xe0] sm:$0xf]
  %v7046 = vld [vmem:[%s3 + $0xe4] sm:$0xf]
  %v7047 = vld [vmem:[%s3 + $0xe8] sm:$0xf]
  %v7048 = vld [vmem:[%s3 + $0xec] sm:$0xf]
  %v7049 = vld [vmem:[%s3 + $0xf0] sm:$0xf]
  %v7050 = vld [vmem:[%s3 + $0xf4] sm:$0xf]
  %v7051 = vld [vmem:[%s3 + $0xf8] sm:$0xf]
  %v7052 = vld [vmem:[%s3 + $0xfc] sm:$0xf]
  %v7053 = vld [vmem:[%s3 + $0x100] sm:$0xf]
  %v7054 = vld [vmem:[%s3 + $0x104] sm:$0xf]
  %v7055 = vld [vmem:[%s3 + $0x108] sm:$0xf]
  %v7056 = vld [vmem:[%s3 + $0x10c] sm:$0xf]
  %v7057 = vld [vmem:[%s3 + $0x110] sm:$0xf]
  %v7058 = vld [vmem:[%s3 + $0x114] sm:$0xf]
  %v7059 = vld [vmem:[%s3 + $0x118] sm:$0xf]
  %v7060 = vld [vmem:[%s3 + $0x11c] sm:$0xf]
  %v7061 = vld [vmem:[%s3 + $0x120] sm:$0xf]
  %v7062 = vld [vmem:[%s3 + $0x124] sm:$0xf]
  %v7063 = vld [vmem:[%s3 + $0x128] sm:$0xf]
  %v7064 = vld [vmem:[%s3 + $0x12c] sm:$0xf]
  %v7065 = vld [vmem:[%s3 + $0x130] sm:$0xf]
  %v7066 = vld [vmem:[%s3 + $0x134] sm:$0xf]
  %v7067 = vld [vmem:[%s3 + $0x138] sm:$0xf]
  %v7068 = vld [vmem:[%s3 + $0x13c] sm:$0xf]
  %v7069 = vld [vmem:[%s3 + $0x140] sm:$0xf]
  %v7070 = vld [vmem:[%s3 + $0x144] sm:$0xf]
  %v7071 = vld [vmem:[%s3 + $0x148] sm:$0xf]
  %v7072 = vld [vmem:[%s3 + $0x14c] sm:$0xf]
  %v7073 = vld [vmem:[%s3 + $0x150] sm:$0xf]
  %v7074 = vld [vmem:[%s3 + $0x154] sm:$0xf]
  %v7075 = vld [vmem:[%s3 + $0x158] sm:$0xf]
  %v7076 = vld [vmem:[%s3 + $0x15c] sm:$0xf]
  %v7077 = vld [vmem:[%s3 + $0x160] sm:$0xf]
  %v7078 = vld [vmem:[%s3 + $0x164] sm:$0xf]
  %v7079 = vld [vmem:[%s3 + $0x168] sm:$0xf]
  %v7080 = vld [vmem:[%s3 + $0x16c] sm:$0xf]
  %v7081 = vld [vmem:[%s3 + $0x170] sm:$0xf]
  %v7082 = vld [vmem:[%s3 + $0x174] sm:$0xf]
  %v7083 = vld [vmem:[%s3 + $0x178] sm:$0xf]
  %v7084 = vld [vmem:[%s3 + $0x17c] sm:$0xf]
  %v7085 = vld [vmem:[%s3 + $0x180] sm:$0xf]
  %v7086 = vld [vmem:[%s3 + $0x184] sm:$0xf]
  %v7087 = vld [vmem:[%s3 + $0x188] sm:$0xf]
  %v7088 = vld [vmem:[%s3 + $0x18c] sm:$0xf]
  %v7089 = vld [vmem:[%s3 + $0x190] sm:$0xf]
  %v7090 = vld [vmem:[%s3 + $0x194] sm:$0xf]
  %v7091 = vld [vmem:[%s3 + $0x198] sm:$0xf]
  %v7092 = vld [vmem:[%s3 + $0x19c] sm:$0xf]
  %v7093 = vld [vmem:[%s3 + $0x1a0] sm:$0xf]
  %v7094 = vld [vmem:[%s3 + $0x1a4] sm:$0xf]
  %v7095 = vld [vmem:[%s3 + $0x1a8] sm:$0xf]
  %v7096 = vld [vmem:[%s3 + $0x1ac] sm:$0xf]
  %v7097 = vld [vmem:[%s3 + $0x1b0] sm:$0xf]
  %v7098 = vld [vmem:[%s3 + $0x1b4] sm:$0xf]
  %v7099 = vld [vmem:[%s3 + $0x1b8] sm:$0xf]
  %v7100 = vld [vmem:[%s3 + $0x1bc] sm:$0xf]
  %v7101 = vld [vmem:[%s3 + $0x1c0] sm:$0xf]
  %v7102 = vld [vmem:[%s3 + $0x1c4] sm:$0xf]
  %v7103 = vld [vmem:[%s3 + $0x1c8] sm:$0xf]
  %v7104 = vld [vmem:[%s3 + $0x1cc] sm:$0xf]
  %v7105 = vld [vmem:[%s3 + $0x1d0] sm:$0xf]
  %v7106 = vld [vmem:[%s3 + $0x1d4] sm:$0xf]
  %v7107 = vld [vmem:[%s3 + $0x1d8] sm:$0xf]
  %v7108 = vld [vmem:[%s3 + $0x1dc] sm:$0xf]
  %v7109 = vld [vmem:[%s3 + $0x1e0] sm:$0xf]
  %v7110 = vld [vmem:[%s3 + $0x1e4] sm:$0xf]
  %v7111 = vld [vmem:[%s3 + $0x1e8] sm:$0xf]
  %v7112 = vld [vmem:[%s3 + $0x1ec] sm:$0xf]
  %v7113 = vld [vmem:[%s3 + $0x1f0] sm:$0xf]
  %v7114 = vld [vmem:[%s3 + $0x1f4] sm:$0xf]
  %v7115 = vld [vmem:[%s3 + $0x1f8] sm:$0xf]
  %v7116 = vld [vmem:[%s3 + $0x1fc] sm:$0xf]
  %v7117 = vpack.c.b16 %v6840, %v6839
  %v7118 = vpack.c.b16 %v6847, %v6840
  %v7119 = vpack.c.b16 %v6842, %v6841
  %v7120 = vpack.c.b16 %v6848, %v6842
  %v7121 = vpack.c.b16 %v6844, %v6843
  %v7122 = vpack.c.b16 %v6849, %v6844
  %v7123 = vpack.c.b16 %v6846, %v6845
  %v7124 = vpack.c.b16 %v6850, %v6846
  %v7125 = vpack.c.b16 %v6851, %v6847
  %v7126 = vpack.c.b16 %v6855, %v6851
  %v7127 = vpack.c.b16 %v6852, %v6848
  %v7128 = vpack.c.b16 %v6856, %v6852
  %v7129 = vpack.c.b16 %v6853, %v6849
  %v7130 = vpack.c.b16 %v6857, %v6853
  %v7131 = vpack.c.b16 %v6854, %v6850
  %v7132 = vpack.c.b16 %v6858, %v6854
  %v7133 = vpack.c.b16 %v6860, %v6859
  %v7134 = vpack.c.b16 %v6863, %v6860
  %v7135 = vpack.c.b16 %v6862, %v6861
  %v7136 = vpack.c.b16 %v6864, %v6862
  %v7137 = vpack.c.b16 %v6865, %v6863
  %v7138 = vpack.c.b16 %v6867, %v6865
  %v7139 = vpack.c.b16 %v6866, %v6864
  %v7140 = vpack.c.b16 %v6868, %v6866
  %v7141 = vpack.c.b16 %v6870, %v6869
  %v7142 = vpack.c.b16 %v6873, %v6870
  %v7143 = vpack.c.b16 %v6872, %v6871
  %v7144 = vpack.c.b16 %v6874, %v6872
  %v7145 = vpack.c.b16 %v6875, %v6873
  %v7146 = vpack.c.b16 %v6877, %v6875
  %v7147 = vpack.c.b16 %v6876, %v6874
  %v7148 = vpack.c.b16 %v6878, %v6876
  %v7149 = vpack.c.b16 %v6880, %v6879
  %v7150 = vpack.c.b16 %v6883, %v6880
  %v7151 = vpack.c.b16 %v6882, %v6881
  %v7152 = vpack.c.b16 %v6884, %v6882
  %v7153 = vpack.c.b16 %v6885, %v6883
  %v7154 = vpack.c.b16 %v6887, %v6885
  %v7155 = vpack.c.b16 %v6886, %v6884
  %v7156 = vpack.c.b16 %v6888, %v6886
  %v7157 = vpack.c.b16 %v6890, %v6889
  %v7158 = vpack.c.b16 %v6893, %v6890
  %v7159 = vpack.c.b16 %v6892, %v6891
  %v7160 = vpack.c.b16 %v6894, %v6892
  %v7161 = vpack.c.b16 %v6895, %v6893
  %v7162 = vpack.c.b16 %v6897, %v6895
  %v7163 = vpack.c.b16 %v6896, %v6894
  %v7164 = vpack.c.b16 %v6898, %v6896
  %v7165 = vpack.c.b16 %v6900, %v6899
  %v7166 = vpack.c.b16 %v6903, %v6900
  %v7167 = vpack.c.b16 %v6902, %v6901
  %v7168 = vpack.c.b16 %v6904, %v6902
  %v7169 = vpack.c.b16 %v6905, %v6903
  %v7170 = vpack.c.b16 %v6907, %v6905
  %v7171 = vpack.c.b16 %v6906, %v6904
  %v7172 = vpack.c.b16 %v6908, %v6906
  %v7173 = vpack.c.b16 %v6910, %v6909
  %v7174 = vpack.c.b16 %v6913, %v6910
  %v7175 = vpack.c.b16 %v6912, %v6911
  %v7176 = vpack.c.b16 %v6914, %v6912
  %v7177 = vpack.c.b16 %v6915, %v6913
  %v7178 = vpack.c.b16 %v6917, %v6915
  %v7179 = vpack.c.b16 %v6916, %v6914
  %v7180 = vpack.c.b16 %v6918, %v6916
  %v7181 = vpack.c.b16 %v6920, %v6919
  %v7182 = vpack.c.b16 %v6923, %v6920
  %v7183 = vpack.c.b16 %v6922, %v6921
  %v7184 = vpack.c.b16 %v6924, %v6922
  %v7185 = vpack.c.b16 %v6925, %v6923
  %v7186 = vpack.c.b16 %v6927, %v6925
  %v7187 = vpack.c.b16 %v6926, %v6924
  %v7188 = vpack.c.b16 %v6928, %v6926
  %v7189 = vpack.c.b16 %v6930, %v6929
  %v7190 = vpack.c.b16 %v6933, %v6930
  %v7191 = vpack.c.b16 %v6932, %v6931
  %v7192 = vpack.c.b16 %v6934, %v6932
  %v7193 = vpack.c.b16 %v6935, %v6933
  %v7194 = vpack.c.b16 %v6937, %v6935
  %v7195 = vpack.c.b16 %v6936, %v6934
  %v7196 = vpack.c.b16 %v6938, %v6936
  %v7197 = vpack.c.b16 %v6940, %v6939
  %v7198 = vpack.c.b16 %v6943, %v6940
  %v7199 = vpack.c.b16 %v6942, %v6941
  %v7200 = vpack.c.b16 %v6944, %v6942
  %v7201 = vpack.c.b16 %v6945, %v6943
  %v7202 = vpack.c.b16 %v6947, %v6945
  %v7203 = vpack.c.b16 %v6946, %v6944
  %v7204 = vpack.c.b16 %v6948, %v6946
  %v7205 = vpack.c.b16 %v6950, %v6949
  %v7206 = vpack.c.b16 %v6953, %v6950
  %v7207 = vpack.c.b16 %v6952, %v6951
  %v7208 = vpack.c.b16 %v6954, %v6952
  %v7209 = vpack.c.b16 %v6955, %v6953
  %v7210 = vpack.c.b16 %v6957, %v6955
  %v7211 = vpack.c.b16 %v6956, %v6954
  %v7212 = vpack.c.b16 %v6958, %v6956
  %v7213 = vpack.c.b16 %v6960, %v6959
  %v7214 = vpack.c.b16 %v6963, %v6960
  %v7215 = vpack.c.b16 %v6962, %v6961
  %v7216 = vpack.c.b16 %v6964, %v6962
  %v7217 = vpack.c.b16 %v6965, %v6963
  %v7218 = vpack.c.b16 %v6967, %v6965
  %v7219 = vpack.c.b16 %v6966, %v6964
  %v7220 = vpack.c.b16 %v6968, %v6966
  %v7221 = vpack.c.b16 %v6970, %v6969
  %v7222 = vpack.c.b16 %v6973, %v6970
  %v7223 = vpack.c.b16 %v6972, %v6971
  %v7224 = vpack.c.b16 %v6974, %v6972
  %v7225 = vpack.c.b16 %v6975, %v6973
  %v7226 = vpack.c.b16 %v6977, %v6975
  %v7227 = vpack.c.b16 %v6976, %v6974
  %v7228 = vpack.c.b16 %v6978, %v6976
  %v7229 = vpack.c.b16 %v6980, %v6979
  %v7230 = vpack.c.b16 %v6983, %v6980
  %v7231 = vpack.c.b16 %v6982, %v6981
  %v7232 = vpack.c.b16 %v6984, %v6982
  %v7233 = vpack.c.b16 %v6985, %v6983
  %v7234 = vpack.c.b16 %v6987, %v6985
  %v7235 = vpack.c.b16 %v6986, %v6984
  %v7236 = vpack.c.b16 %v6988, %v6986
  %v7485 = vunpack.c.l.b16 %v6989
  %v7486 = vunpack.c.l.b16 %v6990
  %v7487 = vunpack.c.l.b16 %v6991
  %v7488 = vunpack.c.l.b16 %v6992
  %v7489 = vunpack.c.l.b16 %v6993
  %v7490 = vunpack.c.l.b16 %v6994
  %v7491 = vunpack.c.l.b16 %v6995
  %v7492 = vunpack.c.l.b16 %v6996
  %v7493 = vunpack.c.l.b16 %v6997
  %v7494 = vunpack.c.l.b16 %v6998
  %v7495 = vunpack.c.l.b16 %v6999
  %v7496 = vunpack.c.l.b16 %v7000
  %v7497 = vunpack.c.l.b16 %v7001
  %v7498 = vunpack.c.l.b16 %v7002
  %v7499 = vunpack.c.l.b16 %v7003
  %v7500 = vunpack.c.l.b16 %v7004
  %v7501 = vunpack.c.l.b16 %v7005
  %v7502 = vunpack.c.l.b16 %v7006
  %v7503 = vunpack.c.l.b16 %v7007
  %v7504 = vunpack.c.l.b16 %v7008
  %v7505 = vunpack.c.l.b16 %v7009
  %v7506 = vunpack.c.l.b16 %v7010
  %v7507 = vunpack.c.l.b16 %v7011
  %v7508 = vunpack.c.l.b16 %v7012
  %v7509 = vunpack.c.l.b16 %v7013
  %v7510 = vunpack.c.l.b16 %v7014
  %v7511 = vunpack.c.l.b16 %v7015
  %v7512 = vunpack.c.l.b16 %v7016
  %v7513 = vunpack.c.l.b16 %v7017
  %v7514 = vunpack.c.l.b16 %v7018
  %v7515 = vunpack.c.l.b16 %v7019
  %v7516 = vunpack.c.l.b16 %v7020
  %v7517 = vunpack.c.l.b16 %v7021
  %v7518 = vunpack.c.l.b16 %v7022
  %v7519 = vunpack.c.l.b16 %v7023
  %v7520 = vunpack.c.l.b16 %v7024
  %v7521 = vunpack.c.l.b16 %v7025
  %v7522 = vunpack.c.l.b16 %v7026
  %v7523 = vunpack.c.l.b16 %v7027
  %v7524 = vunpack.c.l.b16 %v7028
  %v7525 = vunpack.c.l.b16 %v7029
  %v7526 = vunpack.c.l.b16 %v7030
  %v7527 = vunpack.c.l.b16 %v7031
  %v7528 = vunpack.c.l.b16 %v7032
  %v7529 = vunpack.c.l.b16 %v7033
  %v7530 = vunpack.c.l.b16 %v7034
  %v7531 = vunpack.c.l.b16 %v7035
  %v7532 = vunpack.c.l.b16 %v7036
  %v7533 = vunpack.c.l.b16 %v7037
  %v7534 = vunpack.c.l.b16 %v7038
  %v7535 = vunpack.c.l.b16 %v7039
  %v7536 = vunpack.c.l.b16 %v7040
  %v7537 = vunpack.c.l.b16 %v7041
  %v7538 = vunpack.c.l.b16 %v7042
  %v7539 = vunpack.c.l.b16 %v7043
  %v7540 = vunpack.c.l.b16 %v7044
  %v7541 = vunpack.c.l.b16 %v7045
  %v7542 = vunpack.c.l.b16 %v7046
  %v7543 = vunpack.c.l.b16 %v7047
  %v7544 = vunpack.c.l.b16 %v7048
  %v7545 = vunpack.c.l.b16 %v7049
  %v7546 = vunpack.c.l.b16 %v7050
  %v7547 = vunpack.c.l.b16 %v7051
  %v7548 = vunpack.c.l.b16 %v7052
  %v7549 = vunpack.c.l.b16 %v7053
  %v7550 = vunpack.c.l.b16 %v7054
  %v7551 = vunpack.c.l.b16 %v7055
  %v7552 = vunpack.c.l.b16 %v7056
  %v7553 = vunpack.c.l.b16 %v7057
  %v7554 = vunpack.c.l.b16 %v7058
  %v7555 = vunpack.c.l.b16 %v7059
  %v7556 = vunpack.c.l.b16 %v7060
  %v7557 = vunpack.c.l.b16 %v7061
  %v7558 = vunpack.c.l.b16 %v7062
  %v7559 = vunpack.c.l.b16 %v7063
  %v7560 = vunpack.c.l.b16 %v7064
  %v7561 = vunpack.c.l.b16 %v7065
  %v7562 = vunpack.c.l.b16 %v7066
  %v7563 = vunpack.c.l.b16 %v7067
  %v7564 = vunpack.c.l.b16 %v7068
  %v7565 = vunpack.c.l.b16 %v7069
  %v7566 = vunpack.c.l.b16 %v7070
  %v7567 = vunpack.c.l.b16 %v7071
  %v7568 = vunpack.c.l.b16 %v7072
  %v7569 = vunpack.c.l.b16 %v7073
  %v7570 = vunpack.c.l.b16 %v7074
  %v7571 = vunpack.c.l.b16 %v7075
  %v7572 = vunpack.c.l.b16 %v7076
  %v7573 = vunpack.c.l.b16 %v7077
  %v7574 = vunpack.c.l.b16 %v7078
  %v7575 = vunpack.c.l.b16 %v7079
  %v7576 = vunpack.c.l.b16 %v7080
  %v7577 = vunpack.c.l.b16 %v7081
  %v7578 = vunpack.c.l.b16 %v7082
  %v7579 = vunpack.c.l.b16 %v7083
  %v7580 = vunpack.c.l.b16 %v7084
  %v7581 = vunpack.c.l.b16 %v7085
  %v7582 = vunpack.c.l.b16 %v7086
  %v7583 = vunpack.c.l.b16 %v7087
  %v7584 = vunpack.c.l.b16 %v7088
  %v7585 = vunpack.c.l.b16 %v7089
  %v7586 = vunpack.c.l.b16 %v7090
  %v7587 = vunpack.c.l.b16 %v7091
  %v7588 = vunpack.c.l.b16 %v7092
  %v7589 = vunpack.c.l.b16 %v7093
  %v7590 = vunpack.c.l.b16 %v7094
  %v7591 = vunpack.c.l.b16 %v7095
  %v7592 = vunpack.c.l.b16 %v7096
  %v7593 = vunpack.c.l.b16 %v7097
  %v7594 = vunpack.c.l.b16 %v7098
  %v7595 = vunpack.c.l.b16 %v7099
  %v7596 = vunpack.c.l.b16 %v7100
  %v7597 = vunpack.c.l.b16 %v7101
  %v7598 = vunpack.c.l.b16 %v7102
  %v7599 = vunpack.c.l.b16 %v7103
  %v7600 = vunpack.c.l.b16 %v7104
  %v7601 = vunpack.c.l.b16 %v7105
  %v7602 = vunpack.c.l.b16 %v7106
  %v7603 = vunpack.c.l.b16 %v7107
  %v7604 = vunpack.c.l.b16 %v7108
  %v7605 = vunpack.c.l.b16 %v7109
  %v7606 = vunpack.c.l.b16 %v7110
  %v7607 = vunpack.c.l.b16 %v7111
  %v7608 = vunpack.c.l.b16 %v7112
  %v7609 = vunpack.c.l.b16 %v7113
  %v7610 = vunpack.c.l.b16 %v7114
  %v7611 = vunpack.c.l.b16 %v7115
  %v7612 = vunpack.c.l.b16 %v7116
  %v7613 = vpack.c.b16 %v7486, %v7485
  %v7614 = vpack.c.b16 %v7488, %v7487
  %v7615 = vpack.c.b16 %v7490, %v7489
  %v7616 = vpack.c.b16 %v7492, %v7491
  %v7617 = vpack.c.b16 %v7494, %v7493
  %v7618 = vpack.c.b16 %v7496, %v7495
  %v7619 = vpack.c.b16 %v7498, %v7497
  %v7620 = vpack.c.b16 %v7500, %v7499
  %v7621 = vpack.c.b16 %v7502, %v7501
  %v7622 = vpack.c.b16 %v7504, %v7503
  %v7623 = vpack.c.b16 %v7506, %v7505
  %v7624 = vpack.c.b16 %v7508, %v7507
  %v7625 = vpack.c.b16 %v7510, %v7509
  %v7626 = vpack.c.b16 %v7512, %v7511
  %v7627 = vpack.c.b16 %v7514, %v7513
  %v7628 = vpack.c.b16 %v7516, %v7515
  %v7629 = vpack.c.b16 %v7518, %v7517
  %v7630 = vpack.c.b16 %v7520, %v7519
  %v7631 = vpack.c.b16 %v7522, %v7521
  %v7632 = vpack.c.b16 %v7524, %v7523
  %v7633 = vpack.c.b16 %v7526, %v7525
  %v7634 = vpack.c.b16 %v7528, %v7527
  %v7635 = vpack.c.b16 %v7530, %v7529
  %v7636 = vpack.c.b16 %v7532, %v7531
  %v7637 = vpack.c.b16 %v7534, %v7533
  %v7638 = vpack.c.b16 %v7536, %v7535
  %v7639 = vpack.c.b16 %v7538, %v7537
  %v7640 = vpack.c.b16 %v7540, %v7539
  %v7641 = vpack.c.b16 %v7542, %v7541
  %v7642 = vpack.c.b16 %v7544, %v7543
  %v7643 = vpack.c.b16 %v7546, %v7545
  %v7644 = vpack.c.b16 %v7548, %v7547
  %v7645 = vpack.c.b16 %v7550, %v7549
  %v7646 = vpack.c.b16 %v7552, %v7551
  %v7647 = vpack.c.b16 %v7554, %v7553
  %v7648 = vpack.c.b16 %v7556, %v7555
  %v7649 = vpack.c.b16 %v7558, %v7557
  %v7650 = vpack.c.b16 %v7560, %v7559
  %v7651 = vpack.c.b16 %v7562, %v7561
  %v7652 = vpack.c.b16 %v7564, %v7563
  %v7653 = vpack.c.b16 %v7566, %v7565
  %v7654 = vpack.c.b16 %v7568, %v7567
  %v7655 = vpack.c.b16 %v7570, %v7569
  %v7656 = vpack.c.b16 %v7572, %v7571
  %v7657 = vpack.c.b16 %v7574, %v7573
  %v7658 = vpack.c.b16 %v7576, %v7575
  %v7659 = vpack.c.b16 %v7578, %v7577
  %v7660 = vpack.c.b16 %v7580, %v7579
  %v7661 = vpack.c.b16 %v7582, %v7581
  %v7662 = vpack.c.b16 %v7584, %v7583
  %v7663 = vpack.c.b16 %v7586, %v7585
  %v7664 = vpack.c.b16 %v7588, %v7587
  %v7665 = vpack.c.b16 %v7590, %v7589
  %v7666 = vpack.c.b16 %v7592, %v7591
  %v7667 = vpack.c.b16 %v7594, %v7593
  %v7668 = vpack.c.b16 %v7596, %v7595
  %v7669 = vpack.c.b16 %v7598, %v7597
  %v7670 = vpack.c.b16 %v7600, %v7599
  %v7671 = vpack.c.b16 %v7602, %v7601
  %v7672 = vpack.c.b16 %v7604, %v7603
  %v7673 = vpack.c.b16 %v7606, %v7605
  %v7674 = vpack.c.b16 %v7608, %v7607
  %v7675 = vpack.c.b16 %v7610, %v7609
  %v7676 = vpack.c.b16 %v7612, %v7611
  %7741 = vmatprep.subr.bf16.mxu0 0
  %7742 = vmatpush1.bf16.msra.mxu0 %v7613
  %7743 = vmatprep.subr.bf16.mxu0 0
  %7744 = vmatpush1.bf16.msra.mxu0 %v7614
  %7745 = vmatprep.subr.bf16.mxu0 0
  %7746 = vmatpush1.bf16.msra.mxu0 %v7615
  %7747 = vmatprep.subr.bf16.mxu0 0
  %7748 = vmatpush1.bf16.msra.mxu0 %v7616
  %7749 = vmatprep.subr.bf16.mxu0 0
  %7750 = vmatpush1.bf16.msra.mxu0 %v7617
  %7751 = vmatprep.subr.bf16.mxu0 0
  %7752 = vmatpush1.bf16.msra.mxu0 %v7618
  %7753 = vmatprep.subr.bf16.mxu0 0
  %7754 = vmatpush1.bf16.msra.mxu0 %v7619
  %7755 = vmatprep.subr.bf16.mxu0 0
  %7756 = vmatpush1.bf16.msra.mxu0 %v7620
  %7757 = vmatprep.subr.bf16.mxu0 0
  %7758 = vmatpush1.bf16.msra.mxu0 %v7621
  %7759 = vmatprep.subr.bf16.mxu0 0
  %7760 = vmatpush1.bf16.msra.mxu0 %v7622
  %7761 = vmatprep.subr.bf16.mxu0 0
  %7762 = vmatpush1.bf16.msra.mxu0 %v7623
  %7763 = vmatprep.subr.bf16.mxu0 0
  %7764 = vmatpush1.bf16.msra.mxu0 %v7624
  %7765 = vmatprep.subr.bf16.mxu0 0
  %7766 = vmatpush1.bf16.msra.mxu0 %v7625
  %7767 = vmatprep.subr.bf16.mxu0 0
  %7768 = vmatpush1.bf16.msra.mxu0 %v7626
  %7769 = vmatprep.subr.bf16.mxu0 0
  %7770 = vmatpush1.bf16.msra.mxu0 %v7627
  %7771 = vmatprep.subr.bf16.mxu0 0
  %7772 = vmatpush1.bf16.msra.mxu0 %v7628
  %7773 = vmatprep.mubr.bf16.mxu0 %v7118
  %7774 = vmatmul.mubr.bf16.gmra.mrb[0].mxu0 %v7117
  %v7775 = vpop.f32.mrb[0].mxu0
  %v7776 = vadd.f32 0.0, %v7775
  %v7777 = vpop.f32.mrb[0].mxu0
  %v7778 = vpop.f32.mrb[0].mxu0
  %v7779 = vadd.f32 0.0, %v7778
  %v7780 = vpop.f32.mrb[0].mxu0
  %7781 = vmatprep.mubr.bf16.mxu0 %v7126
  %7782 = vmatmul.mubr.bf16.gmra.mrb[0].mxu0 %v7125
  %v7783 = vpop.f32.mrb[0].mxu0
  %v7784 = vadd.f32 0.0, %v7783
  %v7785 = vpop.f32.mrb[0].mxu0
  %v7786 = vpop.f32.mrb[0].mxu0
  %v7787 = vadd.f32 0.0, %v7786
  %v7788 = vpop.f32.mrb[0].mxu0
  %7789 = vmatprep.mubr.bf16.mxu0 %v7122
  %7790 = vmatmul.mubr.bf16.gmra.mrb[0].mxu0 %v7121
  %v7791 = vpop.f32.mrb[0].mxu0
  %v7792 = vadd.f32 0.0, %v7791
  %v7793 = vpop.f32.mrb[0].mxu0
  %v7794 = vpop.f32.mrb[0].mxu0
  %v7795 = vadd.f32 0.0, %v7794
  %v7796 = vpop.f32.mrb[0].mxu0
  %7797 = vmatprep.mubr.bf16.mxu0 %v7130
  %7798 = vmatmul.mubr.bf16.gmra.mrb[0].mxu0 %v7129
  %v7799 = vpop.f32.mrb[0].mxu0
  %v7800 = vadd.f32 0.0, %v7799
  %v7801 = vpop.f32.mrb[0].mxu0
  %v7802 = vpop.f32.mrb[0].mxu0
  %v7803 = vadd.f32 0.0, %v7802
  %v7804 = vpop.f32.mrb[0].mxu0
  %7805 = vmatprep.mubr.bf16.mxu0 %v7134
  %7806 = vmatmul.mubr.bf16.gmra.mrb[0].mxu0 %v7133
  %v7807 = vpop.f32.mrb[0].mxu0
  %v7808 = vadd.f32 0.0, %v7807
  %v7809 = vpop.f32.mrb[0].mxu0
  %v7810 = vpop.f32.mrb[0].mxu0
  %v7811 = vadd.f32 0.0, %v7810
  %v7812 = vpop.f32.mrb[0].mxu0
  %7813 = vmatprep.mubr.bf16.mxu0 %v7138
  %7814 = vmatmul.mubr.bf16.gmra.mrb[0].mxu0 %v7137
  %v7815 = vpop.f32.mrb[0].mxu0
  %v7816 = vadd.f32 0.0, %v7815
  %v7817 = vpop.f32.mrb[0].mxu0
  %v7818 = vpop.f32.mrb[0].mxu0
  %v7819 = vadd.f32 0.0, %v7818
  %v7820 = vpop.f32.mrb[0].mxu0
  %7821 = vmatprep.mubr.bf16.mxu0 %v7142
  %7822 = vmatmul.mubr.bf16.gmra.mrb[0].mxu0 %v7141
  %v7823 = vpop.f32.mrb[0].mxu0
  %v7824 = vadd.f32 0.0, %v7823
  %v7825 = vpop.f32.mrb[0].mxu0
  %v7826 = vpop.f32.mrb[0].mxu0
  %v7827 = vadd.f32 0.0, %v7826
  %v7828 = vpop.f32.mrb[0].mxu0
  %7829 = vmatprep.mubr.bf16.mxu0 %v7146
  %7830 = vmatmul.mubr.bf16.gmra.mrb[0].mxu0 %v7145
  %v7831 = vpop.f32.mrb[0].mxu0
  %v7832 = vadd.f32 0.0, %v7831
  %v7833 = vpop.f32.mrb[0].mxu0
  %v7834 = vpop.f32.mrb[0].mxu0
  %v7835 = vadd.f32 0.0, %v7834
  %v7836 = vpop.f32.mrb[0].mxu0
  %7837 = vmatprep.mubr.bf16.mxu0 %v7150
  %7838 = vmatmul.mubr.bf16.gmra.mrb[0].mxu0 %v7149
  %v7839 = vpop.f32.mrb[0].mxu0
  %v7840 = vadd.f32 0.0, %v7839
  %v7841 = vpop.f32.mrb[0].mxu0
  %v7842 = vpop.f32.mrb[0].mxu0
  %v7843 = vadd.f32 0.0, %v7842
  %v7844 = vpop.f32.mrb[0].mxu0
  %7845 = vmatprep.mubr.bf16.mxu0 %v7154
  %7846 = vmatmul.mubr.bf16.gmra.mrb[0].mxu0 %v7153
  %v7847 = vpop.f32.mrb[0].mxu0
  %v7848 = vadd.f32 0.0, %v7847
  %v7849 = vpop.f32.mrb[0].mxu0
  %v7850 = vpop.f32.mrb[0].mxu0
  %v7851 = vadd.f32 0.0, %v7850
  %v7852 = vpop.f32.mrb[0].mxu0
  %7853 = vmatprep.mubr.bf16.mxu0 %v7158
  %7854 = vmatmul.mubr.bf16.gmra.mrb[0].mxu0 %v7157
  %v7855 = vpop.f32.mrb[0].mxu0
  %v7856 = vadd.f32 0.0, %v7855
  %v7857 = vpop.f32.mrb[0].mxu0
  %v7858 = vpop.f32.mrb[0].mxu0
  %v7859 = vadd.f32 0.0, %v7858
  %v7860 = vpop.f32.mrb[0].mxu0
  %7861 = vmatprep.mubr.bf16.mxu0 %v7162
  %7862 = vmatmul.mubr.bf16.gmra.mrb[0].mxu0 %v7161
  %v7863 = vpop.f32.mrb[0].mxu0
  %v7864 = vadd.f32 0.0, %v7863
  %v7865 = vpop.f32.mrb[0].mxu0
  %v7866 = vpop.f32.mrb[0].mxu0
  %v7867 = vadd.f32 0.0, %v7866
  %v7868 = vpop.f32.mrb[0].mxu0
  %7869 = vmatprep.mubr.bf16.mxu0 %v7166
  %7870 = vmatmul.mubr.bf16.gmra.mrb[0].mxu0 %v7165
  %v7871 = vpop.f32.mrb[0].mxu0
  %v7872 = vadd.f32 0.0, %v7871
  %v7873 = vpop.f32.mrb[0].mxu0
  %v7874 = vpop.f32.mrb[0].mxu0
  %v7875 = vadd.f32 0.0, %v7874
  %v7876 = vpop.f32.mrb[0].mxu0
  %7877 = vmatprep.mubr.bf16.mxu0 %v7170
  %7878 = vmatmul.mubr.bf16.gmra.mrb[0].mxu0 %v7169
  %v7879 = vpop.f32.mrb[0].mxu0
  %v7880 = vadd.f32 0.0, %v7879
  %v7881 = vpop.f32.mrb[0].mxu0
  %v7882 = vpop.f32.mrb[0].mxu0
  %v7883 = vadd.f32 0.0, %v7882
  %v7884 = vpop.f32.mrb[0].mxu0
  %7885 = vmatprep.mubr.bf16.mxu0 %v7174
  %7886 = vmatmul.mubr.bf16.gmra.mrb[0].mxu0 %v7173
  %v7887 = vpop.f32.mrb[0].mxu0
  %v7888 = vadd.f32 0.0, %v7887
  %v7889 = vpop.f32.mrb[0].mxu0
  %v7890 = vpop.f32.mrb[0].mxu0
  %v7891 = vadd.f32 0.0, %v7890
  %v7892 = vpop.f32.mrb[0].mxu0
  %7893 = vmatprep.mubr.bf16.mxu0 %v7178
  %7894 = vmatmul.mubr.bf16.gmra.mrb[0].mxu0 %v7177
  %v7895 = vpop.f32.mrb[0].mxu0
  %v7896 = vadd.f32 0.0, %v7895
  %v7897 = vpop.f32.mrb[0].mxu0
  %v7898 = vpop.f32.mrb[0].mxu0
  %v7899 = vadd.f32 0.0, %v7898
  %v7900 = vpop.f32.mrb[0].mxu0
  %7901 = vmatprep.mubr.bf16.mxu0 %v7182
  %7902 = vmatmul.mubr.bf16.gmra.mrb[0].mxu0 %v7181
  %v7903 = vpop.f32.mrb[0].mxu0
  %v7904 = vadd.f32 0.0, %v7903
  %v7905 = vpop.f32.mrb[0].mxu0
  %v7906 = vpop.f32.mrb[0].mxu0
  %v7907 = vadd.f32 0.0, %v7906
  %v7908 = vpop.f32.mrb[0].mxu0
  %7909 = vmatprep.mubr.bf16.mxu0 %v7186
  %7910 = vmatmul.mubr.bf16.gmra.mrb[0].mxu0 %v7185
  %v7911 = vpop.f32.mrb[0].mxu0
  %v7912 = vadd.f32 0.0, %v7911
  %v7913 = vpop.f32.mrb[0].mxu0
  %v7914 = vpop.f32.mrb[0].mxu0
  %v7915 = vadd.f32 0.0, %v7914
  %v7916 = vpop.f32.mrb[0].mxu0
  %7917 = vmatprep.mubr.bf16.mxu0 %v7190
  %7918 = vmatmul.mubr.bf16.gmra.mrb[0].mxu0 %v7189
  %v7919 = vpop.f32.mrb[0].mxu0
  %v7920 = vadd.f32 0.0, %v7919
  %v7921 = vpop.f32.mrb[0].mxu0
  %v7922 = vpop.f32.mrb[0].mxu0
  %v7923 = vadd.f32 0.0, %v7922
  %v7924 = vpop.f32.mrb[0].mxu0
  %7925 = vmatprep.mubr.bf16.mxu0 %v7194
  %7926 = vmatmul.mubr.bf16.gmra.mrb[0].mxu0 %v7193
  %v7927 = vpop.f32.mrb[0].mxu0
  %v7928 = vadd.f32 0.0, %v7927
  %v7929 = vpop.f32.mrb[0].mxu0
  %v7930 = vpop.f32.mrb[0].mxu0
  %v7931 = vadd.f32 0.0, %v7930
  %v7932 = vpop.f32.mrb[0].mxu0
  %7933 = vmatprep.mubr.bf16.mxu0 %v7198
  %7934 = vmatmul.mubr.bf16.gmra.mrb[0].mxu0 %v7197
  %v7935 = vpop.f32.mrb[0].mxu0
  %v7936 = vadd.f32 0.0, %v7935
  %v7937 = vpop.f32.mrb[0].mxu0
  %v7938 = vpop.f32.mrb[0].mxu0
  %v7939 = vadd.f32 0.0, %v7938
  %v7940 = vpop.f32.mrb[0].mxu0
  %7941 = vmatprep.mubr.bf16.mxu0 %v7202
  %7942 = vmatmul.mubr.bf16.gmra.mrb[0].mxu0 %v7201
  %v7943 = vpop.f32.mrb[0].mxu0
  %v7944 = vadd.f32 0.0, %v7943
  %v7945 = vpop.f32.mrb[0].mxu0
  %v7946 = vpop.f32.mrb[0].mxu0
  %v7947 = vadd.f32 0.0, %v7946
  %v7948 = vpop.f32.mrb[0].mxu0
  %7949 = vmatprep.mubr.bf16.mxu0 %v7206
  %7950 = vmatmul.mubr.bf16.gmra.mrb[0].mxu0 %v7205
  %v7951 = vpop.f32.mrb[0].mxu0
  %v7952 = vadd.f32 0.0, %v7951
  %v7953 = vpop.f32.mrb[0].mxu0
  %v7954 = vpop.f32.mrb[0].mxu0
  %v7955 = vadd.f32 0.0, %v7954
  %v7956 = vpop.f32.mrb[0].mxu0
  %7957 = vmatprep.mubr.bf16.mxu0 %v7210
  %7958 = vmatmul.mubr.bf16.gmra.mrb[0].mxu0 %v7209
  %v7959 = vpop.f32.mrb[0].mxu0
  %v7960 = vadd.f32 0.0, %v7959
  %v7961 = vpop.f32.mrb[0].mxu0
  %v7962 = vpop.f32.mrb[0].mxu0
  %v7963 = vadd.f32 0.0, %v7962
  %v7964 = vpop.f32.mrb[0].mxu0
  %7965 = vmatprep.mubr.bf16.mxu0 %v7214
  %7966 = vmatmul.mubr.bf16.gmra.mrb[0].mxu0 %v7213
  %v7967 = vpop.f32.mrb[0].mxu0
  %v7968 = vadd.f32 0.0, %v7967
  %v7969 = vpop.f32.mrb[0].mxu0
  %v7970 = vpop.f32.mrb[0].mxu0
  %v7971 = vadd.f32 0.0, %v7970
  %v7972 = vpop.f32.mrb[0].mxu0
  %7973 = vmatprep.mubr.bf16.mxu0 %v7218
  %7974 = vmatmul.mubr.bf16.gmra.mrb[0].mxu0 %v7217
  %v7975 = vpop.f32.mrb[0].mxu0
  %v7976 = vadd.f32 0.0, %v7975
  %v7977 = vpop.f32.mrb[0].mxu0
  %v7978 = vpop.f32.mrb[0].mxu0
  %v7979 = vadd.f32 0.0, %v7978
  %v7980 = vpop.f32.mrb[0].mxu0
  %7981 = vmatprep.mubr.bf16.mxu0 %v7222
  %7982 = vmatmul.mubr.bf16.gmra.mrb[0].mxu0 %v7221
  %v7983 = vpop.f32.mrb[0].mxu0
  %v7984 = vadd.f32 0.0, %v7983
  %v7985 = vpop.f32.mrb[0].mxu0
  %v7986 = vpop.f32.mrb[0].mxu0
  %v7987 = vadd.f32 0.0, %v7986
  %v7988 = vpop.f32.mrb[0].mxu0
  %7989 = vmatprep.mubr.bf16.mxu0 %v7226
  %7990 = vmatmul.mubr.bf16.gmra.mrb[0].mxu0 %v7225
  %v7991 = vpop.f32.mrb[0].mxu0
  %v7992 = vadd.f32 0.0, %v7991
  %v7993 = vpop.f32.mrb[0].mxu0
  %v7994 = vpop.f32.mrb[0].mxu0
  %v7995 = vadd.f32 0.0, %v7994
  %v7996 = vpop.f32.mrb[0].mxu0
  %7997 = vdwg.mxu0
  %7998 = vmatprep.subr.bf16.mxu0 0
  %7999 = vmatpush1.bf16.msra.mxu0 %v7629
  %8000 = vmatprep.subr.bf16.mxu0 0
  %8001 = vmatpush1.bf16.msra.mxu0 %v7630
  %8002 = vmatprep.subr.bf16.mxu0 0
  %8003 = vmatpush1.bf16.msra.mxu0 %v7631
  %8004 = vmatprep.subr.bf16.mxu0 0
  %8005 = vmatpush1.bf16.msra.mxu0 %v7632
  %8006 = vmatprep.subr.bf16.mxu0 0
  %8007 = vmatpush1.bf16.msra.mxu0 %v7633
  %8008 = vmatprep.subr.bf16.mxu0 0
  %8009 = vmatpush1.bf16.msra.mxu0 %v7634
  %8010 = vmatprep.subr.bf16.mxu0 0
  %8011 = vmatpush1.bf16.msra.mxu0 %v7635
  %8012 = vmatprep.subr.bf16.mxu0 0
  %8013 = vmatpush1.bf16.msra.mxu0 %v7636
  %8014 = vmatprep.subr.bf16.mxu0 0
  %8015 = vmatpush1.bf16.msra.mxu0 %v7637
  %8016 = vmatprep.subr.bf16.mxu0 0
  %8017 = vmatpush1.bf16.msra.mxu0 %v7638
  %8018 = vmatprep.subr.bf16.mxu0 0
  %8019 = vmatpush1.bf16.msra.mxu0 %v7639
  %8020 = vmatprep.subr.bf16.mxu0 0
  %8021 = vmatpush1.bf16.msra.mxu0 %v7640
  %8022 = vmatprep.subr.bf16.mxu0 0
  %8023 = vmatpush1.bf16.msra.mxu0 %v7641
  %8024 = vmatprep.subr.bf16.mxu0 0
  %8025 = vmatpush1.bf16.msra.mxu0 %v7642
  %8026 = vmatprep.subr.bf16.mxu0 0
  %8027 = vmatpush1.bf16.msra.mxu0 %v7643
  %8028 = vmatprep.subr.bf16.mxu0 0
  %8029 = vmatpush1.bf16.msra.mxu0 %v7644
  %8030 = vmatprep.mubr.bf16.mxu0 %v7120
  %8031 = vmatmul.mubr.bf16.gmra.mrb[0].mxu0 %v7119
  %v8032 = vpop.f32.mrb[0].mxu0
  %v8033 = vadd.f32 %v7776, %v8032
  %v8034 = vpop.f32.mrb[0].mxu0
  %v8035 = vpop.f32.mrb[0].mxu0
  %v8036 = vadd.f32 %v7779, %v8035
  %v8037 = vpop.f32.mrb[0].mxu0
  %8038 = vmatprep.mubr.bf16.mxu0 %v7128
  %8039 = vmatmul.mubr.bf16.gmra.mrb[0].mxu0 %v7127
  %v8040 = vpop.f32.mrb[0].mxu0
  %v8041 = vadd.f32 %v7784, %v8040
  %v8042 = vpop.f32.mrb[0].mxu0
  %v8043 = vpop.f32.mrb[0].mxu0
  %v8044 = vadd.f32 %v7787, %v8043
  %v8045 = vpop.f32.mrb[0].mxu0
  %8046 = vmatprep.mubr.bf16.mxu0 %v7124
  %8047 = vmatmul.mubr.bf16.gmra.mrb[0].mxu0 %v7123
  %v8048 = vpop.f32.mrb[0].mxu0
  %v8049 = vadd.f32 %v7792, %v8048
  %v8050 = vpop.f32.mrb[0].mxu0
  %v8051 = vpop.f32.mrb[0].mxu0
  %v8052 = vadd.f32 %v7795, %v8051
  %v8053 = vpop.f32.mrb[0].mxu0
  %8054 = vmatprep.mubr.bf16.mxu0 %v7132
  %8055 = vmatmul.mubr.bf16.gmra.mrb[0].mxu0 %v7131
  %v8056 = vpop.f32.mrb[0].mxu0
  %v8057 = vadd.f32 %v7800, %v8056
  %v8058 = vpop.f32.mrb[0].mxu0
  %v8059 = vpop.f32.mrb[0].mxu0
  %v8060 = vadd.f32 %v7803, %v8059
  %v8061 = vpop.f32.mrb[0].mxu0
  %8062 = vmatprep.mubr.bf16.mxu0 %v7136
  %8063 = vmatmul.mubr.bf16.gmra.mrb[0].mxu0 %v7135
  %v8064 = vpop.f32.mrb[0].mxu0
  %v8065 = vadd.f32 %v7808, %v8064
  %v8066 = vpop.f32.mrb[0].mxu0
  %v8067 = vpop.f32.mrb[0].mxu0
  %v8068 = vadd.f32 %v7811, %v8067
  %v8069 = vpop.f32.mrb[0].mxu0
  %8070 = vmatprep.mubr.bf16.mxu0 %v7140
  %8071 = vmatmul.mubr.bf16.gmra.mrb[0].mxu0 %v7139
  %v8072 = vpop.f32.mrb[0].mxu0
  %v8073 = vadd.f32 %v7816, %v8072
  %v8074 = vpop.f32.mrb[0].mxu0
  %v8075 = vpop.f32.mrb[0].mxu0
  %v8076 = vadd.f32 %v7819, %v8075
  %v8077 = vpop.f32.mrb[0].mxu0
  %8078 = vmatprep.mubr.bf16.mxu0 %v7144
  %8079 = vmatmul.mubr.bf16.gmra.mrb[0].mxu0 %v7143
  %v8080 = vpop.f32.mrb[0].mxu0
  %v8081 = vadd.f32 %v7824, %v8080
  %v8082 = vpop.f32.mrb[0].mxu0
  %v8083 = vpop.f32.mrb[0].mxu0
  %v8084 = vadd.f32 %v7827, %v8083
  %v8085 = vpop.f32.mrb[0].mxu0
  %8086 = vmatprep.mubr.bf16.mxu0 %v7148
  %8087 = vmatmul.mubr.bf16.gmra.mrb[0].mxu0 %v7147
  %v8088 = vpop.f32.mrb[0].mxu0
  %v8089 = vadd.f32 %v7832, %v8088
  %v8090 = vpop.f32.mrb[0].mxu0
  %v8091 = vpop.f32.mrb[0].mxu0
  %v8092 = vadd.f32 %v7835, %v8091
  %v8093 = vpop.f32.mrb[0].mxu0
  %8094 = vmatprep.mubr.bf16.mxu0 %v7152
  %8095 = vmatmul.mubr.bf16.gmra.mrb[0].mxu0 %v7151
  %v8096 = vpop.f32.mrb[0].mxu0
  %v8097 = vadd.f32 %v7840, %v8096
  %v8098 = vpop.f32.mrb[0].mxu0
  %v8099 = vpop.f32.mrb[0].mxu0
  %v8100 = vadd.f32 %v7843, %v8099
  %v8101 = vpop.f32.mrb[0].mxu0
  %8102 = vmatprep.mubr.bf16.mxu0 %v7156
  %8103 = vmatmul.mubr.bf16.gmra.mrb[0].mxu0 %v7155
  %v8104 = vpop.f32.mrb[0].mxu0
  %v8105 = vadd.f32 %v7848, %v8104
  %v8106 = vpop.f32.mrb[0].mxu0
  %v8107 = vpop.f32.mrb[0].mxu0
  %v8108 = vadd.f32 %v7851, %v8107
  %v8109 = vpop.f32.mrb[0].mxu0
  %8110 = vmatprep.mubr.bf16.mxu0 %v7160
  %8111 = vmatmul.mubr.bf16.gmra.mrb[0].mxu0 %v7159
  %v8112 = vpop.f32.mrb[0].mxu0
  %v8113 = vadd.f32 %v7856, %v8112
  %v8114 = vpop.f32.mrb[0].mxu0
  %v8115 = vpop.f32.mrb[0].mxu0
  %v8116 = vadd.f32 %v7859, %v8115
  %v8117 = vpop.f32.mrb[0].mxu0
  %8118 = vmatprep.mubr.bf16.mxu0 %v7164
  %8119 = vmatmul.mubr.bf16.gmra.mrb[0].mxu0 %v7163
  %v8120 = vpop.f32.mrb[0].mxu0
  %v8121 = vadd.f32 %v7864, %v8120
  %v8122 = vpop.f32.mrb[0].mxu0
  %v8123 = vpop.f32.mrb[0].mxu0
  %v8124 = vadd.f32 %v7867, %v8123
  %v8125 = vpop.f32.mrb[0].mxu0
  %8126 = vmatprep.mubr.bf16.mxu0 %v7168
  %8127 = vmatmul.mubr.bf16.gmra.mrb[0].mxu0 %v7167
  %v8128 = vpop.f32.mrb[0].mxu0
  %v8129 = vadd.f32 %v7872, %v8128
  %v8130 = vpop.f32.mrb[0].mxu0
  %v8131 = vpop.f32.mrb[0].mxu0
  %v8132 = vadd.f32 %v7875, %v8131
  %v8133 = vpop.f32.mrb[0].mxu0
  %8134 = vmatprep.mubr.bf16.mxu0 %v7172
  %8135 = vmatmul.mubr.bf16.gmra.mrb[0].mxu0 %v7171
  %v8136 = vpop.f32.mrb[0].mxu0
  %v8137 = vadd.f32 %v7880, %v8136
  %v8138 = vpop.f32.mrb[0].mxu0
  %v8139 = vpop.f32.mrb[0].mxu0
  %v8140 = vadd.f32 %v7883, %v8139
  %v8141 = vpop.f32.mrb[0].mxu0
  %8142 = vmatprep.mubr.bf16.mxu0 %v7176
  %8143 = vmatmul.mubr.bf16.gmra.mrb[0].mxu0 %v7175
  %v8144 = vpop.f32.mrb[0].mxu0
  %v8145 = vadd.f32 %v7888, %v8144
  %v8146 = vpop.f32.mrb[0].mxu0
  %v8147 = vpop.f32.mrb[0].mxu0
  %v8148 = vadd.f32 %v7891, %v8147
  %v8149 = vpop.f32.mrb[0].mxu0
  %8150 = vmatprep.mubr.bf16.mxu0 %v7180
  %8151 = vmatmul.mubr.bf16.gmra.mrb[0].mxu0 %v7179
  %v8152 = vpop.f32.mrb[0].mxu0
  %v8153 = vadd.f32 %v7896, %v8152
  %v8154 = vpop.f32.mrb[0].mxu0
  %v8155 = vpop.f32.mrb[0].mxu0
  %v8156 = vadd.f32 %v7899, %v8155
  %v8157 = vpop.f32.mrb[0].mxu0
  %8158 = vmatprep.mubr.bf16.mxu0 %v7184
  %8159 = vmatmul.mubr.bf16.gmra.mrb[0].mxu0 %v7183
  %v8160 = vpop.f32.mrb[0].mxu0
  %v8161 = vadd.f32 %v7904, %v8160
  %v8162 = vpop.f32.mrb[0].mxu0
  %v8163 = vpop.f32.mrb[0].mxu0
  %v8164 = vadd.f32 %v7907, %v8163
  %v8165 = vpop.f32.mrb[0].mxu0
  %8166 = vmatprep.mubr.bf16.mxu0 %v7188
  %8167 = vmatmul.mubr.bf16.gmra.mrb[0].mxu0 %v7187
  %v8168 = vpop.f32.mrb[0].mxu0
  %v8169 = vadd.f32 %v7912, %v8168
  %v8170 = vpop.f32.mrb[0].mxu0
  %v8171 = vpop.f32.mrb[0].mxu0
  %v8172 = vadd.f32 %v7915, %v8171
  %v8173 = vpop.f32.mrb[0].mxu0
  %8174 = vmatprep.mubr.bf16.mxu0 %v7192
  %8175 = vmatmul.mubr.bf16.gmra.mrb[0].mxu0 %v7191
  %v8176 = vpop.f32.mrb[0].mxu0
  %v8177 = vadd.f32 %v7920, %v8176
  %v8178 = vpop.f32.mrb[0].mxu0
  %v8179 = vpop.f32.mrb[0].mxu0
  %v8180 = vadd.f32 %v7923, %v8179
  %v8181 = vpop.f32.mrb[0].mxu0
  %8182 = vmatprep.mubr.bf16.mxu0 %v7196
  %8183 = vmatmul.mubr.bf16.gmra.mrb[0].mxu0 %v7195
  %v8184 = vpop.f32.mrb[0].mxu0
  %v8185 = vadd.f32 %v7928, %v8184
  %v8186 = vpop.f32.mrb[0].mxu0
  %v8187 = vpop.f32.mrb[0].mxu0
  %v8188 = vadd.f32 %v7931, %v8187
  %v8189 = vpop.f32.mrb[0].mxu0
  %8190 = vmatprep.mubr.bf16.mxu0 %v7200
  %8191 = vmatmul.mubr.bf16.gmra.mrb[0].mxu0 %v7199
  %v8192 = vpop.f32.mrb[0].mxu0
  %v8193 = vadd.f32 %v7936, %v8192
  %v8194 = vpop.f32.mrb[0].mxu0
  %v8195 = vpop.f32.mrb[0].mxu0
  %v8196 = vadd.f32 %v7939, %v8195
  %v8197 = vpop.f32.mrb[0].mxu0
  %8198 = vmatprep.mubr.bf16.mxu0 %v7204
  %8199 = vmatmul.mubr.bf16.gmra.mrb[0].mxu0 %v7203
  %v8200 = vpop.f32.mrb[0].mxu0
  %v8201 = vadd.f32 %v7944, %v8200
  %v8202 = vpop.f32.mrb[0].mxu0
  %v8203 = vpop.f32.mrb[0].mxu0
  %v8204 = vadd.f32 %v7947, %v8203
  %v8205 = vpop.f32.mrb[0].mxu0
  %8206 = vmatprep.mubr.bf16.mxu0 %v7208
  %8207 = vmatmul.mubr.bf16.gmra.mrb[0].mxu0 %v7207
  %v8208 = vpop.f32.mrb[0].mxu0
  %v8209 = vadd.f32 %v7952, %v8208
  %v8210 = vpop.f32.mrb[0].mxu0
  %v8211 = vpop.f32.mrb[0].mxu0
  %v8212 = vadd.f32 %v7955, %v8211
  %v8213 = vpop.f32.mrb[0].mxu0
  %8214 = vmatprep.mubr.bf16.mxu0 %v7212
  %8215 = vmatmul.mubr.bf16.gmra.mrb[0].mxu0 %v7211
  %v8216 = vpop.f32.mrb[0].mxu0
  %v8217 = vadd.f32 %v7960, %v8216
  %v8218 = vpop.f32.mrb[0].mxu0
  %v8219 = vpop.f32.mrb[0].mxu0
  %v8220 = vadd.f32 %v7963, %v8219
  %v8221 = vpop.f32.mrb[0].mxu0
  %8222 = vmatprep.mubr.bf16.mxu0 %v7216
  %8223 = vmatmul.mubr.bf16.gmra.mrb[0].mxu0 %v7215
  %v8224 = vpop.f32.mrb[0].mxu0
  %v8225 = vadd.f32 %v7968, %v8224
  %v8226 = vpop.f32.mrb[0].mxu0
  %v8227 = vpop.f32.mrb[0].mxu0
  %v8228 = vadd.f32 %v7971, %v8227
  %v8229 = vpop.f32.mrb[0].mxu0
  %8230 = vmatprep.mubr.bf16.mxu0 %v7220
  %8231 = vmatmul.mubr.bf16.gmra.mrb[0].mxu0 %v7219
  %v8232 = vpop.f32.mrb[0].mxu0
  %v8233 = vadd.f32 %v7976, %v8232
  %v8234 = vpop.f32.mrb[0].mxu0
  %v8235 = vpop.f32.mrb[0].mxu0
  %v8236 = vadd.f32 %v7979, %v8235
  %v8237 = vpop.f32.mrb[0].mxu0
  %8238 = vmatprep.mubr.bf16.mxu0 %v7224
  %8239 = vmatmul.mubr.bf16.gmra.mrb[0].mxu0 %v7223
  %v8240 = vpop.f32.mrb[0].mxu0
  %v8241 = vadd.f32 %v7984, %v8240
  %v8242 = vpop.f32.mrb[0].mxu0
  %v8243 = vpop.f32.mrb[0].mxu0
  %v8244 = vadd.f32 %v7987, %v8243
  %v8245 = vpop.f32.mrb[0].mxu0
  %8246 = vmatprep.mubr.bf16.mxu0 %v7228
  %8247 = vmatmul.mubr.bf16.gmra.mrb[0].mxu0 %v7227
  %v8248 = vpop.f32.mrb[0].mxu0
  %v8249 = vadd.f32 %v7992, %v8248
  %v8250 = vpop.f32.mrb[0].mxu0
  %v8251 = vpop.f32.mrb[0].mxu0
  %v8252 = vadd.f32 %v7995, %v8251
  %v8253 = vpop.f32.mrb[0].mxu0
  %8254 = vdwg.mxu0
  %8255 = vmatprep.subr.bf16.mxu0 0
  %8256 = vmatpush1.bf16.msra.mxu0 %v7645
  %8257 = vmatprep.subr.bf16.mxu0 0
  %8258 = vmatpush1.bf16.msra.mxu0 %v7646
  %8259 = vmatprep.subr.bf16.mxu0 0
  %8260 = vmatpush1.bf16.msra.mxu0 %v7647
  %8261 = vmatprep.subr.bf16.mxu0 0
  %8262 = vmatpush1.bf16.msra.mxu0 %v7648
  %8263 = vmatprep.subr.bf16.mxu0 0
  %8264 = vmatpush1.bf16.msra.mxu0 %v7649
  %8265 = vmatprep.subr.bf16.mxu0 0
  %8266 = vmatpush1.bf16.msra.mxu0 %v7650
  %8267 = vmatprep.subr.bf16.mxu0 0
  %8268 = vmatpush1.bf16.msra.mxu0 %v7651
  %8269 = vmatprep.subr.bf16.mxu0 0
  %8270 = vmatpush1.bf16.msra.mxu0 %v7652
  %8271 = vmatprep.subr.bf16.mxu0 0
  %8272 = vmatpush1.bf16.msra.mxu0 %v7653
  %8273 = vmatprep.subr.bf16.mxu0 0
  %8274 = vmatpush1.bf16.msra.mxu0 %v7654
  %8275 = vmatprep.subr.bf16.mxu0 0
  %8276 = vmatpush1.bf16.msra.mxu0 %v7655
  %8277 = vmatprep.subr.bf16.mxu0 0
  %8278 = vmatpush1.bf16.msra.mxu0 %v7656
  %8279 = vmatprep.subr.bf16.mxu0 0
  %8280 = vmatpush1.bf16.msra.mxu0 %v7657
  %8281 = vmatprep.subr.bf16.mxu0 0
  %8282 = vmatpush1.bf16.msra.mxu0 %v7658
  %8283 = vmatprep.subr.bf16.mxu0 0
  %8284 = vmatpush1.bf16.msra.mxu0 %v7659
  %8285 = vmatprep.subr.bf16.mxu0 0
  %8286 = vmatpush1.bf16.msra.mxu0 %v7660
  %8287 = vmatprep.mubr.bf16.mxu0 %v7122
  %8288 = vmatmul.mubr.bf16.gmra.mrb[0].mxu0 %v7121
  %v8289 = vpop.f32.mrb[0].mxu0
  %v8290 = vadd.f32 %v8033, %v8289
  %v8291 = vpop.f32.mrb[0].mxu0
  %v8292 = vpop.f32.mrb[0].mxu0
  %v8293 = vadd.f32 %v8036, %v8292
  %v8294 = vpop.f32.mrb[0].mxu0
  %8295 = vmatprep.mubr.bf16.mxu0 %v7130
  %8296 = vmatmul.mubr.bf16.gmra.mrb[0].mxu0 %v7129
  %v8297 = vpop.f32.mrb[0].mxu0
  %v8298 = vadd.f32 %v8041, %v8297
  %v8299 = vpop.f32.mrb[0].mxu0
  %v8300 = vpop.f32.mrb[0].mxu0
  %v8301 = vadd.f32 %v8044, %v8300
  %v8302 = vpop.f32.mrb[0].mxu0
  %8303 = vmatprep.mubr.bf16.mxu0 %v7134
  %8304 = vmatmul.mubr.bf16.gmra.mrb[0].mxu0 %v7133
  %v8305 = vpop.f32.mrb[0].mxu0
  %v8306 = vadd.f32 %v8049, %v8305
  %v8307 = vpop.f32.mrb[0].mxu0
  %v8308 = vpop.f32.mrb[0].mxu0
  %v8309 = vadd.f32 %v8052, %v8308
  %v8310 = vpop.f32.mrb[0].mxu0
  %8311 = vmatprep.mubr.bf16.mxu0 %v7138
  %8312 = vmatmul.mubr.bf16.gmra.mrb[0].mxu0 %v7137
  %v8313 = vpop.f32.mrb[0].mxu0
  %v8314 = vadd.f32 %v8057, %v8313
  %v8315 = vpop.f32.mrb[0].mxu0
  %v8316 = vpop.f32.mrb[0].mxu0
  %v8317 = vadd.f32 %v8060, %v8316
  %v8318 = vpop.f32.mrb[0].mxu0
  %8319 = vmatprep.mubr.bf16.mxu0 %v7142
  %8320 = vmatmul.mubr.bf16.gmra.mrb[0].mxu0 %v7141
  %v8321 = vpop.f32.mrb[0].mxu0
  %v8322 = vadd.f32 %v8065, %v8321
  %v8323 = vpop.f32.mrb[0].mxu0
  %v8324 = vpop.f32.mrb[0].mxu0
  %v8325 = vadd.f32 %v8068, %v8324
  %v8326 = vpop.f32.mrb[0].mxu0
  %8327 = vmatprep.mubr.bf16.mxu0 %v7146
  %8328 = vmatmul.mubr.bf16.gmra.mrb[0].mxu0 %v7145
  %v8329 = vpop.f32.mrb[0].mxu0
  %v8330 = vadd.f32 %v8073, %v8329
  %v8331 = vpop.f32.mrb[0].mxu0
  %v8332 = vpop.f32.mrb[0].mxu0
  %v8333 = vadd.f32 %v8076, %v8332
  %v8334 = vpop.f32.mrb[0].mxu0
  %8335 = vmatprep.mubr.bf16.mxu0 %v7150
  %8336 = vmatmul.mubr.bf16.gmra.mrb[0].mxu0 %v7149
  %v8337 = vpop.f32.mrb[0].mxu0
  %v8338 = vadd.f32 %v8081, %v8337
  %v8339 = vpop.f32.mrb[0].mxu0
  %v8340 = vpop.f32.mrb[0].mxu0
  %v8341 = vadd.f32 %v8084, %v8340
  %v8342 = vpop.f32.mrb[0].mxu0
  %8343 = vmatprep.mubr.bf16.mxu0 %v7154
  %8344 = vmatmul.mubr.bf16.gmra.mrb[0].mxu0 %v7153
  %v8345 = vpop.f32.mrb[0].mxu0
  %v8346 = vadd.f32 %v8089, %v8345
  %v8347 = vpop.f32.mrb[0].mxu0
  %v8348 = vpop.f32.mrb[0].mxu0
  %v8349 = vadd.f32 %v8092, %v8348
  %v8350 = vpop.f32.mrb[0].mxu0
  %8351 = vmatprep.mubr.bf16.mxu0 %v7158
  %8352 = vmatmul.mubr.bf16.gmra.mrb[0].mxu0 %v7157
  %v8353 = vpop.f32.mrb[0].mxu0
  %v8354 = vadd.f32 %v8097, %v8353
  %v8355 = vpop.f32.mrb[0].mxu0
  %v8356 = vpop.f32.mrb[0].mxu0
  %v8357 = vadd.f32 %v8100, %v8356
  %v8358 = vpop.f32.mrb[0].mxu0
  %8359 = vmatprep.mubr.bf16.mxu0 %v7162
  %8360 = vmatmul.mubr.bf16.gmra.mrb[0].mxu0 %v7161
  %v8361 = vpop.f32.mrb[0].mxu0
  %v8362 = vadd.f32 %v8105, %v8361
  %v8363 = vpop.f32.mrb[0].mxu0
  %v8364 = vpop.f32.mrb[0].mxu0
  %v8365 = vadd.f32 %v8108, %v8364
  %v8366 = vpop.f32.mrb[0].mxu0
  %8367 = vmatprep.mubr.bf16.mxu0 %v7166
  %8368 = vmatmul.mubr.bf16.gmra.mrb[0].mxu0 %v7165
  %v8369 = vpop.f32.mrb[0].mxu0
  %v8370 = vadd.f32 %v8113, %v8369
  %v8371 = vpop.f32.mrb[0].mxu0
  %v8372 = vpop.f32.mrb[0].mxu0
  %v8373 = vadd.f32 %v8116, %v8372
  %v8374 = vpop.f32.mrb[0].mxu0
  %8375 = vmatprep.mubr.bf16.mxu0 %v7170
  %8376 = vmatmul.mubr.bf16.gmra.mrb[0].mxu0 %v7169
  %v8377 = vpop.f32.mrb[0].mxu0
  %v8378 = vadd.f32 %v8121, %v8377
  %v8379 = vpop.f32.mrb[0].mxu0
  %v8380 = vpop.f32.mrb[0].mxu0
  %v8381 = vadd.f32 %v8124, %v8380
  %v8382 = vpop.f32.mrb[0].mxu0
  %8383 = vmatprep.mubr.bf16.mxu0 %v7174
  %8384 = vmatmul.mubr.bf16.gmra.mrb[0].mxu0 %v7173
  %v8385 = vpop.f32.mrb[0].mxu0
  %v8386 = vadd.f32 %v8129, %v8385
  %v8387 = vpop.f32.mrb[0].mxu0
  %v8388 = vpop.f32.mrb[0].mxu0
  %v8389 = vadd.f32 %v8132, %v8388
  %v8390 = vpop.f32.mrb[0].mxu0
  %8391 = vmatprep.mubr.bf16.mxu0 %v7178
  %8392 = vmatmul.mubr.bf16.gmra.mrb[0].mxu0 %v7177
  %v8393 = vpop.f32.mrb[0].mxu0
  %v8394 = vadd.f32 %v8137, %v8393
  %v8395 = vpop.f32.mrb[0].mxu0
  %v8396 = vpop.f32.mrb[0].mxu0
  %v8397 = vadd.f32 %v8140, %v8396
  %v8398 = vpop.f32.mrb[0].mxu0
  %8399 = vmatprep.mubr.bf16.mxu0 %v7182
  %8400 = vmatmul.mubr.bf16.gmra.mrb[0].mxu0 %v7181
  %v8401 = vpop.f32.mrb[0].mxu0
  %v8402 = vadd.f32 %v8145, %v8401
  %v8403 = vpop.f32.mrb[0].mxu0
  %v8404 = vpop.f32.mrb[0].mxu0
  %v8405 = vadd.f32 %v8148, %v8404
  %v8406 = vpop.f32.mrb[0].mxu0
  %8407 = vmatprep.mubr.bf16.mxu0 %v7186
  %8408 = vmatmul.mubr.bf16.gmra.mrb[0].mxu0 %v7185
  %v8409 = vpop.f32.mrb[0].mxu0
  %v8410 = vadd.f32 %v8153, %v8409
  %v8411 = vpop.f32.mrb[0].mxu0
  %v8412 = vpop.f32.mrb[0].mxu0
  %v8413 = vadd.f32 %v8156, %v8412
  %v8414 = vpop.f32.mrb[0].mxu0
  %8415 = vmatprep.mubr.bf16.mxu0 %v7190
  %8416 = vmatmul.mubr.bf16.gmra.mrb[0].mxu0 %v7189
  %v8417 = vpop.f32.mrb[0].mxu0
  %v8418 = vadd.f32 %v8161, %v8417
  %v8419 = vpop.f32.mrb[0].mxu0
  %v8420 = vpop.f32.mrb[0].mxu0
  %v8421 = vadd.f32 %v8164, %v8420
  %v8422 = vpop.f32.mrb[0].mxu0
  %8423 = vmatprep.mubr.bf16.mxu0 %v7194
  %8424 = vmatmul.mubr.bf16.gmra.mrb[0].mxu0 %v7193
  %v8425 = vpop.f32.mrb[0].mxu0
  %v8426 = vadd.f32 %v8169, %v8425
  %v8427 = vpop.f32.mrb[0].mxu0
  %v8428 = vpop.f32.mrb[0].mxu0
  %v8429 = vadd.f32 %v8172, %v8428
  %v8430 = vpop.f32.mrb[0].mxu0
  %8431 = vmatprep.mubr.bf16.mxu0 %v7198
  %8432 = vmatmul.mubr.bf16.gmra.mrb[0].mxu0 %v7197
  %v8433 = vpop.f32.mrb[0].mxu0
  %v8434 = vadd.f32 %v8177, %v8433
  %v8435 = vpop.f32.mrb[0].mxu0
  %v8436 = vpop.f32.mrb[0].mxu0
  %v8437 = vadd.f32 %v8180, %v8436
  %v8438 = vpop.f32.mrb[0].mxu0
  %8439 = vmatprep.mubr.bf16.mxu0 %v7202
  %8440 = vmatmul.mubr.bf16.gmra.mrb[0].mxu0 %v7201
  %v8441 = vpop.f32.mrb[0].mxu0
  %v8442 = vadd.f32 %v8185, %v8441
  %v8443 = vpop.f32.mrb[0].mxu0
  %v8444 = vpop.f32.mrb[0].mxu0
  %v8445 = vadd.f32 %v8188, %v8444
  %v8446 = vpop.f32.mrb[0].mxu0
  %8447 = vmatprep.mubr.bf16.mxu0 %v7206
  %8448 = vmatmul.mubr.bf16.gmra.mrb[0].mxu0 %v7205
  %v8449 = vpop.f32.mrb[0].mxu0
  %v8450 = vadd.f32 %v8193, %v8449
  %v8451 = vpop.f32.mrb[0].mxu0
  %v8452 = vpop.f32.mrb[0].mxu0
  %v8453 = vadd.f32 %v8196, %v8452
  %v8454 = vpop.f32.mrb[0].mxu0
  %8455 = vmatprep.mubr.bf16.mxu0 %v7210
  %8456 = vmatmul.mubr.bf16.gmra.mrb[0].mxu0 %v7209
  %v8457 = vpop.f32.mrb[0].mxu0
  %v8458 = vadd.f32 %v8201, %v8457
  %v8459 = vpop.f32.mrb[0].mxu0
  %v8460 = vpop.f32.mrb[0].mxu0
  %v8461 = vadd.f32 %v8204, %v8460
  %v8462 = vpop.f32.mrb[0].mxu0
  %8463 = vmatprep.mubr.bf16.mxu0 %v7214
  %8464 = vmatmul.mubr.bf16.gmra.mrb[0].mxu0 %v7213
  %v8465 = vpop.f32.mrb[0].mxu0
  %v8466 = vadd.f32 %v8209, %v8465
  %v8467 = vpop.f32.mrb[0].mxu0
  %v8468 = vpop.f32.mrb[0].mxu0
  %v8469 = vadd.f32 %v8212, %v8468
  %v8470 = vpop.f32.mrb[0].mxu0
  %8471 = vmatprep.mubr.bf16.mxu0 %v7218
  %8472 = vmatmul.mubr.bf16.gmra.mrb[0].mxu0 %v7217
  %v8473 = vpop.f32.mrb[0].mxu0
  %v8474 = vadd.f32 %v8217, %v8473
  %v8475 = vpop.f32.mrb[0].mxu0
  %v8476 = vpop.f32.mrb[0].mxu0
  %v8477 = vadd.f32 %v8220, %v8476
  %v8478 = vpop.f32.mrb[0].mxu0
  %8479 = vmatprep.mubr.bf16.mxu0 %v7222
  %8480 = vmatmul.mubr.bf16.gmra.mrb[0].mxu0 %v7221
  %v8481 = vpop.f32.mrb[0].mxu0
  %v8482 = vadd.f32 %v8225, %v8481
  %v8483 = vpop.f32.mrb[0].mxu0
  %v8484 = vpop.f32.mrb[0].mxu0
  %v8485 = vadd.f32 %v8228, %v8484
  %v8486 = vpop.f32.mrb[0].mxu0
  %8487 = vmatprep.mubr.bf16.mxu0 %v7226
  %8488 = vmatmul.mubr.bf16.gmra.mrb[0].mxu0 %v7225
  %v8489 = vpop.f32.mrb[0].mxu0
  %v8490 = vadd.f32 %v8233, %v8489
  %v8491 = vpop.f32.mrb[0].mxu0
  %v8492 = vpop.f32.mrb[0].mxu0
  %v8493 = vadd.f32 %v8236, %v8492
  %v8494 = vpop.f32.mrb[0].mxu0
  %8495 = vmatprep.mubr.bf16.mxu0 %v7230
  %8496 = vmatmul.mubr.bf16.gmra.mrb[0].mxu0 %v7229
  %v8497 = vpop.f32.mrb[0].mxu0
  %v8498 = vadd.f32 %v8241, %v8497
  %v8499 = vpop.f32.mrb[0].mxu0
  %v8500 = vpop.f32.mrb[0].mxu0
  %v8501 = vadd.f32 %v8244, %v8500
  %v8502 = vpop.f32.mrb[0].mxu0
  %8503 = vmatprep.mubr.bf16.mxu0 %v7234
  %8504 = vmatmul.mubr.bf16.gmra.mrb[0].mxu0 %v7233
  %v8505 = vpop.f32.mrb[0].mxu0
  %v8506 = vadd.f32 %v8249, %v8505
  %v8507 = vpop.f32.mrb[0].mxu0
  %v8508 = vpop.f32.mrb[0].mxu0
  %v8509 = vadd.f32 %v8252, %v8508
  %v8510 = vpop.f32.mrb[0].mxu0
  %8511 = vdwg.mxu0
  %8512 = vmatprep.subr.bf16.mxu0 0
  %8513 = vmatpush1.bf16.msra.mxu0 %v7661
  %8514 = vmatprep.subr.bf16.mxu0 0
  %8515 = vmatpush1.bf16.msra.mxu0 %v7662
  %8516 = vmatprep.subr.bf16.mxu0 0
  %8517 = vmatpush1.bf16.msra.mxu0 %v7663
  %8518 = vmatprep.subr.bf16.mxu0 0
  %8519 = vmatpush1.bf16.msra.mxu0 %v7664
  %8520 = vmatprep.subr.bf16.mxu0 0
  %8521 = vmatpush1.bf16.msra.mxu0 %v7665
  %8522 = vmatprep.subr.bf16.mxu0 0
  %8523 = vmatpush1.bf16.msra.mxu0 %v7666
  %8524 = vmatprep.subr.bf16.mxu0 0
  %8525 = vmatpush1.bf16.msra.mxu0 %v7667
  %8526 = vmatprep.subr.bf16.mxu0 0
  %8527 = vmatpush1.bf16.msra.mxu0 %v7668
  %8528 = vmatprep.subr.bf16.mxu0 0
  %8529 = vmatpush1.bf16.msra.mxu0 %v7669
  %8530 = vmatprep.subr.bf16.mxu0 0
  %8531 = vmatpush1.bf16.msra.mxu0 %v7670
  %8532 = vmatprep.subr.bf16.mxu0 0
  %8533 = vmatpush1.bf16.msra.mxu0 %v7671
  %8534 = vmatprep.subr.bf16.mxu0 0
  %8535 = vmatpush1.bf16.msra.mxu0 %v7672
  %8536 = vmatprep.subr.bf16.mxu0 0
  %8537 = vmatpush1.bf16.msra.mxu0 %v7673
  %8538 = vmatprep.subr.bf16.mxu0 0
  %8539 = vmatpush1.bf16.msra.mxu0 %v7674
  %8540 = vmatprep.subr.bf16.mxu0 0
  %8541 = vmatpush1.bf16.msra.mxu0 %v7675
  %8542 = vmatprep.subr.bf16.mxu0 0
  %8543 = vmatpush1.bf16.msra.mxu0 %v7676
  %8544 = vmatprep.mubr.bf16.mxu0 %v7124
  %8545 = vmatmul.mubr.bf16.gmra.mrb[0].mxu0 %v7123
  %v8546 = vpop.f32.mrb[0].mxu0
  %v8547 = vadd.f32 %v8290, %v8546
  %v8548 = vpop.f32.mrb[0].mxu0
  %v8549 = vpop.f32.mrb[0].mxu0
  %v8550 = vadd.f32 %v8293, %v8549
  %v8551 = vpop.f32.mrb[0].mxu0
  %8552 = vmatprep.mubr.bf16.mxu0 %v7132
  %8553 = vmatmul.mubr.bf16.gmra.mrb[0].mxu0 %v7131
  %v8554 = vpop.f32.mrb[0].mxu0
  %v8555 = vadd.f32 %v8298, %v8554
  %v8556 = vpop.f32.mrb[0].mxu0
  %v8557 = vpop.f32.mrb[0].mxu0
  %v8558 = vadd.f32 %v8301, %v8557
  %v8559 = vpop.f32.mrb[0].mxu0
  %8560 = vmatprep.mubr.bf16.mxu0 %v7136
  %8561 = vmatmul.mubr.bf16.gmra.mrb[0].mxu0 %v7135
  %v8562 = vpop.f32.mrb[0].mxu0
  %v8563 = vadd.f32 %v8306, %v8562
  %v8564 = vpop.f32.mrb[0].mxu0
  %v8565 = vpop.f32.mrb[0].mxu0
  %v8566 = vadd.f32 %v8309, %v8565
  %v8567 = vpop.f32.mrb[0].mxu0
  %8568 = vmatprep.mubr.bf16.mxu0 %v7140
  %8569 = vmatmul.mubr.bf16.gmra.mrb[0].mxu0 %v7139
  %v8570 = vpop.f32.mrb[0].mxu0
  %v8571 = vadd.f32 %v8314, %v8570
  %v8572 = vpop.f32.mrb[0].mxu0
  %v8573 = vpop.f32.mrb[0].mxu0
  %v8574 = vadd.f32 %v8317, %v8573
  %v8575 = vpop.f32.mrb[0].mxu0
  %8576 = vmatprep.mubr.bf16.mxu0 %v7144
  %8577 = vmatmul.mubr.bf16.gmra.mrb[0].mxu0 %v7143
  %v8578 = vpop.f32.mrb[0].mxu0
  %v8579 = vadd.f32 %v8322, %v8578
  %v8580 = vpop.f32.mrb[0].mxu0
  %v8581 = vpop.f32.mrb[0].mxu0
  %v8582 = vadd.f32 %v8325, %v8581
  %v8583 = vpop.f32.mrb[0].mxu0
  %8584 = vmatprep.mubr.bf16.mxu0 %v7148
  %8585 = vmatmul.mubr.bf16.gmra.mrb[0].mxu0 %v7147
  %v8586 = vpop.f32.mrb[0].mxu0
  %v8587 = vadd.f32 %v8330, %v8586
  %v8588 = vpop.f32.mrb[0].mxu0
  %v8589 = vpop.f32.mrb[0].mxu0
  %v8590 = vadd.f32 %v8333, %v8589
  %v8591 = vpop.f32.mrb[0].mxu0
  %8592 = vmatprep.mubr.bf16.mxu0 %v7152
  %8593 = vmatmul.mubr.bf16.gmra.mrb[0].mxu0 %v7151
  %v8594 = vpop.f32.mrb[0].mxu0
  %v8595 = vadd.f32 %v8338, %v8594
  %v8596 = vpop.f32.mrb[0].mxu0
  %v8597 = vpop.f32.mrb[0].mxu0
  %v8598 = vadd.f32 %v8341, %v8597
  %v8599 = vpop.f32.mrb[0].mxu0
  %8600 = vmatprep.mubr.bf16.mxu0 %v7156
  %8601 = vmatmul.mubr.bf16.gmra.mrb[0].mxu0 %v7155
  %v8602 = vpop.f32.mrb[0].mxu0
  %v8603 = vadd.f32 %v8346, %v8602
  %v8604 = vpop.f32.mrb[0].mxu0
  %v8605 = vpop.f32.mrb[0].mxu0
  %v8606 = vadd.f32 %v8349, %v8605
  %v8607 = vpop.f32.mrb[0].mxu0
  %8608 = vmatprep.mubr.bf16.mxu0 %v7160
  %8609 = vmatmul.mubr.bf16.gmra.mrb[0].mxu0 %v7159
  %v8610 = vpop.f32.mrb[0].mxu0
  %v8611 = vadd.f32 %v8354, %v8610
  %v8612 = vpop.f32.mrb[0].mxu0
  %v8613 = vpop.f32.mrb[0].mxu0
  %v8614 = vadd.f32 %v8357, %v8613
  %v8615 = vpop.f32.mrb[0].mxu0
  %8616 = vmatprep.mubr.bf16.mxu0 %v7164
  %8617 = vmatmul.mubr.bf16.gmra.mrb[0].mxu0 %v7163
  %v8618 = vpop.f32.mrb[0].mxu0
  %v8619 = vadd.f32 %v8362, %v8618
  %v8620 = vpop.f32.mrb[0].mxu0
  %v8621 = vpop.f32.mrb[0].mxu0
  %v8622 = vadd.f32 %v8365, %v8621
  %v8623 = vpop.f32.mrb[0].mxu0
  %8624 = vmatprep.mubr.bf16.mxu0 %v7168
  %8625 = vmatmul.mubr.bf16.gmra.mrb[0].mxu0 %v7167
  %v8626 = vpop.f32.mrb[0].mxu0
  %v8627 = vadd.f32 %v8370, %v8626
  %v8628 = vpop.f32.mrb[0].mxu0
  %v8629 = vpop.f32.mrb[0].mxu0
  %v8630 = vadd.f32 %v8373, %v8629
  %v8631 = vpop.f32.mrb[0].mxu0
  %8632 = vmatprep.mubr.bf16.mxu0 %v7172
  %8633 = vmatmul.mubr.bf16.gmra.mrb[0].mxu0 %v7171
  %v8634 = vpop.f32.mrb[0].mxu0
  %v8635 = vadd.f32 %v8378, %v8634
  %v8636 = vpop.f32.mrb[0].mxu0
  %v8637 = vpop.f32.mrb[0].mxu0
  %v8638 = vadd.f32 %v8381, %v8637
  %v8639 = vpop.f32.mrb[0].mxu0
  %8640 = vmatprep.mubr.bf16.mxu0 %v7176
  %8641 = vmatmul.mubr.bf16.gmra.mrb[0].mxu0 %v7175
  %v8642 = vpop.f32.mrb[0].mxu0
  %v8643 = vadd.f32 %v8386, %v8642
  %v8644 = vpop.f32.mrb[0].mxu0
  %v8645 = vpop.f32.mrb[0].mxu0
  %v8646 = vadd.f32 %v8389, %v8645
  %v8647 = vpop.f32.mrb[0].mxu0
  %8648 = vmatprep.mubr.bf16.mxu0 %v7180
  %8649 = vmatmul.mubr.bf16.gmra.mrb[0].mxu0 %v7179
  %v8650 = vpop.f32.mrb[0].mxu0
  %v8651 = vadd.f32 %v8394, %v8650
  %v8652 = vpop.f32.mrb[0].mxu0
  %v8653 = vpop.f32.mrb[0].mxu0
  %v8654 = vadd.f32 %v8397, %v8653
  %v8655 = vpop.f32.mrb[0].mxu0
  %8656 = vmatprep.mubr.bf16.mxu0 %v7184
  %8657 = vmatmul.mubr.bf16.gmra.mrb[0].mxu0 %v7183
  %v8658 = vpop.f32.mrb[0].mxu0
  %v8659 = vadd.f32 %v8402, %v8658
  %v8660 = vpop.f32.mrb[0].mxu0
  %v8661 = vpop.f32.mrb[0].mxu0
  %v8662 = vadd.f32 %v8405, %v8661
  %v8663 = vpop.f32.mrb[0].mxu0
  %8664 = vmatprep.mubr.bf16.mxu0 %v7188
  %8665 = vmatmul.mubr.bf16.gmra.mrb[0].mxu0 %v7187
  %v8666 = vpop.f32.mrb[0].mxu0
  %v8667 = vadd.f32 %v8410, %v8666
  %v8668 = vpop.f32.mrb[0].mxu0
  %v8669 = vpop.f32.mrb[0].mxu0
  %v8670 = vadd.f32 %v8413, %v8669
  %v8671 = vpop.f32.mrb[0].mxu0
  %8672 = vmatprep.mubr.bf16.mxu0 %v7192
  %8673 = vmatmul.mubr.bf16.gmra.mrb[0].mxu0 %v7191
  %v8674 = vpop.f32.mrb[0].mxu0
  %v8675 = vadd.f32 %v8418, %v8674
  %v8676 = vpop.f32.mrb[0].mxu0
  %v8677 = vpop.f32.mrb[0].mxu0
  %v8678 = vadd.f32 %v8421, %v8677
  %v8679 = vpop.f32.mrb[0].mxu0
  %8680 = vmatprep.mubr.bf16.mxu0 %v7196
  %8681 = vmatmul.mubr.bf16.gmra.mrb[0].mxu0 %v7195
  %v8682 = vpop.f32.mrb[0].mxu0
  %v8683 = vadd.f32 %v8426, %v8682
  %v8684 = vpop.f32.mrb[0].mxu0
  %v8685 = vpop.f32.mrb[0].mxu0
  %v8686 = vadd.f32 %v8429, %v8685
  %v8687 = vpop.f32.mrb[0].mxu0
  %8688 = vmatprep.mubr.bf16.mxu0 %v7200
  %8689 = vmatmul.mubr.bf16.gmra.mrb[0].mxu0 %v7199
  %v8690 = vpop.f32.mrb[0].mxu0
  %v8691 = vadd.f32 %v8434, %v8690
  %v8692 = vpop.f32.mrb[0].mxu0
  %v8693 = vpop.f32.mrb[0].mxu0
  %v8694 = vadd.f32 %v8437, %v8693
  %v8695 = vpop.f32.mrb[0].mxu0
  %8696 = vmatprep.mubr.bf16.mxu0 %v7204
  %8697 = vmatmul.mubr.bf16.gmra.mrb[0].mxu0 %v7203
  %v8698 = vpop.f32.mrb[0].mxu0
  %v8699 = vadd.f32 %v8442, %v8698
  %v8700 = vpop.f32.mrb[0].mxu0
  %v8701 = vpop.f32.mrb[0].mxu0
  %v8702 = vadd.f32 %v8445, %v8701
  %v8703 = vpop.f32.mrb[0].mxu0
  %8704 = vmatprep.mubr.bf16.mxu0 %v7208
  %8705 = vmatmul.mubr.bf16.gmra.mrb[0].mxu0 %v7207
  %v8706 = vpop.f32.mrb[0].mxu0
  %v8707 = vadd.f32 %v8450, %v8706
  %v8708 = vpop.f32.mrb[0].mxu0
  %v8709 = vpop.f32.mrb[0].mxu0
  %v8710 = vadd.f32 %v8453, %v8709
  %v8711 = vpop.f32.mrb[0].mxu0
  %8712 = vmatprep.mubr.bf16.mxu0 %v7212
  %8713 = vmatmul.mubr.bf16.gmra.mrb[0].mxu0 %v7211
  %v8714 = vpop.f32.mrb[0].mxu0
  %v8715 = vadd.f32 %v8458, %v8714
  %v8716 = vpop.f32.mrb[0].mxu0
  %v8717 = vpop.f32.mrb[0].mxu0
  %v8718 = vadd.f32 %v8461, %v8717
  %v8719 = vpop.f32.mrb[0].mxu0
  %8720 = vmatprep.mubr.bf16.mxu0 %v7216
  %8721 = vmatmul.mubr.bf16.gmra.mrb[0].mxu0 %v7215
  %v8722 = vpop.f32.mrb[0].mxu0
  %v8723 = vadd.f32 %v8466, %v8722
  %v8724 = vpop.f32.mrb[0].mxu0
  %v8725 = vpop.f32.mrb[0].mxu0
  %v8726 = vadd.f32 %v8469, %v8725
  %v8727 = vpop.f32.mrb[0].mxu0
  %8728 = vmatprep.mubr.bf16.mxu0 %v7220
  %8729 = vmatmul.mubr.bf16.gmra.mrb[0].mxu0 %v7219
  %v8730 = vpop.f32.mrb[0].mxu0
  %v8731 = vadd.f32 %v8474, %v8730
  %v8732 = vpop.f32.mrb[0].mxu0
  %v8733 = vpop.f32.mrb[0].mxu0
  %v8734 = vadd.f32 %v8477, %v8733
  %v8735 = vpop.f32.mrb[0].mxu0
  %8736 = vmatprep.mubr.bf16.mxu0 %v7224
  %8737 = vmatmul.mubr.bf16.gmra.mrb[0].mxu0 %v7223
  %v8738 = vpop.f32.mrb[0].mxu0
  %v8739 = vadd.f32 %v8482, %v8738
  %v8740 = vpop.f32.mrb[0].mxu0
  %v8741 = vpop.f32.mrb[0].mxu0
  %v8742 = vadd.f32 %v8485, %v8741
  %v8743 = vpop.f32.mrb[0].mxu0
  %8744 = vmatprep.mubr.bf16.mxu0 %v7228
  %8745 = vmatmul.mubr.bf16.gmra.mrb[0].mxu0 %v7227
  %v8746 = vpop.f32.mrb[0].mxu0
  %v8747 = vadd.f32 %v8490, %v8746
  %v8748 = vpop.f32.mrb[0].mxu0
  %v8749 = vpop.f32.mrb[0].mxu0
  %v8750 = vadd.f32 %v8493, %v8749
  %v8751 = vpop.f32.mrb[0].mxu0
  %8752 = vmatprep.mubr.bf16.mxu0 %v7232
  %8753 = vmatmul.mubr.bf16.gmra.mrb[0].mxu0 %v7231
  %v8754 = vpop.f32.mrb[0].mxu0
  %v8755 = vadd.f32 %v8498, %v8754
  %v8756 = vpop.f32.mrb[0].mxu0
  %v8757 = vpop.f32.mrb[0].mxu0
  %v8758 = vadd.f32 %v8501, %v8757
  %v8759 = vpop.f32.mrb[0].mxu0
  %8760 = vmatprep.mubr.bf16.mxu0 %v7236
  %8761 = vmatmul.mubr.bf16.gmra.mrb[0].mxu0 %v7235
  %v8762 = vpop.f32.mrb[0].mxu0
  %v8763 = vadd.f32 %v8506, %v8762
  %v8764 = vpop.f32.mrb[0].mxu0
  %v8765 = vpop.f32.mrb[0].mxu0
  %v8766 = vadd.f32 %v8509, %v8765
  %v8767 = vpop.f32.mrb[0].mxu0
  %8768 = vdwg.mxu0
  %v8769 = vld [vmem:[%s4] sm:$0x1]
  %v8770 = vld [vmem:[%s4 + $0x1] sm:$0x1]
  %v8771 = vld [vmem:[%s4 + $0x2] sm:$0x1]
  %v8772 = vld [vmem:[%s4 + $0x3] sm:$0x1]
  %v8777 = vlaneseq
  %v8778 = vshrl.u32 %v8777, 7
  %v8779 = vsub.s32 0, %v8778
  %v8780 = vrot.slane %v8769, %v8779
  %v8781 = vlaneseq
  %v8782 = vshrl.u32 %v8781, 7
  %v8783 = vsub.s32 0, %v8782
  %v8784 = vrot.slane %v8770, %v8783
  %v8785 = vlaneseq
  %v8786 = vshrl.u32 %v8785, 7
  %v8787 = vsub.s32 0, %v8786
  %v8788 = vrot.slane %v8771, %v8787
  %v8789 = vlaneseq
  %v8790 = vshrl.u32 %v8789, 7
  %v8791 = vsub.s32 0, %v8790
  %v8792 = vrot.slane %v8772, %v8791
  %v8797 = vadd.f32 %v8547, %v8780
  %v8798 = vadd.f32 %v8550, %v8784
  %v8799 = vadd.f32 %v8555, %v8788
  %v8800 = vadd.f32 %v8558, %v8792
  %v8801 = vadd.f32 %v8563, %v8780
  %v8802 = vadd.f32 %v8566, %v8784
  %v8803 = vadd.f32 %v8571, %v8788
  %v8804 = vadd.f32 %v8574, %v8792
  %v8805 = vadd.f32 %v8579, %v8780
  %v8806 = vadd.f32 %v8582, %v8784
  %v8807 = vadd.f32 %v8587, %v8788
  %v8808 = vadd.f32 %v8590, %v8792
  %v8809 = vadd.f32 %v8595, %v8780
  %v8810 = vadd.f32 %v8598, %v8784
  %v8811 = vadd.f32 %v8603, %v8788
  %v8812 = vadd.f32 %v8606, %v8792
  %v8813 = vadd.f32 %v8611, %v8780
  %v8814 = vadd.f32 %v8614, %v8784
  %v8815 = vadd.f32 %v8619, %v8788
  %v8816 = vadd.f32 %v8622, %v8792
  %v8817 = vadd.f32 %v8627, %v8780
  %v8818 = vadd.f32 %v8630, %v8784
  %v8819 = vadd.f32 %v8635, %v8788
  %v8820 = vadd.f32 %v8638, %v8792
  %v8821 = vadd.f32 %v8643, %v8780
  %v8822 = vadd.f32 %v8646, %v8784
  %v8823 = vadd.f32 %v8651, %v8788
  %v8824 = vadd.f32 %v8654, %v8792
  %v8825 = vadd.f32 %v8659, %v8780
  %v8826 = vadd.f32 %v8662, %v8784
  %v8827 = vadd.f32 %v8667, %v8788
  %v8828 = vadd.f32 %v8670, %v8792
  %v8829 = vadd.f32 %v8675, %v8780
  %v8830 = vadd.f32 %v8678, %v8784
  %v8831 = vadd.f32 %v8683, %v8788
  %v8832 = vadd.f32 %v8686, %v8792
  %v8833 = vadd.f32 %v8691, %v8780
  %v8834 = vadd.f32 %v8694, %v8784
  %v8835 = vadd.f32 %v8699, %v8788
  %v8836 = vadd.f32 %v8702, %v8792
  %v8837 = vadd.f32 %v8707, %v8780
  %v8838 = vadd.f32 %v8710, %v8784
  %v8839 = vadd.f32 %v8715, %v8788
  %v8840 = vadd.f32 %v8718, %v8792
  %v8841 = vadd.f32 %v8723, %v8780
  %v8842 = vadd.f32 %v8726, %v8784
  %v8843 = vadd.f32 %v8731, %v8788
  %v8844 = vadd.f32 %v8734, %v8792
  %v8845 = vadd.f32 %v8739, %v8780
  %v8846 = vadd.f32 %v8742, %v8784
  %v8847 = vadd.f32 %v8747, %v8788
  %v8848 = vadd.f32 %v8750, %v8792
  %v8849 = vadd.f32 %v8755, %v8780
  %v8850 = vadd.f32 %v8758, %v8784
  %v8851 = vadd.f32 %v8763, %v8788
  %v8852 = vadd.f32 %v8766, %v8792
  %v8853 = vmax.f32 %v8797, 0.0
  %v8854 = vmax.f32 %v8798, 0.0
  %v8855 = vmax.f32 %v8799, 0.0
  %v8856 = vmax.f32 %v8800, 0.0
  %v8857 = vmax.f32 %v8801, 0.0
  %v8858 = vmax.f32 %v8802, 0.0
  %v8859 = vmax.f32 %v8803, 0.0
  %v8860 = vmax.f32 %v8804, 0.0
  %v8861 = vmax.f32 %v8805, 0.0
  %v8862 = vmax.f32 %v8806, 0.0
  %v8863 = vmax.f32 %v8807, 0.0
  %v8864 = vmax.f32 %v8808, 0.0
  %v8865 = vmax.f32 %v8809, 0.0
  %v8866 = vmax.f32 %v8810, 0.0
  %v8867 = vmax.f32 %v8811, 0.0
  %v8868 = vmax.f32 %v8812, 0.0
  %v8869 = vmax.f32 %v8813, 0.0
  %v8870 = vmax.f32 %v8814, 0.0
  %v8871 = vmax.f32 %v8815, 0.0
  %v8872 = vmax.f32 %v8816, 0.0
  %v8873 = vmax.f32 %v8817, 0.0
  %v8874 = vmax.f32 %v8818, 0.0
  %v8875 = vmax.f32 %v8819, 0.0
  %v8876 = vmax.f32 %v8820, 0.0
  %v8877 = vmax.f32 %v8821, 0.0
  %v8878 = vmax.f32 %v8822, 0.0
  %v8879 = vmax.f32 %v8823, 0.0
  %v8880 = vmax.f32 %v8824, 0.0
  %v8881 = vmax.f32 %v8825, 0.0
  %v8882 = vmax.f32 %v8826, 0.0
  %v8883 = vmax.f32 %v8827, 0.0
  %v8884 = vmax.f32 %v8828, 0.0
  %v8885 = vmax.f32 %v8829, 0.0
  %v8886 = vmax.f32 %v8830, 0.0
  %v8887 = vmax.f32 %v8831, 0.0
  %v8888 = vmax.f32 %v8832, 0.0
  %v8889 = vmax.f32 %v8833, 0.0
  %v8890 = vmax.f32 %v8834, 0.0
  %v8891 = vmax.f32 %v8835, 0.0
  %v8892 = vmax.f32 %v8836, 0.0
  %v8893 = vmax.f32 %v8837, 0.0
  %v8894 = vmax.f32 %v8838, 0.0
  %v8895 = vmax.f32 %v8839, 0.0
  %v8896 = vmax.f32 %v8840, 0.0
  %v8897 = vmax.f32 %v8841, 0.0
  %v8898 = vmax.f32 %v8842, 0.0
  %v8899 = vmax.f32 %v8843, 0.0
  %v8900 = vmax.f32 %v8844, 0.0
  %v8901 = vmax.f32 %v8845, 0.0
  %v8902 = vmax.f32 %v8846, 0.0
  %v8903 = vmax.f32 %v8847, 0.0
  %v8904 = vmax.f32 %v8848, 0.0
  %v8905 = vmax.f32 %v8849, 0.0
  %v8906 = vmax.f32 %v8850, 0.0
  %v8907 = vmax.f32 %v8851, 0.0
  %v8908 = vmax.f32 %v8852, 0.0
  %v8909 = vpack.c.bf16 %v8853, %v8853
  %v8910 = vpack.c.bf16 %v8854, %v8854
  %v8911 = vpack.c.bf16 %v8855, %v8855
  %v8912 = vpack.c.bf16 %v8856, %v8856
  %v8913 = vpack.c.bf16 %v8857, %v8857
  %v8914 = vpack.c.bf16 %v8858, %v8858
  %v8915 = vpack.c.bf16 %v8859, %v8859
  %v8916 = vpack.c.bf16 %v8860, %v8860
  %v8917 = vpack.c.bf16 %v8861, %v8861
  %v8918 = vpack.c.bf16 %v8862, %v8862
  %v8919 = vpack.c.bf16 %v8863, %v8863
  %v8920 = vpack.c.bf16 %v8864, %v8864
  %v8921 = vpack.c.bf16 %v8865, %v8865
  %v8922 = vpack.c.bf16 %v8866, %v8866
  %v8923 = vpack.c.bf16 %v8867, %v8867
  %v8924 = vpack.c.bf16 %v8868, %v8868
  %v8925 = vpack.c.bf16 %v8869, %v8869
  %v8926 = vpack.c.bf16 %v8870, %v8870
  %v8927 = vpack.c.bf16 %v8871, %v8871
  %v8928 = vpack.c.bf16 %v8872, %v8872
  %v8929 = vpack.c.bf16 %v8873, %v8873
  %v8930 = vpack.c.bf16 %v8874, %v8874
  %v8931 = vpack.c.bf16 %v8875, %v8875
  %v8932 = vpack.c.bf16 %v8876, %v8876
  %v8933 = vpack.c.bf16 %v8877, %v8877
  %v8934 = vpack.c.bf16 %v8878, %v8878
  %v8935 = vpack.c.bf16 %v8879, %v8879
  %v8936 = vpack.c.bf16 %v8880, %v8880
  %v8937 = vpack.c.bf16 %v8881, %v8881
  %v8938 = vpack.c.bf16 %v8882, %v8882
  %v8939 = vpack.c.bf16 %v8883, %v8883
  %v8940 = vpack.c.bf16 %v8884, %v8884
  %v8941 = vpack.c.bf16 %v8885, %v8885
  %v8942 = vpack.c.bf16 %v8886, %v8886
  %v8943 = vpack.c.bf16 %v8887, %v8887
  %v8944 = vpack.c.bf16 %v8888, %v8888
  %v8945 = vpack.c.bf16 %v8889, %v8889
  %v8946 = vpack.c.bf16 %v8890, %v8890
  %v8947 = vpack.c.bf16 %v8891, %v8891
  %v8948 = vpack.c.bf16 %v8892, %v8892
  %v8949 = vpack.c.bf16 %v8893, %v8893
  %v8950 = vpack.c.bf16 %v8894, %v8894
  %v8951 = vpack.c.bf16 %v8895, %v8895
  %v8952 = vpack.c.bf16 %v8896, %v8896
  %v8953 = vpack.c.bf16 %v8897, %v8897
  %v8954 = vpack.c.bf16 %v8898, %v8898
  %v8955 = vpack.c.bf16 %v8899, %v8899
  %v8956 = vpack.c.bf16 %v8900, %v8900
  %v8957 = vpack.c.bf16 %v8901, %v8901
  %v8958 = vpack.c.bf16 %v8902, %v8902
  %v8959 = vpack.c.bf16 %v8903, %v8903
  %v8960 = vpack.c.bf16 %v8904, %v8904
  %v8961 = vpack.c.bf16 %v8905, %v8905
  %v8962 = vpack.c.bf16 %v8906, %v8906
  %v8963 = vpack.c.bf16 %v8907, %v8907
  %v8964 = vpack.c.bf16 %v8908, %v8908
  %v9021 = vunpack.c.l.b16 %v8909
  %v9022 = vunpack.c.l.b16 %v8910
  %v9023 = vunpack.c.l.b16 %v8913
  %v9024 = vunpack.c.l.b16 %v8914
  %v9025 = vunpack.c.l.b16 %v8917
  %v9026 = vunpack.c.l.b16 %v8918
  %v9027 = vunpack.c.l.b16 %v8921
  %v9028 = vunpack.c.l.b16 %v8922
  %v9029 = vunpack.c.l.b16 %v8911
  %v9030 = vunpack.c.l.b16 %v8915
  %v9031 = vunpack.c.l.b16 %v8919
  %v9032 = vunpack.c.l.b16 %v8923
  %v9033 = vunpack.c.l.b16 %v8912
  %v9034 = vunpack.c.l.b16 %v8916
  %v9035 = vunpack.c.l.b16 %v8920
  %v9036 = vunpack.c.l.b16 %v8924
  %v9037 = vunpack.c.l.b16 %v8925
  %v9038 = vunpack.c.l.b16 %v8926
  %v9039 = vunpack.c.l.b16 %v8929
  %v9040 = vunpack.c.l.b16 %v8930
  %v9041 = vunpack.c.l.b16 %v8927
  %v9042 = vunpack.c.l.b16 %v8931
  %v9043 = vunpack.c.l.b16 %v8928
  %v9044 = vunpack.c.l.b16 %v8932
  %v9045 = vunpack.c.l.b16 %v8933
  %v9046 = vunpack.c.l.b16 %v8934
  %v9047 = vunpack.c.l.b16 %v8937
  %v9048 = vunpack.c.l.b16 %v8938
  %v9049 = vunpack.c.l.b16 %v8935
  %v9050 = vunpack.c.l.b16 %v8939
  %v9051 = vunpack.c.l.b16 %v8936
  %v9052 = vunpack.c.l.b16 %v8940
  %v9053 = vunpack.c.l.b16 %v8941
  %v9054 = vunpack.c.l.b16 %v8942
  %v9055 = vunpack.c.l.b16 %v8945
  %v9056 = vunpack.c.l.b16 %v8946
  %v9057 = vunpack.c.l.b16 %v8943
  %v9058 = vunpack.c.l.b16 %v8947
  %v9059 = vunpack.c.l.b16 %v8944
  %v9060 = vunpack.c.l.b16 %v8948
  %v9061 = vunpack.c.l.b16 %v8949
  %v9062 = vunpack.c.l.b16 %v8950
  %v9063 = vunpack.c.l.b16 %v8953
  %v9064 = vunpack.c.l.b16 %v8954
  %v9065 = vunpack.c.l.b16 %v8951
  %v9066 = vunpack.c.l.b16 %v8955
  %v9067 = vunpack.c.l.b16 %v8952
  %v9068 = vunpack.c.l.b16 %v8956
  %v9069 = vunpack.c.l.b16 %v8957
  %v9070 = vunpack.c.l.b16 %v8958
  %v9071 = vunpack.c.l.b16 %v8961
  %v9072 = vunpack.c.l.b16 %v8962
  %v9073 = vunpack.c.l.b16 %v8959
  %v9074 = vunpack.c.l.b16 %v8963
  %v9075 = vunpack.c.l.b16 %v8960
  %v9076 = vunpack.c.l.b16 %v8964
  %v9077 = vld [vmem:[%s5] sm:$0xf]
  %v9078 = vld [vmem:[%s5 + $0x4] sm:$0xf]
  %v9079 = vld [vmem:[%s5 + $0x8] sm:$0xf]
  %v9080 = vld [vmem:[%s5 + $0xc] sm:$0xf]
  %v9081 = vld [vmem:[%s5 + $0x10] sm:$0xf]
  %v9082 = vld [vmem:[%s5 + $0x14] sm:$0xf]
  %v9083 = vld [vmem:[%s5 + $0x18] sm:$0xf]
  %v9084 = vld [vmem:[%s5 + $0x1c] sm:$0xf]
  %v9085 = vld [vmem:[%s5 + $0x20] sm:$0xf]
  %v9086 = vld [vmem:[%s5 + $0x24] sm:$0xf]
  %v9087 = vld [vmem:[%s5 + $0x28] sm:$0xf]
  %v9088 = vld [vmem:[%s5 + $0x2c] sm:$0xf]
  %v9089 = vld [vmem:[%s5 + $0x30] sm:$0xf]
  %v9090 = vld [vmem:[%s5 + $0x34] sm:$0xf]
  %v9091 = vld [vmem:[%s5 + $0x38] sm:$0xf]
  %v9092 = vld [vmem:[%s5 + $0x3c] sm:$0xf]
  %v9093 = vld [vmem:[%s5 + $0x40] sm:$0xf]
  %v9094 = vld [vmem:[%s5 + $0x44] sm:$0xf]
  %v9095 = vld [vmem:[%s5 + $0x48] sm:$0xf]
  %v9096 = vld [vmem:[%s5 + $0x4c] sm:$0xf]
  %v9097 = vld [vmem:[%s5 + $0x50] sm:$0xf]
  %v9098 = vld [vmem:[%s5 + $0x54] sm:$0xf]
  %v9099 = vld [vmem:[%s5 + $0x58] sm:$0xf]
  %v9100 = vld [vmem:[%s5 + $0x5c] sm:$0xf]
  %v9101 = vld [vmem:[%s5 + $0x60] sm:$0xf]
  %v9102 = vld [vmem:[%s5 + $0x64] sm:$0xf]
  %v9103 = vld [vmem:[%s5 + $0x68] sm:$0xf]
  %v9104 = vld [vmem:[%s5 + $0x6c] sm:$0xf]
  %v9105 = vld [vmem:[%s5 + $0x70] sm:$0xf]
  %v9106 = vld [vmem:[%s5 + $0x74] sm:$0xf]
  %v9107 = vld [vmem:[%s5 + $0x78] sm:$0xf]
  %v9108 = vld [vmem:[%s5 + $0x7c] sm:$0xf]
  %v9109 = vld [vmem:[%s5 + $0x80] sm:$0xf]
  %v9110 = vld [vmem:[%s5 + $0x84] sm:$0xf]
  %v9111 = vld [vmem:[%s5 + $0x88] sm:$0xf]
  %v9112 = vld [vmem:[%s5 + $0x8c] sm:$0xf]
  %v9113 = vld [vmem:[%s5 + $0x90] sm:$0xf]
  %v9114 = vld [vmem:[%s5 + $0x94] sm:$0xf]
  %v9115 = vld [vmem:[%s5 + $0x98] sm:$0xf]
  %v9116 = vld [vmem:[%s5 + $0x9c] sm:$0xf]
  %v9117 = vld [vmem:[%s5 + $0xa0] sm:$0xf]
  %v9118 = vld [vmem:[%s5 + $0xa4] sm:$0xf]
  %v9119 = vld [vmem:[%s5 + $0xa8] sm:$0xf]
  %v9120 = vld [vmem:[%s5 + $0xac] sm:$0xf]
  %v9121 = vld [vmem:[%s5 + $0xb0] sm:$0xf]
  %v9122 = vld [vmem:[%s5 + $0xb4] sm:$0xf]
  %v9123 = vld [vmem:[%s5 + $0xb8] sm:$0xf]
  %v9124 = vld [vmem:[%s5 + $0xbc] sm:$0xf]
  %v9125 = vld [vmem:[%s5 + $0xc0] sm:$0xf]
  %v9126 = vld [vmem:[%s5 + $0xc4] sm:$0xf]
  %v9127 = vld [vmem:[%s5 + $0xc8] sm:$0xf]
  %v9128 = vld [vmem:[%s5 + $0xcc] sm:$0xf]
  %v9129 = vld [vmem:[%s5 + $0xd0] sm:$0xf]
  %v9130 = vld [vmem:[%s5 + $0xd4] sm:$0xf]
  %v9131 = vld [vmem:[%s5 + $0xd8] sm:$0xf]
  %v9132 = vld [vmem:[%s5 + $0xdc] sm:$0xf]
  %v9133 = vld [vmem:[%s5 + $0xe0] sm:$0xf]
  %v9134 = vld [vmem:[%s5 + $0xe4] sm:$0xf]
  %v9135 = vld [vmem:[%s5 + $0xe8] sm:$0xf]
  %v9136 = vld [vmem:[%s5 + $0xec] sm:$0xf]
  %v9137 = vld [vmem:[%s5 + $0xf0] sm:$0xf]
  %v9138 = vld [vmem:[%s5 + $0xf4] sm:$0xf]
  %v9139 = vld [vmem:[%s5 + $0xf8] sm:$0xf]
  %v9140 = vld [vmem:[%s5 + $0xfc] sm:$0xf]
  %v9141 = vld [vmem:[%s5 + $0x100] sm:$0xf]
  %v9142 = vld [vmem:[%s5 + $0x104] sm:$0xf]
  %v9143 = vld [vmem:[%s5 + $0x108] sm:$0xf]
  %v9144 = vld [vmem:[%s5 + $0x10c] sm:$0xf]
  %v9145 = vld [vmem:[%s5 + $0x110] sm:$0xf]
  %v9146 = vld [vmem:[%s5 + $0x114] sm:$0xf]
  %v9147 = vld [vmem:[%s5 + $0x118] sm:$0xf]
  %v9148 = vld [vmem:[%s5 + $0x11c] sm:$0xf]
  %v9149 = vld [vmem:[%s5 + $0x120] sm:$0xf]
  %v9150 = vld [vmem:[%s5 + $0x124] sm:$0xf]
  %v9151 = vld [vmem:[%s5 + $0x128] sm:$0xf]
  %v9152 = vld [vmem:[%s5 + $0x12c] sm:$0xf]
  %v9153 = vld [vmem:[%s5 + $0x130] sm:$0xf]
  %v9154 = vld [vmem:[%s5 + $0x134] sm:$0xf]
  %v9155 = vld [vmem:[%s5 + $0x138] sm:$0xf]
  %v9156 = vld [vmem:[%s5 + $0x13c] sm:$0xf]
  %v9157 = vld [vmem:[%s5 + $0x140] sm:$0xf]
  %v9158 = vld [vmem:[%s5 + $0x144] sm:$0xf]
  %v9159 = vld [vmem:[%s5 + $0x148] sm:$0xf]
  %v9160 = vld [vmem:[%s5 + $0x14c] sm:$0xf]
  %v9161 = vld [vmem:[%s5 + $0x150] sm:$0xf]
  %v9162 = vld [vmem:[%s5 + $0x154] sm:$0xf]
  %v9163 = vld [vmem:[%s5 + $0x158] sm:$0xf]
  %v9164 = vld [vmem:[%s5 + $0x15c] sm:$0xf]
  %v9165 = vld [vmem:[%s5 + $0x160] sm:$0xf]
  %v9166 = vld [vmem:[%s5 + $0x164] sm:$0xf]
  %v9167 = vld [vmem:[%s5 + $0x168] sm:$0xf]
  %v9168 = vld [vmem:[%s5 + $0x16c] sm:$0xf]
  %v9169 = vld [vmem:[%s5 + $0x170] sm:$0xf]
  %v9170 = vld [vmem:[%s5 + $0x174] sm:$0xf]
  %v9171 = vld [vmem:[%s5 + $0x178] sm:$0xf]
  %v9172 = vld [vmem:[%s5 + $0x17c] sm:$0xf]
  %v9173 = vld [vmem:[%s5 + $0x180] sm:$0xf]
  %v9174 = vld [vmem:[%s5 + $0x184] sm:$0xf]
  %v9175 = vld [vmem:[%s5 + $0x188] sm:$0xf]
  %v9176 = vld [vmem:[%s5 + $0x18c] sm:$0xf]
  %v9177 = vld [vmem:[%s5 + $0x190] sm:$0xf]
  %v9178 = vld [vmem:[%s5 + $0x194] sm:$0xf]
  %v9179 = vld [vmem:[%s5 + $0x198] sm:$0xf]
  %v9180 = vld [vmem:[%s5 + $0x19c] sm:$0xf]
  %v9181 = vld [vmem:[%s5 + $0x1a0] sm:$0xf]
  %v9182 = vld [vmem:[%s5 + $0x1a4] sm:$0xf]
  %v9183 = vld [vmem:[%s5 + $0x1a8] sm:$0xf]
  %v9184 = vld [vmem:[%s5 + $0x1ac] sm:$0xf]
  %v9185 = vld [vmem:[%s5 + $0x1b0] sm:$0xf]
  %v9186 = vld [vmem:[%s5 + $0x1b4] sm:$0xf]
  %v9187 = vld [vmem:[%s5 + $0x1b8] sm:$0xf]
  %v9188 = vld [vmem:[%s5 + $0x1bc] sm:$0xf]
  %v9189 = vld [vmem:[%s5 + $0x1c0] sm:$0xf]
  %v9190 = vld [vmem:[%s5 + $0x1c4] sm:$0xf]
  %v9191 = vld [vmem:[%s5 + $0x1c8] sm:$0xf]
  %v9192 = vld [vmem:[%s5 + $0x1cc] sm:$0xf]
  %v9193 = vld [vmem:[%s5 + $0x1d0] sm:$0xf]
  %v9194 = vld [vmem:[%s5 + $0x1d4] sm:$0xf]
  %v9195 = vld [vmem:[%s5 + $0x1d8] sm:$0xf]
  %v9196 = vld [vmem:[%s5 + $0x1dc] sm:$0xf]
  %v9197 = vld [vmem:[%s5 + $0x1e0] sm:$0xf]
  %v9198 = vld [vmem:[%s5 + $0x1e4] sm:$0xf]
  %v9199 = vld [vmem:[%s5 + $0x1e8] sm:$0xf]
  %v9200 = vld [vmem:[%s5 + $0x1ec] sm:$0xf]
  %v9201 = vld [vmem:[%s5 + $0x1f0] sm:$0xf]
  %v9202 = vld [vmem:[%s5 + $0x1f4] sm:$0xf]
  %v9203 = vld [vmem:[%s5 + $0x1f8] sm:$0xf]
  %v9204 = vld [vmem:[%s5 + $0x1fc] sm:$0xf]
  %v9205 = vpack.c.b16 %v9022, %v9021
  %v9206 = vpack.c.b16 %v9029, %v9022
  %v9207 = vpack.c.b16 %v9024, %v9023
  %v9208 = vpack.c.b16 %v9030, %v9024
  %v9209 = vpack.c.b16 %v9026, %v9025
  %v9210 = vpack.c.b16 %v9031, %v9026
  %v9211 = vpack.c.b16 %v9028, %v9027
  %v9212 = vpack.c.b16 %v9032, %v9028
  %v9213 = vpack.c.b16 %v9025, %v9029
  %v9214 = vpack.c.b16 %v9026, %v9033
  %v9215 = vpack.c.b16 %v9027, %v9030
  %v9216 = vpack.c.b16 %v9028, %v9034
  %v9217 = vpack.c.b16 %v9037, %v9031
  %v9218 = vpack.c.b16 %v9038, %v9035
  %v9219 = vpack.c.b16 %v9039, %v9032
  %v9220 = vpack.c.b16 %v9040, %v9036
  %v9221 = vpack.c.b16 %v9035, %v9031
  %v9222 = vpack.c.b16 %v9036, %v9032
  %v9223 = vpack.c.b16 %v9041, %v9038
  %v9224 = vpack.c.b16 %v9043, %v9041
  %v9225 = vpack.c.b16 %v9042, %v9040
  %v9226 = vpack.c.b16 %v9044, %v9042
  %v9227 = vpack.c.b16 %v9038, %v9037
  %v9228 = vpack.c.b16 %v9040, %v9039
  %v9229 = vpack.c.b16 %v9046, %v9045
  %v9230 = vpack.c.b16 %v9049, %v9046
  %v9231 = vpack.c.b16 %v9048, %v9047
  %v9232 = vpack.c.b16 %v9050, %v9048
  %v9233 = vpack.c.b16 %v9045, %v9041
  %v9234 = vpack.c.b16 %v9046, %v9043
  %v9235 = vpack.c.b16 %v9047, %v9042
  %v9236 = vpack.c.b16 %v9048, %v9044
  %v9237 = vpack.c.b16 %v9053, %v9049
  %v9238 = vpack.c.b16 %v9054, %v9051
  %v9239 = vpack.c.b16 %v9055, %v9050
  %v9240 = vpack.c.b16 %v9056, %v9052
  %v9241 = vpack.c.b16 %v9051, %v9049
  %v9242 = vpack.c.b16 %v9052, %v9050
  %v9243 = vpack.c.b16 %v9057, %v9054
  %v9244 = vpack.c.b16 %v9059, %v9057
  %v9245 = vpack.c.b16 %v9058, %v9056
  %v9246 = vpack.c.b16 %v9060, %v9058
  %v9247 = vpack.c.b16 %v9054, %v9053
  %v9248 = vpack.c.b16 %v9056, %v9055
  %v9249 = vpack.c.b16 %v9062, %v9061
  %v9250 = vpack.c.b16 %v9065, %v9062
  %v9251 = vpack.c.b16 %v9064, %v9063
  %v9252 = vpack.c.b16 %v9066, %v9064
  %v9253 = vpack.c.b16 %v9061, %v9057
  %v9254 = vpack.c.b16 %v9062, %v9059
  %v9255 = vpack.c.b16 %v9063, %v9058
  %v9256 = vpack.c.b16 %v9064, %v9060
  %v9257 = vpack.c.b16 %v9069, %v9065
  %v9258 = vpack.c.b16 %v9070, %v9067
  %v9259 = vpack.c.b16 %v9071, %v9066
  %v9260 = vpack.c.b16 %v9072, %v9068
  %v9261 = vpack.c.b16 %v9067, %v9065
  %v9262 = vpack.c.b16 %v9068, %v9066
  %v9263 = vpack.c.b16 %v9073, %v9070
  %v9264 = vpack.c.b16 %v9075, %v9073
  %v9265 = vpack.c.b16 %v9074, %v9072
  %v9266 = vpack.c.b16 %v9076, %v9074
  %v9457 = vunpack.c.l.b16 %v9077
  %v9458 = vunpack.c.l.b16 %v9078
  %v9459 = vunpack.c.l.b16 %v9079
  %v9460 = vunpack.c.l.b16 %v9080
  %v9461 = vunpack.c.l.b16 %v9081
  %v9462 = vunpack.c.l.b16 %v9082
  %v9463 = vunpack.c.l.b16 %v9083
  %v9464 = vunpack.c.l.b16 %v9084
  %v9465 = vunpack.c.l.b16 %v9085
  %v9466 = vunpack.c.l.b16 %v9086
  %v9467 = vunpack.c.l.b16 %v9087
  %v9468 = vunpack.c.l.b16 %v9088
  %v9469 = vunpack.c.l.b16 %v9089
  %v9470 = vunpack.c.l.b16 %v9090
  %v9471 = vunpack.c.l.b16 %v9091
  %v9472 = vunpack.c.l.b16 %v9092
  %v9473 = vunpack.c.l.b16 %v9093
  %v9474 = vunpack.c.l.b16 %v9094
  %v9475 = vunpack.c.l.b16 %v9095
  %v9476 = vunpack.c.l.b16 %v9096
  %v9477 = vunpack.c.l.b16 %v9097
  %v9478 = vunpack.c.l.b16 %v9098
  %v9479 = vunpack.c.l.b16 %v9099
  %v9480 = vunpack.c.l.b16 %v9100
  %v9481 = vunpack.c.l.b16 %v9101
  %v9482 = vunpack.c.l.b16 %v9102
  %v9483 = vunpack.c.l.b16 %v9103
  %v9484 = vunpack.c.l.b16 %v9104
  %v9485 = vunpack.c.l.b16 %v9105
  %v9486 = vunpack.c.l.b16 %v9106
  %v9487 = vunpack.c.l.b16 %v9107
  %v9488 = vunpack.c.l.b16 %v9108
  %v9489 = vunpack.c.l.b16 %v9109
  %v9490 = vunpack.c.l.b16 %v9110
  %v9491 = vunpack.c.l.b16 %v9111
  %v9492 = vunpack.c.l.b16 %v9112
  %v9493 = vunpack.c.l.b16 %v9113
  %v9494 = vunpack.c.l.b16 %v9114
  %v9495 = vunpack.c.l.b16 %v9115
  %v9496 = vunpack.c.l.b16 %v9116
  %v9497 = vunpack.c.l.b16 %v9117
  %v9498 = vunpack.c.l.b16 %v9118
  %v9499 = vunpack.c.l.b16 %v9119
  %v9500 = vunpack.c.l.b16 %v9120
  %v9501 = vunpack.c.l.b16 %v9121
  %v9502 = vunpack.c.l.b16 %v9122
  %v9503 = vunpack.c.l.b16 %v9123
  %v9504 = vunpack.c.l.b16 %v9124
  %v9505 = vunpack.c.l.b16 %v9125
  %v9506 = vunpack.c.l.b16 %v9126
  %v9507 = vunpack.c.l.b16 %v9127
  %v9508 = vunpack.c.l.b16 %v9128
  %v9509 = vunpack.c.l.b16 %v9129
  %v9510 = vunpack.c.l.b16 %v9130
  %v9511 = vunpack.c.l.b16 %v9131
  %v9512 = vunpack.c.l.b16 %v9132
  %v9513 = vunpack.c.l.b16 %v9133
  %v9514 = vunpack.c.l.b16 %v9134
  %v9515 = vunpack.c.l.b16 %v9135
  %v9516 = vunpack.c.l.b16 %v9136
  %v9517 = vunpack.c.l.b16 %v9137
  %v9518 = vunpack.c.l.b16 %v9138
  %v9519 = vunpack.c.l.b16 %v9139
  %v9520 = vunpack.c.l.b16 %v9140
  %v9521 = vunpack.c.l.b16 %v9141
  %v9522 = vunpack.c.l.b16 %v9142
  %v9523 = vunpack.c.l.b16 %v9143
  %v9524 = vunpack.c.l.b16 %v9144
  %v9525 = vunpack.c.l.b16 %v9145
  %v9526 = vunpack.c.l.b16 %v9146
  %v9527 = vunpack.c.l.b16 %v9147
  %v9528 = vunpack.c.l.b16 %v9148
  %v9529 = vunpack.c.l.b16 %v9149
  %v9530 = vunpack.c.l.b16 %v9150
  %v9531 = vunpack.c.l.b16 %v9151
  %v9532 = vunpack.c.l.b16 %v9152
  %v9533 = vunpack.c.l.b16 %v9153
  %v9534 = vunpack.c.l.b16 %v9154
  %v9535 = vunpack.c.l.b16 %v9155
  %v9536 = vunpack.c.l.b16 %v9156
  %v9537 = vunpack.c.l.b16 %v9157
  %v9538 = vunpack.c.l.b16 %v9158
  %v9539 = vunpack.c.l.b16 %v9159
  %v9540 = vunpack.c.l.b16 %v9160
  %v9541 = vunpack.c.l.b16 %v9161
  %v9542 = vunpack.c.l.b16 %v9162
  %v9543 = vunpack.c.l.b16 %v9163
  %v9544 = vunpack.c.l.b16 %v9164
  %v9545 = vunpack.c.l.b16 %v9165
  %v9546 = vunpack.c.l.b16 %v9166
  %v9547 = vunpack.c.l.b16 %v9167
  %v9548 = vunpack.c.l.b16 %v9168
  %v9549 = vunpack.c.l.b16 %v9169
  %v9550 = vunpack.c.l.b16 %v9170
  %v9551 = vunpack.c.l.b16 %v9171
  %v9552 = vunpack.c.l.b16 %v9172
  %v9553 = vunpack.c.l.b16 %v9173
  %v9554 = vunpack.c.l.b16 %v9174
  %v9555 = vunpack.c.l.b16 %v9175
  %v9556 = vunpack.c.l.b16 %v9176
  %v9557 = vunpack.c.l.b16 %v9177
  %v9558 = vunpack.c.l.b16 %v9178
  %v9559 = vunpack.c.l.b16 %v9179
  %v9560 = vunpack.c.l.b16 %v9180
  %v9561 = vunpack.c.l.b16 %v9181
  %v9562 = vunpack.c.l.b16 %v9182
  %v9563 = vunpack.c.l.b16 %v9183
  %v9564 = vunpack.c.l.b16 %v9184
  %v9565 = vunpack.c.l.b16 %v9185
  %v9566 = vunpack.c.l.b16 %v9186
  %v9567 = vunpack.c.l.b16 %v9187
  %v9568 = vunpack.c.l.b16 %v9188
  %v9569 = vunpack.c.l.b16 %v9189
  %v9570 = vunpack.c.l.b16 %v9190
  %v9571 = vunpack.c.l.b16 %v9191
  %v9572 = vunpack.c.l.b16 %v9192
  %v9573 = vunpack.c.l.b16 %v9193
  %v9574 = vunpack.c.l.b16 %v9194
  %v9575 = vunpack.c.l.b16 %v9195
  %v9576 = vunpack.c.l.b16 %v9196
  %v9577 = vunpack.c.l.b16 %v9197
  %v9578 = vunpack.c.l.b16 %v9198
  %v9579 = vunpack.c.l.b16 %v9199
  %v9580 = vunpack.c.l.b16 %v9200
  %v9581 = vunpack.c.l.b16 %v9201
  %v9582 = vunpack.c.l.b16 %v9202
  %v9583 = vunpack.c.l.b16 %v9203
  %v9584 = vunpack.c.l.b16 %v9204
  %v9585 = vpack.c.b16 %v9458, %v9457
  %v9586 = vpack.c.b16 %v9460, %v9459
  %v9587 = vpack.c.b16 %v9462, %v9461
  %v9588 = vpack.c.b16 %v9464, %v9463
  %v9589 = vpack.c.b16 %v9466, %v9465
  %v9590 = vpack.c.b16 %v9468, %v9467
  %v9591 = vpack.c.b16 %v9470, %v9469
  %v9592 = vpack.c.b16 %v9472, %v9471
  %v9593 = vpack.c.b16 %v9474, %v9473
  %v9594 = vpack.c.b16 %v9476, %v9475
  %v9595 = vpack.c.b16 %v9478, %v9477
  %v9596 = vpack.c.b16 %v9480, %v9479
  %v9597 = vpack.c.b16 %v9482, %v9481
  %v9598 = vpack.c.b16 %v9484, %v9483
  %v9599 = vpack.c.b16 %v9486, %v9485
  %v9600 = vpack.c.b16 %v9488, %v9487
  %v9601 = vpack.c.b16 %v9490, %v9489
  %v9602 = vpack.c.b16 %v9492, %v9491
  %v9603 = vpack.c.b16 %v9494, %v9493
  %v9604 = vpack.c.b16 %v9496, %v9495
  %v9605 = vpack.c.b16 %v9498, %v9497
  %v9606 = vpack.c.b16 %v9500, %v9499
  %v9607 = vpack.c.b16 %v9502, %v9501
  %v9608 = vpack.c.b16 %v9504, %v9503
  %v9609 = vpack.c.b16 %v9506, %v9505
  %v9610 = vpack.c.b16 %v9508, %v9507
  %v9611 = vpack.c.b16 %v9510, %v9509
  %v9612 = vpack.c.b16 %v9512, %v9511
  %v9613 = vpack.c.b16 %v9514, %v9513
  %v9614 = vpack.c.b16 %v9516, %v9515
  %v9615 = vpack.c.b16 %v9518, %v9517
  %v9616 = vpack.c.b16 %v9520, %v9519
  %v9617 = vpack.c.b16 %v9522, %v9521
  %v9618 = vpack.c.b16 %v9524, %v9523
  %v9619 = vpack.c.b16 %v9526, %v9525
  %v9620 = vpack.c.b16 %v9528, %v9527
  %v9621 = vpack.c.b16 %v9530, %v9529
  %v9622 = vpack.c.b16 %v9532, %v9531
  %v9623 = vpack.c.b16 %v9534, %v9533
  %v9624 = vpack.c.b16 %v9536, %v9535
  %v9625 = vpack.c.b16 %v9538, %v9537
  %v9626 = vpack.c.b16 %v9540, %v9539
  %v9627 = vpack.c.b16 %v9542, %v9541
  %v9628 = vpack.c.b16 %v9544, %v9543
  %v9629 = vpack.c.b16 %v9546, %v9545
  %v9630 = vpack.c.b16 %v9548, %v9547
  %v9631 = vpack.c.b16 %v9550, %v9549
  %v9632 = vpack.c.b16 %v9552, %v9551
  %v9633 = vpack.c.b16 %v9554, %v9553
  %v9634 = vpack.c.b16 %v9556, %v9555
  %v9635 = vpack.c.b16 %v9558, %v9557
  %v9636 = vpack.c.b16 %v9560, %v9559
  %v9637 = vpack.c.b16 %v9562, %v9561
  %v9638 = vpack.c.b16 %v9564, %v9563
  %v9639 = vpack.c.b16 %v9566, %v9565
  %v9640 = vpack.c.b16 %v9568, %v9567
  %v9641 = vpack.c.b16 %v9570, %v9569
  %v9642 = vpack.c.b16 %v9572, %v9571
  %v9643 = vpack.c.b16 %v9574, %v9573
  %v9644 = vpack.c.b16 %v9576, %v9575
  %v9645 = vpack.c.b16 %v9578, %v9577
  %v9646 = vpack.c.b16 %v9580, %v9579
  %v9647 = vpack.c.b16 %v9582, %v9581
  %v9648 = vpack.c.b16 %v9584, %v9583
  %9713 = vmatprep.subr.bf16.mxu0 0
  %9714 = vmatpush1.bf16.msra.mxu0 %v9585
  %9715 = vmatprep.subr.bf16.mxu0 0
  %9716 = vmatpush1.bf16.msra.mxu0 %v9586
  %9717 = vmatprep.subr.bf16.mxu0 0
  %9718 = vmatpush1.bf16.msra.mxu0 %v9587
  %9719 = vmatprep.subr.bf16.mxu0 0
  %9720 = vmatpush1.bf16.msra.mxu0 %v9588
  %9721 = vmatprep.subr.bf16.mxu0 0
  %9722 = vmatpush1.bf16.msra.mxu0 %v9589
  %9723 = vmatprep.subr.bf16.mxu0 0
  %9724 = vmatpush1.bf16.msra.mxu0 %v9590
  %9725 = vmatprep.subr.bf16.mxu0 0
  %9726 = vmatpush1.bf16.msra.mxu0 %v9591
  %9727 = vmatprep.subr.bf16.mxu0 0
  %9728 = vmatpush1.bf16.msra.mxu0 %v9592
  %9729 = vmatprep.subr.bf16.mxu0 0
  %9730 = vmatpush1.bf16.msra.mxu0 %v9593
  %9731 = vmatprep.subr.bf16.mxu0 0
  %9732 = vmatpush1.bf16.msra.mxu0 %v9594
  %9733 = vmatprep.subr.bf16.mxu0 0
  %9734 = vmatpush1.bf16.msra.mxu0 %v9595
  %9735 = vmatprep.subr.bf16.mxu0 0
  %9736 = vmatpush1.bf16.msra.mxu0 %v9596
  %9737 = vmatprep.subr.bf16.mxu0 0
  %9738 = vmatpush1.bf16.msra.mxu0 %v9597
  %9739 = vmatprep.subr.bf16.mxu0 0
  %9740 = vmatpush1.bf16.msra.mxu0 %v9598
  %9741 = vmatprep.subr.bf16.mxu0 0
  %9742 = vmatpush1.bf16.msra.mxu0 %v9599
  %9743 = vmatprep.subr.bf16.mxu0 0
  %9744 = vmatpush1.bf16.msra.mxu0 %v9600
  %9745 = vmatprep.mubr.bf16.mxu0 %v9206
  %9746 = vmatmul.mubr.bf16.gmra.mrb[0].mxu0 %v9205
  %v9747 = vpop.f32.mrb[0].mxu0
  %v9748 = vadd.f32 0.0, %v9747
  %v9749 = vpop.f32.mrb[0].mxu0
  %v9750 = vpop.f32.mrb[0].mxu0
  %v9751 = vadd.f32 0.0, %v9750
  %v9752 = vpop.f32.mrb[0].mxu0
  %9753 = vmatprep.mubr.bf16.mxu0 %v9214
  %9754 = vmatmul.mubr.bf16.gmra.mrb[0].mxu0 %v9213
  %v9755 = vpop.f32.mrb[0].mxu0
  %v9756 = vadd.f32 0.0, %v9755
  %v9757 = vpop.f32.mrb[0].mxu0
  %v9758 = vpop.f32.mrb[0].mxu0
  %v9759 = vadd.f32 0.0, %v9758
  %v9760 = vpop.f32.mrb[0].mxu0
  %9761 = vmatprep.mubr.bf16.mxu0 %v9221
  %9762 = vmatmul.mubr.bf16.gmra.mrb[0].mxu0 %v9210
  %v9763 = vpop.f32.mrb[0].mxu0
  %v9764 = vadd.f32 0.0, %v9763
  %v9765 = vpop.f32.mrb[0].mxu0
  %v9766 = vpop.f32.mrb[0].mxu0
  %v9767 = vadd.f32 0.0, %v9766
  %v9768 = vpop.f32.mrb[0].mxu0
  %9769 = vmatprep.mubr.bf16.mxu0 %v9223
  %9770 = vmatmul.mubr.bf16.gmra.mrb[0].mxu0 %v9227
  %v9771 = vpop.f32.mrb[0].mxu0
  %v9772 = vadd.f32 0.0, %v9771
  %v9773 = vpop.f32.mrb[0].mxu0
  %v9774 = vpop.f32.mrb[0].mxu0
  %v9775 = vadd.f32 0.0, %v9774
  %v9776 = vpop.f32.mrb[0].mxu0
  %9777 = vmatprep.mubr.bf16.mxu0 %v9234
  %9778 = vmatmul.mubr.bf16.gmra.mrb[0].mxu0 %v9233
  %v9779 = vpop.f32.mrb[0].mxu0
  %v9780 = vadd.f32 0.0, %v9779
  %v9781 = vpop.f32.mrb[0].mxu0
  %v9782 = vpop.f32.mrb[0].mxu0
  %v9783 = vadd.f32 0.0, %v9782
  %v9784 = vpop.f32.mrb[0].mxu0
  %9785 = vmatprep.mubr.bf16.mxu0 %v9241
  %9786 = vmatmul.mubr.bf16.gmra.mrb[0].mxu0 %v9230
  %v9787 = vpop.f32.mrb[0].mxu0
  %v9788 = vadd.f32 0.0, %v9787
  %v9789 = vpop.f32.mrb[0].mxu0
  %v9790 = vpop.f32.mrb[0].mxu0
  %v9791 = vadd.f32 0.0, %v9790
  %v9792 = vpop.f32.mrb[0].mxu0
  %9793 = vmatprep.mubr.bf16.mxu0 %v9243
  %9794 = vmatmul.mubr.bf16.gmra.mrb[0].mxu0 %v9247
  %v9795 = vpop.f32.mrb[0].mxu0
  %v9796 = vadd.f32 0.0, %v9795
  %v9797 = vpop.f32.mrb[0].mxu0
  %v9798 = vpop.f32.mrb[0].mxu0
  %v9799 = vadd.f32 0.0, %v9798
  %v9800 = vpop.f32.mrb[0].mxu0
  %9801 = vmatprep.mubr.bf16.mxu0 %v9254
  %9802 = vmatmul.mubr.bf16.gmra.mrb[0].mxu0 %v9253
  %v9803 = vpop.f32.mrb[0].mxu0
  %v9804 = vadd.f32 0.0, %v9803
  %v9805 = vpop.f32.mrb[0].mxu0
  %v9806 = vpop.f32.mrb[0].mxu0
  %v9807 = vadd.f32 0.0, %v9806
  %v9808 = vpop.f32.mrb[0].mxu0
  %9809 = vmatprep.mubr.bf16.mxu0 %v9261
  %9810 = vmatmul.mubr.bf16.gmra.mrb[0].mxu0 %v9250
  %v9811 = vpop.f32.mrb[0].mxu0
  %v9812 = vadd.f32 0.0, %v9811
  %v9813 = vpop.f32.mrb[0].mxu0
  %v9814 = vpop.f32.mrb[0].mxu0
  %v9815 = vadd.f32 0.0, %v9814
  %v9816 = vpop.f32.mrb[0].mxu0
  %9817 = vdwg.mxu0
  %9818 = vmatprep.subr.bf16.mxu0 0
  %9819 = vmatpush1.bf16.msra.mxu0 %v9601
  %9820 = vmatprep.subr.bf16.mxu0 0
  %9821 = vmatpush1.bf16.msra.mxu0 %v9602
  %9822 = vmatprep.subr.bf16.mxu0 0
  %9823 = vmatpush1.bf16.msra.mxu0 %v9603
  %9824 = vmatprep.subr.bf16.mxu0 0
  %9825 = vmatpush1.bf16.msra.mxu0 %v9604
  %9826 = vmatprep.subr.bf16.mxu0 0
  %9827 = vmatpush1.bf16.msra.mxu0 %v9605
  %9828 = vmatprep.subr.bf16.mxu0 0
  %9829 = vmatpush1.bf16.msra.mxu0 %v9606
  %9830 = vmatprep.subr.bf16.mxu0 0
  %9831 = vmatpush1.bf16.msra.mxu0 %v9607
  %9832 = vmatprep.subr.bf16.mxu0 0
  %9833 = vmatpush1.bf16.msra.mxu0 %v9608
  %9834 = vmatprep.subr.bf16.mxu0 0
  %9835 = vmatpush1.bf16.msra.mxu0 %v9609
  %9836 = vmatprep.subr.bf16.mxu0 0
  %9837 = vmatpush1.bf16.msra.mxu0 %v9610
  %9838 = vmatprep.subr.bf16.mxu0 0
  %9839 = vmatpush1.bf16.msra.mxu0 %v9611
  %9840 = vmatprep.subr.bf16.mxu0 0
  %9841 = vmatpush1.bf16.msra.mxu0 %v9612
  %9842 = vmatprep.subr.bf16.mxu0 0
  %9843 = vmatpush1.bf16.msra.mxu0 %v9613
  %9844 = vmatprep.subr.bf16.mxu0 0
  %9845 = vmatpush1.bf16.msra.mxu0 %v9614
  %9846 = vmatprep.subr.bf16.mxu0 0
  %9847 = vmatpush1.bf16.msra.mxu0 %v9615
  %9848 = vmatprep.subr.bf16.mxu0 0
  %9849 = vmatpush1.bf16.msra.mxu0 %v9616
  %9850 = vmatprep.mubr.bf16.mxu0 %v9208
  %9851 = vmatmul.mubr.bf16.gmra.mrb[0].mxu0 %v9207
  %v9852 = vpop.f32.mrb[0].mxu0
  %v9853 = vadd.f32 %v9748, %v9852
  %v9854 = vpop.f32.mrb[0].mxu0
  %v9855 = vpop.f32.mrb[0].mxu0
  %v9856 = vadd.f32 %v9751, %v9855
  %v9857 = vpop.f32.mrb[0].mxu0
  %9858 = vmatprep.mubr.bf16.mxu0 %v9216
  %9859 = vmatmul.mubr.bf16.gmra.mrb[0].mxu0 %v9215
  %v9860 = vpop.f32.mrb[0].mxu0
  %v9861 = vadd.f32 %v9756, %v9860
  %v9862 = vpop.f32.mrb[0].mxu0
  %v9863 = vpop.f32.mrb[0].mxu0
  %v9864 = vadd.f32 %v9759, %v9863
  %v9865 = vpop.f32.mrb[0].mxu0
  %9866 = vmatprep.mubr.bf16.mxu0 %v9222
  %9867 = vmatmul.mubr.bf16.gmra.mrb[0].mxu0 %v9212
  %v9868 = vpop.f32.mrb[0].mxu0
  %v9869 = vadd.f32 %v9764, %v9868
  %v9870 = vpop.f32.mrb[0].mxu0
  %v9871 = vpop.f32.mrb[0].mxu0
  %v9872 = vadd.f32 %v9767, %v9871
  %v9873 = vpop.f32.mrb[0].mxu0
  %9874 = vmatprep.mubr.bf16.mxu0 %v9225
  %9875 = vmatmul.mubr.bf16.gmra.mrb[0].mxu0 %v9228
  %v9876 = vpop.f32.mrb[0].mxu0
  %v9877 = vadd.f32 %v9772, %v9876
  %v9878 = vpop.f32.mrb[0].mxu0
  %v9879 = vpop.f32.mrb[0].mxu0
  %v9880 = vadd.f32 %v9775, %v9879
  %v9881 = vpop.f32.mrb[0].mxu0
  %9882 = vmatprep.mubr.bf16.mxu0 %v9236
  %9883 = vmatmul.mubr.bf16.gmra.mrb[0].mxu0 %v9235
  %v9884 = vpop.f32.mrb[0].mxu0
  %v9885 = vadd.f32 %v9780, %v9884
  %v9886 = vpop.f32.mrb[0].mxu0
  %v9887 = vpop.f32.mrb[0].mxu0
  %v9888 = vadd.f32 %v9783, %v9887
  %v9889 = vpop.f32.mrb[0].mxu0
  %9890 = vmatprep.mubr.bf16.mxu0 %v9242
  %9891 = vmatmul.mubr.bf16.gmra.mrb[0].mxu0 %v9232
  %v9892 = vpop.f32.mrb[0].mxu0
  %v9893 = vadd.f32 %v9788, %v9892
  %v9894 = vpop.f32.mrb[0].mxu0
  %v9895 = vpop.f32.mrb[0].mxu0
  %v9896 = vadd.f32 %v9791, %v9895
  %v9897 = vpop.f32.mrb[0].mxu0
  %9898 = vmatprep.mubr.bf16.mxu0 %v9245
  %9899 = vmatmul.mubr.bf16.gmra.mrb[0].mxu0 %v9248
  %v9900 = vpop.f32.mrb[0].mxu0
  %v9901 = vadd.f32 %v9796, %v9900
  %v9902 = vpop.f32.mrb[0].mxu0
  %v9903 = vpop.f32.mrb[0].mxu0
  %v9904 = vadd.f32 %v9799, %v9903
  %v9905 = vpop.f32.mrb[0].mxu0
  %9906 = vmatprep.mubr.bf16.mxu0 %v9256
  %9907 = vmatmul.mubr.bf16.gmra.mrb[0].mxu0 %v9255
  %v9908 = vpop.f32.mrb[0].mxu0
  %v9909 = vadd.f32 %v9804, %v9908
  %v9910 = vpop.f32.mrb[0].mxu0
  %v9911 = vpop.f32.mrb[0].mxu0
  %v9912 = vadd.f32 %v9807, %v9911
  %v9913 = vpop.f32.mrb[0].mxu0
  %9914 = vmatprep.mubr.bf16.mxu0 %v9262
  %9915 = vmatmul.mubr.bf16.gmra.mrb[0].mxu0 %v9252
  %v9916 = vpop.f32.mrb[0].mxu0
  %v9917 = vadd.f32 %v9812, %v9916
  %v9918 = vpop.f32.mrb[0].mxu0
  %v9919 = vpop.f32.mrb[0].mxu0
  %v9920 = vadd.f32 %v9815, %v9919
  %v9921 = vpop.f32.mrb[0].mxu0
  %9922 = vdwg.mxu0
  %9923 = vmatprep.subr.bf16.mxu0 0
  %9924 = vmatpush1.bf16.msra.mxu0 %v9617
  %9925 = vmatprep.subr.bf16.mxu0 0
  %9926 = vmatpush1.bf16.msra.mxu0 %v9618
  %9927 = vmatprep.subr.bf16.mxu0 0
  %9928 = vmatpush1.bf16.msra.mxu0 %v9619
  %9929 = vmatprep.subr.bf16.mxu0 0
  %9930 = vmatpush1.bf16.msra.mxu0 %v9620
  %9931 = vmatprep.subr.bf16.mxu0 0
  %9932 = vmatpush1.bf16.msra.mxu0 %v9621
  %9933 = vmatprep.subr.bf16.mxu0 0
  %9934 = vmatpush1.bf16.msra.mxu0 %v9622
  %9935 = vmatprep.subr.bf16.mxu0 0
  %9936 = vmatpush1.bf16.msra.mxu0 %v9623
  %9937 = vmatprep.subr.bf16.mxu0 0
  %9938 = vmatpush1.bf16.msra.mxu0 %v9624
  %9939 = vmatprep.subr.bf16.mxu0 0
  %9940 = vmatpush1.bf16.msra.mxu0 %v9625
  %9941 = vmatprep.subr.bf16.mxu0 0
  %9942 = vmatpush1.bf16.msra.mxu0 %v9626
  %9943 = vmatprep.subr.bf16.mxu0 0
  %9944 = vmatpush1.bf16.msra.mxu0 %v9627
  %9945 = vmatprep.subr.bf16.mxu0 0
  %9946 = vmatpush1.bf16.msra.mxu0 %v9628
  %9947 = vmatprep.subr.bf16.mxu0 0
  %9948 = vmatpush1.bf16.msra.mxu0 %v9629
  %9949 = vmatprep.subr.bf16.mxu0 0
  %9950 = vmatpush1.bf16.msra.mxu0 %v9630
  %9951 = vmatprep.subr.bf16.mxu0 0
  %9952 = vmatpush1.bf16.msra.mxu0 %v9631
  %9953 = vmatprep.subr.bf16.mxu0 0
  %9954 = vmatpush1.bf16.msra.mxu0 %v9632
  %9955 = vmatprep.mubr.bf16.mxu0 %v9210
  %9956 = vmatmul.mubr.bf16.gmra.mrb[0].mxu0 %v9209
  %v9957 = vpop.f32.mrb[0].mxu0
  %v9958 = vadd.f32 %v9853, %v9957
  %v9959 = vpop.f32.mrb[0].mxu0
  %v9960 = vpop.f32.mrb[0].mxu0
  %v9961 = vadd.f32 %v9856, %v9960
  %v9962 = vpop.f32.mrb[0].mxu0
  %9963 = vmatprep.mubr.bf16.mxu0 %v9218
  %9964 = vmatmul.mubr.bf16.gmra.mrb[0].mxu0 %v9217
  %v9965 = vpop.f32.mrb[0].mxu0
  %v9966 = vadd.f32 %v9861, %v9965
  %v9967 = vpop.f32.mrb[0].mxu0
  %v9968 = vpop.f32.mrb[0].mxu0
  %v9969 = vadd.f32 %v9864, %v9968
  %v9970 = vpop.f32.mrb[0].mxu0
  %9971 = vmatprep.mubr.bf16.mxu0 %v9224
  %9972 = vmatmul.mubr.bf16.gmra.mrb[0].mxu0 %v9223
  %v9973 = vpop.f32.mrb[0].mxu0
  %v9974 = vadd.f32 %v9869, %v9973
  %v9975 = vpop.f32.mrb[0].mxu0
  %v9976 = vpop.f32.mrb[0].mxu0
  %v9977 = vadd.f32 %v9872, %v9976
  %v9978 = vpop.f32.mrb[0].mxu0
  %9979 = vmatprep.mubr.bf16.mxu0 %v9230
  %9980 = vmatmul.mubr.bf16.gmra.mrb[0].mxu0 %v9229
  %v9981 = vpop.f32.mrb[0].mxu0
  %v9982 = vadd.f32 %v9877, %v9981
  %v9983 = vpop.f32.mrb[0].mxu0
  %v9984 = vpop.f32.mrb[0].mxu0
  %v9985 = vadd.f32 %v9880, %v9984
  %v9986 = vpop.f32.mrb[0].mxu0
  %9987 = vmatprep.mubr.bf16.mxu0 %v9238
  %9988 = vmatmul.mubr.bf16.gmra.mrb[0].mxu0 %v9237
  %v9989 = vpop.f32.mrb[0].mxu0
  %v9990 = vadd.f32 %v9885, %v9989
  %v9991 = vpop.f32.mrb[0].mxu0
  %v9992 = vpop.f32.mrb[0].mxu0
  %v9993 = vadd.f32 %v9888, %v9992
  %v9994 = vpop.f32.mrb[0].mxu0
  %9995 = vmatprep.mubr.bf16.mxu0 %v9244
  %9996 = vmatmul.mubr.bf16.gmra.mrb[0].mxu0 %v9243
  %v9997 = vpop.f32.mrb[0].mxu0
  %v9998 = vadd.f32 %v9893, %v9997
  %v9999 = vpop.f32.mrb[0].mxu0
  %v10000 = vpop.f32.mrb[0].mxu0
  %v10001 = vadd.f32 %v9896, %v10000
  %v10002 = vpop.f32.mrb[0].mxu0
  %10003 = vmatprep.mubr.bf16.mxu0 %v9250
  %10004 = vmatmul.mubr.bf16.gmra.mrb[0].mxu0 %v9249
  %v10005 = vpop.f32.mrb[0].mxu0
  %v10006 = vadd.f32 %v9901, %v10005
  %v10007 = vpop.f32.mrb[0].mxu0
  %v10008 = vpop.f32.mrb[0].mxu0
  %v10009 = vadd.f32 %v9904, %v10008
  %v10010 = vpop.f32.mrb[0].mxu0
  %10011 = vmatprep.mubr.bf16.mxu0 %v9258
  %10012 = vmatmul.mubr.bf16.gmra.mrb[0].mxu0 %v9257
  %v10013 = vpop.f32.mrb[0].mxu0
  %v10014 = vadd.f32 %v9909, %v10013
  %v10015 = vpop.f32.mrb[0].mxu0
  %v10016 = vpop.f32.mrb[0].mxu0
  %v10017 = vadd.f32 %v9912, %v10016
  %v10018 = vpop.f32.mrb[0].mxu0
  %10019 = vmatprep.mubr.bf16.mxu0 %v9264
  %10020 = vmatmul.mubr.bf16.gmra.mrb[0].mxu0 %v9263
  %v10021 = vpop.f32.mrb[0].mxu0
  %v10022 = vadd.f32 %v9917, %v10021
  %v10023 = vpop.f32.mrb[0].mxu0
  %v10024 = vpop.f32.mrb[0].mxu0
  %v10025 = vadd.f32 %v9920, %v10024
  %v10026 = vpop.f32.mrb[0].mxu0
  %10027 = vdwg.mxu0
  %10028 = vmatprep.subr.bf16.mxu0 0
  %10029 = vmatpush1.bf16.msra.mxu0 %v9633
  %10030 = vmatprep.subr.bf16.mxu0 0
  %10031 = vmatpush1.bf16.msra.mxu0 %v9634
  %10032 = vmatprep.subr.bf16.mxu0 0
  %10033 = vmatpush1.bf16.msra.mxu0 %v9635
  %10034 = vmatprep.subr.bf16.mxu0 0
  %10035 = vmatpush1.bf16.msra.mxu0 %v9636
  %10036 = vmatprep.subr.bf16.mxu0 0
  %10037 = vmatpush1.bf16.msra.mxu0 %v9637
  %10038 = vmatprep.subr.bf16.mxu0 0
  %10039 = vmatpush1.bf16.msra.mxu0 %v9638
  %10040 = vmatprep.subr.bf16.mxu0 0
  %10041 = vmatpush1.bf16.msra.mxu0 %v9639
  %10042 = vmatprep.subr.bf16.mxu0 0
  %10043 = vmatpush1.bf16.msra.mxu0 %v9640
  %10044 = vmatprep.subr.bf16.mxu0 0
  %10045 = vmatpush1.bf16.msra.mxu0 %v9641
  %10046 = vmatprep.subr.bf16.mxu0 0
  %10047 = vmatpush1.bf16.msra.mxu0 %v9642
  %10048 = vmatprep.subr.bf16.mxu0 0
  %10049 = vmatpush1.bf16.msra.mxu0 %v9643
  %10050 = vmatprep.subr.bf16.mxu0 0
  %10051 = vmatpush1.bf16.msra.mxu0 %v9644
  %10052 = vmatprep.subr.bf16.mxu0 0
  %10053 = vmatpush1.bf16.msra.mxu0 %v9645
  %10054 = vmatprep.subr.bf16.mxu0 0
  %10055 = vmatpush1.bf16.msra.mxu0 %v9646
  %10056 = vmatprep.subr.bf16.mxu0 0
  %10057 = vmatpush1.bf16.msra.mxu0 %v9647
  %10058 = vmatprep.subr.bf16.mxu0 0
  %10059 = vmatpush1.bf16.msra.mxu0 %v9648
  %10060 = vmatprep.mubr.bf16.mxu0 %v9212
  %10061 = vmatmul.mubr.bf16.gmra.mrb[0].mxu0 %v9211
  %v10062 = vpop.f32.mrb[0].mxu0
  %v10063 = vadd.f32 %v9958, %v10062
  %v10064 = vpop.f32.mrb[0].mxu0
  %v10065 = vpop.f32.mrb[0].mxu0
  %v10066 = vadd.f32 %v9961, %v10065
  %v10067 = vpop.f32.mrb[0].mxu0
  %10068 = vmatprep.mubr.bf16.mxu0 %v9220
  %10069 = vmatmul.mubr.bf16.gmra.mrb[0].mxu0 %v9219
  %v10070 = vpop.f32.mrb[0].mxu0
  %v10071 = vadd.f32 %v9966, %v10070
  %v10072 = vpop.f32.mrb[0].mxu0
  %v10073 = vpop.f32.mrb[0].mxu0
  %v10074 = vadd.f32 %v9969, %v10073
  %v10075 = vpop.f32.mrb[0].mxu0
  %10076 = vmatprep.mubr.bf16.mxu0 %v9226
  %10077 = vmatmul.mubr.bf16.gmra.mrb[0].mxu0 %v9225
  %v10078 = vpop.f32.mrb[0].mxu0
  %v10079 = vadd.f32 %v9974, %v10078
  %v10080 = vpop.f32.mrb[0].mxu0
  %v10081 = vpop.f32.mrb[0].mxu0
  %v10082 = vadd.f32 %v9977, %v10081
  %v10083 = vpop.f32.mrb[0].mxu0
  %10084 = vmatprep.mubr.bf16.mxu0 %v9232
  %10085 = vmatmul.mubr.bf16.gmra.mrb[0].mxu0 %v9231
  %v10086 = vpop.f32.mrb[0].mxu0
  %v10087 = vadd.f32 %v9982, %v10086
  %v10088 = vpop.f32.mrb[0].mxu0
  %v10089 = vpop.f32.mrb[0].mxu0
  %v10090 = vadd.f32 %v9985, %v10089
  %v10091 = vpop.f32.mrb[0].mxu0
  %10092 = vmatprep.mubr.bf16.mxu0 %v9240
  %10093 = vmatmul.mubr.bf16.gmra.mrb[0].mxu0 %v9239
  %v10094 = vpop.f32.mrb[0].mxu0
  %v10095 = vadd.f32 %v9990, %v10094
  %v10096 = vpop.f32.mrb[0].mxu0
  %v10097 = vpop.f32.mrb[0].mxu0
  %v10098 = vadd.f32 %v9993, %v10097
  %v10099 = vpop.f32.mrb[0].mxu0
  %10100 = vmatprep.mubr.bf16.mxu0 %v9246
  %10101 = vmatmul.mubr.bf16.gmra.mrb[0].mxu0 %v9245
  %v10102 = vpop.f32.mrb[0].mxu0
  %v10103 = vadd.f32 %v9998, %v10102
  %v10104 = vpop.f32.mrb[0].mxu0
  %v10105 = vpop.f32.mrb[0].mxu0
  %v10106 = vadd.f32 %v10001, %v10105
  %v10107 = vpop.f32.mrb[0].mxu0
  %10108 = vmatprep.mubr.bf16.mxu0 %v9252
  %10109 = vmatmul.mubr.bf16.gmra.mrb[0].mxu0 %v9251
  %v10110 = vpop.f32.mrb[0].mxu0
  %v10111 = vadd.f32 %v10006, %v10110
  %v10112 = vpop.f32.mrb[0].mxu0
  %v10113 = vpop.f32.mrb[0].mxu0
  %v10114 = vadd.f32 %v10009, %v10113
  %v10115 = vpop.f32.mrb[0].mxu0
  %10116 = vmatprep.mubr.bf16.mxu0 %v9260
  %10117 = vmatmul.mubr.bf16.gmra.mrb[0].mxu0 %v9259
  %v10118 = vpop.f32.mrb[0].mxu0
  %v10119 = vadd.f32 %v10014, %v10118
  %v10120 = vpop.f32.mrb[0].mxu0
  %v10121 = vpop.f32.mrb[0].mxu0
  %v10122 = vadd.f32 %v10017, %v10121
  %v10123 = vpop.f32.mrb[0].mxu0
  %10124 = vmatprep.mubr.bf16.mxu0 %v9266
  %10125 = vmatmul.mubr.bf16.gmra.mrb[0].mxu0 %v9265
  %v10126 = vpop.f32.mrb[0].mxu0
  %v10127 = vadd.f32 %v10022, %v10126
  %v10128 = vpop.f32.mrb[0].mxu0
  %v10129 = vpop.f32.mrb[0].mxu0
  %v10130 = vadd.f32 %v10025, %v10129
  %v10131 = vpop.f32.mrb[0].mxu0
  %10132 = vdwg.mxu0
  %v10133 = vld [vmem:[%s6] sm:$0x1]
  %v10134 = vld [vmem:[%s6 + $0x1] sm:$0x1]
  %v10135 = vld [vmem:[%s6 + $0x2] sm:$0x1]
  %v10139 = vlaneseq
  %v10140 = vshrl.u32 %v10139, 7
  %v10141 = vsub.s32 0, %v10140
  %v10142 = vrot.slane %v10133, %v10141
  %v10143 = vlaneseq
  %v10144 = vshrl.u32 %v10143, 7
  %v10145 = vsub.s32 0, %v10144
  %v10146 = vrot.slane %v10134, %v10145
  %v10147 = vlaneseq
  %v10148 = vshrl.u32 %v10147, 7
  %v10149 = vsub.s32 0, %v10148
  %v10150 = vrot.slane %v10135, %v10149
  %v10154 = vadd.f32 %v10063, %v10142
  %v10155 = vadd.f32 %v10066, %v10146
  %v10156 = vadd.f32 %v10071, %v10150
  %v10157 = vadd.f32 %v10074, %v10142
  %v10158 = vadd.f32 %v10079, %v10146
  %v10159 = vadd.f32 %v10082, %v10150
  %v10160 = vadd.f32 %v10087, %v10142
  %v10161 = vadd.f32 %v10090, %v10146
  %v10162 = vadd.f32 %v10095, %v10150
  %v10163 = vadd.f32 %v10098, %v10142
  %v10164 = vadd.f32 %v10103, %v10146
  %v10165 = vadd.f32 %v10106, %v10150
  %v10166 = vadd.f32 %v10111, %v10142
  %v10167 = vadd.f32 %v10114, %v10146
  %v10168 = vadd.f32 %v10119, %v10150
  %v10169 = vadd.f32 %v10122, %v10142
  %v10170 = vadd.f32 %v10127, %v10146
  %v10171 = vadd.f32 %v10130, %v10150
  %v10172 = vmax.f32 %v10154, 0.0
  %v10173 = vmax.f32 %v10155, 0.0
  %v10174 = vmax.f32 %v10156, 0.0
  %v10175 = vmax.f32 %v10157, 0.0
  %v10176 = vmax.f32 %v10158, 0.0
  %v10177 = vmax.f32 %v10159, 0.0
  %v10178 = vmax.f32 %v10160, 0.0
  %v10179 = vmax.f32 %v10161, 0.0
  %v10180 = vmax.f32 %v10162, 0.0
  %v10181 = vmax.f32 %v10163, 0.0
  %v10182 = vmax.f32 %v10164, 0.0
  %v10183 = vmax.f32 %v10165, 0.0
  %v10184 = vmax.f32 %v10166, 0.0
  %v10185 = vmax.f32 %v10167, 0.0
  %v10186 = vmax.f32 %v10168, 0.0
  %v10187 = vmax.f32 %v10169, 0.0
  %v10188 = vmax.f32 %v10170, 0.0
  %v10189 = vmax.f32 %v10171, 0.0
  %v10190 = vpack.c.bf16 %v10172, %v10172
  %v10191 = vpack.c.bf16 %v10173, %v10173
  %v10192 = vpack.c.bf16 %v10174, %v10174
  %v10193 = vpack.c.bf16 %v10175, %v10175
  %v10194 = vpack.c.bf16 %v10176, %v10176
  %v10195 = vpack.c.bf16 %v10177, %v10177
  %v10196 = vpack.c.bf16 %v10178, %v10178
  %v10197 = vpack.c.bf16 %v10179, %v10179
  %v10198 = vpack.c.bf16 %v10180, %v10180
  %v10199 = vpack.c.bf16 %v10181, %v10181
  %v10200 = vpack.c.bf16 %v10182, %v10182
  %v10201 = vpack.c.bf16 %v10183, %v10183
  %v10202 = vpack.c.bf16 %v10184, %v10184
  %v10203 = vpack.c.bf16 %v10185, %v10185
  %v10204 = vpack.c.bf16 %v10186, %v10186
  %v10205 = vpack.c.bf16 %v10187, %v10187
  %v10206 = vpack.c.bf16 %v10188, %v10188
  %v10207 = vpack.c.bf16 %v10189, %v10189
  %v10226 = vunpack.c.l.b16 %v10190
  %v10227 = vunpack.c.l.b16 %v10191
  %v10228 = vunpack.c.l.b16 %v10193
  %v10229 = vunpack.c.l.b16 %v10194
  %v10230 = vunpack.c.l.b16 %v10196
  %v10231 = vunpack.c.l.b16 %v10197
  %v10232 = vunpack.c.l.b16 %v10199
  %v10233 = vunpack.c.l.b16 %v10200
  %v10234 = vunpack.c.l.b16 %v10192
  %v10235 = vunpack.c.l.b16 %v10195
  %v10236 = vunpack.c.l.b16 %v10198
  %v10237 = vunpack.c.l.b16 %v10201
  %v10238 = vunpack.c.l.b16 %v10202
  %v10239 = vunpack.c.l.b16 %v10203
  %v10240 = vunpack.c.l.b16 %v10205
  %v10241 = vunpack.c.l.b16 %v10206
  %v10242 = vunpack.c.l.b16 %v10204
  %v10243 = vunpack.c.l.b16 %v10207
  %v10244 = vld [vmem:[%s7] sm:$0xf]
  %v10245 = vld [vmem:[%s7 + $0x4] sm:$0xf]
  %v10246 = vld [vmem:[%s7 + $0x8] sm:$0xf]
  %v10247 = vld [vmem:[%s7 + $0xc] sm:$0xf]
  %v10248 = vld [vmem:[%s7 + $0x10] sm:$0xf]
  %v10249 = vld [vmem:[%s7 + $0x14] sm:$0xf]
  %v10250 = vld [vmem:[%s7 + $0x18] sm:$0xf]
  %v10251 = vld [vmem:[%s7 + $0x1c] sm:$0xf]
  %v10252 = vld [vmem:[%s7 + $0x20] sm:$0xf]
  %v10253 = vld [vmem:[%s7 + $0x24] sm:$0xf]
  %v10254 = vld [vmem:[%s7 + $0x28] sm:$0xf]
  %v10255 = vld [vmem:[%s7 + $0x2c] sm:$0xf]
  %v10256 = vld [vmem:[%s7 + $0x30] sm:$0xf]
  %v10257 = vld [vmem:[%s7 + $0x34] sm:$0xf]
  %v10258 = vld [vmem:[%s7 + $0x38] sm:$0xf]
  %v10259 = vld [vmem:[%s7 + $0x3c] sm:$0xf]
  %v10260 = vld [vmem:[%s7 + $0x40] sm:$0xf]
  %v10261 = vld [vmem:[%s7 + $0x44] sm:$0xf]
  %v10262 = vld [vmem:[%s7 + $0x48] sm:$0xf]
  %v10263 = vld [vmem:[%s7 + $0x4c] sm:$0xf]
  %v10264 = vld [vmem:[%s7 + $0x50] sm:$0xf]
  %v10265 = vld [vmem:[%s7 + $0x54] sm:$0xf]
  %v10266 = vld [vmem:[%s7 + $0x58] sm:$0xf]
  %v10267 = vld [vmem:[%s7 + $0x5c] sm:$0xf]
  %v10268 = vld [vmem:[%s7 + $0x60] sm:$0xf]
  %v10269 = vld [vmem:[%s7 + $0x64] sm:$0xf]
  %v10270 = vld [vmem:[%s7 + $0x68] sm:$0xf]
  %v10271 = vld [vmem:[%s7 + $0x6c] sm:$0xf]
  %v10272 = vld [vmem:[%s7 + $0x70] sm:$0xf]
  %v10273 = vld [vmem:[%s7 + $0x74] sm:$0xf]
  %v10274 = vld [vmem:[%s7 + $0x78] sm:$0xf]
  %v10275 = vld [vmem:[%s7 + $0x7c] sm:$0xf]
  %v10276 = vld [vmem:[%s7 + $0x80] sm:$0xf]
  %v10277 = vld [vmem:[%s7 + $0x84] sm:$0xf]
  %v10278 = vld [vmem:[%s7 + $0x88] sm:$0xf]
  %v10279 = vld [vmem:[%s7 + $0x8c] sm:$0xf]
  %v10280 = vld [vmem:[%s7 + $0x90] sm:$0xf]
  %v10281 = vld [vmem:[%s7 + $0x94] sm:$0xf]
  %v10282 = vld [vmem:[%s7 + $0x98] sm:$0xf]
  %v10283 = vld [vmem:[%s7 + $0x9c] sm:$0xf]
  %v10284 = vld [vmem:[%s7 + $0xa0] sm:$0xf]
  %v10285 = vld [vmem:[%s7 + $0xa4] sm:$0xf]
  %v10286 = vld [vmem:[%s7 + $0xa8] sm:$0xf]
  %v10287 = vld [vmem:[%s7 + $0xac] sm:$0xf]
  %v10288 = vld [vmem:[%s7 + $0xb0] sm:$0xf]
  %v10289 = vld [vmem:[%s7 + $0xb4] sm:$0xf]
  %v10290 = vld [vmem:[%s7 + $0xb8] sm:$0xf]
  %v10291 = vld [vmem:[%s7 + $0xbc] sm:$0xf]
  %v10292 = vld [vmem:[%s7 + $0xc0] sm:$0xf]
  %v10293 = vld [vmem:[%s7 + $0xc4] sm:$0xf]
  %v10294 = vld [vmem:[%s7 + $0xc8] sm:$0xf]
  %v10295 = vld [vmem:[%s7 + $0xcc] sm:$0xf]
  %v10296 = vld [vmem:[%s7 + $0xd0] sm:$0xf]
  %v10297 = vld [vmem:[%s7 + $0xd4] sm:$0xf]
  %v10298 = vld [vmem:[%s7 + $0xd8] sm:$0xf]
  %v10299 = vld [vmem:[%s7 + $0xdc] sm:$0xf]
  %v10300 = vld [vmem:[%s7 + $0xe0] sm:$0xf]
  %v10301 = vld [vmem:[%s7 + $0xe4] sm:$0xf]
  %v10302 = vld [vmem:[%s7 + $0xe8] sm:$0xf]
  %v10303 = vld [vmem:[%s7 + $0xec] sm:$0xf]
  %v10304 = vld [vmem:[%s7 + $0xf0] sm:$0xf]
  %v10305 = vld [vmem:[%s7 + $0xf4] sm:$0xf]
  %v10306 = vld [vmem:[%s7 + $0xf8] sm:$0xf]
  %v10307 = vld [vmem:[%s7 + $0xfc] sm:$0xf]
  %v10308 = vld [vmem:[%s7 + $0x100] sm:$0xf]
  %v10309 = vld [vmem:[%s7 + $0x104] sm:$0xf]
  %v10310 = vld [vmem:[%s7 + $0x108] sm:$0xf]
  %v10311 = vld [vmem:[%s7 + $0x10c] sm:$0xf]
  %v10312 = vld [vmem:[%s7 + $0x110] sm:$0xf]
  %v10313 = vld [vmem:[%s7 + $0x114] sm:$0xf]
  %v10314 = vld [vmem:[%s7 + $0x118] sm:$0xf]
  %v10315 = vld [vmem:[%s7 + $0x11c] sm:$0xf]
  %v10316 = vld [vmem:[%s7 + $0x120] sm:$0xf]
  %v10317 = vld [vmem:[%s7 + $0x124] sm:$0xf]
  %v10318 = vld [vmem:[%s7 + $0x128] sm:$0xf]
  %v10319 = vld [vmem:[%s7 + $0x12c] sm:$0xf]
  %v10320 = vld [vmem:[%s7 + $0x130] sm:$0xf]
  %v10321 = vld [vmem:[%s7 + $0x134] sm:$0xf]
  %v10322 = vld [vmem:[%s7 + $0x138] sm:$0xf]
  %v10323 = vld [vmem:[%s7 + $0x13c] sm:$0xf]
  %v10324 = vld [vmem:[%s7 + $0x140] sm:$0xf]
  %v10325 = vld [vmem:[%s7 + $0x144] sm:$0xf]
  %v10326 = vld [vmem:[%s7 + $0x148] sm:$0xf]
  %v10327 = vld [vmem:[%s7 + $0x14c] sm:$0xf]
  %v10328 = vld [vmem:[%s7 + $0x150] sm:$0xf]
  %v10329 = vld [vmem:[%s7 + $0x154] sm:$0xf]
  %v10330 = vld [vmem:[%s7 + $0x158] sm:$0xf]
  %v10331 = vld [vmem:[%s7 + $0x15c] sm:$0xf]
  %v10332 = vld [vmem:[%s7 + $0x160] sm:$0xf]
  %v10333 = vld [vmem:[%s7 + $0x164] sm:$0xf]
  %v10334 = vld [vmem:[%s7 + $0x168] sm:$0xf]
  %v10335 = vld [vmem:[%s7 + $0x16c] sm:$0xf]
  %v10336 = vld [vmem:[%s7 + $0x170] sm:$0xf]
  %v10337 = vld [vmem:[%s7 + $0x174] sm:$0xf]
  %v10338 = vld [vmem:[%s7 + $0x178] sm:$0xf]
  %v10339 = vld [vmem:[%s7 + $0x17c] sm:$0xf]
  %v10340 = vld [vmem:[%s7 + $0x180] sm:$0xf]
  %v10341 = vld [vmem:[%s7 + $0x184] sm:$0xf]
  %v10342 = vld [vmem:[%s7 + $0x188] sm:$0xf]
  %v10343 = vld [vmem:[%s7 + $0x18c] sm:$0xf]
  %v10344 = vld [vmem:[%s7 + $0x190] sm:$0xf]
  %v10345 = vld [vmem:[%s7 + $0x194] sm:$0xf]
  %v10346 = vld [vmem:[%s7 + $0x198] sm:$0xf]
  %v10347 = vld [vmem:[%s7 + $0x19c] sm:$0xf]
  %v10348 = vld [vmem:[%s7 + $0x1a0] sm:$0xf]
  %v10349 = vld [vmem:[%s7 + $0x1a4] sm:$0xf]
  %v10350 = vld [vmem:[%s7 + $0x1a8] sm:$0xf]
  %v10351 = vld [vmem:[%s7 + $0x1ac] sm:$0xf]
  %v10352 = vld [vmem:[%s7 + $0x1b0] sm:$0xf]
  %v10353 = vld [vmem:[%s7 + $0x1b4] sm:$0xf]
  %v10354 = vld [vmem:[%s7 + $0x1b8] sm:$0xf]
  %v10355 = vld [vmem:[%s7 + $0x1bc] sm:$0xf]
  %v10356 = vld [vmem:[%s7 + $0x1c0] sm:$0xf]
  %v10357 = vld [vmem:[%s7 + $0x1c4] sm:$0xf]
  %v10358 = vld [vmem:[%s7 + $0x1c8] sm:$0xf]
  %v10359 = vld [vmem:[%s7 + $0x1cc] sm:$0xf]
  %v10360 = vld [vmem:[%s7 + $0x1d0] sm:$0xf]
  %v10361 = vld [vmem:[%s7 + $0x1d4] sm:$0xf]
  %v10362 = vld [vmem:[%s7 + $0x1d8] sm:$0xf]
  %v10363 = vld [vmem:[%s7 + $0x1dc] sm:$0xf]
  %v10364 = vld [vmem:[%s7 + $0x1e0] sm:$0xf]
  %v10365 = vld [vmem:[%s7 + $0x1e4] sm:$0xf]
  %v10366 = vld [vmem:[%s7 + $0x1e8] sm:$0xf]
  %v10367 = vld [vmem:[%s7 + $0x1ec] sm:$0xf]
  %v10368 = vld [vmem:[%s7 + $0x1f0] sm:$0xf]
  %v10369 = vld [vmem:[%s7 + $0x1f4] sm:$0xf]
  %v10370 = vld [vmem:[%s7 + $0x1f8] sm:$0xf]
  %v10371 = vld [vmem:[%s7 + $0x1fc] sm:$0xf]
  %v10372 = vpack.c.b16 %v10227, %v10226
  %v10373 = vpack.c.b16 %v10234, %v10227
  %v10374 = vpack.c.b16 %v10229, %v10228
  %v10375 = vpack.c.b16 %v10235, %v10229
  %v10376 = vpack.c.b16 %v10231, %v10230
  %v10377 = vpack.c.b16 %v10236, %v10231
  %v10378 = vpack.c.b16 %v10233, %v10232
  %v10379 = vpack.c.b16 %v10237, %v10233
  %v10380 = vpack.c.b16 %v10239, %v10238
  %v10381 = vpack.c.b16 %v10242, %v10239
  %v10382 = vpack.c.b16 %v10241, %v10240
  %v10383 = vpack.c.b16 %v10243, %v10241
  %v10524 = vunpack.c.l.b16 %v10244
  %v10525 = vunpack.c.l.b16 %v10245
  %v10526 = vunpack.c.l.b16 %v10246
  %v10527 = vunpack.c.l.b16 %v10247
  %v10528 = vunpack.c.l.b16 %v10248
  %v10529 = vunpack.c.l.b16 %v10249
  %v10530 = vunpack.c.l.b16 %v10250
  %v10531 = vunpack.c.l.b16 %v10251
  %v10532 = vunpack.c.l.b16 %v10252
  %v10533 = vunpack.c.l.b16 %v10253
  %v10534 = vunpack.c.l.b16 %v10254
  %v10535 = vunpack.c.l.b16 %v10255
  %v10536 = vunpack.c.l.b16 %v10256
  %v10537 = vunpack.c.l.b16 %v10257
  %v10538 = vunpack.c.l.b16 %v10258
  %v10539 = vunpack.c.l.b16 %v10259
  %v10540 = vunpack.c.l.b16 %v10260
  %v10541 = vunpack.c.l.b16 %v10261
  %v10542 = vunpack.c.l.b16 %v10262
  %v10543 = vunpack.c.l.b16 %v10263
  %v10544 = vunpack.c.l.b16 %v10264
  %v10545 = vunpack.c.l.b16 %v10265
  %v10546 = vunpack.c.l.b16 %v10266
  %v10547 = vunpack.c.l.b16 %v10267
  %v10548 = vunpack.c.l.b16 %v10268
  %v10549 = vunpack.c.l.b16 %v10269
  %v10550 = vunpack.c.l.b16 %v10270
  %v10551 = vunpack.c.l.b16 %v10271
  %v10552 = vunpack.c.l.b16 %v10272
  %v10553 = vunpack.c.l.b16 %v10273
  %v10554 = vunpack.c.l.b16 %v10274
  %v10555 = vunpack.c.l.b16 %v10275
  %v10556 = vunpack.c.l.b16 %v10276
  %v10557 = vunpack.c.l.b16 %v10277
  %v10558 = vunpack.c.l.b16 %v10278
  %v10559 = vunpack.c.l.b16 %v10279
  %v10560 = vunpack.c.l.b16 %v10280
  %v10561 = vunpack.c.l.b16 %v10281
  %v10562 = vunpack.c.l.b16 %v10282
  %v10563 = vunpack.c.l.b16 %v10283
  %v10564 = vunpack.c.l.b16 %v10284
  %v10565 = vunpack.c.l.b16 %v10285
  %v10566 = vunpack.c.l.b16 %v10286
  %v10567 = vunpack.c.l.b16 %v10287
  %v10568 = vunpack.c.l.b16 %v10288
  %v10569 = vunpack.c.l.b16 %v10289
  %v10570 = vunpack.c.l.b16 %v10290
  %v10571 = vunpack.c.l.b16 %v10291
  %v10572 = vunpack.c.l.b16 %v10292
  %v10573 = vunpack.c.l.b16 %v10293
  %v10574 = vunpack.c.l.b16 %v10294
  %v10575 = vunpack.c.l.b16 %v10295
  %v10576 = vunpack.c.l.b16 %v10296
  %v10577 = vunpack.c.l.b16 %v10297
  %v10578 = vunpack.c.l.b16 %v10298
  %v10579 = vunpack.c.l.b16 %v10299
  %v10580 = vunpack.c.l.b16 %v10300
  %v10581 = vunpack.c.l.b16 %v10301
  %v10582 = vunpack.c.l.b16 %v10302
  %v10583 = vunpack.c.l.b16 %v10303
  %v10584 = vunpack.c.l.b16 %v10304
  %v10585 = vunpack.c.l.b16 %v10305
  %v10586 = vunpack.c.l.b16 %v10306
  %v10587 = vunpack.c.l.b16 %v10307
  %v10588 = vunpack.c.l.b16 %v10308
  %v10589 = vunpack.c.l.b16 %v10309
  %v10590 = vunpack.c.l.b16 %v10310
  %v10591 = vunpack.c.l.b16 %v10311
  %v10592 = vunpack.c.l.b16 %v10312
  %v10593 = vunpack.c.l.b16 %v10313
  %v10594 = vunpack.c.l.b16 %v10314
  %v10595 = vunpack.c.l.b16 %v10315
  %v10596 = vunpack.c.l.b16 %v10316
  %v10597 = vunpack.c.l.b16 %v10317
  %v10598 = vunpack.c.l.b16 %v10318
  %v10599 = vunpack.c.l.b16 %v10319
  %v10600 = vunpack.c.l.b16 %v10320
  %v10601 = vunpack.c.l.b16 %v10321
  %v10602 = vunpack.c.l.b16 %v10322
  %v10603 = vunpack.c.l.b16 %v10323
  %v10604 = vunpack.c.l.b16 %v10324
  %v10605 = vunpack.c.l.b16 %v10325
  %v10606 = vunpack.c.l.b16 %v10326
  %v10607 = vunpack.c.l.b16 %v10327
  %v10608 = vunpack.c.l.b16 %v10328
  %v10609 = vunpack.c.l.b16 %v10329
  %v10610 = vunpack.c.l.b16 %v10330
  %v10611 = vunpack.c.l.b16 %v10331
  %v10612 = vunpack.c.l.b16 %v10332
  %v10613 = vunpack.c.l.b16 %v10333
  %v10614 = vunpack.c.l.b16 %v10334
  %v10615 = vunpack.c.l.b16 %v10335
  %v10616 = vunpack.c.l.b16 %v10336
  %v10617 = vunpack.c.l.b16 %v10337
  %v10618 = vunpack.c.l.b16 %v10338
  %v10619 = vunpack.c.l.b16 %v10339
  %v10620 = vunpack.c.l.b16 %v10340
  %v10621 = vunpack.c.l.b16 %v10341
  %v10622 = vunpack.c.l.b16 %v10342
  %v10623 = vunpack.c.l.b16 %v10343
  %v10624 = vunpack.c.l.b16 %v10344
  %v10625 = vunpack.c.l.b16 %v10345
  %v10626 = vunpack.c.l.b16 %v10346
  %v10627 = vunpack.c.l.b16 %v10347
  %v10628 = vunpack.c.l.b16 %v10348
  %v10629 = vunpack.c.l.b16 %v10349
  %v10630 = vunpack.c.l.b16 %v10350
  %v10631 = vunpack.c.l.b16 %v10351
  %v10632 = vunpack.c.l.b16 %v10352
  %v10633 = vunpack.c.l.b16 %v10353
  %v10634 = vunpack.c.l.b16 %v10354
  %v10635 = vunpack.c.l.b16 %v10355
  %v10636 = vunpack.c.l.b16 %v10356
  %v10637 = vunpack.c.l.b16 %v10357
  %v10638 = vunpack.c.l.b16 %v10358
  %v10639 = vunpack.c.l.b16 %v10359
  %v10640 = vunpack.c.l.b16 %v10360
  %v10641 = vunpack.c.l.b16 %v10361
  %v10642 = vunpack.c.l.b16 %v10362
  %v10643 = vunpack.c.l.b16 %v10363
  %v10644 = vunpack.c.l.b16 %v10364
  %v10645 = vunpack.c.l.b16 %v10365
  %v10646 = vunpack.c.l.b16 %v10366
  %v10647 = vunpack.c.l.b16 %v10367
  %v10648 = vunpack.c.l.b16 %v10368
  %v10649 = vunpack.c.l.b16 %v10369
  %v10650 = vunpack.c.l.b16 %v10370
  %v10651 = vunpack.c.l.b16 %v10371
  %v10652 = vpack.c.b16 %v10525, %v10524
  %v10653 = vpack.c.b16 %v10527, %v10526
  %v10654 = vpack.c.b16 %v10529, %v10528
  %v10655 = vpack.c.b16 %v10531, %v10530
  %v10656 = vpack.c.b16 %v10533, %v10532
  %v10657 = vpack.c.b16 %v10535, %v10534
  %v10658 = vpack.c.b16 %v10537, %v10536
  %v10659 = vpack.c.b16 %v10539, %v10538
  %v10660 = vpack.c.b16 %v10541, %v10540
  %v10661 = vpack.c.b16 %v10543, %v10542
  %v10662 = vpack.c.b16 %v10545, %v10544
  %v10663 = vpack.c.b16 %v10547, %v10546
  %v10664 = vpack.c.b16 %v10549, %v10548
  %v10665 = vpack.c.b16 %v10551, %v10550
  %v10666 = vpack.c.b16 %v10553, %v10552
  %v10667 = vpack.c.b16 %v10555, %v10554
  %v10668 = vpack.c.b16 %v10557, %v10556
  %v10669 = vpack.c.b16 %v10559, %v10558
  %v10670 = vpack.c.b16 %v10561, %v10560
  %v10671 = vpack.c.b16 %v10563, %v10562
  %v10672 = vpack.c.b16 %v10565, %v10564
  %v10673 = vpack.c.b16 %v10567, %v10566
  %v10674 = vpack.c.b16 %v10569, %v10568
  %v10675 = vpack.c.b16 %v10571, %v10570
  %v10676 = vpack.c.b16 %v10573, %v10572
  %v10677 = vpack.c.b16 %v10575, %v10574
  %v10678 = vpack.c.b16 %v10577, %v10576
  %v10679 = vpack.c.b16 %v10579, %v10578
  %v10680 = vpack.c.b16 %v10581, %v10580
  %v10681 = vpack.c.b16 %v10583, %v10582
  %v10682 = vpack.c.b16 %v10585, %v10584
  %v10683 = vpack.c.b16 %v10587, %v10586
  %v10684 = vpack.c.b16 %v10589, %v10588
  %v10685 = vpack.c.b16 %v10591, %v10590
  %v10686 = vpack.c.b16 %v10593, %v10592
  %v10687 = vpack.c.b16 %v10595, %v10594
  %v10688 = vpack.c.b16 %v10597, %v10596
  %v10689 = vpack.c.b16 %v10599, %v10598
  %v10690 = vpack.c.b16 %v10601, %v10600
  %v10691 = vpack.c.b16 %v10603, %v10602
  %v10692 = vpack.c.b16 %v10605, %v10604
  %v10693 = vpack.c.b16 %v10607, %v10606
  %v10694 = vpack.c.b16 %v10609, %v10608
  %v10695 = vpack.c.b16 %v10611, %v10610
  %v10696 = vpack.c.b16 %v10613, %v10612
  %v10697 = vpack.c.b16 %v10615, %v10614
  %v10698 = vpack.c.b16 %v10617, %v10616
  %v10699 = vpack.c.b16 %v10619, %v10618
  %v10700 = vpack.c.b16 %v10621, %v10620
  %v10701 = vpack.c.b16 %v10623, %v10622
  %v10702 = vpack.c.b16 %v10625, %v10624
  %v10703 = vpack.c.b16 %v10627, %v10626
  %v10704 = vpack.c.b16 %v10629, %v10628
  %v10705 = vpack.c.b16 %v10631, %v10630
  %v10706 = vpack.c.b16 %v10633, %v10632
  %v10707 = vpack.c.b16 %v10635, %v10634
  %v10708 = vpack.c.b16 %v10637, %v10636
  %v10709 = vpack.c.b16 %v10639, %v10638
  %v10710 = vpack.c.b16 %v10641, %v10640
  %v10711 = vpack.c.b16 %v10643, %v10642
  %v10712 = vpack.c.b16 %v10645, %v10644
  %v10713 = vpack.c.b16 %v10647, %v10646
  %v10714 = vpack.c.b16 %v10649, %v10648
  %v10715 = vpack.c.b16 %v10651, %v10650
  %10780 = vmatprep.subr.bf16.mxu0 0
  %10781 = vmatpush1.bf16.msra.mxu0 %v10652
  %10782 = vmatprep.subr.bf16.mxu0 0
  %10783 = vmatpush1.bf16.msra.mxu0 %v10653
  %10784 = vmatprep.subr.bf16.mxu0 0
  %10785 = vmatpush1.bf16.msra.mxu0 %v10654
  %10786 = vmatprep.subr.bf16.mxu0 0
  %10787 = vmatpush1.bf16.msra.mxu0 %v10655
  %10788 = vmatprep.subr.bf16.mxu0 0
  %10789 = vmatpush1.bf16.msra.mxu0 %v10656
  %10790 = vmatprep.subr.bf16.mxu0 0
  %10791 = vmatpush1.bf16.msra.mxu0 %v10657
  %10792 = vmatprep.subr.bf16.mxu0 0
  %10793 = vmatpush1.bf16.msra.mxu0 %v10658
  %10794 = vmatprep.subr.bf16.mxu0 0
  %10795 = vmatpush1.bf16.msra.mxu0 %v10659
  %10796 = vmatprep.subr.bf16.mxu0 0
  %10797 = vmatpush1.bf16.msra.mxu0 %v10660
  %10798 = vmatprep.subr.bf16.mxu0 0
  %10799 = vmatpush1.bf16.msra.mxu0 %v10661
  %10800 = vmatprep.subr.bf16.mxu0 0
  %10801 = vmatpush1.bf16.msra.mxu0 %v10662
  %10802 = vmatprep.subr.bf16.mxu0 0
  %10803 = vmatpush1.bf16.msra.mxu0 %v10663
  %10804 = vmatprep.subr.bf16.mxu0 0
  %10805 = vmatpush1.bf16.msra.mxu0 %v10664
  %10806 = vmatprep.subr.bf16.mxu0 0
  %10807 = vmatpush1.bf16.msra.mxu0 %v10665
  %10808 = vmatprep.subr.bf16.mxu0 0
  %10809 = vmatpush1.bf16.msra.mxu0 %v10666
  %10810 = vmatprep.subr.bf16.mxu0 0
  %10811 = vmatpush1.bf16.msra.mxu0 %v10667
  %10812 = vmatprep.mubr.bf16.mxu0 %v10373
  %10813 = vmatmul.mubr.bf16.gmra.mrb[0].mxu0 %v10372
  %v10814 = vpop.f32.mrb[0].mxu0
  %v10815 = vadd.f32 0.0, %v10814
  %v10816 = vpop.f32.mrb[0].mxu0
  %v10817 = vpop.f32.mrb[0].mxu0
  %v10818 = vadd.f32 0.0, %v10817
  %v10819 = vpop.f32.mrb[0].mxu0
  %10820 = vmatprep.mubr.bf16.mxu0 %v10377
  %10821 = vmatmul.mubr.bf16.gmra.mrb[0].mxu0 %v10376
  %v10822 = vpop.f32.mrb[0].mxu0
  %v10823 = vadd.f32 0.0, %v10822
  %v10824 = vpop.f32.mrb[0].mxu0
  %v10825 = vpop.f32.mrb[0].mxu0
  %v10826 = vadd.f32 0.0, %v10825
  %v10827 = vpop.f32.mrb[0].mxu0
  %10828 = vdwg.mxu0
  %10829 = vmatprep.subr.bf16.mxu0 0
  %10830 = vmatpush1.bf16.msra.mxu0 %v10668
  %10831 = vmatprep.subr.bf16.mxu0 0
  %10832 = vmatpush1.bf16.msra.mxu0 %v10669
  %10833 = vmatprep.subr.bf16.mxu0 0
  %10834 = vmatpush1.bf16.msra.mxu0 %v10670
  %10835 = vmatprep.subr.bf16.mxu0 0
  %10836 = vmatpush1.bf16.msra.mxu0 %v10671
  %10837 = vmatprep.subr.bf16.mxu0 0
  %10838 = vmatpush1.bf16.msra.mxu0 %v10672
  %10839 = vmatprep.subr.bf16.mxu0 0
  %10840 = vmatpush1.bf16.msra.mxu0 %v10673
  %10841 = vmatprep.subr.bf16.mxu0 0
  %10842 = vmatpush1.bf16.msra.mxu0 %v10674
  %10843 = vmatprep.subr.bf16.mxu0 0
  %10844 = vmatpush1.bf16.msra.mxu0 %v10675
  %10845 = vmatprep.subr.bf16.mxu0 0
  %10846 = vmatpush1.bf16.msra.mxu0 %v10676
  %10847 = vmatprep.subr.bf16.mxu0 0
  %10848 = vmatpush1.bf16.msra.mxu0 %v10677
  %10849 = vmatprep.subr.bf16.mxu0 0
  %10850 = vmatpush1.bf16.msra.mxu0 %v10678
  %10851 = vmatprep.subr.bf16.mxu0 0
  %10852 = vmatpush1.bf16.msra.mxu0 %v10679
  %10853 = vmatprep.subr.bf16.mxu0 0
  %10854 = vmatpush1.bf16.msra.mxu0 %v10680
  %10855 = vmatprep.subr.bf16.mxu0 0
  %10856 = vmatpush1.bf16.msra.mxu0 %v10681
  %10857 = vmatprep.subr.bf16.mxu0 0
  %10858 = vmatpush1.bf16.msra.mxu0 %v10682
  %10859 = vmatprep.subr.bf16.mxu0 0
  %10860 = vmatpush1.bf16.msra.mxu0 %v10683
  %10861 = vmatprep.mubr.bf16.mxu0 %v10375
  %10862 = vmatmul.mubr.bf16.gmra.mrb[0].mxu0 %v10374
  %v10863 = vpop.f32.mrb[0].mxu0
  %v10864 = vadd.f32 %v10815, %v10863
  %v10865 = vpop.f32.mrb[0].mxu0
  %v10866 = vpop.f32.mrb[0].mxu0
  %v10867 = vadd.f32 %v10818, %v10866
  %v10868 = vpop.f32.mrb[0].mxu0
  %10869 = vmatprep.mubr.bf16.mxu0 %v10379
  %10870 = vmatmul.mubr.bf16.gmra.mrb[0].mxu0 %v10378
  %v10871 = vpop.f32.mrb[0].mxu0
  %v10872 = vadd.f32 %v10823, %v10871
  %v10873 = vpop.f32.mrb[0].mxu0
  %v10874 = vpop.f32.mrb[0].mxu0
  %v10875 = vadd.f32 %v10826, %v10874
  %v10876 = vpop.f32.mrb[0].mxu0
  %10877 = vdwg.mxu0
  %10878 = vmatprep.subr.bf16.mxu0 0
  %10879 = vmatpush1.bf16.msra.mxu0 %v10684
  %10880 = vmatprep.subr.bf16.mxu0 0
  %10881 = vmatpush1.bf16.msra.mxu0 %v10685
  %10882 = vmatprep.subr.bf16.mxu0 0
  %10883 = vmatpush1.bf16.msra.mxu0 %v10686
  %10884 = vmatprep.subr.bf16.mxu0 0
  %10885 = vmatpush1.bf16.msra.mxu0 %v10687
  %10886 = vmatprep.subr.bf16.mxu0 0
  %10887 = vmatpush1.bf16.msra.mxu0 %v10688
  %10888 = vmatprep.subr.bf16.mxu0 0
  %10889 = vmatpush1.bf16.msra.mxu0 %v10689
  %10890 = vmatprep.subr.bf16.mxu0 0
  %10891 = vmatpush1.bf16.msra.mxu0 %v10690
  %10892 = vmatprep.subr.bf16.mxu0 0
  %10893 = vmatpush1.bf16.msra.mxu0 %v10691
  %10894 = vmatprep.subr.bf16.mxu0 0
  %10895 = vmatpush1.bf16.msra.mxu0 %v10692
  %10896 = vmatprep.subr.bf16.mxu0 0
  %10897 = vmatpush1.bf16.msra.mxu0 %v10693
  %10898 = vmatprep.subr.bf16.mxu0 0
  %10899 = vmatpush1.bf16.msra.mxu0 %v10694
  %10900 = vmatprep.subr.bf16.mxu0 0
  %10901 = vmatpush1.bf16.msra.mxu0 %v10695
  %10902 = vmatprep.subr.bf16.mxu0 0
  %10903 = vmatpush1.bf16.msra.mxu0 %v10696
  %10904 = vmatprep.subr.bf16.mxu0 0
  %10905 = vmatpush1.bf16.msra.mxu0 %v10697
  %10906 = vmatprep.subr.bf16.mxu0 0
  %10907 = vmatpush1.bf16.msra.mxu0 %v10698
  %10908 = vmatprep.subr.bf16.mxu0 0
  %10909 = vmatpush1.bf16.msra.mxu0 %v10699
  %10910 = vmatprep.mubr.bf16.mxu0 %v10377
  %10911 = vmatmul.mubr.bf16.gmra.mrb[0].mxu0 %v10376
  %v10912 = vpop.f32.mrb[0].mxu0
  %v10913 = vadd.f32 %v10864, %v10912
  %v10914 = vpop.f32.mrb[0].mxu0
  %v10915 = vpop.f32.mrb[0].mxu0
  %v10916 = vadd.f32 %v10867, %v10915
  %v10917 = vpop.f32.mrb[0].mxu0
  %10918 = vmatprep.mubr.bf16.mxu0 %v10381
  %10919 = vmatmul.mubr.bf16.gmra.mrb[0].mxu0 %v10380
  %v10920 = vpop.f32.mrb[0].mxu0
  %v10921 = vadd.f32 %v10872, %v10920
  %v10922 = vpop.f32.mrb[0].mxu0
  %v10923 = vpop.f32.mrb[0].mxu0
  %v10924 = vadd.f32 %v10875, %v10923
  %v10925 = vpop.f32.mrb[0].mxu0
  %10926 = vdwg.mxu0
  %10927 = vmatprep.subr.bf16.mxu0 0
  %10928 = vmatpush1.bf16.msra.mxu0 %v10700
  %10929 = vmatprep.subr.bf16.mxu0 0
  %10930 = vmatpush1.bf16.msra.mxu0 %v10701
  %10931 = vmatprep.subr.bf16.mxu0 0
  %10932 = vmatpush1.bf16.msra.mxu0 %v10702
  %10933 = vmatprep.subr.bf16.mxu0 0
  %10934 = vmatpush1.bf16.msra.mxu0 %v10703
  %10935 = vmatprep.subr.bf16.mxu0 0
  %10936 = vmatpush1.bf16.msra.mxu0 %v10704
  %10937 = vmatprep.subr.bf16.mxu0 0
  %10938 = vmatpush1.bf16.msra.mxu0 %v10705
  %10939 = vmatprep.subr.bf16.mxu0 0
  %10940 = vmatpush1.bf16.msra.mxu0 %v10706
  %10941 = vmatprep.subr.bf16.mxu0 0
  %10942 = vmatpush1.bf16.msra.mxu0 %v10707
  %10943 = vmatprep.subr.bf16.mxu0 0
  %10944 = vmatpush1.bf16.msra.mxu0 %v10708
  %10945 = vmatprep.subr.bf16.mxu0 0
  %10946 = vmatpush1.bf16.msra.mxu0 %v10709
  %10947 = vmatprep.subr.bf16.mxu0 0
  %10948 = vmatpush1.bf16.msra.mxu0 %v10710
  %10949 = vmatprep.subr.bf16.mxu0 0
  %10950 = vmatpush1.bf16.msra.mxu0 %v10711
  %10951 = vmatprep.subr.bf16.mxu0 0
  %10952 = vmatpush1.bf16.msra.mxu0 %v10712
  %10953 = vmatprep.subr.bf16.mxu0 0
  %10954 = vmatpush1.bf16.msra.mxu0 %v10713
  %10955 = vmatprep.subr.bf16.mxu0 0
  %10956 = vmatpush1.bf16.msra.mxu0 %v10714
  %10957 = vmatprep.subr.bf16.mxu0 0
  %10958 = vmatpush1.bf16.msra.mxu0 %v10715
  %10959 = vmatprep.mubr.bf16.mxu0 %v10379
  %10960 = vmatmul.mubr.bf16.gmra.mrb[0].mxu0 %v10378
  %v10961 = vpop.f32.mrb[0].mxu0
  %v10962 = vadd.f32 %v10913, %v10961
  %v10963 = vpop.f32.mrb[0].mxu0
  %v10964 = vpop.f32.mrb[0].mxu0
  %v10965 = vadd.f32 %v10916, %v10964
  %v10966 = vpop.f32.mrb[0].mxu0
  %10967 = vmatprep.mubr.bf16.mxu0 %v10383
  %10968 = vmatmul.mubr.bf16.gmra.mrb[0].mxu0 %v10382
  %v10969 = vpop.f32.mrb[0].mxu0
  %v10970 = vadd.f32 %v10921, %v10969
  %v10971 = vpop.f32.mrb[0].mxu0
  %v10972 = vpop.f32.mrb[0].mxu0
  %v10973 = vadd.f32 %v10924, %v10972
  %v10974 = vpop.f32.mrb[0].mxu0
  %10975 = vdwg.mxu0
  %v10976 = vld [vmem:[%s8] sm:$0x1]
  %v10977 = vld [vmem:[%s8 + $0x1] sm:$0x1]
  %v10980 = vlaneseq
  %v10981 = vshrl.u32 %v10980, 7
  %v10982 = vsub.s32 0, %v10981
  %v10983 = vrot.slane %v10976, %v10982
  %v10984 = vlaneseq
  %v10985 = vshrl.u32 %v10984, 7
  %v10986 = vsub.s32 0, %v10985
  %v10987 = vrot.slane %v10977, %v10986
  %v10990 = vadd.f32 %v10962, %v10983
  %v10991 = vadd.f32 %v10965, %v10987
  %v10992 = vadd.f32 %v10970, %v10983
  %v10993 = vadd.f32 %v10973, %v10987
  %v10994 = vmax.f32 %v10990, 0.0
  %v10995 = vmax.f32 %v10991, 0.0
  %v10996 = vmax.f32 %v10992, 0.0
  %v10997 = vmax.f32 %v10993, 0.0
  %10998 = vst [vmem:[%s9] sm:$0xff] %v10994
  %10999 = vst [vmem:[%s9 + $0x8] sm:$0xff] %v10995
  %11000 = vst [vmem:[%s9 + $0x10] sm:$0xff] %v10996
  %11001 = vst [vmem:[%s9 + $0x18] sm:$0xff] %v10997
  // Predicated region
  $region38: #{_lambda_.1} parent=0 // pred_check
    _
  $region39: #{_lambda_.1} parent=0 // pred_check_branch
    %11003 = sbr.rel (0) target = $region41
  $region40: #{_lambda_.1} parent=0 // pred_region
    _
  $region41: #{_lambda_.1} parent=0 // pred_fallthru
    _
  // Predicated region
  $region42: #{_lambda_.1} parent=0 // pred_check
    _
  $region43: #{_lambda_.1} parent=0 // pred_check_branch
    %11005 = sbr.rel (0) target = $region45
  $region44: #{_lambda_.1} parent=0 // pred_region
    _
  $region45: #{_lambda_.1} parent=0 // pred_fallthru
    _

</llo_original>
